<compile_context>
chip_gen: v7x
topology: tpu7x:2x2x1
jax: 0.10.0
libtpu: 0.0.40
codegen_flags: <defaults>
</compile_context>

<pallas_src>
import functools

import jax
import jax.numpy as jnp
from jax import lax
from jax.experimental import pallas as pl
from jax.experimental.pallas import tpu as pltpu

C_PAD = 128  # every channel dimension is padded to one full lane width


# ----------------------------------------------------------------------------
# In-kernel building blocks (operate on VMEM refs only)
# ----------------------------------------------------------------------------
def _conv3x3_bias_relu(src_ref, w_ref, b_ref, dst_ref, *, ho_n, wo_n,
                       dst_row_off=0, dst_col_off=0):
    """Valid 3x3 conv + folded bias + ReLU, NHWC, channels == C_PAD.

    src_ref: (Hi, Wi, C_PAD) activation ref (f32 or bf16), Hi >= ho_n+2, Wi >= wo_n+2
    w_ref:   (3, 3, C_PAD, C_PAD) bf16 weights (BN scale folded in)
    b_ref:   (1, C_PAD) f32 bias (conv bias + BN shift folded)
    dst_ref: rows written at [dst_row_off + ho, dst_col_off : dst_col_off + wo_n, :]
    """

    def row_body(ho, carry):
        acc = jnp.zeros((wo_n, C_PAD), jnp.float32)
        for kh in range(3):           # static 3x3 taps -> 9 MXU matmuls / row
            for kw in range(3):
                lhs = src_ref[ho + kh, pl.ds(kw, wo_n), :].astype(jnp.bfloat16)
                acc = acc + jnp.dot(lhs, w_ref[kh, kw],
                                    preferred_element_type=jnp.float32)
        y = jnp.maximum(acc + b_ref[...], 0.0)            # f32 epilogue
        dst_ref[dst_row_off + ho, pl.ds(dst_col_off, wo_n), :] = y
        return carry

    lax.fori_loop(0, ho_n, row_body, 0)


def _maxpool2x2(src_ref, dst_ref, *, hp_n, wp_n, dst_row_off=0, dst_col_off=0):
    """MaxPool2d(kernel=2, stride=2), floor mode, NHWC with C_PAD lanes.

    Purely VMEM-resident; uses only contiguous (1, C_PAD) loads/stores.
    """
    for po in range(hp_n):            # static tiny loops (<= 7 x 7)
        for pw in range(wp_n):
            v00 = src_ref[2 * po, pl.ds(2 * pw, 1), :]
            v01 = src_ref[2 * po, pl.ds(2 * pw + 1, 1), :]
            v10 = src_ref[2 * po + 1, pl.ds(2 * pw, 1), :]
            v11 = src_ref[2 * po + 1, pl.ds(2 * pw + 1, 1), :]
            dst_ref[dst_row_off + po, pl.ds(dst_col_off + pw, 1), :] = jnp.maximum(
                jnp.maximum(v00, v01), jnp.maximum(v10, v11))


# ----------------------------------------------------------------------------
# Fused-forward kernel factory
# ----------------------------------------------------------------------------
def _scnn_dims(h, w):
    h1, w1 = h - 2, w - 2                # layer-1 conv out
    p1h, p1w = h1 // 2, w1 // 2          # layer-1 pool out
    h2, w2 = p1h - 2, p1w - 2            # layer-2 conv out
    p2h, p2w = h2 // 2, w2 // 2          # layer-2 pool out (= layers 3/4 spatial)
    return (h1, w1), (p1h, p1w), (h2, w2), (p2h, p2w)


def _make_fused_kernel(upto, h, w):
    (H1, W1), (P1H, P1W), (H2, W2), (P2H, P2W) = _scnn_dims(h, w)

    def kernel(x_ref, w1_ref, b1_ref, w2_ref, b2_ref, w3_ref, b3_ref,
               w4_ref, b4_ref, o_ref, c1, p1, c2, p2pad, c3pad):
        # ---- layer 1: Conv(3->64, pad=0) + BN + ReLU + MaxPool(2) ----
        _conv3x3_bias_relu(x_ref, w1_ref, b1_ref, c1, ho_n=H1, wo_n=W1)
        if upto == 1:
            _maxpool2x2(c1, o_ref, hp_n=P1H, wp_n=P1W)
            return
        _maxpool2x2(c1, p1, hp_n=P1H, wp_n=P1W)

        # ---- layer 2: Conv(64->64, pad=0) + BN + ReLU + MaxPool(2) ----
        _conv3x3_bias_relu(p1, w2_ref, b2_ref, c2, ho_n=H2, wo_n=W2)
        if upto == 2:
            _maxpool2x2(c2, o_ref, hp_n=P2H, wp_n=P2W)
            return
        # pool straight into the centre of a zeroed buffer -> layer-3 padded input
        p2pad[...] = jnp.zeros(p2pad.shape, p2pad.dtype)
        _maxpool2x2(c2, p2pad, hp_n=P2H, wp_n=P2W, dst_row_off=1, dst_col_off=1)

        # ---- layer 3: Conv(64->64, pad=1) + BN + ReLU ----
        if upto == 3:
            _conv3x3_bias_relu(p2pad, w3_ref, b3_ref, o_ref, ho_n=P2H, wo_n=P2W)
            return
        c3pad[...] = jnp.zeros(c3pad.shape, c3pad.dtype)
        _conv3x3_bias_relu(p2pad, w3_ref, b3_ref, c3pad, ho_n=P2H, wo_n=P2W,
                           dst_row_off=1, dst_col_off=1)

        # ---- layer 4: Conv(64->64, pad=1) + BN + ReLU ----
        _conv3x3_bias_relu(c3pad, w4_ref, b4_ref, o_ref, ho_n=P2H, wo_n=P2W)

    return kernel


# ----------------------------------------------------------------------------
# Host-side parameter folding + forward
# ----------------------------------------------------------------------------
def _fold_conv_bn(w, b, gamma, beta, rmean, rvar, eps=1e-5):
    """Fold eval-mode BatchNorm into the conv.

    Returns (3,3,C_PAD,C_PAD) bf16 weights (scale folded) and a (1,C_PAD) f32
    bias ((b - rmean)*scale + beta).  Padded channels are exactly zero.
    """
    cout, cin = w.shape[0], w.shape[1]
    scale = gamma / jnp.sqrt(rvar + eps)                       # (cout,)
    wf = jnp.transpose(w, (2, 3, 1, 0)) * scale                # (3,3,cin,cout)
    wf = jnp.pad(wf, ((0, 0), (0, 0), (0, C_PAD - cin), (0, C_PAD - cout)))
    bias = (b - rmean) * scale + beta                          # (cout,)
    bias = jnp.pad(bias, (0, C_PAD - cout)).reshape(1, C_PAD)
    return wf.astype(jnp.bfloat16), bias.astype(jnp.float32)


@functools.partial(jax.jit, static_argnames=("latent",))
def scnn_forward(x, params, latent=None):
    """Mirrors SCNN.forward (NCHW in, NCHW out).  `latent` is a static int."""
    num_layers = len(params)
    assert num_layers == 4
    if latent is not None and (latent < 0 or latent > num_layers - 1):
        raise ValueError("Invalid layer index")
    upto = num_layers if latent is None else latent + 1

    n, cin, h, w = x.shape
    assert h >= 10 and w >= 10, "input spatial dims too small for this SCNN"
    cout = params[0]["w"].shape[0]

    # NCHW -> NHWC once, pad channels to 128 lanes, bf16 for the MXU.
    x_nhwc = jnp.transpose(x, (0, 2, 3, 1))
    x_p = jnp.pad(x_nhwc, ((0, 0), (0, 0), (0, 0), (0, C_PAD - cin)))
    x_p = x_p.astype(jnp.bfloat16)

    folded = [_fold_conv_bn(p["w"], p["b"], p["gamma"], p["beta"],
                            p["rmean"], p["rvar"]) for p in params]

    (H1, W1), (P1H, P1W), (H2, W2), (P2H, P2W) = _scnn_dims(h, w)
    oh, ow = ((P1H, P1W) if upto == 1 else (P2H, P2W))

    kernel = _make_fused_kernel(upto, h, w)

    w_spec = pl.BlockSpec((3, 3, C_PAD, C_PAD), lambda i: (0, 0, 0, 0))
    b_spec = pl.BlockSpec((1, C_PAD), lambda i: (0, 0))

    out = pl.pallas_call(
        kernel,
        out_shape=jax.ShapeDtypeStruct((n, oh, ow, C_PAD), jnp.float32),
        grid=(n,),
        in_specs=[pl.BlockSpec((None, h, w, C_PAD), lambda i: (i, 0, 0, 0)),
                  w_spec, b_spec, w_spec, b_spec, w_spec, b_spec, w_spec, b_spec],
        out_specs=pl.BlockSpec((None, oh, ow, C_PAD), lambda i: (i, 0, 0, 0)),
        scratch_shapes=[
            pltpu.VMEM((H1, W1, C_PAD), jnp.float32),            # conv1 out
            pltpu.VMEM((P1H, P1W, C_PAD), jnp.float32),          # pool1 out
            pltpu.VMEM((H2, W2, C_PAD), jnp.float32),            # conv2 out
            pltpu.VMEM((P2H + 2, P2W + 2, C_PAD), jnp.float32),  # pool2 out, zero-padded ring (layer-3 input)
            pltpu.VMEM((P2H + 2, P2W + 2, C_PAD), jnp.float32),  # conv3 out, zero-padded ring (layer-4 input)
        ],
        compiler_params=pltpu.CompilerParams(
            dimension_semantics=("parallel",)),
    )(x_p, folded[0][0], folded[0][1], folded[1][0], folded[1][1],
      folded[2][0], folded[2][1], folded[3][0], folded[3][1])

    out = out[..., :cout]                    # drop channel padding
    return jnp.transpose(out, (0, 3, 1, 2))  # NHWC -> NCHW at the model boundary


# ----------------------------------------------------------------------------
# Deterministic synthetic parameters matching SCNN.__init__ shapes
# ----------------------------------------------------------------------------
def init_scnn_params(key):
    specs = [(3, 64), (64, 64), (64, 64), (64, 64)]   # (cin, cout) per layer
    params = []
    for i, (cin, cout) in enumerate(specs):
        ks = jax.random.split(jax.random.fold_in(key, i), 6)
        fan_in = cin * 9
        w = jax.random.normal(ks[0], (cout, cin, 3, 3), jnp.float32) / jnp.sqrt(fan_in)
        b = 0.01 * jax.random.normal(ks[1], (cout,), jnp.float32)
        gamma = 1.0 + 0.1 * jax.random.normal(ks[2], (cout,), jnp.float32)
        beta = 0.05 * jax.random.normal(ks[3], (cout,), jnp.float32)
        rmean = 0.02 * jax.random.normal(ks[4], (cout,), jnp.float32)
        rvar = 1.0 + 0.1 * jnp.abs(jax.random.normal(ks[5], (cout,), jnp.float32))
        params.append(dict(w=w, b=b, gamma=gamma, beta=beta, rmean=rmean, rvar=rvar))
    return params


if __name__ == "__main__":
    key = jax.random.PRNGKey(0)
    params = init_scnn_params(jax.random.fold_in(key, 100))
    # Small NCHW input consistent with Conv2d(3, ...): [N=2, C=3, H=16, W=16]
    x = jax.random.normal(jax.random.fold_in(key, 200), (2, 3, 16, 16), jnp.float32)

    out = jax.block_until_ready(scnn_forward(x, params))            # (2, 64, 2, 2)
    lat = jax.block_until_ready(scnn_forward(x, params, latent=1))  # (2, 64, 2, 2)

    assert out.shape == (2, 64, 2, 2), out.shape
    assert lat.shape == (2, 64, 2, 2), lat.shape
    assert jnp.all(jnp.isfinite(out))
    assert jnp.all(jnp.isfinite(lat))
    print("KERNEL_OK")
</pallas_src>

<mosaic_0001>
module attributes {stable_mosaic.version = 11 : i64} {
  func.func @kernel(%arg0: i32, %arg1: memref<1x16x16x128xbf16, #tpu.memory_space<vmem>>, %arg2: memref<3x3x128x128xbf16, #tpu.memory_space<vmem>>, %arg3: memref<1x128xf32, #tpu.memory_space<vmem>>, %arg4: memref<3x3x128x128xbf16, #tpu.memory_space<vmem>>, %arg5: memref<1x128xf32, #tpu.memory_space<vmem>>, %arg6: memref<3x3x128x128xbf16, #tpu.memory_space<vmem>>, %arg7: memref<1x128xf32, #tpu.memory_space<vmem>>, %arg8: memref<3x3x128x128xbf16, #tpu.memory_space<vmem>>, %arg9: memref<1x128xf32, #tpu.memory_space<vmem>>, %arg10: memref<1x2x2x128xf32, #tpu.memory_space<vmem>>, %arg11: memref<14x14x128xf32, #tpu.memory_space<vmem>>, %arg12: memref<7x7x128xf32, #tpu.memory_space<vmem>>, %arg13: memref<5x5x128xf32, #tpu.memory_space<vmem>>, %arg14: memref<4x4x128xf32, #tpu.memory_space<vmem>>, %arg15: memref<4x4x128xf32, #tpu.memory_space<vmem>>) attributes {dimension_semantics = [#tpu.dimension_semantics<parallel>], iteration_bounds = array<i64: 2>, scalar_prefetch = 0 : i64, scratch_operands = 5 : i64, tpu.core_type = #tpu.core_type<tc>, window_params = [{transform_indices = @transform_0, window_bounds = array<i64: 1, 16, 16, 128>}, {pipeline_mode = #tpu.pipeline_mode<synchronous>, transform_indices = @transform_1, window_bounds = array<i64: 3, 3, 128, 128>}, {pipeline_mode = #tpu.pipeline_mode<synchronous>, transform_indices = @transform_2, window_bounds = array<i64: 1, 128>}, {pipeline_mode = #tpu.pipeline_mode<synchronous>, transform_indices = @transform_3, window_bounds = array<i64: 3, 3, 128, 128>}, {pipeline_mode = #tpu.pipeline_mode<synchronous>, transform_indices = @transform_4, window_bounds = array<i64: 1, 128>}, {pipeline_mode = #tpu.pipeline_mode<synchronous>, transform_indices = @transform_5, window_bounds = array<i64: 3, 3, 128, 128>}, {pipeline_mode = #tpu.pipeline_mode<synchronous>, transform_indices = @transform_6, window_bounds = array<i64: 1, 128>}, {pipeline_mode = #tpu.pipeline_mode<synchronous>, transform_indices = @transform_7, window_bounds = array<i64: 3, 3, 128, 128>}, {pipeline_mode = #tpu.pipeline_mode<synchronous>, transform_indices = @transform_8, window_bounds = array<i64: 1, 128>}, {transform_indices = @transform_9, window_bounds = array<i64: 1, 2, 2, 128>}]} {
    %c0_i32 = arith.constant 0 : i32
    %c14_i32 = arith.constant 14 : i32
    %0 = arith.addi %c0_i32, %c14_i32 : i32
    %c1_i32 = arith.constant 1 : i32
    scf.for %arg16 = %c0_i32 to %0 step %c1_i32  : i32 {
      %cst_799 = arith.constant 0.000000e+00 : f32
      %750 = vector.broadcast %cst_799 : f32 to vector<14x128xf32>
      %c0_i32_800 = arith.constant 0 : i32
      %751 = arith.addi %arg16, %c0_i32_800 : i32
      %c0_801 = arith.constant 0 : index
      %752 = arith.index_cast %751 : i32 to index
      %c0_802 = arith.constant 0 : index
      %c0_803 = arith.constant 0 : index
      %753 = vector.load %arg1[%c0_801, %752, %c0_802, %c0_803] : memref<1x16x16x128xbf16, #tpu.memory_space<vmem>>, vector<1x1x14x128xbf16>
      %754 = vector.shape_cast %753 : vector<1x1x14x128xbf16> to vector<14x128xbf16>
      %c0_804 = arith.constant 0 : index
      %c0_805 = arith.constant 0 : index
      %c0_806 = arith.constant 0 : index
      %c0_807 = arith.constant 0 : index
      %755 = vector.load %arg2[%c0_804, %c0_805, %c0_806, %c0_807] : memref<3x3x128x128xbf16, #tpu.memory_space<vmem>>, vector<1x1x128x128xbf16>
      %756 = vector.shape_cast %755 : vector<1x1x128x128xbf16> to vector<128x128xbf16>
      %cst_808 = arith.constant dense<0.000000e+00> : vector<14x128xf32>
      %757 = tpu.matmul %754, %756, %cst_808 {dimension_numbers = #tpu.dot_dimension_numbers<[1], [0], [0], [1], [0, 0, 1, 1], [], []>} : vector<14x128xbf16>, vector<128x128xbf16>, vector<14x128xf32> -> vector<14x128xf32>
      %758 = arith.addf %750, %757 : vector<14x128xf32>
      %c0_i32_809 = arith.constant 0 : i32
      %759 = arith.addi %arg16, %c0_i32_809 : i32
      %c0_810 = arith.constant 0 : index
      %760 = arith.index_cast %759 : i32 to index
      %c1_811 = arith.constant 1 : index
      %c0_812 = arith.constant 0 : index
      %761 = vector.load %arg1[%c0_810, %760, %c1_811, %c0_812] : memref<1x16x16x128xbf16, #tpu.memory_space<vmem>>, vector<1x1x14x128xbf16>
      %762 = vector.shape_cast %761 : vector<1x1x14x128xbf16> to vector<14x128xbf16>
      %c0_813 = arith.constant 0 : index
      %c1_814 = arith.constant 1 : index
      %c0_815 = arith.constant 0 : index
      %c0_816 = arith.constant 0 : index
      %763 = vector.load %arg2[%c0_813, %c1_814, %c0_815, %c0_816] : memref<3x3x128x128xbf16, #tpu.memory_space<vmem>>, vector<1x1x128x128xbf16>
      %764 = vector.shape_cast %763 : vector<1x1x128x128xbf16> to vector<128x128xbf16>
      %cst_817 = arith.constant dense<0.000000e+00> : vector<14x128xf32>
      %765 = tpu.matmul %762, %764, %cst_817 {dimension_numbers = #tpu.dot_dimension_numbers<[1], [0], [0], [1], [0, 0, 1, 1], [], []>} : vector<14x128xbf16>, vector<128x128xbf16>, vector<14x128xf32> -> vector<14x128xf32>
      %766 = arith.addf %758, %765 : vector<14x128xf32>
      %c0_i32_818 = arith.constant 0 : i32
      %767 = arith.addi %arg16, %c0_i32_818 : i32
      %c0_819 = arith.constant 0 : index
      %768 = arith.index_cast %767 : i32 to index
      %c2_820 = arith.constant 2 : index
      %c0_821 = arith.constant 0 : index
      %769 = vector.load %arg1[%c0_819, %768, %c2_820, %c0_821] : memref<1x16x16x128xbf16, #tpu.memory_space<vmem>>, vector<1x1x14x128xbf16>
      %770 = vector.shape_cast %769 : vector<1x1x14x128xbf16> to vector<14x128xbf16>
      %c0_822 = arith.constant 0 : index
      %c2_823 = arith.constant 2 : index
      %c0_824 = arith.constant 0 : index
      %c0_825 = arith.constant 0 : index
      %771 = vector.load %arg2[%c0_822, %c2_823, %c0_824, %c0_825] : memref<3x3x128x128xbf16, #tpu.memory_space<vmem>>, vector<1x1x128x128xbf16>
      %772 = vector.shape_cast %771 : vector<1x1x128x128xbf16> to vector<128x128xbf16>
      %cst_826 = arith.constant dense<0.000000e+00> : vector<14x128xf32>
      %773 = tpu.matmul %770, %772, %cst_826 {dimension_numbers = #tpu.dot_dimension_numbers<[1], [0], [0], [1], [0, 0, 1, 1], [], []>} : vector<14x128xbf16>, vector<128x128xbf16>, vector<14x128xf32> -> vector<14x128xf32>
      %774 = arith.addf %766, %773 : vector<14x128xf32>
      %c1_i32_827 = arith.constant 1 : i32
      %775 = arith.addi %arg16, %c1_i32_827 : i32
      %c0_828 = arith.constant 0 : index
      %776 = arith.index_cast %775 : i32 to index
      %c0_829 = arith.constant 0 : index
      %c0_830 = arith.constant 0 : index
      %777 = vector.load %arg1[%c0_828, %776, %c0_829, %c0_830] : memref<1x16x16x128xbf16, #tpu.memory_space<vmem>>, vector<1x1x14x128xbf16>
      %778 = vector.shape_cast %777 : vector<1x1x14x128xbf16> to vector<14x128xbf16>
      %c1_831 = arith.constant 1 : index
      %c0_832 = arith.constant 0 : index
      %c0_833 = arith.constant 0 : index
      %c0_834 = arith.constant 0 : index
      %779 = vector.load %arg2[%c1_831, %c0_832, %c0_833, %c0_834] : memref<3x3x128x128xbf16, #tpu.memory_space<vmem>>, vector<1x1x128x128xbf16>
      %780 = vector.shape_cast %779 : vector<1x1x128x128xbf16> to vector<128x128xbf16>
      %cst_835 = arith.constant dense<0.000000e+00> : vector<14x128xf32>
      %781 = tpu.matmul %778, %780, %cst_835 {dimension_numbers = #tpu.dot_dimension_numbers<[1], [0], [0], [1], [0, 0, 1, 1], [], []>} : vector<14x128xbf16>, vector<128x128xbf16>, vector<14x128xf32> -> vector<14x128xf32>
      %782 = arith.addf %774, %781 : vector<14x128xf32>
      %c1_i32_836 = arith.constant 1 : i32
      %783 = arith.addi %arg16, %c1_i32_836 : i32
      %c0_837 = arith.constant 0 : index
      %784 = arith.index_cast %783 : i32 to index
      %c1_838 = arith.constant 1 : index
      %c0_839 = arith.constant 0 : index
      %785 = vector.load %arg1[%c0_837, %784, %c1_838, %c0_839] : memref<1x16x16x128xbf16, #tpu.memory_space<vmem>>, vector<1x1x14x128xbf16>
      %786 = vector.shape_cast %785 : vector<1x1x14x128xbf16> to vector<14x128xbf16>
      %c1_840 = arith.constant 1 : index
      %c1_841 = arith.constant 1 : index
      %c0_842 = arith.constant 0 : index
      %c0_843 = arith.constant 0 : index
      %787 = vector.load %arg2[%c1_840, %c1_841, %c0_842, %c0_843] : memref<3x3x128x128xbf16, #tpu.memory_space<vmem>>, vector<1x1x128x128xbf16>
      %788 = vector.shape_cast %787 : vector<1x1x128x128xbf16> to vector<128x128xbf16>
      %cst_844 = arith.constant dense<0.000000e+00> : vector<14x128xf32>
      %789 = tpu.matmul %786, %788, %cst_844 {dimension_numbers = #tpu.dot_dimension_numbers<[1], [0], [0], [1], [0, 0, 1, 1], [], []>} : vector<14x128xbf16>, vector<128x128xbf16>, vector<14x128xf32> -> vector<14x128xf32>
      %790 = arith.addf %782, %789 : vector<14x128xf32>
      %c1_i32_845 = arith.constant 1 : i32
      %791 = arith.addi %arg16, %c1_i32_845 : i32
      %c0_846 = arith.constant 0 : index
      %792 = arith.index_cast %791 : i32 to index
      %c2_847 = arith.constant 2 : index
      %c0_848 = arith.constant 0 : index
      %793 = vector.load %arg1[%c0_846, %792, %c2_847, %c0_848] : memref<1x16x16x128xbf16, #tpu.memory_space<vmem>>, vector<1x1x14x128xbf16>
      %794 = vector.shape_cast %793 : vector<1x1x14x128xbf16> to vector<14x128xbf16>
      %c1_849 = arith.constant 1 : index
      %c2_850 = arith.constant 2 : index
      %c0_851 = arith.constant 0 : index
      %c0_852 = arith.constant 0 : index
      %795 = vector.load %arg2[%c1_849, %c2_850, %c0_851, %c0_852] : memref<3x3x128x128xbf16, #tpu.memory_space<vmem>>, vector<1x1x128x128xbf16>
      %796 = vector.shape_cast %795 : vector<1x1x128x128xbf16> to vector<128x128xbf16>
      %cst_853 = arith.constant dense<0.000000e+00> : vector<14x128xf32>
      %797 = tpu.matmul %794, %796, %cst_853 {dimension_numbers = #tpu.dot_dimension_numbers<[1], [0], [0], [1], [0, 0, 1, 1], [], []>} : vector<14x128xbf16>, vector<128x128xbf16>, vector<14x128xf32> -> vector<14x128xf32>
      %798 = arith.addf %790, %797 : vector<14x128xf32>
      %c2_i32_854 = arith.constant 2 : i32
      %799 = arith.addi %arg16, %c2_i32_854 : i32
      %c0_855 = arith.constant 0 : index
      %800 = arith.index_cast %799 : i32 to index
      %c0_856 = arith.constant 0 : index
      %c0_857 = arith.constant 0 : index
      %801 = vector.load %arg1[%c0_855, %800, %c0_856, %c0_857] : memref<1x16x16x128xbf16, #tpu.memory_space<vmem>>, vector<1x1x14x128xbf16>
      %802 = vector.shape_cast %801 : vector<1x1x14x128xbf16> to vector<14x128xbf16>
      %c2_858 = arith.constant 2 : index
      %c0_859 = arith.constant 0 : index
      %c0_860 = arith.constant 0 : index
      %c0_861 = arith.constant 0 : index
      %803 = vector.load %arg2[%c2_858, %c0_859, %c0_860, %c0_861] : memref<3x3x128x128xbf16, #tpu.memory_space<vmem>>, vector<1x1x128x128xbf16>
      %804 = vector.shape_cast %803 : vector<1x1x128x128xbf16> to vector<128x128xbf16>
      %cst_862 = arith.constant dense<0.000000e+00> : vector<14x128xf32>
      %805 = tpu.matmul %802, %804, %cst_862 {dimension_numbers = #tpu.dot_dimension_numbers<[1], [0], [0], [1], [0, 0, 1, 1], [], []>} : vector<14x128xbf16>, vector<128x128xbf16>, vector<14x128xf32> -> vector<14x128xf32>
      %806 = arith.addf %798, %805 : vector<14x128xf32>
      %c2_i32_863 = arith.constant 2 : i32
      %807 = arith.addi %arg16, %c2_i32_863 : i32
      %c0_864 = arith.constant 0 : index
      %808 = arith.index_cast %807 : i32 to index
      %c1_865 = arith.constant 1 : index
      %c0_866 = arith.constant 0 : index
      %809 = vector.load %arg1[%c0_864, %808, %c1_865, %c0_866] : memref<1x16x16x128xbf16, #tpu.memory_space<vmem>>, vector<1x1x14x128xbf16>
      %810 = vector.shape_cast %809 : vector<1x1x14x128xbf16> to vector<14x128xbf16>
      %c2_867 = arith.constant 2 : index
      %c1_868 = arith.constant 1 : index
      %c0_869 = arith.constant 0 : index
      %c0_870 = arith.constant 0 : index
      %811 = vector.load %arg2[%c2_867, %c1_868, %c0_869, %c0_870] : memref<3x3x128x128xbf16, #tpu.memory_space<vmem>>, vector<1x1x128x128xbf16>
      %812 = vector.shape_cast %811 : vector<1x1x128x128xbf16> to vector<128x128xbf16>
      %cst_871 = arith.constant dense<0.000000e+00> : vector<14x128xf32>
      %813 = tpu.matmul %810, %812, %cst_871 {dimension_numbers = #tpu.dot_dimension_numbers<[1], [0], [0], [1], [0, 0, 1, 1], [], []>} : vector<14x128xbf16>, vector<128x128xbf16>, vector<14x128xf32> -> vector<14x128xf32>
      %814 = arith.addf %806, %813 : vector<14x128xf32>
      %c2_i32_872 = arith.constant 2 : i32
      %815 = arith.addi %arg16, %c2_i32_872 : i32
      %c0_873 = arith.constant 0 : index
      %816 = arith.index_cast %815 : i32 to index
      %c2_874 = arith.constant 2 : index
      %c0_875 = arith.constant 0 : index
      %817 = vector.load %arg1[%c0_873, %816, %c2_874, %c0_875] : memref<1x16x16x128xbf16, #tpu.memory_space<vmem>>, vector<1x1x14x128xbf16>
      %818 = vector.shape_cast %817 : vector<1x1x14x128xbf16> to vector<14x128xbf16>
      %c2_876 = arith.constant 2 : index
      %c2_877 = arith.constant 2 : index
      %c0_878 = arith.constant 0 : index
      %c0_879 = arith.constant 0 : index
      %819 = vector.load %arg2[%c2_876, %c2_877, %c0_878, %c0_879] : memref<3x3x128x128xbf16, #tpu.memory_space<vmem>>, vector<1x1x128x128xbf16>
      %820 = vector.shape_cast %819 : vector<1x1x128x128xbf16> to vector<128x128xbf16>
      %cst_880 = arith.constant dense<0.000000e+00> : vector<14x128xf32>
      %821 = tpu.matmul %818, %820, %cst_880 {dimension_numbers = #tpu.dot_dimension_numbers<[1], [0], [0], [1], [0, 0, 1, 1], [], []>} : vector<14x128xbf16>, vector<128x128xbf16>, vector<14x128xf32> -> vector<14x128xf32>
      %822 = arith.addf %814, %821 : vector<14x128xf32>
      %c0_881 = arith.constant 0 : index
      %c0_882 = arith.constant 0 : index
      %823 = vector.load %arg3[%c0_881, %c0_882] : memref<1x128xf32, #tpu.memory_space<vmem>>, vector<1x128xf32>
      %824 = vector.broadcast %823 : vector<1x128xf32> to vector<14x128xf32>
      %825 = arith.addf %822, %824 : vector<14x128xf32>
      %cst_883 = arith.constant 0.000000e+00 : f32
      %826 = vector.broadcast %cst_883 : f32 to vector<14x128xf32>
      %827 = arith.maximumf %825, %826 : vector<14x128xf32>
      %c0_i32_884 = arith.constant 0 : i32
      %828 = arith.addi %c0_i32_884, %arg16 : i32
      %829 = arith.index_cast %828 : i32 to index
      %c0_885 = arith.constant 0 : index
      %c0_886 = arith.constant 0 : index
      %830 = vector.load %arg11[%829, %c0_885, %c0_886] : memref<14x14x128xf32, #tpu.memory_space<vmem>>, vector<1x14x128xf32>
      %831 = vector.shape_cast %830 : vector<1x14x128xf32> to vector<14x128xf32>
      %832 = vector.shape_cast %827 : vector<14x128xf32> to vector<1x14x128xf32>
      tpu.vector_store %arg11[%829, %c0_885, %c0_886], %832 {strides = array<i32>} : memref<14x14x128xf32, #tpu.memory_space<vmem>>, vector<1x14x128xf32>,
    }
    %c14_i32_0 = arith.constant 14 : i32
    %c0 = arith.constant 0 : index
    %c0_1 = arith.constant 0 : index
    %c0_2 = arith.constant 0 : index
    %1 = vector.load %arg11[%c0, %c0_1, %c0_2] : memref<14x14x128xf32, #tpu.memory_space<vmem>>, vector<1x1x128xf32>
    %2 = vector.shape_cast %1 : vector<1x1x128xf32> to vector<1x128xf32>
    %c0_3 = arith.constant 0 : index
    %c1 = arith.constant 1 : index
    %c0_4 = arith.constant 0 : index
    %3 = vector.load %arg11[%c0_3, %c1, %c0_4] : memref<14x14x128xf32, #tpu.memory_space<vmem>>, vector<1x1x128xf32>
    %4 = vector.shape_cast %3 : vector<1x1x128xf32> to vector<1x128xf32>
    %c1_5 = arith.constant 1 : index
    %c0_6 = arith.constant 0 : index
    %c0_7 = arith.constant 0 : index
    %5 = vector.load %arg11[%c1_5, %c0_6, %c0_7] : memref<14x14x128xf32, #tpu.memory_space<vmem>>, vector<1x1x128xf32>
    %6 = vector.shape_cast %5 : vector<1x1x128xf32> to vector<1x128xf32>
    %c1_8 = arith.constant 1 : index
    %c1_9 = arith.constant 1 : index
    %c0_10 = arith.constant 0 : index
    %7 = vector.load %arg11[%c1_8, %c1_9, %c0_10] : memref<14x14x128xf32, #tpu.memory_space<vmem>>, vector<1x1x128xf32>
    %8 = vector.shape_cast %7 : vector<1x1x128xf32> to vector<1x128xf32>
    %9 = arith.maximumf %2, %4 : vector<1x128xf32>
    %10 = arith.maximumf %6, %8 : vector<1x128xf32>
    %11 = arith.maximumf %9, %10 : vector<1x128xf32>
    %c0_11 = arith.constant 0 : index
    %c0_12 = arith.constant 0 : index
    %c0_13 = arith.constant 0 : index
    %12 = vector.load %arg12[%c0_11, %c0_12, %c0_13] : memref<7x7x128xf32, #tpu.memory_space<vmem>>, vector<1x1x128xf32>
    %13 = vector.shape_cast %12 : vector<1x1x128xf32> to vector<1x128xf32>
    %14 = vector.shape_cast %11 : vector<1x128xf32> to vector<1x1x128xf32>
    tpu.vector_store %arg12[%c0_11, %c0_12, %c0_13], %14 {strides = array<i32>} : memref<7x7x128xf32, #tpu.memory_space<vmem>>, vector<1x1x128xf32>,
    %c0_14 = arith.constant 0 : index
    %c2 = arith.constant 2 : index
    %c0_15 = arith.constant 0 : index
    %15 = vector.load %arg11[%c0_14, %c2, %c0_15] : memref<14x14x128xf32, #tpu.memory_space<vmem>>, vector<1x1x128xf32>
    %16 = vector.shape_cast %15 : vector<1x1x128xf32> to vector<1x128xf32>
    %c0_16 = arith.constant 0 : index
    %c3 = arith.constant 3 : index
    %c0_17 = arith.constant 0 : index
    %17 = vector.load %arg11[%c0_16, %c3, %c0_17] : memref<14x14x128xf32, #tpu.memory_space<vmem>>, vector<1x1x128xf32>
    %18 = vector.shape_cast %17 : vector<1x1x128xf32> to vector<1x128xf32>
    %c1_18 = arith.constant 1 : index
    %c2_19 = arith.constant 2 : index
    %c0_20 = arith.constant 0 : index
    %19 = vector.load %arg11[%c1_18, %c2_19, %c0_20] : memref<14x14x128xf32, #tpu.memory_space<vmem>>, vector<1x1x128xf32>
    %20 = vector.shape_cast %19 : vector<1x1x128xf32> to vector<1x128xf32>
    %c1_21 = arith.constant 1 : index
    %c3_22 = arith.constant 3 : index
    %c0_23 = arith.constant 0 : index
    %21 = vector.load %arg11[%c1_21, %c3_22, %c0_23] : memref<14x14x128xf32, #tpu.memory_space<vmem>>, vector<1x1x128xf32>
    %22 = vector.shape_cast %21 : vector<1x1x128xf32> to vector<1x128xf32>
    %23 = arith.maximumf %16, %18 : vector<1x128xf32>
    %24 = arith.maximumf %20, %22 : vector<1x128xf32>
    %25 = arith.maximumf %23, %24 : vector<1x128xf32>
    %c0_24 = arith.constant 0 : index
    %c1_25 = arith.constant 1 : index
    %c0_26 = arith.constant 0 : index
    %26 = vector.load %arg12[%c0_24, %c1_25, %c0_26] : memref<7x7x128xf32, #tpu.memory_space<vmem>>, vector<1x1x128xf32>
    %27 = vector.shape_cast %26 : vector<1x1x128xf32> to vector<1x128xf32>
    %28 = vector.shape_cast %25 : vector<1x128xf32> to vector<1x1x128xf32>
    tpu.vector_store %arg12[%c0_24, %c1_25, %c0_26], %28 {strides = array<i32>} : memref<7x7x128xf32, #tpu.memory_space<vmem>>, vector<1x1x128xf32>,
    %c0_27 = arith.constant 0 : index
    %c4 = arith.constant 4 : index
    %c0_28 = arith.constant 0 : index
    %29 = vector.load %arg11[%c0_27, %c4, %c0_28] : memref<14x14x128xf32, #tpu.memory_space<vmem>>, vector<1x1x128xf32>
    %30 = vector.shape_cast %29 : vector<1x1x128xf32> to vector<1x128xf32>
    %c0_29 = arith.constant 0 : index
    %c5 = arith.constant 5 : index
    %c0_30 = arith.constant 0 : index
    %31 = vector.load %arg11[%c0_29, %c5, %c0_30] : memref<14x14x128xf32, #tpu.memory_space<vmem>>, vector<1x1x128xf32>
    %32 = vector.shape_cast %31 : vector<1x1x128xf32> to vector<1x128xf32>
    %c1_31 = arith.constant 1 : index
    %c4_32 = arith.constant 4 : index
    %c0_33 = arith.constant 0 : index
    %33 = vector.load %arg11[%c1_31, %c4_32, %c0_33] : memref<14x14x128xf32, #tpu.memory_space<vmem>>, vector<1x1x128xf32>
    %34 = vector.shape_cast %33 : vector<1x1x128xf32> to vector<1x128xf32>
    %c1_34 = arith.constant 1 : index
    %c5_35 = arith.constant 5 : index
    %c0_36 = arith.constant 0 : index
    %35 = vector.load %arg11[%c1_34, %c5_35, %c0_36] : memref<14x14x128xf32, #tpu.memory_space<vmem>>, vector<1x1x128xf32>
    %36 = vector.shape_cast %35 : vector<1x1x128xf32> to vector<1x128xf32>
    %37 = arith.maximumf %30, %32 : vector<1x128xf32>
    %38 = arith.maximumf %34, %36 : vector<1x128xf32>
    %39 = arith.maximumf %37, %38 : vector<1x128xf32>
    %c0_37 = arith.constant 0 : index
    %c2_38 = arith.constant 2 : index
    %c0_39 = arith.constant 0 : index
    %40 = vector.load %arg12[%c0_37, %c2_38, %c0_39] : memref<7x7x128xf32, #tpu.memory_space<vmem>>, vector<1x1x128xf32>
    %41 = vector.shape_cast %40 : vector<1x1x128xf32> to vector<1x128xf32>
    %42 = vector.shape_cast %39 : vector<1x128xf32> to vector<1x1x128xf32>
    tpu.vector_store %arg12[%c0_37, %c2_38, %c0_39], %42 {strides = array<i32>} : memref<7x7x128xf32, #tpu.memory_space<vmem>>, vector<1x1x128xf32>,
    %c0_40 = arith.constant 0 : index
    %c6 = arith.constant 6 : index
    %c0_41 = arith.constant 0 : index
    %43 = vector.load %arg11[%c0_40, %c6, %c0_41] : memref<14x14x128xf32, #tpu.memory_space<vmem>>, vector<1x1x128xf32>
    %44 = vector.shape_cast %43 : vector<1x1x128xf32> to vector<1x128xf32>
    %c0_42 = arith.constant 0 : index
    %c7 = arith.constant 7 : index
    %c0_43 = arith.constant 0 : index
    %45 = vector.load %arg11[%c0_42, %c7, %c0_43] : memref<14x14x128xf32, #tpu.memory_space<vmem>>, vector<1x1x128xf32>
    %46 = vector.shape_cast %45 : vector<1x1x128xf32> to vector<1x128xf32>
    %c1_44 = arith.constant 1 : index
    %c6_45 = arith.constant 6 : index
    %c0_46 = arith.constant 0 : index
    %47 = vector.load %arg11[%c1_44, %c6_45, %c0_46] : memref<14x14x128xf32, #tpu.memory_space<vmem>>, vector<1x1x128xf32>
    %48 = vector.shape_cast %47 : vector<1x1x128xf32> to vector<1x128xf32>
    %c1_47 = arith.constant 1 : index
    %c7_48 = arith.constant 7 : index
    %c0_49 = arith.constant 0 : index
    %49 = vector.load %arg11[%c1_47, %c7_48, %c0_49] : memref<14x14x128xf32, #tpu.memory_space<vmem>>, vector<1x1x128xf32>
    %50 = vector.shape_cast %49 : vector<1x1x128xf32> to vector<1x128xf32>
    %51 = arith.maximumf %44, %46 : vector<1x128xf32>
    %52 = arith.maximumf %48, %50 : vector<1x128xf32>
    %53 = arith.maximumf %51, %52 : vector<1x128xf32>
    %c0_50 = arith.constant 0 : index
    %c3_51 = arith.constant 3 : index
    %c0_52 = arith.constant 0 : index
    %54 = vector.load %arg12[%c0_50, %c3_51, %c0_52] : memref<7x7x128xf32, #tpu.memory_space<vmem>>, vector<1x1x128xf32>
    %55 = vector.shape_cast %54 : vector<1x1x128xf32> to vector<1x128xf32>
    %56 = vector.shape_cast %53 : vector<1x128xf32> to vector<1x1x128xf32>
    tpu.vector_store %arg12[%c0_50, %c3_51, %c0_52], %56 {strides = array<i32>} : memref<7x7x128xf32, #tpu.memory_space<vmem>>, vector<1x1x128xf32>,
    %c0_53 = arith.constant 0 : index
    %c8 = arith.constant 8 : index
    %c0_54 = arith.constant 0 : index
    %57 = vector.load %arg11[%c0_53, %c8, %c0_54] : memref<14x14x128xf32, #tpu.memory_space<vmem>>, vector<1x1x128xf32>
    %58 = vector.shape_cast %57 : vector<1x1x128xf32> to vector<1x128xf32>
    %c0_55 = arith.constant 0 : index
    %c9 = arith.constant 9 : index
    %c0_56 = arith.constant 0 : index
    %59 = vector.load %arg11[%c0_55, %c9, %c0_56] : memref<14x14x128xf32, #tpu.memory_space<vmem>>, vector<1x1x128xf32>
    %60 = vector.shape_cast %59 : vector<1x1x128xf32> to vector<1x128xf32>
    %c1_57 = arith.constant 1 : index
    %c8_58 = arith.constant 8 : index
    %c0_59 = arith.constant 0 : index
    %61 = vector.load %arg11[%c1_57, %c8_58, %c0_59] : memref<14x14x128xf32, #tpu.memory_space<vmem>>, vector<1x1x128xf32>
    %62 = vector.shape_cast %61 : vector<1x1x128xf32> to vector<1x128xf32>
    %c1_60 = arith.constant 1 : index
    %c9_61 = arith.constant 9 : index
    %c0_62 = arith.constant 0 : index
    %63 = vector.load %arg11[%c1_60, %c9_61, %c0_62] : memref<14x14x128xf32, #tpu.memory_space<vmem>>, vector<1x1x128xf32>
    %64 = vector.shape_cast %63 : vector<1x1x128xf32> to vector<1x128xf32>
    %65 = arith.maximumf %58, %60 : vector<1x128xf32>
    %66 = arith.maximumf %62, %64 : vector<1x128xf32>
    %67 = arith.maximumf %65, %66 : vector<1x128xf32>
    %c0_63 = arith.constant 0 : index
    %c4_64 = arith.constant 4 : index
    %c0_65 = arith.constant 0 : index
    %68 = vector.load %arg12[%c0_63, %c4_64, %c0_65] : memref<7x7x128xf32, #tpu.memory_space<vmem>>, vector<1x1x128xf32>
    %69 = vector.shape_cast %68 : vector<1x1x128xf32> to vector<1x128xf32>
    %70 = vector.shape_cast %67 : vector<1x128xf32> to vector<1x1x128xf32>
    tpu.vector_store %arg12[%c0_63, %c4_64, %c0_65], %70 {strides = array<i32>} : memref<7x7x128xf32, #tpu.memory_space<vmem>>, vector<1x1x128xf32>,
    %c0_66 = arith.constant 0 : index
    %c10 = arith.constant 10 : index
    %c0_67 = arith.constant 0 : index
    %71 = vector.load %arg11[%c0_66, %c10, %c0_67] : memref<14x14x128xf32, #tpu.memory_space<vmem>>, vector<1x1x128xf32>
    %72 = vector.shape_cast %71 : vector<1x1x128xf32> to vector<1x128xf32>
    %c0_68 = arith.constant 0 : index
    %c11 = arith.constant 11 : index
    %c0_69 = arith.constant 0 : index
    %73 = vector.load %arg11[%c0_68, %c11, %c0_69] : memref<14x14x128xf32, #tpu.memory_space<vmem>>, vector<1x1x128xf32>
    %74 = vector.shape_cast %73 : vector<1x1x128xf32> to vector<1x128xf32>
    %c1_70 = arith.constant 1 : index
    %c10_71 = arith.constant 10 : index
    %c0_72 = arith.constant 0 : index
    %75 = vector.load %arg11[%c1_70, %c10_71, %c0_72] : memref<14x14x128xf32, #tpu.memory_space<vmem>>, vector<1x1x128xf32>
    %76 = vector.shape_cast %75 : vector<1x1x128xf32> to vector<1x128xf32>
    %c1_73 = arith.constant 1 : index
    %c11_74 = arith.constant 11 : index
    %c0_75 = arith.constant 0 : index
    %77 = vector.load %arg11[%c1_73, %c11_74, %c0_75] : memref<14x14x128xf32, #tpu.memory_space<vmem>>, vector<1x1x128xf32>
    %78 = vector.shape_cast %77 : vector<1x1x128xf32> to vector<1x128xf32>
    %79 = arith.maximumf %72, %74 : vector<1x128xf32>
    %80 = arith.maximumf %76, %78 : vector<1x128xf32>
    %81 = arith.maximumf %79, %80 : vector<1x128xf32>
    %c0_76 = arith.constant 0 : index
    %c5_77 = arith.constant 5 : index
    %c0_78 = arith.constant 0 : index
    %82 = vector.load %arg12[%c0_76, %c5_77, %c0_78] : memref<7x7x128xf32, #tpu.memory_space<vmem>>, vector<1x1x128xf32>
    %83 = vector.shape_cast %82 : vector<1x1x128xf32> to vector<1x128xf32>
    %84 = vector.shape_cast %81 : vector<1x128xf32> to vector<1x1x128xf32>
    tpu.vector_store %arg12[%c0_76, %c5_77, %c0_78], %84 {strides = array<i32>} : memref<7x7x128xf32, #tpu.memory_space<vmem>>, vector<1x1x128xf32>,
    %c0_79 = arith.constant 0 : index
    %c12 = arith.constant 12 : index
    %c0_80 = arith.constant 0 : index
    %85 = vector.load %arg11[%c0_79, %c12, %c0_80] : memref<14x14x128xf32, #tpu.memory_space<vmem>>, vector<1x1x128xf32>
    %86 = vector.shape_cast %85 : vector<1x1x128xf32> to vector<1x128xf32>
    %c0_81 = arith.constant 0 : index
    %c13 = arith.constant 13 : index
    %c0_82 = arith.constant 0 : index
    %87 = vector.load %arg11[%c0_81, %c13, %c0_82] : memref<14x14x128xf32, #tpu.memory_space<vmem>>, vector<1x1x128xf32>
    %88 = vector.shape_cast %87 : vector<1x1x128xf32> to vector<1x128xf32>
    %c1_83 = arith.constant 1 : index
    %c12_84 = arith.constant 12 : index
    %c0_85 = arith.constant 0 : index
    %89 = vector.load %arg11[%c1_83, %c12_84, %c0_85] : memref<14x14x128xf32, #tpu.memory_space<vmem>>, vector<1x1x128xf32>
    %90 = vector.shape_cast %89 : vector<1x1x128xf32> to vector<1x128xf32>
    %c1_86 = arith.constant 1 : index
    %c13_87 = arith.constant 13 : index
    %c0_88 = arith.constant 0 : index
    %91 = vector.load %arg11[%c1_86, %c13_87, %c0_88] : memref<14x14x128xf32, #tpu.memory_space<vmem>>, vector<1x1x128xf32>
    %92 = vector.shape_cast %91 : vector<1x1x128xf32> to vector<1x128xf32>
    %93 = arith.maximumf %86, %88 : vector<1x128xf32>
    %94 = arith.maximumf %90, %92 : vector<1x128xf32>
    %95 = arith.maximumf %93, %94 : vector<1x128xf32>
    %c0_89 = arith.constant 0 : index
    %c6_90 = arith.constant 6 : index
    %c0_91 = arith.constant 0 : index
    %96 = vector.load %arg12[%c0_89, %c6_90, %c0_91] : memref<7x7x128xf32, #tpu.memory_space<vmem>>, vector<1x1x128xf32>
    %97 = vector.shape_cast %96 : vector<1x1x128xf32> to vector<1x128xf32>
    %98 = vector.shape_cast %95 : vector<1x128xf32> to vector<1x1x128xf32>
    tpu.vector_store %arg12[%c0_89, %c6_90, %c0_91], %98 {strides = array<i32>} : memref<7x7x128xf32, #tpu.memory_space<vmem>>, vector<1x1x128xf32>,
    %c2_92 = arith.constant 2 : index
    %c0_93 = arith.constant 0 : index
    %c0_94 = arith.constant 0 : index
    %99 = vector.load %arg11[%c2_92, %c0_93, %c0_94] : memref<14x14x128xf32, #tpu.memory_space<vmem>>, vector<1x1x128xf32>
    %100 = vector.shape_cast %99 : vector<1x1x128xf32> to vector<1x128xf32>
    %c2_95 = arith.constant 2 : index
    %c1_96 = arith.constant 1 : index
    %c0_97 = arith.constant 0 : index
    %101 = vector.load %arg11[%c2_95, %c1_96, %c0_97] : memref<14x14x128xf32, #tpu.memory_space<vmem>>, vector<1x1x128xf32>
    %102 = vector.shape_cast %101 : vector<1x1x128xf32> to vector<1x128xf32>
    %c3_98 = arith.constant 3 : index
    %c0_99 = arith.constant 0 : index
    %c0_100 = arith.constant 0 : index
    %103 = vector.load %arg11[%c3_98, %c0_99, %c0_100] : memref<14x14x128xf32, #tpu.memory_space<vmem>>, vector<1x1x128xf32>
    %104 = vector.shape_cast %103 : vector<1x1x128xf32> to vector<1x128xf32>
    %c3_101 = arith.constant 3 : index
    %c1_102 = arith.constant 1 : index
    %c0_103 = arith.constant 0 : index
    %105 = vector.load %arg11[%c3_101, %c1_102, %c0_103] : memref<14x14x128xf32, #tpu.memory_space<vmem>>, vector<1x1x128xf32>
    %106 = vector.shape_cast %105 : vector<1x1x128xf32> to vector<1x128xf32>
    %107 = arith.maximumf %100, %102 : vector<1x128xf32>
    %108 = arith.maximumf %104, %106 : vector<1x128xf32>
    %109 = arith.maximumf %107, %108 : vector<1x128xf32>
    %c1_104 = arith.constant 1 : index
    %c0_105 = arith.constant 0 : index
    %c0_106 = arith.constant 0 : index
    %110 = vector.load %arg12[%c1_104, %c0_105, %c0_106] : memref<7x7x128xf32, #tpu.memory_space<vmem>>, vector<1x1x128xf32>
    %111 = vector.shape_cast %110 : vector<1x1x128xf32> to vector<1x128xf32>
    %112 = vector.shape_cast %109 : vector<1x128xf32> to vector<1x1x128xf32>
    tpu.vector_store %arg12[%c1_104, %c0_105, %c0_106], %112 {strides = array<i32>} : memref<7x7x128xf32, #tpu.memory_space<vmem>>, vector<1x1x128xf32>,
    %c2_107 = arith.constant 2 : index
    %c2_108 = arith.constant 2 : index
    %c0_109 = arith.constant 0 : index
    %113 = vector.load %arg11[%c2_107, %c2_108, %c0_109] : memref<14x14x128xf32, #tpu.memory_space<vmem>>, vector<1x1x128xf32>
    %114 = vector.shape_cast %113 : vector<1x1x128xf32> to vector<1x128xf32>
    %c2_110 = arith.constant 2 : index
    %c3_111 = arith.constant 3 : index
    %c0_112 = arith.constant 0 : index
    %115 = vector.load %arg11[%c2_110, %c3_111, %c0_112] : memref<14x14x128xf32, #tpu.memory_space<vmem>>, vector<1x1x128xf32>
    %116 = vector.shape_cast %115 : vector<1x1x128xf32> to vector<1x128xf32>
    %c3_113 = arith.constant 3 : index
    %c2_114 = arith.constant 2 : index
    %c0_115 = arith.constant 0 : index
    %117 = vector.load %arg11[%c3_113, %c2_114, %c0_115] : memref<14x14x128xf32, #tpu.memory_space<vmem>>, vector<1x1x128xf32>
    %118 = vector.shape_cast %117 : vector<1x1x128xf32> to vector<1x128xf32>
    %c3_116 = arith.constant 3 : index
    %c3_117 = arith.constant 3 : index
    %c0_118 = arith.constant 0 : index
    %119 = vector.load %arg11[%c3_116, %c3_117, %c0_118] : memref<14x14x128xf32, #tpu.memory_space<vmem>>, vector<1x1x128xf32>
    %120 = vector.shape_cast %119 : vector<1x1x128xf32> to vector<1x128xf32>
    %121 = arith.maximumf %114, %116 : vector<1x128xf32>
    %122 = arith.maximumf %118, %120 : vector<1x128xf32>
    %123 = arith.maximumf %121, %122 : vector<1x128xf32>
    %c1_119 = arith.constant 1 : index
    %c1_120 = arith.constant 1 : index
    %c0_121 = arith.constant 0 : index
    %124 = vector.load %arg12[%c1_119, %c1_120, %c0_121] : memref<7x7x128xf32, #tpu.memory_space<vmem>>, vector<1x1x128xf32>
    %125 = vector.shape_cast %124 : vector<1x1x128xf32> to vector<1x128xf32>
    %126 = vector.shape_cast %123 : vector<1x128xf32> to vector<1x1x128xf32>
    tpu.vector_store %arg12[%c1_119, %c1_120, %c0_121], %126 {strides = array<i32>} : memref<7x7x128xf32, #tpu.memory_space<vmem>>, vector<1x1x128xf32>,
    %c2_122 = arith.constant 2 : index
    %c4_123 = arith.constant 4 : index
    %c0_124 = arith.constant 0 : index
    %127 = vector.load %arg11[%c2_122, %c4_123, %c0_124] : memref<14x14x128xf32, #tpu.memory_space<vmem>>, vector<1x1x128xf32>
    %128 = vector.shape_cast %127 : vector<1x1x128xf32> to vector<1x128xf32>
    %c2_125 = arith.constant 2 : index
    %c5_126 = arith.constant 5 : index
    %c0_127 = arith.constant 0 : index
    %129 = vector.load %arg11[%c2_125, %c5_126, %c0_127] : memref<14x14x128xf32, #tpu.memory_space<vmem>>, vector<1x1x128xf32>
    %130 = vector.shape_cast %129 : vector<1x1x128xf32> to vector<1x128xf32>
    %c3_128 = arith.constant 3 : index
    %c4_129 = arith.constant 4 : index
    %c0_130 = arith.constant 0 : index
    %131 = vector.load %arg11[%c3_128, %c4_129, %c0_130] : memref<14x14x128xf32, #tpu.memory_space<vmem>>, vector<1x1x128xf32>
    %132 = vector.shape_cast %131 : vector<1x1x128xf32> to vector<1x128xf32>
    %c3_131 = arith.constant 3 : index
    %c5_132 = arith.constant 5 : index
    %c0_133 = arith.constant 0 : index
    %133 = vector.load %arg11[%c3_131, %c5_132, %c0_133] : memref<14x14x128xf32, #tpu.memory_space<vmem>>, vector<1x1x128xf32>
    %134 = vector.shape_cast %133 : vector<1x1x128xf32> to vector<1x128xf32>
    %135 = arith.maximumf %128, %130 : vector<1x128xf32>
    %136 = arith.maximumf %132, %134 : vector<1x128xf32>
    %137 = arith.maximumf %135, %136 : vector<1x128xf32>
    %c1_134 = arith.constant 1 : index
    %c2_135 = arith.constant 2 : index
    %c0_136 = arith.constant 0 : index
    %138 = vector.load %arg12[%c1_134, %c2_135, %c0_136] : memref<7x7x128xf32, #tpu.memory_space<vmem>>, vector<1x1x128xf32>
    %139 = vector.shape_cast %138 : vector<1x1x128xf32> to vector<1x128xf32>
    %140 = vector.shape_cast %137 : vector<1x128xf32> to vector<1x1x128xf32>
    tpu.vector_store %arg12[%c1_134, %c2_135, %c0_136], %140 {strides = array<i32>} : memref<7x7x128xf32, #tpu.memory_space<vmem>>, vector<1x1x128xf32>,
    %c2_137 = arith.constant 2 : index
    %c6_138 = arith.constant 6 : index
    %c0_139 = arith.constant 0 : index
    %141 = vector.load %arg11[%c2_137, %c6_138, %c0_139] : memref<14x14x128xf32, #tpu.memory_space<vmem>>, vector<1x1x128xf32>
    %142 = vector.shape_cast %141 : vector<1x1x128xf32> to vector<1x128xf32>
    %c2_140 = arith.constant 2 : index
    %c7_141 = arith.constant 7 : index
    %c0_142 = arith.constant 0 : index
    %143 = vector.load %arg11[%c2_140, %c7_141, %c0_142] : memref<14x14x128xf32, #tpu.memory_space<vmem>>, vector<1x1x128xf32>
    %144 = vector.shape_cast %143 : vector<1x1x128xf32> to vector<1x128xf32>
    %c3_143 = arith.constant 3 : index
    %c6_144 = arith.constant 6 : index
    %c0_145 = arith.constant 0 : index
    %145 = vector.load %arg11[%c3_143, %c6_144, %c0_145] : memref<14x14x128xf32, #tpu.memory_space<vmem>>, vector<1x1x128xf32>
    %146 = vector.shape_cast %145 : vector<1x1x128xf32> to vector<1x128xf32>
    %c3_146 = arith.constant 3 : index
    %c7_147 = arith.constant 7 : index
    %c0_148 = arith.constant 0 : index
    %147 = vector.load %arg11[%c3_146, %c7_147, %c0_148] : memref<14x14x128xf32, #tpu.memory_space<vmem>>, vector<1x1x128xf32>
    %148 = vector.shape_cast %147 : vector<1x1x128xf32> to vector<1x128xf32>
    %149 = arith.maximumf %142, %144 : vector<1x128xf32>
    %150 = arith.maximumf %146, %148 : vector<1x128xf32>
    %151 = arith.maximumf %149, %150 : vector<1x128xf32>
    %c1_149 = arith.constant 1 : index
    %c3_150 = arith.constant 3 : index
    %c0_151 = arith.constant 0 : index
    %152 = vector.load %arg12[%c1_149, %c3_150, %c0_151] : memref<7x7x128xf32, #tpu.memory_space<vmem>>, vector<1x1x128xf32>
    %153 = vector.shape_cast %152 : vector<1x1x128xf32> to vector<1x128xf32>
    %154 = vector.shape_cast %151 : vector<1x128xf32> to vector<1x1x128xf32>
    tpu.vector_store %arg12[%c1_149, %c3_150, %c0_151], %154 {strides = array<i32>} : memref<7x7x128xf32, #tpu.memory_space<vmem>>, vector<1x1x128xf32>,
    %c2_152 = arith.constant 2 : index
    %c8_153 = arith.constant 8 : index
    %c0_154 = arith.constant 0 : index
    %155 = vector.load %arg11[%c2_152, %c8_153, %c0_154] : memref<14x14x128xf32, #tpu.memory_space<vmem>>, vector<1x1x128xf32>
    %156 = vector.shape_cast %155 : vector<1x1x128xf32> to vector<1x128xf32>
    %c2_155 = arith.constant 2 : index
    %c9_156 = arith.constant 9 : index
    %c0_157 = arith.constant 0 : index
    %157 = vector.load %arg11[%c2_155, %c9_156, %c0_157] : memref<14x14x128xf32, #tpu.memory_space<vmem>>, vector<1x1x128xf32>
    %158 = vector.shape_cast %157 : vector<1x1x128xf32> to vector<1x128xf32>
    %c3_158 = arith.constant 3 : index
    %c8_159 = arith.constant 8 : index
    %c0_160 = arith.constant 0 : index
    %159 = vector.load %arg11[%c3_158, %c8_159, %c0_160] : memref<14x14x128xf32, #tpu.memory_space<vmem>>, vector<1x1x128xf32>
    %160 = vector.shape_cast %159 : vector<1x1x128xf32> to vector<1x128xf32>
    %c3_161 = arith.constant 3 : index
    %c9_162 = arith.constant 9 : index
    %c0_163 = arith.constant 0 : index
    %161 = vector.load %arg11[%c3_161, %c9_162, %c0_163] : memref<14x14x128xf32, #tpu.memory_space<vmem>>, vector<1x1x128xf32>
    %162 = vector.shape_cast %161 : vector<1x1x128xf32> to vector<1x128xf32>
    %163 = arith.maximumf %156, %158 : vector<1x128xf32>
    %164 = arith.maximumf %160, %162 : vector<1x128xf32>
    %165 = arith.maximumf %163, %164 : vector<1x128xf32>
    %c1_164 = arith.constant 1 : index
    %c4_165 = arith.constant 4 : index
    %c0_166 = arith.constant 0 : index
    %166 = vector.load %arg12[%c1_164, %c4_165, %c0_166] : memref<7x7x128xf32, #tpu.memory_space<vmem>>, vector<1x1x128xf32>
    %167 = vector.shape_cast %166 : vector<1x1x128xf32> to vector<1x128xf32>
    %168 = vector.shape_cast %165 : vector<1x128xf32> to vector<1x1x128xf32>
    tpu.vector_store %arg12[%c1_164, %c4_165, %c0_166], %168 {strides = array<i32>} : memref<7x7x128xf32, #tpu.memory_space<vmem>>, vector<1x1x128xf32>,
    %c2_167 = arith.constant 2 : index
    %c10_168 = arith.constant 10 : index
    %c0_169 = arith.constant 0 : index
    %169 = vector.load %arg11[%c2_167, %c10_168, %c0_169] : memref<14x14x128xf32, #tpu.memory_space<vmem>>, vector<1x1x128xf32>
    %170 = vector.shape_cast %169 : vector<1x1x128xf32> to vector<1x128xf32>
    %c2_170 = arith.constant 2 : index
    %c11_171 = arith.constant 11 : index
    %c0_172 = arith.constant 0 : index
    %171 = vector.load %arg11[%c2_170, %c11_171, %c0_172] : memref<14x14x128xf32, #tpu.memory_space<vmem>>, vector<1x1x128xf32>
    %172 = vector.shape_cast %171 : vector<1x1x128xf32> to vector<1x128xf32>
    %c3_173 = arith.constant 3 : index
    %c10_174 = arith.constant 10 : index
    %c0_175 = arith.constant 0 : index
    %173 = vector.load %arg11[%c3_173, %c10_174, %c0_175] : memref<14x14x128xf32, #tpu.memory_space<vmem>>, vector<1x1x128xf32>
    %174 = vector.shape_cast %173 : vector<1x1x128xf32> to vector<1x128xf32>
    %c3_176 = arith.constant 3 : index
    %c11_177 = arith.constant 11 : index
    %c0_178 = arith.constant 0 : index
    %175 = vector.load %arg11[%c3_176, %c11_177, %c0_178] : memref<14x14x128xf32, #tpu.memory_space<vmem>>, vector<1x1x128xf32>
    %176 = vector.shape_cast %175 : vector<1x1x128xf32> to vector<1x128xf32>
    %177 = arith.maximumf %170, %172 : vector<1x128xf32>
    %178 = arith.maximumf %174, %176 : vector<1x128xf32>
    %179 = arith.maximumf %177, %178 : vector<1x128xf32>
    %c1_179 = arith.constant 1 : index
    %c5_180 = arith.constant 5 : index
    %c0_181 = arith.constant 0 : index
    %180 = vector.load %arg12[%c1_179, %c5_180, %c0_181] : memref<7x7x128xf32, #tpu.memory_space<vmem>>, vector<1x1x128xf32>
    %181 = vector.shape_cast %180 : vector<1x1x128xf32> to vector<1x128xf32>
    %182 = vector.shape_cast %179 : vector<1x128xf32> to vector<1x1x128xf32>
    tpu.vector_store %arg12[%c1_179, %c5_180, %c0_181], %182 {strides = array<i32>} : memref<7x7x128xf32, #tpu.memory_space<vmem>>, vector<1x1x128xf32>,
    %c2_182 = arith.constant 2 : index
    %c12_183 = arith.constant 12 : index
    %c0_184 = arith.constant 0 : index
    %183 = vector.load %arg11[%c2_182, %c12_183, %c0_184] : memref<14x14x128xf32, #tpu.memory_space<vmem>>, vector<1x1x128xf32>
    %184 = vector.shape_cast %183 : vector<1x1x128xf32> to vector<1x128xf32>
    %c2_185 = arith.constant 2 : index
    %c13_186 = arith.constant 13 : index
    %c0_187 = arith.constant 0 : index
    %185 = vector.load %arg11[%c2_185, %c13_186, %c0_187] : memref<14x14x128xf32, #tpu.memory_space<vmem>>, vector<1x1x128xf32>
    %186 = vector.shape_cast %185 : vector<1x1x128xf32> to vector<1x128xf32>
    %c3_188 = arith.constant 3 : index
    %c12_189 = arith.constant 12 : index
    %c0_190 = arith.constant 0 : index
    %187 = vector.load %arg11[%c3_188, %c12_189, %c0_190] : memref<14x14x128xf32, #tpu.memory_space<vmem>>, vector<1x1x128xf32>
    %188 = vector.shape_cast %187 : vector<1x1x128xf32> to vector<1x128xf32>
    %c3_191 = arith.constant 3 : index
    %c13_192 = arith.constant 13 : index
    %c0_193 = arith.constant 0 : index
    %189 = vector.load %arg11[%c3_191, %c13_192, %c0_193] : memref<14x14x128xf32, #tpu.memory_space<vmem>>, vector<1x1x128xf32>
    %190 = vector.shape_cast %189 : vector<1x1x128xf32> to vector<1x128xf32>
    %191 = arith.maximumf %184, %186 : vector<1x128xf32>
    %192 = arith.maximumf %188, %190 : vector<1x128xf32>
    %193 = arith.maximumf %191, %192 : vector<1x128xf32>
    %c1_194 = arith.constant 1 : index
    %c6_195 = arith.constant 6 : index
    %c0_196 = arith.constant 0 : index
    %194 = vector.load %arg12[%c1_194, %c6_195, %c0_196] : memref<7x7x128xf32, #tpu.memory_space<vmem>>, vector<1x1x128xf32>
    %195 = vector.shape_cast %194 : vector<1x1x128xf32> to vector<1x128xf32>
    %196 = vector.shape_cast %193 : vector<1x128xf32> to vector<1x1x128xf32>
    tpu.vector_store %arg12[%c1_194, %c6_195, %c0_196], %196 {strides = array<i32>} : memref<7x7x128xf32, #tpu.memory_space<vmem>>, vector<1x1x128xf32>,
    %c4_197 = arith.constant 4 : index
    %c0_198 = arith.constant 0 : index
    %c0_199 = arith.constant 0 : index
    %197 = vector.load %arg11[%c4_197, %c0_198, %c0_199] : memref<14x14x128xf32, #tpu.memory_space<vmem>>, vector<1x1x128xf32>
    %198 = vector.shape_cast %197 : vector<1x1x128xf32> to vector<1x128xf32>
    %c4_200 = arith.constant 4 : index
    %c1_201 = arith.constant 1 : index
    %c0_202 = arith.constant 0 : index
    %199 = vector.load %arg11[%c4_200, %c1_201, %c0_202] : memref<14x14x128xf32, #tpu.memory_space<vmem>>, vector<1x1x128xf32>
    %200 = vector.shape_cast %199 : vector<1x1x128xf32> to vector<1x128xf32>
    %c5_203 = arith.constant 5 : index
    %c0_204 = arith.constant 0 : index
    %c0_205 = arith.constant 0 : index
    %201 = vector.load %arg11[%c5_203, %c0_204, %c0_205] : memref<14x14x128xf32, #tpu.memory_space<vmem>>, vector<1x1x128xf32>
    %202 = vector.shape_cast %201 : vector<1x1x128xf32> to vector<1x128xf32>
    %c5_206 = arith.constant 5 : index
    %c1_207 = arith.constant 1 : index
    %c0_208 = arith.constant 0 : index
    %203 = vector.load %arg11[%c5_206, %c1_207, %c0_208] : memref<14x14x128xf32, #tpu.memory_space<vmem>>, vector<1x1x128xf32>
    %204 = vector.shape_cast %203 : vector<1x1x128xf32> to vector<1x128xf32>
    %205 = arith.maximumf %198, %200 : vector<1x128xf32>
    %206 = arith.maximumf %202, %204 : vector<1x128xf32>
    %207 = arith.maximumf %205, %206 : vector<1x128xf32>
    %c2_209 = arith.constant 2 : index
    %c0_210 = arith.constant 0 : index
    %c0_211 = arith.constant 0 : index
    %208 = vector.load %arg12[%c2_209, %c0_210, %c0_211] : memref<7x7x128xf32, #tpu.memory_space<vmem>>, vector<1x1x128xf32>
    %209 = vector.shape_cast %208 : vector<1x1x128xf32> to vector<1x128xf32>
    %210 = vector.shape_cast %207 : vector<1x128xf32> to vector<1x1x128xf32>
    tpu.vector_store %arg12[%c2_209, %c0_210, %c0_211], %210 {strides = array<i32>} : memref<7x7x128xf32, #tpu.memory_space<vmem>>, vector<1x1x128xf32>,
    %c4_212 = arith.constant 4 : index
    %c2_213 = arith.constant 2 : index
    %c0_214 = arith.constant 0 : index
    %211 = vector.load %arg11[%c4_212, %c2_213, %c0_214] : memref<14x14x128xf32, #tpu.memory_space<vmem>>, vector<1x1x128xf32>
    %212 = vector.shape_cast %211 : vector<1x1x128xf32> to vector<1x128xf32>
    %c4_215 = arith.constant 4 : index
    %c3_216 = arith.constant 3 : index
    %c0_217 = arith.constant 0 : index
    %213 = vector.load %arg11[%c4_215, %c3_216, %c0_217] : memref<14x14x128xf32, #tpu.memory_space<vmem>>, vector<1x1x128xf32>
    %214 = vector.shape_cast %213 : vector<1x1x128xf32> to vector<1x128xf32>
    %c5_218 = arith.constant 5 : index
    %c2_219 = arith.constant 2 : index
    %c0_220 = arith.constant 0 : index
    %215 = vector.load %arg11[%c5_218, %c2_219, %c0_220] : memref<14x14x128xf32, #tpu.memory_space<vmem>>, vector<1x1x128xf32>
    %216 = vector.shape_cast %215 : vector<1x1x128xf32> to vector<1x128xf32>
    %c5_221 = arith.constant 5 : index
    %c3_222 = arith.constant 3 : index
    %c0_223 = arith.constant 0 : index
    %217 = vector.load %arg11[%c5_221, %c3_222, %c0_223] : memref<14x14x128xf32, #tpu.memory_space<vmem>>, vector<1x1x128xf32>
    %218 = vector.shape_cast %217 : vector<1x1x128xf32> to vector<1x128xf32>
    %219 = arith.maximumf %212, %214 : vector<1x128xf32>
    %220 = arith.maximumf %216, %218 : vector<1x128xf32>
    %221 = arith.maximumf %219, %220 : vector<1x128xf32>
    %c2_224 = arith.constant 2 : index
    %c1_225 = arith.constant 1 : index
    %c0_226 = arith.constant 0 : index
    %222 = vector.load %arg12[%c2_224, %c1_225, %c0_226] : memref<7x7x128xf32, #tpu.memory_space<vmem>>, vector<1x1x128xf32>
    %223 = vector.shape_cast %222 : vector<1x1x128xf32> to vector<1x128xf32>
    %224 = vector.shape_cast %221 : vector<1x128xf32> to vector<1x1x128xf32>
    tpu.vector_store %arg12[%c2_224, %c1_225, %c0_226], %224 {strides = array<i32>} : memref<7x7x128xf32, #tpu.memory_space<vmem>>, vector<1x1x128xf32>,
    %c4_227 = arith.constant 4 : index
    %c4_228 = arith.constant 4 : index
    %c0_229 = arith.constant 0 : index
    %225 = vector.load %arg11[%c4_227, %c4_228, %c0_229] : memref<14x14x128xf32, #tpu.memory_space<vmem>>, vector<1x1x128xf32>
    %226 = vector.shape_cast %225 : vector<1x1x128xf32> to vector<1x128xf32>
    %c4_230 = arith.constant 4 : index
    %c5_231 = arith.constant 5 : index
    %c0_232 = arith.constant 0 : index
    %227 = vector.load %arg11[%c4_230, %c5_231, %c0_232] : memref<14x14x128xf32, #tpu.memory_space<vmem>>, vector<1x1x128xf32>
    %228 = vector.shape_cast %227 : vector<1x1x128xf32> to vector<1x128xf32>
    %c5_233 = arith.constant 5 : index
    %c4_234 = arith.constant 4 : index
    %c0_235 = arith.constant 0 : index
    %229 = vector.load %arg11[%c5_233, %c4_234, %c0_235] : memref<14x14x128xf32, #tpu.memory_space<vmem>>, vector<1x1x128xf32>
    %230 = vector.shape_cast %229 : vector<1x1x128xf32> to vector<1x128xf32>
    %c5_236 = arith.constant 5 : index
    %c5_237 = arith.constant 5 : index
    %c0_238 = arith.constant 0 : index
    %231 = vector.load %arg11[%c5_236, %c5_237, %c0_238] : memref<14x14x128xf32, #tpu.memory_space<vmem>>, vector<1x1x128xf32>
    %232 = vector.shape_cast %231 : vector<1x1x128xf32> to vector<1x128xf32>
    %233 = arith.maximumf %226, %228 : vector<1x128xf32>
    %234 = arith.maximumf %230, %232 : vector<1x128xf32>
    %235 = arith.maximumf %233, %234 : vector<1x128xf32>
    %c2_239 = arith.constant 2 : index
    %c2_240 = arith.constant 2 : index
    %c0_241 = arith.constant 0 : index
    %236 = vector.load %arg12[%c2_239, %c2_240, %c0_241] : memref<7x7x128xf32, #tpu.memory_space<vmem>>, vector<1x1x128xf32>
    %237 = vector.shape_cast %236 : vector<1x1x128xf32> to vector<1x128xf32>
    %238 = vector.shape_cast %235 : vector<1x128xf32> to vector<1x1x128xf32>
    tpu.vector_store %arg12[%c2_239, %c2_240, %c0_241], %238 {strides = array<i32>} : memref<7x7x128xf32, #tpu.memory_space<vmem>>, vector<1x1x128xf32>,
    %c4_242 = arith.constant 4 : index
    %c6_243 = arith.constant 6 : index
    %c0_244 = arith.constant 0 : index
    %239 = vector.load %arg11[%c4_242, %c6_243, %c0_244] : memref<14x14x128xf32, #tpu.memory_space<vmem>>, vector<1x1x128xf32>
    %240 = vector.shape_cast %239 : vector<1x1x128xf32> to vector<1x128xf32>
    %c4_245 = arith.constant 4 : index
    %c7_246 = arith.constant 7 : index
    %c0_247 = arith.constant 0 : index
    %241 = vector.load %arg11[%c4_245, %c7_246, %c0_247] : memref<14x14x128xf32, #tpu.memory_space<vmem>>, vector<1x1x128xf32>
    %242 = vector.shape_cast %241 : vector<1x1x128xf32> to vector<1x128xf32>
    %c5_248 = arith.constant 5 : index
    %c6_249 = arith.constant 6 : index
    %c0_250 = arith.constant 0 : index
    %243 = vector.load %arg11[%c5_248, %c6_249, %c0_250] : memref<14x14x128xf32, #tpu.memory_space<vmem>>, vector<1x1x128xf32>
    %244 = vector.shape_cast %243 : vector<1x1x128xf32> to vector<1x128xf32>
    %c5_251 = arith.constant 5 : index
    %c7_252 = arith.constant 7 : index
    %c0_253 = arith.constant 0 : index
    %245 = vector.load %arg11[%c5_251, %c7_252, %c0_253] : memref<14x14x128xf32, #tpu.memory_space<vmem>>, vector<1x1x128xf32>
    %246 = vector.shape_cast %245 : vector<1x1x128xf32> to vector<1x128xf32>
    %247 = arith.maximumf %240, %242 : vector<1x128xf32>
    %248 = arith.maximumf %244, %246 : vector<1x128xf32>
    %249 = arith.maximumf %247, %248 : vector<1x128xf32>
    %c2_254 = arith.constant 2 : index
    %c3_255 = arith.constant 3 : index
    %c0_256 = arith.constant 0 : index
    %250 = vector.load %arg12[%c2_254, %c3_255, %c0_256] : memref<7x7x128xf32, #tpu.memory_space<vmem>>, vector<1x1x128xf32>
    %251 = vector.shape_cast %250 : vector<1x1x128xf32> to vector<1x128xf32>
    %252 = vector.shape_cast %249 : vector<1x128xf32> to vector<1x1x128xf32>
    tpu.vector_store %arg12[%c2_254, %c3_255, %c0_256], %252 {strides = array<i32>} : memref<7x7x128xf32, #tpu.memory_space<vmem>>, vector<1x1x128xf32>,
    %c4_257 = arith.constant 4 : index
    %c8_258 = arith.constant 8 : index
    %c0_259 = arith.constant 0 : index
    %253 = vector.load %arg11[%c4_257, %c8_258, %c0_259] : memref<14x14x128xf32, #tpu.memory_space<vmem>>, vector<1x1x128xf32>
    %254 = vector.shape_cast %253 : vector<1x1x128xf32> to vector<1x128xf32>
    %c4_260 = arith.constant 4 : index
    %c9_261 = arith.constant 9 : index
    %c0_262 = arith.constant 0 : index
    %255 = vector.load %arg11[%c4_260, %c9_261, %c0_262] : memref<14x14x128xf32, #tpu.memory_space<vmem>>, vector<1x1x128xf32>
    %256 = vector.shape_cast %255 : vector<1x1x128xf32> to vector<1x128xf32>
    %c5_263 = arith.constant 5 : index
    %c8_264 = arith.constant 8 : index
    %c0_265 = arith.constant 0 : index
    %257 = vector.load %arg11[%c5_263, %c8_264, %c0_265] : memref<14x14x128xf32, #tpu.memory_space<vmem>>, vector<1x1x128xf32>
    %258 = vector.shape_cast %257 : vector<1x1x128xf32> to vector<1x128xf32>
    %c5_266 = arith.constant 5 : index
    %c9_267 = arith.constant 9 : index
    %c0_268 = arith.constant 0 : index
    %259 = vector.load %arg11[%c5_266, %c9_267, %c0_268] : memref<14x14x128xf32, #tpu.memory_space<vmem>>, vector<1x1x128xf32>
    %260 = vector.shape_cast %259 : vector<1x1x128xf32> to vector<1x128xf32>
    %261 = arith.maximumf %254, %256 : vector<1x128xf32>
    %262 = arith.maximumf %258, %260 : vector<1x128xf32>
    %263 = arith.maximumf %261, %262 : vector<1x128xf32>
    %c2_269 = arith.constant 2 : index
    %c4_270 = arith.constant 4 : index
    %c0_271 = arith.constant 0 : index
    %264 = vector.load %arg12[%c2_269, %c4_270, %c0_271] : memref<7x7x128xf32, #tpu.memory_space<vmem>>, vector<1x1x128xf32>
    %265 = vector.shape_cast %264 : vector<1x1x128xf32> to vector<1x128xf32>
    %266 = vector.shape_cast %263 : vector<1x128xf32> to vector<1x1x128xf32>
    tpu.vector_store %arg12[%c2_269, %c4_270, %c0_271], %266 {strides = array<i32>} : memref<7x7x128xf32, #tpu.memory_space<vmem>>, vector<1x1x128xf32>,
    %c4_272 = arith.constant 4 : index
    %c10_273 = arith.constant 10 : index
    %c0_274 = arith.constant 0 : index
    %267 = vector.load %arg11[%c4_272, %c10_273, %c0_274] : memref<14x14x128xf32, #tpu.memory_space<vmem>>, vector<1x1x128xf32>
    %268 = vector.shape_cast %267 : vector<1x1x128xf32> to vector<1x128xf32>
    %c4_275 = arith.constant 4 : index
    %c11_276 = arith.constant 11 : index
    %c0_277 = arith.constant 0 : index
    %269 = vector.load %arg11[%c4_275, %c11_276, %c0_277] : memref<14x14x128xf32, #tpu.memory_space<vmem>>, vector<1x1x128xf32>
    %270 = vector.shape_cast %269 : vector<1x1x128xf32> to vector<1x128xf32>
    %c5_278 = arith.constant 5 : index
    %c10_279 = arith.constant 10 : index
    %c0_280 = arith.constant 0 : index
    %271 = vector.load %arg11[%c5_278, %c10_279, %c0_280] : memref<14x14x128xf32, #tpu.memory_space<vmem>>, vector<1x1x128xf32>
    %272 = vector.shape_cast %271 : vector<1x1x128xf32> to vector<1x128xf32>
    %c5_281 = arith.constant 5 : index
    %c11_282 = arith.constant 11 : index
    %c0_283 = arith.constant 0 : index
    %273 = vector.load %arg11[%c5_281, %c11_282, %c0_283] : memref<14x14x128xf32, #tpu.memory_space<vmem>>, vector<1x1x128xf32>
    %274 = vector.shape_cast %273 : vector<1x1x128xf32> to vector<1x128xf32>
    %275 = arith.maximumf %268, %270 : vector<1x128xf32>
    %276 = arith.maximumf %272, %274 : vector<1x128xf32>
    %277 = arith.maximumf %275, %276 : vector<1x128xf32>
    %c2_284 = arith.constant 2 : index
    %c5_285 = arith.constant 5 : index
    %c0_286 = arith.constant 0 : index
    %278 = vector.load %arg12[%c2_284, %c5_285, %c0_286] : memref<7x7x128xf32, #tpu.memory_space<vmem>>, vector<1x1x128xf32>
    %279 = vector.shape_cast %278 : vector<1x1x128xf32> to vector<1x128xf32>
    %280 = vector.shape_cast %277 : vector<1x128xf32> to vector<1x1x128xf32>
    tpu.vector_store %arg12[%c2_284, %c5_285, %c0_286], %280 {strides = array<i32>} : memref<7x7x128xf32, #tpu.memory_space<vmem>>, vector<1x1x128xf32>,
    %c4_287 = arith.constant 4 : index
    %c12_288 = arith.constant 12 : index
    %c0_289 = arith.constant 0 : index
    %281 = vector.load %arg11[%c4_287, %c12_288, %c0_289] : memref<14x14x128xf32, #tpu.memory_space<vmem>>, vector<1x1x128xf32>
    %282 = vector.shape_cast %281 : vector<1x1x128xf32> to vector<1x128xf32>
    %c4_290 = arith.constant 4 : index
    %c13_291 = arith.constant 13 : index
    %c0_292 = arith.constant 0 : index
    %283 = vector.load %arg11[%c4_290, %c13_291, %c0_292] : memref<14x14x128xf32, #tpu.memory_space<vmem>>, vector<1x1x128xf32>
    %284 = vector.shape_cast %283 : vector<1x1x128xf32> to vector<1x128xf32>
    %c5_293 = arith.constant 5 : index
    %c12_294 = arith.constant 12 : index
    %c0_295 = arith.constant 0 : index
    %285 = vector.load %arg11[%c5_293, %c12_294, %c0_295] : memref<14x14x128xf32, #tpu.memory_space<vmem>>, vector<1x1x128xf32>
    %286 = vector.shape_cast %285 : vector<1x1x128xf32> to vector<1x128xf32>
    %c5_296 = arith.constant 5 : index
    %c13_297 = arith.constant 13 : index
    %c0_298 = arith.constant 0 : index
    %287 = vector.load %arg11[%c5_296, %c13_297, %c0_298] : memref<14x14x128xf32, #tpu.memory_space<vmem>>, vector<1x1x128xf32>
    %288 = vector.shape_cast %287 : vector<1x1x128xf32> to vector<1x128xf32>
    %289 = arith.maximumf %282, %284 : vector<1x128xf32>
    %290 = arith.maximumf %286, %288 : vector<1x128xf32>
    %291 = arith.maximumf %289, %290 : vector<1x128xf32>
    %c2_299 = arith.constant 2 : index
    %c6_300 = arith.constant 6 : index
    %c0_301 = arith.constant 0 : index
    %292 = vector.load %arg12[%c2_299, %c6_300, %c0_301] : memref<7x7x128xf32, #tpu.memory_space<vmem>>, vector<1x1x128xf32>
    %293 = vector.shape_cast %292 : vector<1x1x128xf32> to vector<1x128xf32>
    %294 = vector.shape_cast %291 : vector<1x128xf32> to vector<1x1x128xf32>
    tpu.vector_store %arg12[%c2_299, %c6_300, %c0_301], %294 {strides = array<i32>} : memref<7x7x128xf32, #tpu.memory_space<vmem>>, vector<1x1x128xf32>,
    %c6_302 = arith.constant 6 : index
    %c0_303 = arith.constant 0 : index
    %c0_304 = arith.constant 0 : index
    %295 = vector.load %arg11[%c6_302, %c0_303, %c0_304] : memref<14x14x128xf32, #tpu.memory_space<vmem>>, vector<1x1x128xf32>
    %296 = vector.shape_cast %295 : vector<1x1x128xf32> to vector<1x128xf32>
    %c6_305 = arith.constant 6 : index
    %c1_306 = arith.constant 1 : index
    %c0_307 = arith.constant 0 : index
    %297 = vector.load %arg11[%c6_305, %c1_306, %c0_307] : memref<14x14x128xf32, #tpu.memory_space<vmem>>, vector<1x1x128xf32>
    %298 = vector.shape_cast %297 : vector<1x1x128xf32> to vector<1x128xf32>
    %c7_308 = arith.constant 7 : index
    %c0_309 = arith.constant 0 : index
    %c0_310 = arith.constant 0 : index
    %299 = vector.load %arg11[%c7_308, %c0_309, %c0_310] : memref<14x14x128xf32, #tpu.memory_space<vmem>>, vector<1x1x128xf32>
    %300 = vector.shape_cast %299 : vector<1x1x128xf32> to vector<1x128xf32>
    %c7_311 = arith.constant 7 : index
    %c1_312 = arith.constant 1 : index
    %c0_313 = arith.constant 0 : index
    %301 = vector.load %arg11[%c7_311, %c1_312, %c0_313] : memref<14x14x128xf32, #tpu.memory_space<vmem>>, vector<1x1x128xf32>
    %302 = vector.shape_cast %301 : vector<1x1x128xf32> to vector<1x128xf32>
    %303 = arith.maximumf %296, %298 : vector<1x128xf32>
    %304 = arith.maximumf %300, %302 : vector<1x128xf32>
    %305 = arith.maximumf %303, %304 : vector<1x128xf32>
    %c3_314 = arith.constant 3 : index
    %c0_315 = arith.constant 0 : index
    %c0_316 = arith.constant 0 : index
    %306 = vector.load %arg12[%c3_314, %c0_315, %c0_316] : memref<7x7x128xf32, #tpu.memory_space<vmem>>, vector<1x1x128xf32>
    %307 = vector.shape_cast %306 : vector<1x1x128xf32> to vector<1x128xf32>
    %308 = vector.shape_cast %305 : vector<1x128xf32> to vector<1x1x128xf32>
    tpu.vector_store %arg12[%c3_314, %c0_315, %c0_316], %308 {strides = array<i32>} : memref<7x7x128xf32, #tpu.memory_space<vmem>>, vector<1x1x128xf32>,
    %c6_317 = arith.constant 6 : index
    %c2_318 = arith.constant 2 : index
    %c0_319 = arith.constant 0 : index
    %309 = vector.load %arg11[%c6_317, %c2_318, %c0_319] : memref<14x14x128xf32, #tpu.memory_space<vmem>>, vector<1x1x128xf32>
    %310 = vector.shape_cast %309 : vector<1x1x128xf32> to vector<1x128xf32>
    %c6_320 = arith.constant 6 : index
    %c3_321 = arith.constant 3 : index
    %c0_322 = arith.constant 0 : index
    %311 = vector.load %arg11[%c6_320, %c3_321, %c0_322] : memref<14x14x128xf32, #tpu.memory_space<vmem>>, vector<1x1x128xf32>
    %312 = vector.shape_cast %311 : vector<1x1x128xf32> to vector<1x128xf32>
    %c7_323 = arith.constant 7 : index
    %c2_324 = arith.constant 2 : index
    %c0_325 = arith.constant 0 : index
    %313 = vector.load %arg11[%c7_323, %c2_324, %c0_325] : memref<14x14x128xf32, #tpu.memory_space<vmem>>, vector<1x1x128xf32>
    %314 = vector.shape_cast %313 : vector<1x1x128xf32> to vector<1x128xf32>
    %c7_326 = arith.constant 7 : index
    %c3_327 = arith.constant 3 : index
    %c0_328 = arith.constant 0 : index
    %315 = vector.load %arg11[%c7_326, %c3_327, %c0_328] : memref<14x14x128xf32, #tpu.memory_space<vmem>>, vector<1x1x128xf32>
    %316 = vector.shape_cast %315 : vector<1x1x128xf32> to vector<1x128xf32>
    %317 = arith.maximumf %310, %312 : vector<1x128xf32>
    %318 = arith.maximumf %314, %316 : vector<1x128xf32>
    %319 = arith.maximumf %317, %318 : vector<1x128xf32>
    %c3_329 = arith.constant 3 : index
    %c1_330 = arith.constant 1 : index
    %c0_331 = arith.constant 0 : index
    %320 = vector.load %arg12[%c3_329, %c1_330, %c0_331] : memref<7x7x128xf32, #tpu.memory_space<vmem>>, vector<1x1x128xf32>
    %321 = vector.shape_cast %320 : vector<1x1x128xf32> to vector<1x128xf32>
    %322 = vector.shape_cast %319 : vector<1x128xf32> to vector<1x1x128xf32>
    tpu.vector_store %arg12[%c3_329, %c1_330, %c0_331], %322 {strides = array<i32>} : memref<7x7x128xf32, #tpu.memory_space<vmem>>, vector<1x1x128xf32>,
    %c6_332 = arith.constant 6 : index
    %c4_333 = arith.constant 4 : index
    %c0_334 = arith.constant 0 : index
    %323 = vector.load %arg11[%c6_332, %c4_333, %c0_334] : memref<14x14x128xf32, #tpu.memory_space<vmem>>, vector<1x1x128xf32>
    %324 = vector.shape_cast %323 : vector<1x1x128xf32> to vector<1x128xf32>
    %c6_335 = arith.constant 6 : index
    %c5_336 = arith.constant 5 : index
    %c0_337 = arith.constant 0 : index
    %325 = vector.load %arg11[%c6_335, %c5_336, %c0_337] : memref<14x14x128xf32, #tpu.memory_space<vmem>>, vector<1x1x128xf32>
    %326 = vector.shape_cast %325 : vector<1x1x128xf32> to vector<1x128xf32>
    %c7_338 = arith.constant 7 : index
    %c4_339 = arith.constant 4 : index
    %c0_340 = arith.constant 0 : index
    %327 = vector.load %arg11[%c7_338, %c4_339, %c0_340] : memref<14x14x128xf32, #tpu.memory_space<vmem>>, vector<1x1x128xf32>
    %328 = vector.shape_cast %327 : vector<1x1x128xf32> to vector<1x128xf32>
    %c7_341 = arith.constant 7 : index
    %c5_342 = arith.constant 5 : index
    %c0_343 = arith.constant 0 : index
    %329 = vector.load %arg11[%c7_341, %c5_342, %c0_343] : memref<14x14x128xf32, #tpu.memory_space<vmem>>, vector<1x1x128xf32>
    %330 = vector.shape_cast %329 : vector<1x1x128xf32> to vector<1x128xf32>
    %331 = arith.maximumf %324, %326 : vector<1x128xf32>
    %332 = arith.maximumf %328, %330 : vector<1x128xf32>
    %333 = arith.maximumf %331, %332 : vector<1x128xf32>
    %c3_344 = arith.constant 3 : index
    %c2_345 = arith.constant 2 : index
    %c0_346 = arith.constant 0 : index
    %334 = vector.load %arg12[%c3_344, %c2_345, %c0_346] : memref<7x7x128xf32, #tpu.memory_space<vmem>>, vector<1x1x128xf32>
    %335 = vector.shape_cast %334 : vector<1x1x128xf32> to vector<1x128xf32>
    %336 = vector.shape_cast %333 : vector<1x128xf32> to vector<1x1x128xf32>
    tpu.vector_store %arg12[%c3_344, %c2_345, %c0_346], %336 {strides = array<i32>} : memref<7x7x128xf32, #tpu.memory_space<vmem>>, vector<1x1x128xf32>,
    %c6_347 = arith.constant 6 : index
    %c6_348 = arith.constant 6 : index
    %c0_349 = arith.constant 0 : index
    %337 = vector.load %arg11[%c6_347, %c6_348, %c0_349] : memref<14x14x128xf32, #tpu.memory_space<vmem>>, vector<1x1x128xf32>
    %338 = vector.shape_cast %337 : vector<1x1x128xf32> to vector<1x128xf32>
    %c6_350 = arith.constant 6 : index
    %c7_351 = arith.constant 7 : index
    %c0_352 = arith.constant 0 : index
    %339 = vector.load %arg11[%c6_350, %c7_351, %c0_352] : memref<14x14x128xf32, #tpu.memory_space<vmem>>, vector<1x1x128xf32>
    %340 = vector.shape_cast %339 : vector<1x1x128xf32> to vector<1x128xf32>
    %c7_353 = arith.constant 7 : index
    %c6_354 = arith.constant 6 : index
    %c0_355 = arith.constant 0 : index
    %341 = vector.load %arg11[%c7_353, %c6_354, %c0_355] : memref<14x14x128xf32, #tpu.memory_space<vmem>>, vector<1x1x128xf32>
    %342 = vector.shape_cast %341 : vector<1x1x128xf32> to vector<1x128xf32>
    %c7_356 = arith.constant 7 : index
    %c7_357 = arith.constant 7 : index
    %c0_358 = arith.constant 0 : index
    %343 = vector.load %arg11[%c7_356, %c7_357, %c0_358] : memref<14x14x128xf32, #tpu.memory_space<vmem>>, vector<1x1x128xf32>
    %344 = vector.shape_cast %343 : vector<1x1x128xf32> to vector<1x128xf32>
    %345 = arith.maximumf %338, %340 : vector<1x128xf32>
    %346 = arith.maximumf %342, %344 : vector<1x128xf32>
    %347 = arith.maximumf %345, %346 : vector<1x128xf32>
    %c3_359 = arith.constant 3 : index
    %c3_360 = arith.constant 3 : index
    %c0_361 = arith.constant 0 : index
    %348 = vector.load %arg12[%c3_359, %c3_360, %c0_361] : memref<7x7x128xf32, #tpu.memory_space<vmem>>, vector<1x1x128xf32>
    %349 = vector.shape_cast %348 : vector<1x1x128xf32> to vector<1x128xf32>
    %350 = vector.shape_cast %347 : vector<1x128xf32> to vector<1x1x128xf32>
    tpu.vector_store %arg12[%c3_359, %c3_360, %c0_361], %350 {strides = array<i32>} : memref<7x7x128xf32, #tpu.memory_space<vmem>>, vector<1x1x128xf32>,
    %c6_362 = arith.constant 6 : index
    %c8_363 = arith.constant 8 : index
    %c0_364 = arith.constant 0 : index
    %351 = vector.load %arg11[%c6_362, %c8_363, %c0_364] : memref<14x14x128xf32, #tpu.memory_space<vmem>>, vector<1x1x128xf32>
    %352 = vector.shape_cast %351 : vector<1x1x128xf32> to vector<1x128xf32>
    %c6_365 = arith.constant 6 : index
    %c9_366 = arith.constant 9 : index
    %c0_367 = arith.constant 0 : index
    %353 = vector.load %arg11[%c6_365, %c9_366, %c0_367] : memref<14x14x128xf32, #tpu.memory_space<vmem>>, vector<1x1x128xf32>
    %354 = vector.shape_cast %353 : vector<1x1x128xf32> to vector<1x128xf32>
    %c7_368 = arith.constant 7 : index
    %c8_369 = arith.constant 8 : index
    %c0_370 = arith.constant 0 : index
    %355 = vector.load %arg11[%c7_368, %c8_369, %c0_370] : memref<14x14x128xf32, #tpu.memory_space<vmem>>, vector<1x1x128xf32>
    %356 = vector.shape_cast %355 : vector<1x1x128xf32> to vector<1x128xf32>
    %c7_371 = arith.constant 7 : index
    %c9_372 = arith.constant 9 : index
    %c0_373 = arith.constant 0 : index
    %357 = vector.load %arg11[%c7_371, %c9_372, %c0_373] : memref<14x14x128xf32, #tpu.memory_space<vmem>>, vector<1x1x128xf32>
    %358 = vector.shape_cast %357 : vector<1x1x128xf32> to vector<1x128xf32>
    %359 = arith.maximumf %352, %354 : vector<1x128xf32>
    %360 = arith.maximumf %356, %358 : vector<1x128xf32>
    %361 = arith.maximumf %359, %360 : vector<1x128xf32>
    %c3_374 = arith.constant 3 : index
    %c4_375 = arith.constant 4 : index
    %c0_376 = arith.constant 0 : index
    %362 = vector.load %arg12[%c3_374, %c4_375, %c0_376] : memref<7x7x128xf32, #tpu.memory_space<vmem>>, vector<1x1x128xf32>
    %363 = vector.shape_cast %362 : vector<1x1x128xf32> to vector<1x128xf32>
    %364 = vector.shape_cast %361 : vector<1x128xf32> to vector<1x1x128xf32>
    tpu.vector_store %arg12[%c3_374, %c4_375, %c0_376], %364 {strides = array<i32>} : memref<7x7x128xf32, #tpu.memory_space<vmem>>, vector<1x1x128xf32>,
    %c6_377 = arith.constant 6 : index
    %c10_378 = arith.constant 10 : index
    %c0_379 = arith.constant 0 : index
    %365 = vector.load %arg11[%c6_377, %c10_378, %c0_379] : memref<14x14x128xf32, #tpu.memory_space<vmem>>, vector<1x1x128xf32>
    %366 = vector.shape_cast %365 : vector<1x1x128xf32> to vector<1x128xf32>
    %c6_380 = arith.constant 6 : index
    %c11_381 = arith.constant 11 : index
    %c0_382 = arith.constant 0 : index
    %367 = vector.load %arg11[%c6_380, %c11_381, %c0_382] : memref<14x14x128xf32, #tpu.memory_space<vmem>>, vector<1x1x128xf32>
    %368 = vector.shape_cast %367 : vector<1x1x128xf32> to vector<1x128xf32>
    %c7_383 = arith.constant 7 : index
    %c10_384 = arith.constant 10 : index
    %c0_385 = arith.constant 0 : index
    %369 = vector.load %arg11[%c7_383, %c10_384, %c0_385] : memref<14x14x128xf32, #tpu.memory_space<vmem>>, vector<1x1x128xf32>
    %370 = vector.shape_cast %369 : vector<1x1x128xf32> to vector<1x128xf32>
    %c7_386 = arith.constant 7 : index
    %c11_387 = arith.constant 11 : index
    %c0_388 = arith.constant 0 : index
    %371 = vector.load %arg11[%c7_386, %c11_387, %c0_388] : memref<14x14x128xf32, #tpu.memory_space<vmem>>, vector<1x1x128xf32>
    %372 = vector.shape_cast %371 : vector<1x1x128xf32> to vector<1x128xf32>
    %373 = arith.maximumf %366, %368 : vector<1x128xf32>
    %374 = arith.maximumf %370, %372 : vector<1x128xf32>
    %375 = arith.maximumf %373, %374 : vector<1x128xf32>
    %c3_389 = arith.constant 3 : index
    %c5_390 = arith.constant 5 : index
    %c0_391 = arith.constant 0 : index
    %376 = vector.load %arg12[%c3_389, %c5_390, %c0_391] : memref<7x7x128xf32, #tpu.memory_space<vmem>>, vector<1x1x128xf32>
    %377 = vector.shape_cast %376 : vector<1x1x128xf32> to vector<1x128xf32>
    %378 = vector.shape_cast %375 : vector<1x128xf32> to vector<1x1x128xf32>
    tpu.vector_store %arg12[%c3_389, %c5_390, %c0_391], %378 {strides = array<i32>} : memref<7x7x128xf32, #tpu.memory_space<vmem>>, vector<1x1x128xf32>,
    %c6_392 = arith.constant 6 : index
    %c12_393 = arith.constant 12 : index
    %c0_394 = arith.constant 0 : index
    %379 = vector.load %arg11[%c6_392, %c12_393, %c0_394] : memref<14x14x128xf32, #tpu.memory_space<vmem>>, vector<1x1x128xf32>
    %380 = vector.shape_cast %379 : vector<1x1x128xf32> to vector<1x128xf32>
    %c6_395 = arith.constant 6 : index
    %c13_396 = arith.constant 13 : index
    %c0_397 = arith.constant 0 : index
    %381 = vector.load %arg11[%c6_395, %c13_396, %c0_397] : memref<14x14x128xf32, #tpu.memory_space<vmem>>, vector<1x1x128xf32>
    %382 = vector.shape_cast %381 : vector<1x1x128xf32> to vector<1x128xf32>
    %c7_398 = arith.constant 7 : index
    %c12_399 = arith.constant 12 : index
    %c0_400 = arith.constant 0 : index
    %383 = vector.load %arg11[%c7_398, %c12_399, %c0_400] : memref<14x14x128xf32, #tpu.memory_space<vmem>>, vector<1x1x128xf32>
    %384 = vector.shape_cast %383 : vector<1x1x128xf32> to vector<1x128xf32>
    %c7_401 = arith.constant 7 : index
    %c13_402 = arith.constant 13 : index
    %c0_403 = arith.constant 0 : index
    %385 = vector.load %arg11[%c7_401, %c13_402, %c0_403] : memref<14x14x128xf32, #tpu.memory_space<vmem>>, vector<1x1x128xf32>
    %386 = vector.shape_cast %385 : vector<1x1x128xf32> to vector<1x128xf32>
    %387 = arith.maximumf %380, %382 : vector<1x128xf32>
    %388 = arith.maximumf %384, %386 : vector<1x128xf32>
    %389 = arith.maximumf %387, %388 : vector<1x128xf32>
    %c3_404 = arith.constant 3 : index
    %c6_405 = arith.constant 6 : index
    %c0_406 = arith.constant 0 : index
    %390 = vector.load %arg12[%c3_404, %c6_405, %c0_406] : memref<7x7x128xf32, #tpu.memory_space<vmem>>, vector<1x1x128xf32>
    %391 = vector.shape_cast %390 : vector<1x1x128xf32> to vector<1x128xf32>
    %392 = vector.shape_cast %389 : vector<1x128xf32> to vector<1x1x128xf32>
    tpu.vector_store %arg12[%c3_404, %c6_405, %c0_406], %392 {strides = array<i32>} : memref<7x7x128xf32, #tpu.memory_space<vmem>>, vector<1x1x128xf32>,
    %c8_407 = arith.constant 8 : index
    %c0_408 = arith.constant 0 : index
    %c0_409 = arith.constant 0 : index
    %393 = vector.load %arg11[%c8_407, %c0_408, %c0_409] : memref<14x14x128xf32, #tpu.memory_space<vmem>>, vector<1x1x128xf32>
    %394 = vector.shape_cast %393 : vector<1x1x128xf32> to vector<1x128xf32>
    %c8_410 = arith.constant 8 : index
    %c1_411 = arith.constant 1 : index
    %c0_412 = arith.constant 0 : index
    %395 = vector.load %arg11[%c8_410, %c1_411, %c0_412] : memref<14x14x128xf32, #tpu.memory_space<vmem>>, vector<1x1x128xf32>
    %396 = vector.shape_cast %395 : vector<1x1x128xf32> to vector<1x128xf32>
    %c9_413 = arith.constant 9 : index
    %c0_414 = arith.constant 0 : index
    %c0_415 = arith.constant 0 : index
    %397 = vector.load %arg11[%c9_413, %c0_414, %c0_415] : memref<14x14x128xf32, #tpu.memory_space<vmem>>, vector<1x1x128xf32>
    %398 = vector.shape_cast %397 : vector<1x1x128xf32> to vector<1x128xf32>
    %c9_416 = arith.constant 9 : index
    %c1_417 = arith.constant 1 : index
    %c0_418 = arith.constant 0 : index
    %399 = vector.load %arg11[%c9_416, %c1_417, %c0_418] : memref<14x14x128xf32, #tpu.memory_space<vmem>>, vector<1x1x128xf32>
    %400 = vector.shape_cast %399 : vector<1x1x128xf32> to vector<1x128xf32>
    %401 = arith.maximumf %394, %396 : vector<1x128xf32>
    %402 = arith.maximumf %398, %400 : vector<1x128xf32>
    %403 = arith.maximumf %401, %402 : vector<1x128xf32>
    %c4_419 = arith.constant 4 : index
    %c0_420 = arith.constant 0 : index
    %c0_421 = arith.constant 0 : index
    %404 = vector.load %arg12[%c4_419, %c0_420, %c0_421] : memref<7x7x128xf32, #tpu.memory_space<vmem>>, vector<1x1x128xf32>
    %405 = vector.shape_cast %404 : vector<1x1x128xf32> to vector<1x128xf32>
    %406 = vector.shape_cast %403 : vector<1x128xf32> to vector<1x1x128xf32>
    tpu.vector_store %arg12[%c4_419, %c0_420, %c0_421], %406 {strides = array<i32>} : memref<7x7x128xf32, #tpu.memory_space<vmem>>, vector<1x1x128xf32>,
    %c8_422 = arith.constant 8 : index
    %c2_423 = arith.constant 2 : index
    %c0_424 = arith.constant 0 : index
    %407 = vector.load %arg11[%c8_422, %c2_423, %c0_424] : memref<14x14x128xf32, #tpu.memory_space<vmem>>, vector<1x1x128xf32>
    %408 = vector.shape_cast %407 : vector<1x1x128xf32> to vector<1x128xf32>
    %c8_425 = arith.constant 8 : index
    %c3_426 = arith.constant 3 : index
    %c0_427 = arith.constant 0 : index
    %409 = vector.load %arg11[%c8_425, %c3_426, %c0_427] : memref<14x14x128xf32, #tpu.memory_space<vmem>>, vector<1x1x128xf32>
    %410 = vector.shape_cast %409 : vector<1x1x128xf32> to vector<1x128xf32>
    %c9_428 = arith.constant 9 : index
    %c2_429 = arith.constant 2 : index
    %c0_430 = arith.constant 0 : index
    %411 = vector.load %arg11[%c9_428, %c2_429, %c0_430] : memref<14x14x128xf32, #tpu.memory_space<vmem>>, vector<1x1x128xf32>
    %412 = vector.shape_cast %411 : vector<1x1x128xf32> to vector<1x128xf32>
    %c9_431 = arith.constant 9 : index
    %c3_432 = arith.constant 3 : index
    %c0_433 = arith.constant 0 : index
    %413 = vector.load %arg11[%c9_431, %c3_432, %c0_433] : memref<14x14x128xf32, #tpu.memory_space<vmem>>, vector<1x1x128xf32>
    %414 = vector.shape_cast %413 : vector<1x1x128xf32> to vector<1x128xf32>
    %415 = arith.maximumf %408, %410 : vector<1x128xf32>
    %416 = arith.maximumf %412, %414 : vector<1x128xf32>
    %417 = arith.maximumf %415, %416 : vector<1x128xf32>
    %c4_434 = arith.constant 4 : index
    %c1_435 = arith.constant 1 : index
    %c0_436 = arith.constant 0 : index
    %418 = vector.load %arg12[%c4_434, %c1_435, %c0_436] : memref<7x7x128xf32, #tpu.memory_space<vmem>>, vector<1x1x128xf32>
    %419 = vector.shape_cast %418 : vector<1x1x128xf32> to vector<1x128xf32>
    %420 = vector.shape_cast %417 : vector<1x128xf32> to vector<1x1x128xf32>
    tpu.vector_store %arg12[%c4_434, %c1_435, %c0_436], %420 {strides = array<i32>} : memref<7x7x128xf32, #tpu.memory_space<vmem>>, vector<1x1x128xf32>,
    %c8_437 = arith.constant 8 : index
    %c4_438 = arith.constant 4 : index
    %c0_439 = arith.constant 0 : index
    %421 = vector.load %arg11[%c8_437, %c4_438, %c0_439] : memref<14x14x128xf32, #tpu.memory_space<vmem>>, vector<1x1x128xf32>
    %422 = vector.shape_cast %421 : vector<1x1x128xf32> to vector<1x128xf32>
    %c8_440 = arith.constant 8 : index
    %c5_441 = arith.constant 5 : index
    %c0_442 = arith.constant 0 : index
    %423 = vector.load %arg11[%c8_440, %c5_441, %c0_442] : memref<14x14x128xf32, #tpu.memory_space<vmem>>, vector<1x1x128xf32>
    %424 = vector.shape_cast %423 : vector<1x1x128xf32> to vector<1x128xf32>
    %c9_443 = arith.constant 9 : index
    %c4_444 = arith.constant 4 : index
    %c0_445 = arith.constant 0 : index
    %425 = vector.load %arg11[%c9_443, %c4_444, %c0_445] : memref<14x14x128xf32, #tpu.memory_space<vmem>>, vector<1x1x128xf32>
    %426 = vector.shape_cast %425 : vector<1x1x128xf32> to vector<1x128xf32>
    %c9_446 = arith.constant 9 : index
    %c5_447 = arith.constant 5 : index
    %c0_448 = arith.constant 0 : index
    %427 = vector.load %arg11[%c9_446, %c5_447, %c0_448] : memref<14x14x128xf32, #tpu.memory_space<vmem>>, vector<1x1x128xf32>
    %428 = vector.shape_cast %427 : vector<1x1x128xf32> to vector<1x128xf32>
    %429 = arith.maximumf %422, %424 : vector<1x128xf32>
    %430 = arith.maximumf %426, %428 : vector<1x128xf32>
    %431 = arith.maximumf %429, %430 : vector<1x128xf32>
    %c4_449 = arith.constant 4 : index
    %c2_450 = arith.constant 2 : index
    %c0_451 = arith.constant 0 : index
    %432 = vector.load %arg12[%c4_449, %c2_450, %c0_451] : memref<7x7x128xf32, #tpu.memory_space<vmem>>, vector<1x1x128xf32>
    %433 = vector.shape_cast %432 : vector<1x1x128xf32> to vector<1x128xf32>
    %434 = vector.shape_cast %431 : vector<1x128xf32> to vector<1x1x128xf32>
    tpu.vector_store %arg12[%c4_449, %c2_450, %c0_451], %434 {strides = array<i32>} : memref<7x7x128xf32, #tpu.memory_space<vmem>>, vector<1x1x128xf32>,
    %c8_452 = arith.constant 8 : index
    %c6_453 = arith.constant 6 : index
    %c0_454 = arith.constant 0 : index
    %435 = vector.load %arg11[%c8_452, %c6_453, %c0_454] : memref<14x14x128xf32, #tpu.memory_space<vmem>>, vector<1x1x128xf32>
    %436 = vector.shape_cast %435 : vector<1x1x128xf32> to vector<1x128xf32>
    %c8_455 = arith.constant 8 : index
    %c7_456 = arith.constant 7 : index
    %c0_457 = arith.constant 0 : index
    %437 = vector.load %arg11[%c8_455, %c7_456, %c0_457] : memref<14x14x128xf32, #tpu.memory_space<vmem>>, vector<1x1x128xf32>
    %438 = vector.shape_cast %437 : vector<1x1x128xf32> to vector<1x128xf32>
    %c9_458 = arith.constant 9 : index
    %c6_459 = arith.constant 6 : index
    %c0_460 = arith.constant 0 : index
    %439 = vector.load %arg11[%c9_458, %c6_459, %c0_460] : memref<14x14x128xf32, #tpu.memory_space<vmem>>, vector<1x1x128xf32>
    %440 = vector.shape_cast %439 : vector<1x1x128xf32> to vector<1x128xf32>
    %c9_461 = arith.constant 9 : index
    %c7_462 = arith.constant 7 : index
    %c0_463 = arith.constant 0 : index
    %441 = vector.load %arg11[%c9_461, %c7_462, %c0_463] : memref<14x14x128xf32, #tpu.memory_space<vmem>>, vector<1x1x128xf32>
    %442 = vector.shape_cast %441 : vector<1x1x128xf32> to vector<1x128xf32>
    %443 = arith.maximumf %436, %438 : vector<1x128xf32>
    %444 = arith.maximumf %440, %442 : vector<1x128xf32>
    %445 = arith.maximumf %443, %444 : vector<1x128xf32>
    %c4_464 = arith.constant 4 : index
    %c3_465 = arith.constant 3 : index
    %c0_466 = arith.constant 0 : index
    %446 = vector.load %arg12[%c4_464, %c3_465, %c0_466] : memref<7x7x128xf32, #tpu.memory_space<vmem>>, vector<1x1x128xf32>
    %447 = vector.shape_cast %446 : vector<1x1x128xf32> to vector<1x128xf32>
    %448 = vector.shape_cast %445 : vector<1x128xf32> to vector<1x1x128xf32>
    tpu.vector_store %arg12[%c4_464, %c3_465, %c0_466], %448 {strides = array<i32>} : memref<7x7x128xf32, #tpu.memory_space<vmem>>, vector<1x1x128xf32>,
    %c8_467 = arith.constant 8 : index
    %c8_468 = arith.constant 8 : index
    %c0_469 = arith.constant 0 : index
    %449 = vector.load %arg11[%c8_467, %c8_468, %c0_469] : memref<14x14x128xf32, #tpu.memory_space<vmem>>, vector<1x1x128xf32>
    %450 = vector.shape_cast %449 : vector<1x1x128xf32> to vector<1x128xf32>
    %c8_470 = arith.constant 8 : index
    %c9_471 = arith.constant 9 : index
    %c0_472 = arith.constant 0 : index
    %451 = vector.load %arg11[%c8_470, %c9_471, %c0_472] : memref<14x14x128xf32, #tpu.memory_space<vmem>>, vector<1x1x128xf32>
    %452 = vector.shape_cast %451 : vector<1x1x128xf32> to vector<1x128xf32>
    %c9_473 = arith.constant 9 : index
    %c8_474 = arith.constant 8 : index
    %c0_475 = arith.constant 0 : index
    %453 = vector.load %arg11[%c9_473, %c8_474, %c0_475] : memref<14x14x128xf32, #tpu.memory_space<vmem>>, vector<1x1x128xf32>
    %454 = vector.shape_cast %453 : vector<1x1x128xf32> to vector<1x128xf32>
    %c9_476 = arith.constant 9 : index
    %c9_477 = arith.constant 9 : index
    %c0_478 = arith.constant 0 : index
    %455 = vector.load %arg11[%c9_476, %c9_477, %c0_478] : memref<14x14x128xf32, #tpu.memory_space<vmem>>, vector<1x1x128xf32>
    %456 = vector.shape_cast %455 : vector<1x1x128xf32> to vector<1x128xf32>
    %457 = arith.maximumf %450, %452 : vector<1x128xf32>
    %458 = arith.maximumf %454, %456 : vector<1x128xf32>
    %459 = arith.maximumf %457, %458 : vector<1x128xf32>
    %c4_479 = arith.constant 4 : index
    %c4_480 = arith.constant 4 : index
    %c0_481 = arith.constant 0 : index
    %460 = vector.load %arg12[%c4_479, %c4_480, %c0_481] : memref<7x7x128xf32, #tpu.memory_space<vmem>>, vector<1x1x128xf32>
    %461 = vector.shape_cast %460 : vector<1x1x128xf32> to vector<1x128xf32>
    %462 = vector.shape_cast %459 : vector<1x128xf32> to vector<1x1x128xf32>
    tpu.vector_store %arg12[%c4_479, %c4_480, %c0_481], %462 {strides = array<i32>} : memref<7x7x128xf32, #tpu.memory_space<vmem>>, vector<1x1x128xf32>,
    %c8_482 = arith.constant 8 : index
    %c10_483 = arith.constant 10 : index
    %c0_484 = arith.constant 0 : index
    %463 = vector.load %arg11[%c8_482, %c10_483, %c0_484] : memref<14x14x128xf32, #tpu.memory_space<vmem>>, vector<1x1x128xf32>
    %464 = vector.shape_cast %463 : vector<1x1x128xf32> to vector<1x128xf32>
    %c8_485 = arith.constant 8 : index
    %c11_486 = arith.constant 11 : index
    %c0_487 = arith.constant 0 : index
    %465 = vector.load %arg11[%c8_485, %c11_486, %c0_487] : memref<14x14x128xf32, #tpu.memory_space<vmem>>, vector<1x1x128xf32>
    %466 = vector.shape_cast %465 : vector<1x1x128xf32> to vector<1x128xf32>
    %c9_488 = arith.constant 9 : index
    %c10_489 = arith.constant 10 : index
    %c0_490 = arith.constant 0 : index
    %467 = vector.load %arg11[%c9_488, %c10_489, %c0_490] : memref<14x14x128xf32, #tpu.memory_space<vmem>>, vector<1x1x128xf32>
    %468 = vector.shape_cast %467 : vector<1x1x128xf32> to vector<1x128xf32>
    %c9_491 = arith.constant 9 : index
    %c11_492 = arith.constant 11 : index
    %c0_493 = arith.constant 0 : index
    %469 = vector.load %arg11[%c9_491, %c11_492, %c0_493] : memref<14x14x128xf32, #tpu.memory_space<vmem>>, vector<1x1x128xf32>
    %470 = vector.shape_cast %469 : vector<1x1x128xf32> to vector<1x128xf32>
    %471 = arith.maximumf %464, %466 : vector<1x128xf32>
    %472 = arith.maximumf %468, %470 : vector<1x128xf32>
    %473 = arith.maximumf %471, %472 : vector<1x128xf32>
    %c4_494 = arith.constant 4 : index
    %c5_495 = arith.constant 5 : index
    %c0_496 = arith.constant 0 : index
    %474 = vector.load %arg12[%c4_494, %c5_495, %c0_496] : memref<7x7x128xf32, #tpu.memory_space<vmem>>, vector<1x1x128xf32>
    %475 = vector.shape_cast %474 : vector<1x1x128xf32> to vector<1x128xf32>
    %476 = vector.shape_cast %473 : vector<1x128xf32> to vector<1x1x128xf32>
    tpu.vector_store %arg12[%c4_494, %c5_495, %c0_496], %476 {strides = array<i32>} : memref<7x7x128xf32, #tpu.memory_space<vmem>>, vector<1x1x128xf32>,
    %c8_497 = arith.constant 8 : index
    %c12_498 = arith.constant 12 : index
    %c0_499 = arith.constant 0 : index
    %477 = vector.load %arg11[%c8_497, %c12_498, %c0_499] : memref<14x14x128xf32, #tpu.memory_space<vmem>>, vector<1x1x128xf32>
    %478 = vector.shape_cast %477 : vector<1x1x128xf32> to vector<1x128xf32>
    %c8_500 = arith.constant 8 : index
    %c13_501 = arith.constant 13 : index
    %c0_502 = arith.constant 0 : index
    %479 = vector.load %arg11[%c8_500, %c13_501, %c0_502] : memref<14x14x128xf32, #tpu.memory_space<vmem>>, vector<1x1x128xf32>
    %480 = vector.shape_cast %479 : vector<1x1x128xf32> to vector<1x128xf32>
    %c9_503 = arith.constant 9 : index
    %c12_504 = arith.constant 12 : index
    %c0_505 = arith.constant 0 : index
    %481 = vector.load %arg11[%c9_503, %c12_504, %c0_505] : memref<14x14x128xf32, #tpu.memory_space<vmem>>, vector<1x1x128xf32>
    %482 = vector.shape_cast %481 : vector<1x1x128xf32> to vector<1x128xf32>
    %c9_506 = arith.constant 9 : index
    %c13_507 = arith.constant 13 : index
    %c0_508 = arith.constant 0 : index
    %483 = vector.load %arg11[%c9_506, %c13_507, %c0_508] : memref<14x14x128xf32, #tpu.memory_space<vmem>>, vector<1x1x128xf32>
    %484 = vector.shape_cast %483 : vector<1x1x128xf32> to vector<1x128xf32>
    %485 = arith.maximumf %478, %480 : vector<1x128xf32>
    %486 = arith.maximumf %482, %484 : vector<1x128xf32>
    %487 = arith.maximumf %485, %486 : vector<1x128xf32>
    %c4_509 = arith.constant 4 : index
    %c6_510 = arith.constant 6 : index
    %c0_511 = arith.constant 0 : index
    %488 = vector.load %arg12[%c4_509, %c6_510, %c0_511] : memref<7x7x128xf32, #tpu.memory_space<vmem>>, vector<1x1x128xf32>
    %489 = vector.shape_cast %488 : vector<1x1x128xf32> to vector<1x128xf32>
    %490 = vector.shape_cast %487 : vector<1x128xf32> to vector<1x1x128xf32>
    tpu.vector_store %arg12[%c4_509, %c6_510, %c0_511], %490 {strides = array<i32>} : memref<7x7x128xf32, #tpu.memory_space<vmem>>, vector<1x1x128xf32>,
    %c10_512 = arith.constant 10 : index
    %c0_513 = arith.constant 0 : index
    %c0_514 = arith.constant 0 : index
    %491 = vector.load %arg11[%c10_512, %c0_513, %c0_514] : memref<14x14x128xf32, #tpu.memory_space<vmem>>, vector<1x1x128xf32>
    %492 = vector.shape_cast %491 : vector<1x1x128xf32> to vector<1x128xf32>
    %c10_515 = arith.constant 10 : index
    %c1_516 = arith.constant 1 : index
    %c0_517 = arith.constant 0 : index
    %493 = vector.load %arg11[%c10_515, %c1_516, %c0_517] : memref<14x14x128xf32, #tpu.memory_space<vmem>>, vector<1x1x128xf32>
    %494 = vector.shape_cast %493 : vector<1x1x128xf32> to vector<1x128xf32>
    %c11_518 = arith.constant 11 : index
    %c0_519 = arith.constant 0 : index
    %c0_520 = arith.constant 0 : index
    %495 = vector.load %arg11[%c11_518, %c0_519, %c0_520] : memref<14x14x128xf32, #tpu.memory_space<vmem>>, vector<1x1x128xf32>
    %496 = vector.shape_cast %495 : vector<1x1x128xf32> to vector<1x128xf32>
    %c11_521 = arith.constant 11 : index
    %c1_522 = arith.constant 1 : index
    %c0_523 = arith.constant 0 : index
    %497 = vector.load %arg11[%c11_521, %c1_522, %c0_523] : memref<14x14x128xf32, #tpu.memory_space<vmem>>, vector<1x1x128xf32>
    %498 = vector.shape_cast %497 : vector<1x1x128xf32> to vector<1x128xf32>
    %499 = arith.maximumf %492, %494 : vector<1x128xf32>
    %500 = arith.maximumf %496, %498 : vector<1x128xf32>
    %501 = arith.maximumf %499, %500 : vector<1x128xf32>
    %c5_524 = arith.constant 5 : index
    %c0_525 = arith.constant 0 : index
    %c0_526 = arith.constant 0 : index
    %502 = vector.load %arg12[%c5_524, %c0_525, %c0_526] : memref<7x7x128xf32, #tpu.memory_space<vmem>>, vector<1x1x128xf32>
    %503 = vector.shape_cast %502 : vector<1x1x128xf32> to vector<1x128xf32>
    %504 = vector.shape_cast %501 : vector<1x128xf32> to vector<1x1x128xf32>
    tpu.vector_store %arg12[%c5_524, %c0_525, %c0_526], %504 {strides = array<i32>} : memref<7x7x128xf32, #tpu.memory_space<vmem>>, vector<1x1x128xf32>,
    %c10_527 = arith.constant 10 : index
    %c2_528 = arith.constant 2 : index
    %c0_529 = arith.constant 0 : index
    %505 = vector.load %arg11[%c10_527, %c2_528, %c0_529] : memref<14x14x128xf32, #tpu.memory_space<vmem>>, vector<1x1x128xf32>
    %506 = vector.shape_cast %505 : vector<1x1x128xf32> to vector<1x128xf32>
    %c10_530 = arith.constant 10 : index
    %c3_531 = arith.constant 3 : index
    %c0_532 = arith.constant 0 : index
    %507 = vector.load %arg11[%c10_530, %c3_531, %c0_532] : memref<14x14x128xf32, #tpu.memory_space<vmem>>, vector<1x1x128xf32>
    %508 = vector.shape_cast %507 : vector<1x1x128xf32> to vector<1x128xf32>
    %c11_533 = arith.constant 11 : index
    %c2_534 = arith.constant 2 : index
    %c0_535 = arith.constant 0 : index
    %509 = vector.load %arg11[%c11_533, %c2_534, %c0_535] : memref<14x14x128xf32, #tpu.memory_space<vmem>>, vector<1x1x128xf32>
    %510 = vector.shape_cast %509 : vector<1x1x128xf32> to vector<1x128xf32>
    %c11_536 = arith.constant 11 : index
    %c3_537 = arith.constant 3 : index
    %c0_538 = arith.constant 0 : index
    %511 = vector.load %arg11[%c11_536, %c3_537, %c0_538] : memref<14x14x128xf32, #tpu.memory_space<vmem>>, vector<1x1x128xf32>
    %512 = vector.shape_cast %511 : vector<1x1x128xf32> to vector<1x128xf32>
    %513 = arith.maximumf %506, %508 : vector<1x128xf32>
    %514 = arith.maximumf %510, %512 : vector<1x128xf32>
    %515 = arith.maximumf %513, %514 : vector<1x128xf32>
    %c5_539 = arith.constant 5 : index
    %c1_540 = arith.constant 1 : index
    %c0_541 = arith.constant 0 : index
    %516 = vector.load %arg12[%c5_539, %c1_540, %c0_541] : memref<7x7x128xf32, #tpu.memory_space<vmem>>, vector<1x1x128xf32>
    %517 = vector.shape_cast %516 : vector<1x1x128xf32> to vector<1x128xf32>
    %518 = vector.shape_cast %515 : vector<1x128xf32> to vector<1x1x128xf32>
    tpu.vector_store %arg12[%c5_539, %c1_540, %c0_541], %518 {strides = array<i32>} : memref<7x7x128xf32, #tpu.memory_space<vmem>>, vector<1x1x128xf32>,
    %c10_542 = arith.constant 10 : index
    %c4_543 = arith.constant 4 : index
    %c0_544 = arith.constant 0 : index
    %519 = vector.load %arg11[%c10_542, %c4_543, %c0_544] : memref<14x14x128xf32, #tpu.memory_space<vmem>>, vector<1x1x128xf32>
    %520 = vector.shape_cast %519 : vector<1x1x128xf32> to vector<1x128xf32>
    %c10_545 = arith.constant 10 : index
    %c5_546 = arith.constant 5 : index
    %c0_547 = arith.constant 0 : index
    %521 = vector.load %arg11[%c10_545, %c5_546, %c0_547] : memref<14x14x128xf32, #tpu.memory_space<vmem>>, vector<1x1x128xf32>
    %522 = vector.shape_cast %521 : vector<1x1x128xf32> to vector<1x128xf32>
    %c11_548 = arith.constant 11 : index
    %c4_549 = arith.constant 4 : index
    %c0_550 = arith.constant 0 : index
    %523 = vector.load %arg11[%c11_548, %c4_549, %c0_550] : memref<14x14x128xf32, #tpu.memory_space<vmem>>, vector<1x1x128xf32>
    %524 = vector.shape_cast %523 : vector<1x1x128xf32> to vector<1x128xf32>
    %c11_551 = arith.constant 11 : index
    %c5_552 = arith.constant 5 : index
    %c0_553 = arith.constant 0 : index
    %525 = vector.load %arg11[%c11_551, %c5_552, %c0_553] : memref<14x14x128xf32, #tpu.memory_space<vmem>>, vector<1x1x128xf32>
    %526 = vector.shape_cast %525 : vector<1x1x128xf32> to vector<1x128xf32>
    %527 = arith.maximumf %520, %522 : vector<1x128xf32>
    %528 = arith.maximumf %524, %526 : vector<1x128xf32>
    %529 = arith.maximumf %527, %528 : vector<1x128xf32>
    %c5_554 = arith.constant 5 : index
    %c2_555 = arith.constant 2 : index
    %c0_556 = arith.constant 0 : index
    %530 = vector.load %arg12[%c5_554, %c2_555, %c0_556] : memref<7x7x128xf32, #tpu.memory_space<vmem>>, vector<1x1x128xf32>
    %531 = vector.shape_cast %530 : vector<1x1x128xf32> to vector<1x128xf32>
    %532 = vector.shape_cast %529 : vector<1x128xf32> to vector<1x1x128xf32>
    tpu.vector_store %arg12[%c5_554, %c2_555, %c0_556], %532 {strides = array<i32>} : memref<7x7x128xf32, #tpu.memory_space<vmem>>, vector<1x1x128xf32>,
    %c10_557 = arith.constant 10 : index
    %c6_558 = arith.constant 6 : index
    %c0_559 = arith.constant 0 : index
    %533 = vector.load %arg11[%c10_557, %c6_558, %c0_559] : memref<14x14x128xf32, #tpu.memory_space<vmem>>, vector<1x1x128xf32>
    %534 = vector.shape_cast %533 : vector<1x1x128xf32> to vector<1x128xf32>
    %c10_560 = arith.constant 10 : index
    %c7_561 = arith.constant 7 : index
    %c0_562 = arith.constant 0 : index
    %535 = vector.load %arg11[%c10_560, %c7_561, %c0_562] : memref<14x14x128xf32, #tpu.memory_space<vmem>>, vector<1x1x128xf32>
    %536 = vector.shape_cast %535 : vector<1x1x128xf32> to vector<1x128xf32>
    %c11_563 = arith.constant 11 : index
    %c6_564 = arith.constant 6 : index
    %c0_565 = arith.constant 0 : index
    %537 = vector.load %arg11[%c11_563, %c6_564, %c0_565] : memref<14x14x128xf32, #tpu.memory_space<vmem>>, vector<1x1x128xf32>
    %538 = vector.shape_cast %537 : vector<1x1x128xf32> to vector<1x128xf32>
    %c11_566 = arith.constant 11 : index
    %c7_567 = arith.constant 7 : index
    %c0_568 = arith.constant 0 : index
    %539 = vector.load %arg11[%c11_566, %c7_567, %c0_568] : memref<14x14x128xf32, #tpu.memory_space<vmem>>, vector<1x1x128xf32>
    %540 = vector.shape_cast %539 : vector<1x1x128xf32> to vector<1x128xf32>
    %541 = arith.maximumf %534, %536 : vector<1x128xf32>
    %542 = arith.maximumf %538, %540 : vector<1x128xf32>
    %543 = arith.maximumf %541, %542 : vector<1x128xf32>
    %c5_569 = arith.constant 5 : index
    %c3_570 = arith.constant 3 : index
    %c0_571 = arith.constant 0 : index
    %544 = vector.load %arg12[%c5_569, %c3_570, %c0_571] : memref<7x7x128xf32, #tpu.memory_space<vmem>>, vector<1x1x128xf32>
    %545 = vector.shape_cast %544 : vector<1x1x128xf32> to vector<1x128xf32>
    %546 = vector.shape_cast %543 : vector<1x128xf32> to vector<1x1x128xf32>
    tpu.vector_store %arg12[%c5_569, %c3_570, %c0_571], %546 {strides = array<i32>} : memref<7x7x128xf32, #tpu.memory_space<vmem>>, vector<1x1x128xf32>,
    %c10_572 = arith.constant 10 : index
    %c8_573 = arith.constant 8 : index
    %c0_574 = arith.constant 0 : index
    %547 = vector.load %arg11[%c10_572, %c8_573, %c0_574] : memref<14x14x128xf32, #tpu.memory_space<vmem>>, vector<1x1x128xf32>
    %548 = vector.shape_cast %547 : vector<1x1x128xf32> to vector<1x128xf32>
    %c10_575 = arith.constant 10 : index
    %c9_576 = arith.constant 9 : index
    %c0_577 = arith.constant 0 : index
    %549 = vector.load %arg11[%c10_575, %c9_576, %c0_577] : memref<14x14x128xf32, #tpu.memory_space<vmem>>, vector<1x1x128xf32>
    %550 = vector.shape_cast %549 : vector<1x1x128xf32> to vector<1x128xf32>
    %c11_578 = arith.constant 11 : index
    %c8_579 = arith.constant 8 : index
    %c0_580 = arith.constant 0 : index
    %551 = vector.load %arg11[%c11_578, %c8_579, %c0_580] : memref<14x14x128xf32, #tpu.memory_space<vmem>>, vector<1x1x128xf32>
    %552 = vector.shape_cast %551 : vector<1x1x128xf32> to vector<1x128xf32>
    %c11_581 = arith.constant 11 : index
    %c9_582 = arith.constant 9 : index
    %c0_583 = arith.constant 0 : index
    %553 = vector.load %arg11[%c11_581, %c9_582, %c0_583] : memref<14x14x128xf32, #tpu.memory_space<vmem>>, vector<1x1x128xf32>
    %554 = vector.shape_cast %553 : vector<1x1x128xf32> to vector<1x128xf32>
    %555 = arith.maximumf %548, %550 : vector<1x128xf32>
    %556 = arith.maximumf %552, %554 : vector<1x128xf32>
    %557 = arith.maximumf %555, %556 : vector<1x128xf32>
    %c5_584 = arith.constant 5 : index
    %c4_585 = arith.constant 4 : index
    %c0_586 = arith.constant 0 : index
    %558 = vector.load %arg12[%c5_584, %c4_585, %c0_586] : memref<7x7x128xf32, #tpu.memory_space<vmem>>, vector<1x1x128xf32>
    %559 = vector.shape_cast %558 : vector<1x1x128xf32> to vector<1x128xf32>
    %560 = vector.shape_cast %557 : vector<1x128xf32> to vector<1x1x128xf32>
    tpu.vector_store %arg12[%c5_584, %c4_585, %c0_586], %560 {strides = array<i32>} : memref<7x7x128xf32, #tpu.memory_space<vmem>>, vector<1x1x128xf32>,
    %c10_587 = arith.constant 10 : index
    %c10_588 = arith.constant 10 : index
    %c0_589 = arith.constant 0 : index
    %561 = vector.load %arg11[%c10_587, %c10_588, %c0_589] : memref<14x14x128xf32, #tpu.memory_space<vmem>>, vector<1x1x128xf32>
    %562 = vector.shape_cast %561 : vector<1x1x128xf32> to vector<1x128xf32>
    %c10_590 = arith.constant 10 : index
    %c11_591 = arith.constant 11 : index
    %c0_592 = arith.constant 0 : index
    %563 = vector.load %arg11[%c10_590, %c11_591, %c0_592] : memref<14x14x128xf32, #tpu.memory_space<vmem>>, vector<1x1x128xf32>
    %564 = vector.shape_cast %563 : vector<1x1x128xf32> to vector<1x128xf32>
    %c11_593 = arith.constant 11 : index
    %c10_594 = arith.constant 10 : index
    %c0_595 = arith.constant 0 : index
    %565 = vector.load %arg11[%c11_593, %c10_594, %c0_595] : memref<14x14x128xf32, #tpu.memory_space<vmem>>, vector<1x1x128xf32>
    %566 = vector.shape_cast %565 : vector<1x1x128xf32> to vector<1x128xf32>
    %c11_596 = arith.constant 11 : index
    %c11_597 = arith.constant 11 : index
    %c0_598 = arith.constant 0 : index
    %567 = vector.load %arg11[%c11_596, %c11_597, %c0_598] : memref<14x14x128xf32, #tpu.memory_space<vmem>>, vector<1x1x128xf32>
    %568 = vector.shape_cast %567 : vector<1x1x128xf32> to vector<1x128xf32>
    %569 = arith.maximumf %562, %564 : vector<1x128xf32>
    %570 = arith.maximumf %566, %568 : vector<1x128xf32>
    %571 = arith.maximumf %569, %570 : vector<1x128xf32>
    %c5_599 = arith.constant 5 : index
    %c5_600 = arith.constant 5 : index
    %c0_601 = arith.constant 0 : index
    %572 = vector.load %arg12[%c5_599, %c5_600, %c0_601] : memref<7x7x128xf32, #tpu.memory_space<vmem>>, vector<1x1x128xf32>
    %573 = vector.shape_cast %572 : vector<1x1x128xf32> to vector<1x128xf32>
    %574 = vector.shape_cast %571 : vector<1x128xf32> to vector<1x1x128xf32>
    tpu.vector_store %arg12[%c5_599, %c5_600, %c0_601], %574 {strides = array<i32>} : memref<7x7x128xf32, #tpu.memory_space<vmem>>, vector<1x1x128xf32>,
    %c10_602 = arith.constant 10 : index
    %c12_603 = arith.constant 12 : index
    %c0_604 = arith.constant 0 : index
    %575 = vector.load %arg11[%c10_602, %c12_603, %c0_604] : memref<14x14x128xf32, #tpu.memory_space<vmem>>, vector<1x1x128xf32>
    %576 = vector.shape_cast %575 : vector<1x1x128xf32> to vector<1x128xf32>
    %c10_605 = arith.constant 10 : index
    %c13_606 = arith.constant 13 : index
    %c0_607 = arith.constant 0 : index
    %577 = vector.load %arg11[%c10_605, %c13_606, %c0_607] : memref<14x14x128xf32, #tpu.memory_space<vmem>>, vector<1x1x128xf32>
    %578 = vector.shape_cast %577 : vector<1x1x128xf32> to vector<1x128xf32>
    %c11_608 = arith.constant 11 : index
    %c12_609 = arith.constant 12 : index
    %c0_610 = arith.constant 0 : index
    %579 = vector.load %arg11[%c11_608, %c12_609, %c0_610] : memref<14x14x128xf32, #tpu.memory_space<vmem>>, vector<1x1x128xf32>
    %580 = vector.shape_cast %579 : vector<1x1x128xf32> to vector<1x128xf32>
    %c11_611 = arith.constant 11 : index
    %c13_612 = arith.constant 13 : index
    %c0_613 = arith.constant 0 : index
    %581 = vector.load %arg11[%c11_611, %c13_612, %c0_613] : memref<14x14x128xf32, #tpu.memory_space<vmem>>, vector<1x1x128xf32>
    %582 = vector.shape_cast %581 : vector<1x1x128xf32> to vector<1x128xf32>
    %583 = arith.maximumf %576, %578 : vector<1x128xf32>
    %584 = arith.maximumf %580, %582 : vector<1x128xf32>
    %585 = arith.maximumf %583, %584 : vector<1x128xf32>
    %c5_614 = arith.constant 5 : index
    %c6_615 = arith.constant 6 : index
    %c0_616 = arith.constant 0 : index
    %586 = vector.load %arg12[%c5_614, %c6_615, %c0_616] : memref<7x7x128xf32, #tpu.memory_space<vmem>>, vector<1x1x128xf32>
    %587 = vector.shape_cast %586 : vector<1x1x128xf32> to vector<1x128xf32>
    %588 = vector.shape_cast %585 : vector<1x128xf32> to vector<1x1x128xf32>
    tpu.vector_store %arg12[%c5_614, %c6_615, %c0_616], %588 {strides = array<i32>} : memref<7x7x128xf32, #tpu.memory_space<vmem>>, vector<1x1x128xf32>,
    %c12_617 = arith.constant 12 : index
    %c0_618 = arith.constant 0 : index
    %c0_619 = arith.constant 0 : index
    %589 = vector.load %arg11[%c12_617, %c0_618, %c0_619] : memref<14x14x128xf32, #tpu.memory_space<vmem>>, vector<1x1x128xf32>
    %590 = vector.shape_cast %589 : vector<1x1x128xf32> to vector<1x128xf32>
    %c12_620 = arith.constant 12 : index
    %c1_621 = arith.constant 1 : index
    %c0_622 = arith.constant 0 : index
    %591 = vector.load %arg11[%c12_620, %c1_621, %c0_622] : memref<14x14x128xf32, #tpu.memory_space<vmem>>, vector<1x1x128xf32>
    %592 = vector.shape_cast %591 : vector<1x1x128xf32> to vector<1x128xf32>
    %c13_623 = arith.constant 13 : index
    %c0_624 = arith.constant 0 : index
    %c0_625 = arith.constant 0 : index
    %593 = vector.load %arg11[%c13_623, %c0_624, %c0_625] : memref<14x14x128xf32, #tpu.memory_space<vmem>>, vector<1x1x128xf32>
    %594 = vector.shape_cast %593 : vector<1x1x128xf32> to vector<1x128xf32>
    %c13_626 = arith.constant 13 : index
    %c1_627 = arith.constant 1 : index
    %c0_628 = arith.constant 0 : index
    %595 = vector.load %arg11[%c13_626, %c1_627, %c0_628] : memref<14x14x128xf32, #tpu.memory_space<vmem>>, vector<1x1x128xf32>
    %596 = vector.shape_cast %595 : vector<1x1x128xf32> to vector<1x128xf32>
    %597 = arith.maximumf %590, %592 : vector<1x128xf32>
    %598 = arith.maximumf %594, %596 : vector<1x128xf32>
    %599 = arith.maximumf %597, %598 : vector<1x128xf32>
    %c6_629 = arith.constant 6 : index
    %c0_630 = arith.constant 0 : index
    %c0_631 = arith.constant 0 : index
    %600 = vector.load %arg12[%c6_629, %c0_630, %c0_631] : memref<7x7x128xf32, #tpu.memory_space<vmem>>, vector<1x1x128xf32>
    %601 = vector.shape_cast %600 : vector<1x1x128xf32> to vector<1x128xf32>
    %602 = vector.shape_cast %599 : vector<1x128xf32> to vector<1x1x128xf32>
    tpu.vector_store %arg12[%c6_629, %c0_630, %c0_631], %602 {strides = array<i32>} : memref<7x7x128xf32, #tpu.memory_space<vmem>>, vector<1x1x128xf32>,
    %c12_632 = arith.constant 12 : index
    %c2_633 = arith.constant 2 : index
    %c0_634 = arith.constant 0 : index
    %603 = vector.load %arg11[%c12_632, %c2_633, %c0_634] : memref<14x14x128xf32, #tpu.memory_space<vmem>>, vector<1x1x128xf32>
    %604 = vector.shape_cast %603 : vector<1x1x128xf32> to vector<1x128xf32>
    %c12_635 = arith.constant 12 : index
    %c3_636 = arith.constant 3 : index
    %c0_637 = arith.constant 0 : index
    %605 = vector.load %arg11[%c12_635, %c3_636, %c0_637] : memref<14x14x128xf32, #tpu.memory_space<vmem>>, vector<1x1x128xf32>
    %606 = vector.shape_cast %605 : vector<1x1x128xf32> to vector<1x128xf32>
    %c13_638 = arith.constant 13 : index
    %c2_639 = arith.constant 2 : index
    %c0_640 = arith.constant 0 : index
    %607 = vector.load %arg11[%c13_638, %c2_639, %c0_640] : memref<14x14x128xf32, #tpu.memory_space<vmem>>, vector<1x1x128xf32>
    %608 = vector.shape_cast %607 : vector<1x1x128xf32> to vector<1x128xf32>
    %c13_641 = arith.constant 13 : index
    %c3_642 = arith.constant 3 : index
    %c0_643 = arith.constant 0 : index
    %609 = vector.load %arg11[%c13_641, %c3_642, %c0_643] : memref<14x14x128xf32, #tpu.memory_space<vmem>>, vector<1x1x128xf32>
    %610 = vector.shape_cast %609 : vector<1x1x128xf32> to vector<1x128xf32>
    %611 = arith.maximumf %604, %606 : vector<1x128xf32>
    %612 = arith.maximumf %608, %610 : vector<1x128xf32>
    %613 = arith.maximumf %611, %612 : vector<1x128xf32>
    %c6_644 = arith.constant 6 : index
    %c1_645 = arith.constant 1 : index
    %c0_646 = arith.constant 0 : index
    %614 = vector.load %arg12[%c6_644, %c1_645, %c0_646] : memref<7x7x128xf32, #tpu.memory_space<vmem>>, vector<1x1x128xf32>
    %615 = vector.shape_cast %614 : vector<1x1x128xf32> to vector<1x128xf32>
    %616 = vector.shape_cast %613 : vector<1x128xf32> to vector<1x1x128xf32>
    tpu.vector_store %arg12[%c6_644, %c1_645, %c0_646], %616 {strides = array<i32>} : memref<7x7x128xf32, #tpu.memory_space<vmem>>, vector<1x1x128xf32>,
    %c12_647 = arith.constant 12 : index
    %c4_648 = arith.constant 4 : index
    %c0_649 = arith.constant 0 : index
    %617 = vector.load %arg11[%c12_647, %c4_648, %c0_649] : memref<14x14x128xf32, #tpu.memory_space<vmem>>, vector<1x1x128xf32>
    %618 = vector.shape_cast %617 : vector<1x1x128xf32> to vector<1x128xf32>
    %c12_650 = arith.constant 12 : index
    %c5_651 = arith.constant 5 : index
    %c0_652 = arith.constant 0 : index
    %619 = vector.load %arg11[%c12_650, %c5_651, %c0_652] : memref<14x14x128xf32, #tpu.memory_space<vmem>>, vector<1x1x128xf32>
    %620 = vector.shape_cast %619 : vector<1x1x128xf32> to vector<1x128xf32>
    %c13_653 = arith.constant 13 : index
    %c4_654 = arith.constant 4 : index
    %c0_655 = arith.constant 0 : index
    %621 = vector.load %arg11[%c13_653, %c4_654, %c0_655] : memref<14x14x128xf32, #tpu.memory_space<vmem>>, vector<1x1x128xf32>
    %622 = vector.shape_cast %621 : vector<1x1x128xf32> to vector<1x128xf32>
    %c13_656 = arith.constant 13 : index
    %c5_657 = arith.constant 5 : index
    %c0_658 = arith.constant 0 : index
    %623 = vector.load %arg11[%c13_656, %c5_657, %c0_658] : memref<14x14x128xf32, #tpu.memory_space<vmem>>, vector<1x1x128xf32>
    %624 = vector.shape_cast %623 : vector<1x1x128xf32> to vector<1x128xf32>
    %625 = arith.maximumf %618, %620 : vector<1x128xf32>
    %626 = arith.maximumf %622, %624 : vector<1x128xf32>
    %627 = arith.maximumf %625, %626 : vector<1x128xf32>
    %c6_659 = arith.constant 6 : index
    %c2_660 = arith.constant 2 : index
    %c0_661 = arith.constant 0 : index
    %628 = vector.load %arg12[%c6_659, %c2_660, %c0_661] : memref<7x7x128xf32, #tpu.memory_space<vmem>>, vector<1x1x128xf32>
    %629 = vector.shape_cast %628 : vector<1x1x128xf32> to vector<1x128xf32>
    %630 = vector.shape_cast %627 : vector<1x128xf32> to vector<1x1x128xf32>
    tpu.vector_store %arg12[%c6_659, %c2_660, %c0_661], %630 {strides = array<i32>} : memref<7x7x128xf32, #tpu.memory_space<vmem>>, vector<1x1x128xf32>,
    %c12_662 = arith.constant 12 : index
    %c6_663 = arith.constant 6 : index
    %c0_664 = arith.constant 0 : index
    %631 = vector.load %arg11[%c12_662, %c6_663, %c0_664] : memref<14x14x128xf32, #tpu.memory_space<vmem>>, vector<1x1x128xf32>
    %632 = vector.shape_cast %631 : vector<1x1x128xf32> to vector<1x128xf32>
    %c12_665 = arith.constant 12 : index
    %c7_666 = arith.constant 7 : index
    %c0_667 = arith.constant 0 : index
    %633 = vector.load %arg11[%c12_665, %c7_666, %c0_667] : memref<14x14x128xf32, #tpu.memory_space<vmem>>, vector<1x1x128xf32>
    %634 = vector.shape_cast %633 : vector<1x1x128xf32> to vector<1x128xf32>
    %c13_668 = arith.constant 13 : index
    %c6_669 = arith.constant 6 : index
    %c0_670 = arith.constant 0 : index
    %635 = vector.load %arg11[%c13_668, %c6_669, %c0_670] : memref<14x14x128xf32, #tpu.memory_space<vmem>>, vector<1x1x128xf32>
    %636 = vector.shape_cast %635 : vector<1x1x128xf32> to vector<1x128xf32>
    %c13_671 = arith.constant 13 : index
    %c7_672 = arith.constant 7 : index
    %c0_673 = arith.constant 0 : index
    %637 = vector.load %arg11[%c13_671, %c7_672, %c0_673] : memref<14x14x128xf32, #tpu.memory_space<vmem>>, vector<1x1x128xf32>
    %638 = vector.shape_cast %637 : vector<1x1x128xf32> to vector<1x128xf32>
    %639 = arith.maximumf %632, %634 : vector<1x128xf32>
    %640 = arith.maximumf %636, %638 : vector<1x128xf32>
    %641 = arith.maximumf %639, %640 : vector<1x128xf32>
    %c6_674 = arith.constant 6 : index
    %c3_675 = arith.constant 3 : index
    %c0_676 = arith.constant 0 : index
    %642 = vector.load %arg12[%c6_674, %c3_675, %c0_676] : memref<7x7x128xf32, #tpu.memory_space<vmem>>, vector<1x1x128xf32>
    %643 = vector.shape_cast %642 : vector<1x1x128xf32> to vector<1x128xf32>
    %644 = vector.shape_cast %641 : vector<1x128xf32> to vector<1x1x128xf32>
    tpu.vector_store %arg12[%c6_674, %c3_675, %c0_676], %644 {strides = array<i32>} : memref<7x7x128xf32, #tpu.memory_space<vmem>>, vector<1x1x128xf32>,
    %c12_677 = arith.constant 12 : index
    %c8_678 = arith.constant 8 : index
    %c0_679 = arith.constant 0 : index
    %645 = vector.load %arg11[%c12_677, %c8_678, %c0_679] : memref<14x14x128xf32, #tpu.memory_space<vmem>>, vector<1x1x128xf32>
    %646 = vector.shape_cast %645 : vector<1x1x128xf32> to vector<1x128xf32>
    %c12_680 = arith.constant 12 : index
    %c9_681 = arith.constant 9 : index
    %c0_682 = arith.constant 0 : index
    %647 = vector.load %arg11[%c12_680, %c9_681, %c0_682] : memref<14x14x128xf32, #tpu.memory_space<vmem>>, vector<1x1x128xf32>
    %648 = vector.shape_cast %647 : vector<1x1x128xf32> to vector<1x128xf32>
    %c13_683 = arith.constant 13 : index
    %c8_684 = arith.constant 8 : index
    %c0_685 = arith.constant 0 : index
    %649 = vector.load %arg11[%c13_683, %c8_684, %c0_685] : memref<14x14x128xf32, #tpu.memory_space<vmem>>, vector<1x1x128xf32>
    %650 = vector.shape_cast %649 : vector<1x1x128xf32> to vector<1x128xf32>
    %c13_686 = arith.constant 13 : index
    %c9_687 = arith.constant 9 : index
    %c0_688 = arith.constant 0 : index
    %651 = vector.load %arg11[%c13_686, %c9_687, %c0_688] : memref<14x14x128xf32, #tpu.memory_space<vmem>>, vector<1x1x128xf32>
    %652 = vector.shape_cast %651 : vector<1x1x128xf32> to vector<1x128xf32>
    %653 = arith.maximumf %646, %648 : vector<1x128xf32>
    %654 = arith.maximumf %650, %652 : vector<1x128xf32>
    %655 = arith.maximumf %653, %654 : vector<1x128xf32>
    %c6_689 = arith.constant 6 : index
    %c4_690 = arith.constant 4 : index
    %c0_691 = arith.constant 0 : index
    %656 = vector.load %arg12[%c6_689, %c4_690, %c0_691] : memref<7x7x128xf32, #tpu.memory_space<vmem>>, vector<1x1x128xf32>
    %657 = vector.shape_cast %656 : vector<1x1x128xf32> to vector<1x128xf32>
    %658 = vector.shape_cast %655 : vector<1x128xf32> to vector<1x1x128xf32>
    tpu.vector_store %arg12[%c6_689, %c4_690, %c0_691], %658 {strides = array<i32>} : memref<7x7x128xf32, #tpu.memory_space<vmem>>, vector<1x1x128xf32>,
    %c12_692 = arith.constant 12 : index
    %c10_693 = arith.constant 10 : index
    %c0_694 = arith.constant 0 : index
    %659 = vector.load %arg11[%c12_692, %c10_693, %c0_694] : memref<14x14x128xf32, #tpu.memory_space<vmem>>, vector<1x1x128xf32>
    %660 = vector.shape_cast %659 : vector<1x1x128xf32> to vector<1x128xf32>
    %c12_695 = arith.constant 12 : index
    %c11_696 = arith.constant 11 : index
    %c0_697 = arith.constant 0 : index
    %661 = vector.load %arg11[%c12_695, %c11_696, %c0_697] : memref<14x14x128xf32, #tpu.memory_space<vmem>>, vector<1x1x128xf32>
    %662 = vector.shape_cast %661 : vector<1x1x128xf32> to vector<1x128xf32>
    %c13_698 = arith.constant 13 : index
    %c10_699 = arith.constant 10 : index
    %c0_700 = arith.constant 0 : index
    %663 = vector.load %arg11[%c13_698, %c10_699, %c0_700] : memref<14x14x128xf32, #tpu.memory_space<vmem>>, vector<1x1x128xf32>
    %664 = vector.shape_cast %663 : vector<1x1x128xf32> to vector<1x128xf32>
    %c13_701 = arith.constant 13 : index
    %c11_702 = arith.constant 11 : index
    %c0_703 = arith.constant 0 : index
    %665 = vector.load %arg11[%c13_701, %c11_702, %c0_703] : memref<14x14x128xf32, #tpu.memory_space<vmem>>, vector<1x1x128xf32>
    %666 = vector.shape_cast %665 : vector<1x1x128xf32> to vector<1x128xf32>
    %667 = arith.maximumf %660, %662 : vector<1x128xf32>
    %668 = arith.maximumf %664, %666 : vector<1x128xf32>
    %669 = arith.maximumf %667, %668 : vector<1x128xf32>
    %c6_704 = arith.constant 6 : index
    %c5_705 = arith.constant 5 : index
    %c0_706 = arith.constant 0 : index
    %670 = vector.load %arg12[%c6_704, %c5_705, %c0_706] : memref<7x7x128xf32, #tpu.memory_space<vmem>>, vector<1x1x128xf32>
    %671 = vector.shape_cast %670 : vector<1x1x128xf32> to vector<1x128xf32>
    %672 = vector.shape_cast %669 : vector<1x128xf32> to vector<1x1x128xf32>
    tpu.vector_store %arg12[%c6_704, %c5_705, %c0_706], %672 {strides = array<i32>} : memref<7x7x128xf32, #tpu.memory_space<vmem>>, vector<1x1x128xf32>,
    %c12_707 = arith.constant 12 : index
    %c12_708 = arith.constant 12 : index
    %c0_709 = arith.constant 0 : index
    %673 = vector.load %arg11[%c12_707, %c12_708, %c0_709] : memref<14x14x128xf32, #tpu.memory_space<vmem>>, vector<1x1x128xf32>
    %674 = vector.shape_cast %673 : vector<1x1x128xf32> to vector<1x128xf32>
    %c12_710 = arith.constant 12 : index
    %c13_711 = arith.constant 13 : index
    %c0_712 = arith.constant 0 : index
    %675 = vector.load %arg11[%c12_710, %c13_711, %c0_712] : memref<14x14x128xf32, #tpu.memory_space<vmem>>, vector<1x1x128xf32>
    %676 = vector.shape_cast %675 : vector<1x1x128xf32> to vector<1x128xf32>
    %c13_713 = arith.constant 13 : index
    %c12_714 = arith.constant 12 : index
    %c0_715 = arith.constant 0 : index
    %677 = vector.load %arg11[%c13_713, %c12_714, %c0_715] : memref<14x14x128xf32, #tpu.memory_space<vmem>>, vector<1x1x128xf32>
    %678 = vector.shape_cast %677 : vector<1x1x128xf32> to vector<1x128xf32>
    %c13_716 = arith.constant 13 : index
    %c13_717 = arith.constant 13 : index
    %c0_718 = arith.constant 0 : index
    %679 = vector.load %arg11[%c13_716, %c13_717, %c0_718] : memref<14x14x128xf32, #tpu.memory_space<vmem>>, vector<1x1x128xf32>
    %680 = vector.shape_cast %679 : vector<1x1x128xf32> to vector<1x128xf32>
    %681 = arith.maximumf %674, %676 : vector<1x128xf32>
    %682 = arith.maximumf %678, %680 : vector<1x128xf32>
    %683 = arith.maximumf %681, %682 : vector<1x128xf32>
    %c6_719 = arith.constant 6 : index
    %c6_720 = arith.constant 6 : index
    %c0_721 = arith.constant 0 : index
    %684 = vector.load %arg12[%c6_719, %c6_720, %c0_721] : memref<7x7x128xf32, #tpu.memory_space<vmem>>, vector<1x1x128xf32>
    %685 = vector.shape_cast %684 : vector<1x1x128xf32> to vector<1x128xf32>
    %686 = vector.shape_cast %683 : vector<1x128xf32> to vector<1x1x128xf32>
    tpu.vector_store %arg12[%c6_719, %c6_720, %c0_721], %686 {strides = array<i32>} : memref<7x7x128xf32, #tpu.memory_space<vmem>>, vector<1x1x128xf32>,
    %c0_i32_722 = arith.constant 0 : i32
    %c5_i32 = arith.constant 5 : i32
    %687 = arith.addi %c0_i32_722, %c5_i32 : i32
    %c1_i32_723 = arith.constant 1 : i32
    scf.for %arg16 = %c0_i32_722 to %687 step %c1_i32_723  : i32 {
      %cst_799 = arith.constant 0.000000e+00 : f32
      %750 = vector.broadcast %cst_799 : f32 to vector<5x128xf32>
      %c0_i32_800 = arith.constant 0 : i32
      %751 = arith.addi %arg16, %c0_i32_800 : i32
      %752 = arith.index_cast %751 : i32 to index
      %c0_801 = arith.constant 0 : index
      %c0_802 = arith.constant 0 : index
      %753 = vector.load %arg12[%752, %c0_801, %c0_802] : memref<7x7x128xf32, #tpu.memory_space<vmem>>, vector<1x5x128xf32>
      %754 = vector.shape_cast %753 : vector<1x5x128xf32> to vector<5x128xf32>
      %755 = arith.truncf %754 : vector<5x128xf32> to vector<5x128xbf16>
      %c0_803 = arith.constant 0 : index
      %c0_804 = arith.constant 0 : index
      %c0_805 = arith.constant 0 : index
      %c0_806 = arith.constant 0 : index
      %756 = vector.load %arg4[%c0_803, %c0_804, %c0_805, %c0_806] : memref<3x3x128x128xbf16, #tpu.memory_space<vmem>>, vector<1x1x128x128xbf16>
      %757 = vector.shape_cast %756 : vector<1x1x128x128xbf16> to vector<128x128xbf16>
      %cst_807 = arith.constant dense<0.000000e+00> : vector<5x128xf32>
      %758 = tpu.matmul %755, %757, %cst_807 {dimension_numbers = #tpu.dot_dimension_numbers<[1], [0], [0], [1], [0, 0, 1, 1], [], []>} : vector<5x128xbf16>, vector<128x128xbf16>, vector<5x128xf32> -> vector<5x128xf32>
      %759 = arith.addf %750, %758 : vector<5x128xf32>
      %c0_i32_808 = arith.constant 0 : i32
      %760 = arith.addi %arg16, %c0_i32_808 : i32
      %761 = arith.index_cast %760 : i32 to index
      %c1_809 = arith.constant 1 : index
      %c0_810 = arith.constant 0 : index
      %762 = vector.load %arg12[%761, %c1_809, %c0_810] : memref<7x7x128xf32, #tpu.memory_space<vmem>>, vector<1x5x128xf32>
      %763 = vector.shape_cast %762 : vector<1x5x128xf32> to vector<5x128xf32>
      %764 = arith.truncf %763 : vector<5x128xf32> to vector<5x128xbf16>
      %c0_811 = arith.constant 0 : index
      %c1_812 = arith.constant 1 : index
      %c0_813 = arith.constant 0 : index
      %c0_814 = arith.constant 0 : index
      %765 = vector.load %arg4[%c0_811, %c1_812, %c0_813, %c0_814] : memref<3x3x128x128xbf16, #tpu.memory_space<vmem>>, vector<1x1x128x128xbf16>
      %766 = vector.shape_cast %765 : vector<1x1x128x128xbf16> to vector<128x128xbf16>
      %cst_815 = arith.constant dense<0.000000e+00> : vector<5x128xf32>
      %767 = tpu.matmul %764, %766, %cst_815 {dimension_numbers = #tpu.dot_dimension_numbers<[1], [0], [0], [1], [0, 0, 1, 1], [], []>} : vector<5x128xbf16>, vector<128x128xbf16>, vector<5x128xf32> -> vector<5x128xf32>
      %768 = arith.addf %759, %767 : vector<5x128xf32>
      %c0_i32_816 = arith.constant 0 : i32
      %769 = arith.addi %arg16, %c0_i32_816 : i32
      %770 = arith.index_cast %769 : i32 to index
      %c2_817 = arith.constant 2 : index
      %c0_818 = arith.constant 0 : index
      %771 = vector.load %arg12[%770, %c2_817, %c0_818] : memref<7x7x128xf32, #tpu.memory_space<vmem>>, vector<1x5x128xf32>
      %772 = vector.shape_cast %771 : vector<1x5x128xf32> to vector<5x128xf32>
      %773 = arith.truncf %772 : vector<5x128xf32> to vector<5x128xbf16>
      %c0_819 = arith.constant 0 : index
      %c2_820 = arith.constant 2 : index
      %c0_821 = arith.constant 0 : index
      %c0_822 = arith.constant 0 : index
      %774 = vector.load %arg4[%c0_819, %c2_820, %c0_821, %c0_822] : memref<3x3x128x128xbf16, #tpu.memory_space<vmem>>, vector<1x1x128x128xbf16>
      %775 = vector.shape_cast %774 : vector<1x1x128x128xbf16> to vector<128x128xbf16>
      %cst_823 = arith.constant dense<0.000000e+00> : vector<5x128xf32>
      %776 = tpu.matmul %773, %775, %cst_823 {dimension_numbers = #tpu.dot_dimension_numbers<[1], [0], [0], [1], [0, 0, 1, 1], [], []>} : vector<5x128xbf16>, vector<128x128xbf16>, vector<5x128xf32> -> vector<5x128xf32>
      %777 = arith.addf %768, %776 : vector<5x128xf32>
      %c1_i32_824 = arith.constant 1 : i32
      %778 = arith.addi %arg16, %c1_i32_824 : i32
      %779 = arith.index_cast %778 : i32 to index
      %c0_825 = arith.constant 0 : index
      %c0_826 = arith.constant 0 : index
      %780 = vector.load %arg12[%779, %c0_825, %c0_826] : memref<7x7x128xf32, #tpu.memory_space<vmem>>, vector<1x5x128xf32>
      %781 = vector.shape_cast %780 : vector<1x5x128xf32> to vector<5x128xf32>
      %782 = arith.truncf %781 : vector<5x128xf32> to vector<5x128xbf16>
      %c1_827 = arith.constant 1 : index
      %c0_828 = arith.constant 0 : index
      %c0_829 = arith.constant 0 : index
      %c0_830 = arith.constant 0 : index
      %783 = vector.load %arg4[%c1_827, %c0_828, %c0_829, %c0_830] : memref<3x3x128x128xbf16, #tpu.memory_space<vmem>>, vector<1x1x128x128xbf16>
      %784 = vector.shape_cast %783 : vector<1x1x128x128xbf16> to vector<128x128xbf16>
      %cst_831 = arith.constant dense<0.000000e+00> : vector<5x128xf32>
      %785 = tpu.matmul %782, %784, %cst_831 {dimension_numbers = #tpu.dot_dimension_numbers<[1], [0], [0], [1], [0, 0, 1, 1], [], []>} : vector<5x128xbf16>, vector<128x128xbf16>, vector<5x128xf32> -> vector<5x128xf32>
      %786 = arith.addf %777, %785 : vector<5x128xf32>
      %c1_i32_832 = arith.constant 1 : i32
      %787 = arith.addi %arg16, %c1_i32_832 : i32
      %788 = arith.index_cast %787 : i32 to index
      %c1_833 = arith.constant 1 : index
      %c0_834 = arith.constant 0 : index
      %789 = vector.load %arg12[%788, %c1_833, %c0_834] : memref<7x7x128xf32, #tpu.memory_space<vmem>>, vector<1x5x128xf32>
      %790 = vector.shape_cast %789 : vector<1x5x128xf32> to vector<5x128xf32>
      %791 = arith.truncf %790 : vector<5x128xf32> to vector<5x128xbf16>
      %c1_835 = arith.constant 1 : index
      %c1_836 = arith.constant 1 : index
      %c0_837 = arith.constant 0 : index
      %c0_838 = arith.constant 0 : index
      %792 = vector.load %arg4[%c1_835, %c1_836, %c0_837, %c0_838] : memref<3x3x128x128xbf16, #tpu.memory_space<vmem>>, vector<1x1x128x128xbf16>
      %793 = vector.shape_cast %792 : vector<1x1x128x128xbf16> to vector<128x128xbf16>
      %cst_839 = arith.constant dense<0.000000e+00> : vector<5x128xf32>
      %794 = tpu.matmul %791, %793, %cst_839 {dimension_numbers = #tpu.dot_dimension_numbers<[1], [0], [0], [1], [0, 0, 1, 1], [], []>} : vector<5x128xbf16>, vector<128x128xbf16>, vector<5x128xf32> -> vector<5x128xf32>
      %795 = arith.addf %786, %794 : vector<5x128xf32>
      %c1_i32_840 = arith.constant 1 : i32
      %796 = arith.addi %arg16, %c1_i32_840 : i32
      %797 = arith.index_cast %796 : i32 to index
      %c2_841 = arith.constant 2 : index
      %c0_842 = arith.constant 0 : index
      %798 = vector.load %arg12[%797, %c2_841, %c0_842] : memref<7x7x128xf32, #tpu.memory_space<vmem>>, vector<1x5x128xf32>
      %799 = vector.shape_cast %798 : vector<1x5x128xf32> to vector<5x128xf32>
      %800 = arith.truncf %799 : vector<5x128xf32> to vector<5x128xbf16>
      %c1_843 = arith.constant 1 : index
      %c2_844 = arith.constant 2 : index
      %c0_845 = arith.constant 0 : index
      %c0_846 = arith.constant 0 : index
      %801 = vector.load %arg4[%c1_843, %c2_844, %c0_845, %c0_846] : memref<3x3x128x128xbf16, #tpu.memory_space<vmem>>, vector<1x1x128x128xbf16>
      %802 = vector.shape_cast %801 : vector<1x1x128x128xbf16> to vector<128x128xbf16>
      %cst_847 = arith.constant dense<0.000000e+00> : vector<5x128xf32>
      %803 = tpu.matmul %800, %802, %cst_847 {dimension_numbers = #tpu.dot_dimension_numbers<[1], [0], [0], [1], [0, 0, 1, 1], [], []>} : vector<5x128xbf16>, vector<128x128xbf16>, vector<5x128xf32> -> vector<5x128xf32>
      %804 = arith.addf %795, %803 : vector<5x128xf32>
      %c2_i32_848 = arith.constant 2 : i32
      %805 = arith.addi %arg16, %c2_i32_848 : i32
      %806 = arith.index_cast %805 : i32 to index
      %c0_849 = arith.constant 0 : index
      %c0_850 = arith.constant 0 : index
      %807 = vector.load %arg12[%806, %c0_849, %c0_850] : memref<7x7x128xf32, #tpu.memory_space<vmem>>, vector<1x5x128xf32>
      %808 = vector.shape_cast %807 : vector<1x5x128xf32> to vector<5x128xf32>
      %809 = arith.truncf %808 : vector<5x128xf32> to vector<5x128xbf16>
      %c2_851 = arith.constant 2 : index
      %c0_852 = arith.constant 0 : index
      %c0_853 = arith.constant 0 : index
      %c0_854 = arith.constant 0 : index
      %810 = vector.load %arg4[%c2_851, %c0_852, %c0_853, %c0_854] : memref<3x3x128x128xbf16, #tpu.memory_space<vmem>>, vector<1x1x128x128xbf16>
      %811 = vector.shape_cast %810 : vector<1x1x128x128xbf16> to vector<128x128xbf16>
      %cst_855 = arith.constant dense<0.000000e+00> : vector<5x128xf32>
      %812 = tpu.matmul %809, %811, %cst_855 {dimension_numbers = #tpu.dot_dimension_numbers<[1], [0], [0], [1], [0, 0, 1, 1], [], []>} : vector<5x128xbf16>, vector<128x128xbf16>, vector<5x128xf32> -> vector<5x128xf32>
      %813 = arith.addf %804, %812 : vector<5x128xf32>
      %c2_i32_856 = arith.constant 2 : i32
      %814 = arith.addi %arg16, %c2_i32_856 : i32
      %815 = arith.index_cast %814 : i32 to index
      %c1_857 = arith.constant 1 : index
      %c0_858 = arith.constant 0 : index
      %816 = vector.load %arg12[%815, %c1_857, %c0_858] : memref<7x7x128xf32, #tpu.memory_space<vmem>>, vector<1x5x128xf32>
      %817 = vector.shape_cast %816 : vector<1x5x128xf32> to vector<5x128xf32>
      %818 = arith.truncf %817 : vector<5x128xf32> to vector<5x128xbf16>
      %c2_859 = arith.constant 2 : index
      %c1_860 = arith.constant 1 : index
      %c0_861 = arith.constant 0 : index
      %c0_862 = arith.constant 0 : index
      %819 = vector.load %arg4[%c2_859, %c1_860, %c0_861, %c0_862] : memref<3x3x128x128xbf16, #tpu.memory_space<vmem>>, vector<1x1x128x128xbf16>
      %820 = vector.shape_cast %819 : vector<1x1x128x128xbf16> to vector<128x128xbf16>
      %cst_863 = arith.constant dense<0.000000e+00> : vector<5x128xf32>
      %821 = tpu.matmul %818, %820, %cst_863 {dimension_numbers = #tpu.dot_dimension_numbers<[1], [0], [0], [1], [0, 0, 1, 1], [], []>} : vector<5x128xbf16>, vector<128x128xbf16>, vector<5x128xf32> -> vector<5x128xf32>
      %822 = arith.addf %813, %821 : vector<5x128xf32>
      %c2_i32_864 = arith.constant 2 : i32
      %823 = arith.addi %arg16, %c2_i32_864 : i32
      %824 = arith.index_cast %823 : i32 to index
      %c2_865 = arith.constant 2 : index
      %c0_866 = arith.constant 0 : index
      %825 = vector.load %arg12[%824, %c2_865, %c0_866] : memref<7x7x128xf32, #tpu.memory_space<vmem>>, vector<1x5x128xf32>
      %826 = vector.shape_cast %825 : vector<1x5x128xf32> to vector<5x128xf32>
      %827 = arith.truncf %826 : vector<5x128xf32> to vector<5x128xbf16>
      %c2_867 = arith.constant 2 : index
      %c2_868 = arith.constant 2 : index
      %c0_869 = arith.constant 0 : index
      %c0_870 = arith.constant 0 : index
      %828 = vector.load %arg4[%c2_867, %c2_868, %c0_869, %c0_870] : memref<3x3x128x128xbf16, #tpu.memory_space<vmem>>, vector<1x1x128x128xbf16>
      %829 = vector.shape_cast %828 : vector<1x1x128x128xbf16> to vector<128x128xbf16>
      %cst_871 = arith.constant dense<0.000000e+00> : vector<5x128xf32>
      %830 = tpu.matmul %827, %829, %cst_871 {dimension_numbers = #tpu.dot_dimension_numbers<[1], [0], [0], [1], [0, 0, 1, 1], [], []>} : vector<5x128xbf16>, vector<128x128xbf16>, vector<5x128xf32> -> vector<5x128xf32>
      %831 = arith.addf %822, %830 : vector<5x128xf32>
      %c0_872 = arith.constant 0 : index
      %c0_873 = arith.constant 0 : index
      %832 = vector.load %arg5[%c0_872, %c0_873] : memref<1x128xf32, #tpu.memory_space<vmem>>, vector<1x128xf32>
      %833 = vector.broadcast %832 : vector<1x128xf32> to vector<5x128xf32>
      %834 = arith.addf %831, %833 : vector<5x128xf32>
      %cst_874 = arith.constant 0.000000e+00 : f32
      %835 = vector.broadcast %cst_874 : f32 to vector<5x128xf32>
      %836 = arith.maximumf %834, %835 : vector<5x128xf32>
      %c0_i32_875 = arith.constant 0 : i32
      %837 = arith.addi %c0_i32_875, %arg16 : i32
      %838 = arith.index_cast %837 : i32 to index
      %c0_876 = arith.constant 0 : index
      %c0_877 = arith.constant 0 : index
      %839 = vector.load %arg13[%838, %c0_876, %c0_877] : memref<5x5x128xf32, #tpu.memory_space<vmem>>, vector<1x5x128xf32>
      %840 = vector.shape_cast %839 : vector<1x5x128xf32> to vector<5x128xf32>
      %841 = vector.shape_cast %836 : vector<5x128xf32> to vector<1x5x128xf32>
      tpu.vector_store %arg13[%838, %c0_876, %c0_877], %841 {strides = array<i32>} : memref<5x5x128xf32, #tpu.memory_space<vmem>>, vector<1x5x128xf32>,
    }
    %c5_i32_724 = arith.constant 5 : i32
    %cst = arith.constant 0.000000e+00 : f32
    %688 = vector.broadcast %cst : f32 to vector<4x4x128xf32>
    %c0_725 = arith.constant 0 : index
    %c0_726 = arith.constant 0 : index
    %c0_727 = arith.constant 0 : index
    %689 = vector.load %arg14[%c0_725, %c0_726, %c0_727] : memref<4x4x128xf32, #tpu.memory_space<vmem>>, vector<4x4x128xf32>
    tpu.vector_store %arg14[%c0_725, %c0_726, %c0_727], %688 {strides = array<i32>} : memref<4x4x128xf32, #tpu.memory_space<vmem>>, vector<4x4x128xf32>,
    %c0_728 = arith.constant 0 : index
    %c0_729 = arith.constant 0 : index
    %c0_730 = arith.constant 0 : index
    %690 = vector.load %arg13[%c0_728, %c0_729, %c0_730] : memref<5x5x128xf32, #tpu.memory_space<vmem>>, vector<1x1x128xf32>
    %691 = vector.shape_cast %690 : vector<1x1x128xf32> to vector<1x128xf32>
    %c0_731 = arith.constant 0 : index
    %c1_732 = arith.constant 1 : index
    %c0_733 = arith.constant 0 : index
    %692 = vector.load %arg13[%c0_731, %c1_732, %c0_733] : memref<5x5x128xf32, #tpu.memory_space<vmem>>, vector<1x1x128xf32>
    %693 = vector.shape_cast %692 : vector<1x1x128xf32> to vector<1x128xf32>
    %c1_734 = arith.constant 1 : index
    %c0_735 = arith.constant 0 : index
    %c0_736 = arith.constant 0 : index
    %694 = vector.load %arg13[%c1_734, %c0_735, %c0_736] : memref<5x5x128xf32, #tpu.memory_space<vmem>>, vector<1x1x128xf32>
    %695 = vector.shape_cast %694 : vector<1x1x128xf32> to vector<1x128xf32>
    %c1_737 = arith.constant 1 : index
    %c1_738 = arith.constant 1 : index
    %c0_739 = arith.constant 0 : index
    %696 = vector.load %arg13[%c1_737, %c1_738, %c0_739] : memref<5x5x128xf32, #tpu.memory_space<vmem>>, vector<1x1x128xf32>
    %697 = vector.shape_cast %696 : vector<1x1x128xf32> to vector<1x128xf32>
    %698 = arith.maximumf %691, %693 : vector<1x128xf32>
    %699 = arith.maximumf %695, %697 : vector<1x128xf32>
    %700 = arith.maximumf %698, %699 : vector<1x128xf32>
    %c1_740 = arith.constant 1 : index
    %c1_741 = arith.constant 1 : index
    %c0_742 = arith.constant 0 : index
    %701 = vector.load %arg14[%c1_740, %c1_741, %c0_742] : memref<4x4x128xf32, #tpu.memory_space<vmem>>, vector<1x1x128xf32>
    %702 = vector.shape_cast %701 : vector<1x1x128xf32> to vector<1x128xf32>
    %703 = vector.shape_cast %700 : vector<1x128xf32> to vector<1x1x128xf32>
    tpu.vector_store %arg14[%c1_740, %c1_741, %c0_742], %703 {strides = array<i32>} : memref<4x4x128xf32, #tpu.memory_space<vmem>>, vector<1x1x128xf32>,
    %c0_743 = arith.constant 0 : index
    %c2_744 = arith.constant 2 : index
    %c0_745 = arith.constant 0 : index
    %704 = vector.load %arg13[%c0_743, %c2_744, %c0_745] : memref<5x5x128xf32, #tpu.memory_space<vmem>>, vector<1x1x128xf32>
    %705 = vector.shape_cast %704 : vector<1x1x128xf32> to vector<1x128xf32>
    %c0_746 = arith.constant 0 : index
    %c3_747 = arith.constant 3 : index
    %c0_748 = arith.constant 0 : index
    %706 = vector.load %arg13[%c0_746, %c3_747, %c0_748] : memref<5x5x128xf32, #tpu.memory_space<vmem>>, vector<1x1x128xf32>
    %707 = vector.shape_cast %706 : vector<1x1x128xf32> to vector<1x128xf32>
    %c1_749 = arith.constant 1 : index
    %c2_750 = arith.constant 2 : index
    %c0_751 = arith.constant 0 : index
    %708 = vector.load %arg13[%c1_749, %c2_750, %c0_751] : memref<5x5x128xf32, #tpu.memory_space<vmem>>, vector<1x1x128xf32>
    %709 = vector.shape_cast %708 : vector<1x1x128xf32> to vector<1x128xf32>
    %c1_752 = arith.constant 1 : index
    %c3_753 = arith.constant 3 : index
    %c0_754 = arith.constant 0 : index
    %710 = vector.load %arg13[%c1_752, %c3_753, %c0_754] : memref<5x5x128xf32, #tpu.memory_space<vmem>>, vector<1x1x128xf32>
    %711 = vector.shape_cast %710 : vector<1x1x128xf32> to vector<1x128xf32>
    %712 = arith.maximumf %705, %707 : vector<1x128xf32>
    %713 = arith.maximumf %709, %711 : vector<1x128xf32>
    %714 = arith.maximumf %712, %713 : vector<1x128xf32>
    %c1_755 = arith.constant 1 : index
    %c2_756 = arith.constant 2 : index
    %c0_757 = arith.constant 0 : index
    %715 = vector.load %arg14[%c1_755, %c2_756, %c0_757] : memref<4x4x128xf32, #tpu.memory_space<vmem>>, vector<1x1x128xf32>
    %716 = vector.shape_cast %715 : vector<1x1x128xf32> to vector<1x128xf32>
    %717 = vector.shape_cast %714 : vector<1x128xf32> to vector<1x1x128xf32>
    tpu.vector_store %arg14[%c1_755, %c2_756, %c0_757], %717 {strides = array<i32>} : memref<4x4x128xf32, #tpu.memory_space<vmem>>, vector<1x1x128xf32>,
    %c2_758 = arith.constant 2 : index
    %c0_759 = arith.constant 0 : index
    %c0_760 = arith.constant 0 : index
    %718 = vector.load %arg13[%c2_758, %c0_759, %c0_760] : memref<5x5x128xf32, #tpu.memory_space<vmem>>, vector<1x1x128xf32>
    %719 = vector.shape_cast %718 : vector<1x1x128xf32> to vector<1x128xf32>
    %c2_761 = arith.constant 2 : index
    %c1_762 = arith.constant 1 : index
    %c0_763 = arith.constant 0 : index
    %720 = vector.load %arg13[%c2_761, %c1_762, %c0_763] : memref<5x5x128xf32, #tpu.memory_space<vmem>>, vector<1x1x128xf32>
    %721 = vector.shape_cast %720 : vector<1x1x128xf32> to vector<1x128xf32>
    %c3_764 = arith.constant 3 : index
    %c0_765 = arith.constant 0 : index
    %c0_766 = arith.constant 0 : index
    %722 = vector.load %arg13[%c3_764, %c0_765, %c0_766] : memref<5x5x128xf32, #tpu.memory_space<vmem>>, vector<1x1x128xf32>
    %723 = vector.shape_cast %722 : vector<1x1x128xf32> to vector<1x128xf32>
    %c3_767 = arith.constant 3 : index
    %c1_768 = arith.constant 1 : index
    %c0_769 = arith.constant 0 : index
    %724 = vector.load %arg13[%c3_767, %c1_768, %c0_769] : memref<5x5x128xf32, #tpu.memory_space<vmem>>, vector<1x1x128xf32>
    %725 = vector.shape_cast %724 : vector<1x1x128xf32> to vector<1x128xf32>
    %726 = arith.maximumf %719, %721 : vector<1x128xf32>
    %727 = arith.maximumf %723, %725 : vector<1x128xf32>
    %728 = arith.maximumf %726, %727 : vector<1x128xf32>
    %c2_770 = arith.constant 2 : index
    %c1_771 = arith.constant 1 : index
    %c0_772 = arith.constant 0 : index
    %729 = vector.load %arg14[%c2_770, %c1_771, %c0_772] : memref<4x4x128xf32, #tpu.memory_space<vmem>>, vector<1x1x128xf32>
    %730 = vector.shape_cast %729 : vector<1x1x128xf32> to vector<1x128xf32>
    %731 = vector.shape_cast %728 : vector<1x128xf32> to vector<1x1x128xf32>
    tpu.vector_store %arg14[%c2_770, %c1_771, %c0_772], %731 {strides = array<i32>} : memref<4x4x128xf32, #tpu.memory_space<vmem>>, vector<1x1x128xf32>,
    %c2_773 = arith.constant 2 : index
    %c2_774 = arith.constant 2 : index
    %c0_775 = arith.constant 0 : index
    %732 = vector.load %arg13[%c2_773, %c2_774, %c0_775] : memref<5x5x128xf32, #tpu.memory_space<vmem>>, vector<1x1x128xf32>
    %733 = vector.shape_cast %732 : vector<1x1x128xf32> to vector<1x128xf32>
    %c2_776 = arith.constant 2 : index
    %c3_777 = arith.constant 3 : index
    %c0_778 = arith.constant 0 : index
    %734 = vector.load %arg13[%c2_776, %c3_777, %c0_778] : memref<5x5x128xf32, #tpu.memory_space<vmem>>, vector<1x1x128xf32>
    %735 = vector.shape_cast %734 : vector<1x1x128xf32> to vector<1x128xf32>
    %c3_779 = arith.constant 3 : index
    %c2_780 = arith.constant 2 : index
    %c0_781 = arith.constant 0 : index
    %736 = vector.load %arg13[%c3_779, %c2_780, %c0_781] : memref<5x5x128xf32, #tpu.memory_space<vmem>>, vector<1x1x128xf32>
    %737 = vector.shape_cast %736 : vector<1x1x128xf32> to vector<1x128xf32>
    %c3_782 = arith.constant 3 : index
    %c3_783 = arith.constant 3 : index
    %c0_784 = arith.constant 0 : index
    %738 = vector.load %arg13[%c3_782, %c3_783, %c0_784] : memref<5x5x128xf32, #tpu.memory_space<vmem>>, vector<1x1x128xf32>
    %739 = vector.shape_cast %738 : vector<1x1x128xf32> to vector<1x128xf32>
    %740 = arith.maximumf %733, %735 : vector<1x128xf32>
    %741 = arith.maximumf %737, %739 : vector<1x128xf32>
    %742 = arith.maximumf %740, %741 : vector<1x128xf32>
    %c2_785 = arith.constant 2 : index
    %c2_786 = arith.constant 2 : index
    %c0_787 = arith.constant 0 : index
    %743 = vector.load %arg14[%c2_785, %c2_786, %c0_787] : memref<4x4x128xf32, #tpu.memory_space<vmem>>, vector<1x1x128xf32>
    %744 = vector.shape_cast %743 : vector<1x1x128xf32> to vector<1x128xf32>
    %745 = vector.shape_cast %742 : vector<1x128xf32> to vector<1x1x128xf32>
    tpu.vector_store %arg14[%c2_785, %c2_786, %c0_787], %745 {strides = array<i32>} : memref<4x4x128xf32, #tpu.memory_space<vmem>>, vector<1x1x128xf32>,
    %cst_788 = arith.constant 0.000000e+00 : f32
    %746 = vector.broadcast %cst_788 : f32 to vector<4x4x128xf32>
    %c0_789 = arith.constant 0 : index
    %c0_790 = arith.constant 0 : index
    %c0_791 = arith.constant 0 : index
    %747 = vector.load %arg15[%c0_789, %c0_790, %c0_791] : memref<4x4x128xf32, #tpu.memory_space<vmem>>, vector<4x4x128xf32>
    tpu.vector_store %arg15[%c0_789, %c0_790, %c0_791], %746 {strides = array<i32>} : memref<4x4x128xf32, #tpu.memory_space<vmem>>, vector<4x4x128xf32>,
    %c0_i32_792 = arith.constant 0 : i32
    %c2_i32 = arith.constant 2 : i32
    %748 = arith.addi %c0_i32_792, %c2_i32 : i32
    %c1_i32_793 = arith.constant 1 : i32
    scf.for %arg16 = %c0_i32_792 to %748 step %c1_i32_793  : i32 {
      %cst_799 = arith.constant 0.000000e+00 : f32
      %750 = vector.broadcast %cst_799 : f32 to vector<2x128xf32>
      %c0_i32_800 = arith.constant 0 : i32
      %751 = arith.addi %arg16, %c0_i32_800 : i32
      %752 = arith.index_cast %751 : i32 to index
      %c0_801 = arith.constant 0 : index
      %c0_802 = arith.constant 0 : index
      %753 = vector.load %arg14[%752, %c0_801, %c0_802] : memref<4x4x128xf32, #tpu.memory_space<vmem>>, vector<1x2x128xf32>
      %754 = vector.shape_cast %753 : vector<1x2x128xf32> to vector<2x128xf32>
      %755 = arith.truncf %754 : vector<2x128xf32> to vector<2x128xbf16>
      %c0_803 = arith.constant 0 : index
      %c0_804 = arith.constant 0 : index
      %c0_805 = arith.constant 0 : index
      %c0_806 = arith.constant 0 : index
      %756 = vector.load %arg6[%c0_803, %c0_804, %c0_805, %c0_806] : memref<3x3x128x128xbf16, #tpu.memory_space<vmem>>, vector<1x1x128x128xbf16>
      %757 = vector.shape_cast %756 : vector<1x1x128x128xbf16> to vector<128x128xbf16>
      %cst_807 = arith.constant dense<0.000000e+00> : vector<2x128xf32>
      %758 = tpu.matmul %755, %757, %cst_807 {dimension_numbers = #tpu.dot_dimension_numbers<[1], [0], [0], [1], [0, 0, 1, 1], [], []>} : vector<2x128xbf16>, vector<128x128xbf16>, vector<2x128xf32> -> vector<2x128xf32>
      %759 = arith.addf %750, %758 : vector<2x128xf32>
      %c0_i32_808 = arith.constant 0 : i32
      %760 = arith.addi %arg16, %c0_i32_808 : i32
      %761 = arith.index_cast %760 : i32 to index
      %c1_809 = arith.constant 1 : index
      %c0_810 = arith.constant 0 : index
      %762 = vector.load %arg14[%761, %c1_809, %c0_810] : memref<4x4x128xf32, #tpu.memory_space<vmem>>, vector<1x2x128xf32>
      %763 = vector.shape_cast %762 : vector<1x2x128xf32> to vector<2x128xf32>
      %764 = arith.truncf %763 : vector<2x128xf32> to vector<2x128xbf16>
      %c0_811 = arith.constant 0 : index
      %c1_812 = arith.constant 1 : index
      %c0_813 = arith.constant 0 : index
      %c0_814 = arith.constant 0 : index
      %765 = vector.load %arg6[%c0_811, %c1_812, %c0_813, %c0_814] : memref<3x3x128x128xbf16, #tpu.memory_space<vmem>>, vector<1x1x128x128xbf16>
      %766 = vector.shape_cast %765 : vector<1x1x128x128xbf16> to vector<128x128xbf16>
      %cst_815 = arith.constant dense<0.000000e+00> : vector<2x128xf32>
      %767 = tpu.matmul %764, %766, %cst_815 {dimension_numbers = #tpu.dot_dimension_numbers<[1], [0], [0], [1], [0, 0, 1, 1], [], []>} : vector<2x128xbf16>, vector<128x128xbf16>, vector<2x128xf32> -> vector<2x128xf32>
      %768 = arith.addf %759, %767 : vector<2x128xf32>
      %c0_i32_816 = arith.constant 0 : i32
      %769 = arith.addi %arg16, %c0_i32_816 : i32
      %770 = arith.index_cast %769 : i32 to index
      %c2_817 = arith.constant 2 : index
      %c0_818 = arith.constant 0 : index
      %771 = vector.load %arg14[%770, %c2_817, %c0_818] : memref<4x4x128xf32, #tpu.memory_space<vmem>>, vector<1x2x128xf32>
      %772 = vector.shape_cast %771 : vector<1x2x128xf32> to vector<2x128xf32>
      %773 = arith.truncf %772 : vector<2x128xf32> to vector<2x128xbf16>
      %c0_819 = arith.constant 0 : index
      %c2_820 = arith.constant 2 : index
      %c0_821 = arith.constant 0 : index
      %c0_822 = arith.constant 0 : index
      %774 = vector.load %arg6[%c0_819, %c2_820, %c0_821, %c0_822] : memref<3x3x128x128xbf16, #tpu.memory_space<vmem>>, vector<1x1x128x128xbf16>
      %775 = vector.shape_cast %774 : vector<1x1x128x128xbf16> to vector<128x128xbf16>
      %cst_823 = arith.constant dense<0.000000e+00> : vector<2x128xf32>
      %776 = tpu.matmul %773, %775, %cst_823 {dimension_numbers = #tpu.dot_dimension_numbers<[1], [0], [0], [1], [0, 0, 1, 1], [], []>} : vector<2x128xbf16>, vector<128x128xbf16>, vector<2x128xf32> -> vector<2x128xf32>
      %777 = arith.addf %768, %776 : vector<2x128xf32>
      %c1_i32_824 = arith.constant 1 : i32
      %778 = arith.addi %arg16, %c1_i32_824 : i32
      %779 = arith.index_cast %778 : i32 to index
      %c0_825 = arith.constant 0 : index
      %c0_826 = arith.constant 0 : index
      %780 = vector.load %arg14[%779, %c0_825, %c0_826] : memref<4x4x128xf32, #tpu.memory_space<vmem>>, vector<1x2x128xf32>
      %781 = vector.shape_cast %780 : vector<1x2x128xf32> to vector<2x128xf32>
      %782 = arith.truncf %781 : vector<2x128xf32> to vector<2x128xbf16>
      %c1_827 = arith.constant 1 : index
      %c0_828 = arith.constant 0 : index
      %c0_829 = arith.constant 0 : index
      %c0_830 = arith.constant 0 : index
      %783 = vector.load %arg6[%c1_827, %c0_828, %c0_829, %c0_830] : memref<3x3x128x128xbf16, #tpu.memory_space<vmem>>, vector<1x1x128x128xbf16>
      %784 = vector.shape_cast %783 : vector<1x1x128x128xbf16> to vector<128x128xbf16>
      %cst_831 = arith.constant dense<0.000000e+00> : vector<2x128xf32>
      %785 = tpu.matmul %782, %784, %cst_831 {dimension_numbers = #tpu.dot_dimension_numbers<[1], [0], [0], [1], [0, 0, 1, 1], [], []>} : vector<2x128xbf16>, vector<128x128xbf16>, vector<2x128xf32> -> vector<2x128xf32>
      %786 = arith.addf %777, %785 : vector<2x128xf32>
      %c1_i32_832 = arith.constant 1 : i32
      %787 = arith.addi %arg16, %c1_i32_832 : i32
      %788 = arith.index_cast %787 : i32 to index
      %c1_833 = arith.constant 1 : index
      %c0_834 = arith.constant 0 : index
      %789 = vector.load %arg14[%788, %c1_833, %c0_834] : memref<4x4x128xf32, #tpu.memory_space<vmem>>, vector<1x2x128xf32>
      %790 = vector.shape_cast %789 : vector<1x2x128xf32> to vector<2x128xf32>
      %791 = arith.truncf %790 : vector<2x128xf32> to vector<2x128xbf16>
      %c1_835 = arith.constant 1 : index
      %c1_836 = arith.constant 1 : index
      %c0_837 = arith.constant 0 : index
      %c0_838 = arith.constant 0 : index
      %792 = vector.load %arg6[%c1_835, %c1_836, %c0_837, %c0_838] : memref<3x3x128x128xbf16, #tpu.memory_space<vmem>>, vector<1x1x128x128xbf16>
      %793 = vector.shape_cast %792 : vector<1x1x128x128xbf16> to vector<128x128xbf16>
      %cst_839 = arith.constant dense<0.000000e+00> : vector<2x128xf32>
      %794 = tpu.matmul %791, %793, %cst_839 {dimension_numbers = #tpu.dot_dimension_numbers<[1], [0], [0], [1], [0, 0, 1, 1], [], []>} : vector<2x128xbf16>, vector<128x128xbf16>, vector<2x128xf32> -> vector<2x128xf32>
      %795 = arith.addf %786, %794 : vector<2x128xf32>
      %c1_i32_840 = arith.constant 1 : i32
      %796 = arith.addi %arg16, %c1_i32_840 : i32
      %797 = arith.index_cast %796 : i32 to index
      %c2_841 = arith.constant 2 : index
      %c0_842 = arith.constant 0 : index
      %798 = vector.load %arg14[%797, %c2_841, %c0_842] : memref<4x4x128xf32, #tpu.memory_space<vmem>>, vector<1x2x128xf32>
      %799 = vector.shape_cast %798 : vector<1x2x128xf32> to vector<2x128xf32>
      %800 = arith.truncf %799 : vector<2x128xf32> to vector<2x128xbf16>
      %c1_843 = arith.constant 1 : index
      %c2_844 = arith.constant 2 : index
      %c0_845 = arith.constant 0 : index
      %c0_846 = arith.constant 0 : index
      %801 = vector.load %arg6[%c1_843, %c2_844, %c0_845, %c0_846] : memref<3x3x128x128xbf16, #tpu.memory_space<vmem>>, vector<1x1x128x128xbf16>
      %802 = vector.shape_cast %801 : vector<1x1x128x128xbf16> to vector<128x128xbf16>
      %cst_847 = arith.constant dense<0.000000e+00> : vector<2x128xf32>
      %803 = tpu.matmul %800, %802, %cst_847 {dimension_numbers = #tpu.dot_dimension_numbers<[1], [0], [0], [1], [0, 0, 1, 1], [], []>} : vector<2x128xbf16>, vector<128x128xbf16>, vector<2x128xf32> -> vector<2x128xf32>
      %804 = arith.addf %795, %803 : vector<2x128xf32>
      %c2_i32_848 = arith.constant 2 : i32
      %805 = arith.addi %arg16, %c2_i32_848 : i32
      %806 = arith.index_cast %805 : i32 to index
      %c0_849 = arith.constant 0 : index
      %c0_850 = arith.constant 0 : index
      %807 = vector.load %arg14[%806, %c0_849, %c0_850] : memref<4x4x128xf32, #tpu.memory_space<vmem>>, vector<1x2x128xf32>
      %808 = vector.shape_cast %807 : vector<1x2x128xf32> to vector<2x128xf32>
      %809 = arith.truncf %808 : vector<2x128xf32> to vector<2x128xbf16>
      %c2_851 = arith.constant 2 : index
      %c0_852 = arith.constant 0 : index
      %c0_853 = arith.constant 0 : index
      %c0_854 = arith.constant 0 : index
      %810 = vector.load %arg6[%c2_851, %c0_852, %c0_853, %c0_854] : memref<3x3x128x128xbf16, #tpu.memory_space<vmem>>, vector<1x1x128x128xbf16>
      %811 = vector.shape_cast %810 : vector<1x1x128x128xbf16> to vector<128x128xbf16>
      %cst_855 = arith.constant dense<0.000000e+00> : vector<2x128xf32>
      %812 = tpu.matmul %809, %811, %cst_855 {dimension_numbers = #tpu.dot_dimension_numbers<[1], [0], [0], [1], [0, 0, 1, 1], [], []>} : vector<2x128xbf16>, vector<128x128xbf16>, vector<2x128xf32> -> vector<2x128xf32>
      %813 = arith.addf %804, %812 : vector<2x128xf32>
      %c2_i32_856 = arith.constant 2 : i32
      %814 = arith.addi %arg16, %c2_i32_856 : i32
      %815 = arith.index_cast %814 : i32 to index
      %c1_857 = arith.constant 1 : index
      %c0_858 = arith.constant 0 : index
      %816 = vector.load %arg14[%815, %c1_857, %c0_858] : memref<4x4x128xf32, #tpu.memory_space<vmem>>, vector<1x2x128xf32>
      %817 = vector.shape_cast %816 : vector<1x2x128xf32> to vector<2x128xf32>
      %818 = arith.truncf %817 : vector<2x128xf32> to vector<2x128xbf16>
      %c2_859 = arith.constant 2 : index
      %c1_860 = arith.constant 1 : index
      %c0_861 = arith.constant 0 : index
      %c0_862 = arith.constant 0 : index
      %819 = vector.load %arg6[%c2_859, %c1_860, %c0_861, %c0_862] : memref<3x3x128x128xbf16, #tpu.memory_space<vmem>>, vector<1x1x128x128xbf16>
      %820 = vector.shape_cast %819 : vector<1x1x128x128xbf16> to vector<128x128xbf16>
      %cst_863 = arith.constant dense<0.000000e+00> : vector<2x128xf32>
      %821 = tpu.matmul %818, %820, %cst_863 {dimension_numbers = #tpu.dot_dimension_numbers<[1], [0], [0], [1], [0, 0, 1, 1], [], []>} : vector<2x128xbf16>, vector<128x128xbf16>, vector<2x128xf32> -> vector<2x128xf32>
      %822 = arith.addf %813, %821 : vector<2x128xf32>
      %c2_i32_864 = arith.constant 2 : i32
      %823 = arith.addi %arg16, %c2_i32_864 : i32
      %824 = arith.index_cast %823 : i32 to index
      %c2_865 = arith.constant 2 : index
      %c0_866 = arith.constant 0 : index
      %825 = vector.load %arg14[%824, %c2_865, %c0_866] : memref<4x4x128xf32, #tpu.memory_space<vmem>>, vector<1x2x128xf32>
      %826 = vector.shape_cast %825 : vector<1x2x128xf32> to vector<2x128xf32>
      %827 = arith.truncf %826 : vector<2x128xf32> to vector<2x128xbf16>
      %c2_867 = arith.constant 2 : index
      %c2_868 = arith.constant 2 : index
      %c0_869 = arith.constant 0 : index
      %c0_870 = arith.constant 0 : index
      %828 = vector.load %arg6[%c2_867, %c2_868, %c0_869, %c0_870] : memref<3x3x128x128xbf16, #tpu.memory_space<vmem>>, vector<1x1x128x128xbf16>
      %829 = vector.shape_cast %828 : vector<1x1x128x128xbf16> to vector<128x128xbf16>
      %cst_871 = arith.constant dense<0.000000e+00> : vector<2x128xf32>
      %830 = tpu.matmul %827, %829, %cst_871 {dimension_numbers = #tpu.dot_dimension_numbers<[1], [0], [0], [1], [0, 0, 1, 1], [], []>} : vector<2x128xbf16>, vector<128x128xbf16>, vector<2x128xf32> -> vector<2x128xf32>
      %831 = arith.addf %822, %830 : vector<2x128xf32>
      %c0_872 = arith.constant 0 : index
      %c0_873 = arith.constant 0 : index
      %832 = vector.load %arg7[%c0_872, %c0_873] : memref<1x128xf32, #tpu.memory_space<vmem>>, vector<1x128xf32>
      %833 = vector.broadcast %832 : vector<1x128xf32> to vector<2x128xf32>
      %834 = arith.addf %831, %833 : vector<2x128xf32>
      %cst_874 = arith.constant 0.000000e+00 : f32
      %835 = vector.broadcast %cst_874 : f32 to vector<2x128xf32>
      %836 = arith.maximumf %834, %835 : vector<2x128xf32>
      %c1_i32_875 = arith.constant 1 : i32
      %837 = arith.addi %c1_i32_875, %arg16 : i32
      %838 = arith.index_cast %837 : i32 to index
      %c1_876 = arith.constant 1 : index
      %c0_877 = arith.constant 0 : index
      %839 = vector.load %arg15[%838, %c1_876, %c0_877] : memref<4x4x128xf32, #tpu.memory_space<vmem>>, vector<1x2x128xf32>
      %840 = vector.shape_cast %839 : vector<1x2x128xf32> to vector<2x128xf32>
      %841 = vector.shape_cast %836 : vector<2x128xf32> to vector<1x2x128xf32>
      tpu.vector_store %arg15[%838, %c1_876, %c0_877], %841 {strides = array<i32>} : memref<4x4x128xf32, #tpu.memory_space<vmem>>, vector<1x2x128xf32>,
    }
    %c2_i32_794 = arith.constant 2 : i32
    %c0_i32_795 = arith.constant 0 : i32
    %c2_i32_796 = arith.constant 2 : i32
    %749 = arith.addi %c0_i32_795, %c2_i32_796 : i32
    %c1_i32_797 = arith.constant 1 : i32
    scf.for %arg16 = %c0_i32_795 to %749 step %c1_i32_797  : i32 {
      %cst_799 = arith.constant 0.000000e+00 : f32
      %750 = vector.broadcast %cst_799 : f32 to vector<2x128xf32>
      %c0_i32_800 = arith.constant 0 : i32
      %751 = arith.addi %arg16, %c0_i32_800 : i32
      %752 = arith.index_cast %751 : i32 to index
      %c0_801 = arith.constant 0 : index
      %c0_802 = arith.constant 0 : index
      %753 = vector.load %arg15[%752, %c0_801, %c0_802] : memref<4x4x128xf32, #tpu.memory_space<vmem>>, vector<1x2x128xf32>
      %754 = vector.shape_cast %753 : vector<1x2x128xf32> to vector<2x128xf32>
      %755 = arith.truncf %754 : vector<2x128xf32> to vector<2x128xbf16>
      %c0_803 = arith.constant 0 : index
      %c0_804 = arith.constant 0 : index
      %c0_805 = arith.constant 0 : index
      %c0_806 = arith.constant 0 : index
      %756 = vector.load %arg8[%c0_803, %c0_804, %c0_805, %c0_806] : memref<3x3x128x128xbf16, #tpu.memory_space<vmem>>, vector<1x1x128x128xbf16>
      %757 = vector.shape_cast %756 : vector<1x1x128x128xbf16> to vector<128x128xbf16>
      %cst_807 = arith.constant dense<0.000000e+00> : vector<2x128xf32>
      %758 = tpu.matmul %755, %757, %cst_807 {dimension_numbers = #tpu.dot_dimension_numbers<[1], [0], [0], [1], [0, 0, 1, 1], [], []>} : vector<2x128xbf16>, vector<128x128xbf16>, vector<2x128xf32> -> vector<2x128xf32>
      %759 = arith.addf %750, %758 : vector<2x128xf32>
      %c0_i32_808 = arith.constant 0 : i32
      %760 = arith.addi %arg16, %c0_i32_808 : i32
      %761 = arith.index_cast %760 : i32 to index
      %c1_809 = arith.constant 1 : index
      %c0_810 = arith.constant 0 : index
      %762 = vector.load %arg15[%761, %c1_809, %c0_810] : memref<4x4x128xf32, #tpu.memory_space<vmem>>, vector<1x2x128xf32>
      %763 = vector.shape_cast %762 : vector<1x2x128xf32> to vector<2x128xf32>
      %764 = arith.truncf %763 : vector<2x128xf32> to vector<2x128xbf16>
      %c0_811 = arith.constant 0 : index
      %c1_812 = arith.constant 1 : index
      %c0_813 = arith.constant 0 : index
      %c0_814 = arith.constant 0 : index
      %765 = vector.load %arg8[%c0_811, %c1_812, %c0_813, %c0_814] : memref<3x3x128x128xbf16, #tpu.memory_space<vmem>>, vector<1x1x128x128xbf16>
      %766 = vector.shape_cast %765 : vector<1x1x128x128xbf16> to vector<128x128xbf16>
      %cst_815 = arith.constant dense<0.000000e+00> : vector<2x128xf32>
      %767 = tpu.matmul %764, %766, %cst_815 {dimension_numbers = #tpu.dot_dimension_numbers<[1], [0], [0], [1], [0, 0, 1, 1], [], []>} : vector<2x128xbf16>, vector<128x128xbf16>, vector<2x128xf32> -> vector<2x128xf32>
      %768 = arith.addf %759, %767 : vector<2x128xf32>
      %c0_i32_816 = arith.constant 0 : i32
      %769 = arith.addi %arg16, %c0_i32_816 : i32
      %770 = arith.index_cast %769 : i32 to index
      %c2_817 = arith.constant 2 : index
      %c0_818 = arith.constant 0 : index
      %771 = vector.load %arg15[%770, %c2_817, %c0_818] : memref<4x4x128xf32, #tpu.memory_space<vmem>>, vector<1x2x128xf32>
      %772 = vector.shape_cast %771 : vector<1x2x128xf32> to vector<2x128xf32>
      %773 = arith.truncf %772 : vector<2x128xf32> to vector<2x128xbf16>
      %c0_819 = arith.constant 0 : index
      %c2_820 = arith.constant 2 : index
      %c0_821 = arith.constant 0 : index
      %c0_822 = arith.constant 0 : index
      %774 = vector.load %arg8[%c0_819, %c2_820, %c0_821, %c0_822] : memref<3x3x128x128xbf16, #tpu.memory_space<vmem>>, vector<1x1x128x128xbf16>
      %775 = vector.shape_cast %774 : vector<1x1x128x128xbf16> to vector<128x128xbf16>
      %cst_823 = arith.constant dense<0.000000e+00> : vector<2x128xf32>
      %776 = tpu.matmul %773, %775, %cst_823 {dimension_numbers = #tpu.dot_dimension_numbers<[1], [0], [0], [1], [0, 0, 1, 1], [], []>} : vector<2x128xbf16>, vector<128x128xbf16>, vector<2x128xf32> -> vector<2x128xf32>
      %777 = arith.addf %768, %776 : vector<2x128xf32>
      %c1_i32_824 = arith.constant 1 : i32
      %778 = arith.addi %arg16, %c1_i32_824 : i32
      %779 = arith.index_cast %778 : i32 to index
      %c0_825 = arith.constant 0 : index
      %c0_826 = arith.constant 0 : index
      %780 = vector.load %arg15[%779, %c0_825, %c0_826] : memref<4x4x128xf32, #tpu.memory_space<vmem>>, vector<1x2x128xf32>
      %781 = vector.shape_cast %780 : vector<1x2x128xf32> to vector<2x128xf32>
      %782 = arith.truncf %781 : vector<2x128xf32> to vector<2x128xbf16>
      %c1_827 = arith.constant 1 : index
      %c0_828 = arith.constant 0 : index
      %c0_829 = arith.constant 0 : index
      %c0_830 = arith.constant 0 : index
      %783 = vector.load %arg8[%c1_827, %c0_828, %c0_829, %c0_830] : memref<3x3x128x128xbf16, #tpu.memory_space<vmem>>, vector<1x1x128x128xbf16>
      %784 = vector.shape_cast %783 : vector<1x1x128x128xbf16> to vector<128x128xbf16>
      %cst_831 = arith.constant dense<0.000000e+00> : vector<2x128xf32>
      %785 = tpu.matmul %782, %784, %cst_831 {dimension_numbers = #tpu.dot_dimension_numbers<[1], [0], [0], [1], [0, 0, 1, 1], [], []>} : vector<2x128xbf16>, vector<128x128xbf16>, vector<2x128xf32> -> vector<2x128xf32>
      %786 = arith.addf %777, %785 : vector<2x128xf32>
      %c1_i32_832 = arith.constant 1 : i32
      %787 = arith.addi %arg16, %c1_i32_832 : i32
      %788 = arith.index_cast %787 : i32 to index
      %c1_833 = arith.constant 1 : index
      %c0_834 = arith.constant 0 : index
      %789 = vector.load %arg15[%788, %c1_833, %c0_834] : memref<4x4x128xf32, #tpu.memory_space<vmem>>, vector<1x2x128xf32>
      %790 = vector.shape_cast %789 : vector<1x2x128xf32> to vector<2x128xf32>
      %791 = arith.truncf %790 : vector<2x128xf32> to vector<2x128xbf16>
      %c1_835 = arith.constant 1 : index
      %c1_836 = arith.constant 1 : index
      %c0_837 = arith.constant 0 : index
      %c0_838 = arith.constant 0 : index
      %792 = vector.load %arg8[%c1_835, %c1_836, %c0_837, %c0_838] : memref<3x3x128x128xbf16, #tpu.memory_space<vmem>>, vector<1x1x128x128xbf16>
      %793 = vector.shape_cast %792 : vector<1x1x128x128xbf16> to vector<128x128xbf16>
      %cst_839 = arith.constant dense<0.000000e+00> : vector<2x128xf32>
      %794 = tpu.matmul %791, %793, %cst_839 {dimension_numbers = #tpu.dot_dimension_numbers<[1], [0], [0], [1], [0, 0, 1, 1], [], []>} : vector<2x128xbf16>, vector<128x128xbf16>, vector<2x128xf32> -> vector<2x128xf32>
      %795 = arith.addf %786, %794 : vector<2x128xf32>
      %c1_i32_840 = arith.constant 1 : i32
      %796 = arith.addi %arg16, %c1_i32_840 : i32
      %797 = arith.index_cast %796 : i32 to index
      %c2_841 = arith.constant 2 : index
      %c0_842 = arith.constant 0 : index
      %798 = vector.load %arg15[%797, %c2_841, %c0_842] : memref<4x4x128xf32, #tpu.memory_space<vmem>>, vector<1x2x128xf32>
      %799 = vector.shape_cast %798 : vector<1x2x128xf32> to vector<2x128xf32>
      %800 = arith.truncf %799 : vector<2x128xf32> to vector<2x128xbf16>
      %c1_843 = arith.constant 1 : index
      %c2_844 = arith.constant 2 : index
      %c0_845 = arith.constant 0 : index
      %c0_846 = arith.constant 0 : index
      %801 = vector.load %arg8[%c1_843, %c2_844, %c0_845, %c0_846] : memref<3x3x128x128xbf16, #tpu.memory_space<vmem>>, vector<1x1x128x128xbf16>
      %802 = vector.shape_cast %801 : vector<1x1x128x128xbf16> to vector<128x128xbf16>
      %cst_847 = arith.constant dense<0.000000e+00> : vector<2x128xf32>
      %803 = tpu.matmul %800, %802, %cst_847 {dimension_numbers = #tpu.dot_dimension_numbers<[1], [0], [0], [1], [0, 0, 1, 1], [], []>} : vector<2x128xbf16>, vector<128x128xbf16>, vector<2x128xf32> -> vector<2x128xf32>
      %804 = arith.addf %795, %803 : vector<2x128xf32>
      %c2_i32_848 = arith.constant 2 : i32
      %805 = arith.addi %arg16, %c2_i32_848 : i32
      %806 = arith.index_cast %805 : i32 to index
      %c0_849 = arith.constant 0 : index
      %c0_850 = arith.constant 0 : index
      %807 = vector.load %arg15[%806, %c0_849, %c0_850] : memref<4x4x128xf32, #tpu.memory_space<vmem>>, vector<1x2x128xf32>
      %808 = vector.shape_cast %807 : vector<1x2x128xf32> to vector<2x128xf32>
      %809 = arith.truncf %808 : vector<2x128xf32> to vector<2x128xbf16>
      %c2_851 = arith.constant 2 : index
      %c0_852 = arith.constant 0 : index
      %c0_853 = arith.constant 0 : index
      %c0_854 = arith.constant 0 : index
      %810 = vector.load %arg8[%c2_851, %c0_852, %c0_853, %c0_854] : memref<3x3x128x128xbf16, #tpu.memory_space<vmem>>, vector<1x1x128x128xbf16>
      %811 = vector.shape_cast %810 : vector<1x1x128x128xbf16> to vector<128x128xbf16>
      %cst_855 = arith.constant dense<0.000000e+00> : vector<2x128xf32>
      %812 = tpu.matmul %809, %811, %cst_855 {dimension_numbers = #tpu.dot_dimension_numbers<[1], [0], [0], [1], [0, 0, 1, 1], [], []>} : vector<2x128xbf16>, vector<128x128xbf16>, vector<2x128xf32> -> vector<2x128xf32>
      %813 = arith.addf %804, %812 : vector<2x128xf32>
      %c2_i32_856 = arith.constant 2 : i32
      %814 = arith.addi %arg16, %c2_i32_856 : i32
      %815 = arith.index_cast %814 : i32 to index
      %c1_857 = arith.constant 1 : index
      %c0_858 = arith.constant 0 : index
      %816 = vector.load %arg15[%815, %c1_857, %c0_858] : memref<4x4x128xf32, #tpu.memory_space<vmem>>, vector<1x2x128xf32>
      %817 = vector.shape_cast %816 : vector<1x2x128xf32> to vector<2x128xf32>
      %818 = arith.truncf %817 : vector<2x128xf32> to vector<2x128xbf16>
      %c2_859 = arith.constant 2 : index
      %c1_860 = arith.constant 1 : index
      %c0_861 = arith.constant 0 : index
      %c0_862 = arith.constant 0 : index
      %819 = vector.load %arg8[%c2_859, %c1_860, %c0_861, %c0_862] : memref<3x3x128x128xbf16, #tpu.memory_space<vmem>>, vector<1x1x128x128xbf16>
      %820 = vector.shape_cast %819 : vector<1x1x128x128xbf16> to vector<128x128xbf16>
      %cst_863 = arith.constant dense<0.000000e+00> : vector<2x128xf32>
      %821 = tpu.matmul %818, %820, %cst_863 {dimension_numbers = #tpu.dot_dimension_numbers<[1], [0], [0], [1], [0, 0, 1, 1], [], []>} : vector<2x128xbf16>, vector<128x128xbf16>, vector<2x128xf32> -> vector<2x128xf32>
      %822 = arith.addf %813, %821 : vector<2x128xf32>
      %c2_i32_864 = arith.constant 2 : i32
      %823 = arith.addi %arg16, %c2_i32_864 : i32
      %824 = arith.index_cast %823 : i32 to index
      %c2_865 = arith.constant 2 : index
      %c0_866 = arith.constant 0 : index
      %825 = vector.load %arg15[%824, %c2_865, %c0_866] : memref<4x4x128xf32, #tpu.memory_space<vmem>>, vector<1x2x128xf32>
      %826 = vector.shape_cast %825 : vector<1x2x128xf32> to vector<2x128xf32>
      %827 = arith.truncf %826 : vector<2x128xf32> to vector<2x128xbf16>
      %c2_867 = arith.constant 2 : index
      %c2_868 = arith.constant 2 : index
      %c0_869 = arith.constant 0 : index
      %c0_870 = arith.constant 0 : index
      %828 = vector.load %arg8[%c2_867, %c2_868, %c0_869, %c0_870] : memref<3x3x128x128xbf16, #tpu.memory_space<vmem>>, vector<1x1x128x128xbf16>
      %829 = vector.shape_cast %828 : vector<1x1x128x128xbf16> to vector<128x128xbf16>
      %cst_871 = arith.constant dense<0.000000e+00> : vector<2x128xf32>
      %830 = tpu.matmul %827, %829, %cst_871 {dimension_numbers = #tpu.dot_dimension_numbers<[1], [0], [0], [1], [0, 0, 1, 1], [], []>} : vector<2x128xbf16>, vector<128x128xbf16>, vector<2x128xf32> -> vector<2x128xf32>
      %831 = arith.addf %822, %830 : vector<2x128xf32>
      %c0_872 = arith.constant 0 : index
      %c0_873 = arith.constant 0 : index
      %832 = vector.load %arg9[%c0_872, %c0_873] : memref<1x128xf32, #tpu.memory_space<vmem>>, vector<1x128xf32>
      %833 = vector.broadcast %832 : vector<1x128xf32> to vector<2x128xf32>
      %834 = arith.addf %831, %833 : vector<2x128xf32>
      %cst_874 = arith.constant 0.000000e+00 : f32
      %835 = vector.broadcast %cst_874 : f32 to vector<2x128xf32>
      %836 = arith.maximumf %834, %835 : vector<2x128xf32>
      %c0_i32_875 = arith.constant 0 : i32
      %837 = arith.addi %c0_i32_875, %arg16 : i32
      %c0_876 = arith.constant 0 : index
      %838 = arith.index_cast %837 : i32 to index
      %c0_877 = arith.constant 0 : index
      %c0_878 = arith.constant 0 : index
      %839 = vector.load %arg10[%c0_876, %838, %c0_877, %c0_878] : memref<1x2x2x128xf32, #tpu.memory_space<vmem>>, vector<1x1x2x128xf32>
      %840 = vector.shape_cast %839 : vector<1x1x2x128xf32> to vector<2x128xf32>
      %841 = vector.shape_cast %836 : vector<2x128xf32> to vector<1x1x2x128xf32>
      tpu.vector_store %arg10[%c0_876, %838, %c0_877, %c0_878], %841 {strides = array<i32>} : memref<1x2x2x128xf32, #tpu.memory_space<vmem>>, vector<1x1x2x128xf32>,
    }
    %c2_i32_798 = arith.constant 2 : i32
    return
  }
  func.func @transform_0(%arg0: i32) -> (i32, i32, i32, i32) {
    %c0_i32 = arith.constant 0 : i32
    %c0_i32_0 = arith.constant 0 : i32
    %c0_i32_1 = arith.constant 0 : i32
    %c0_i32_2 = arith.constant 0 : i32
    return %arg0, %c0_i32, %c0_i32_0, %c0_i32_1 : i32, i32, i32, i32
  }
  func.func @transform_1(%arg0: i32) -> (i32, i32, i32, i32) {
    %c0_i32 = arith.constant 0 : i32
    %c0_i32_0 = arith.constant 0 : i32
    %c0_i32_1 = arith.constant 0 : i32
    %c0_i32_2 = arith.constant 0 : i32
    %c0_i32_3 = arith.constant 0 : i32
    return %c0_i32, %c0_i32_0, %c0_i32_1, %c0_i32_2 : i32, i32, i32, i32
  }
  func.func @transform_2(%arg0: i32) -> (i32, i32) {
    %c0_i32 = arith.constant 0 : i32
    %c0_i32_0 = arith.constant 0 : i32
    %c0_i32_1 = arith.constant 0 : i32
    return %c0_i32, %c0_i32_0 : i32, i32
  }
  func.func @transform_3(%arg0: i32) -> (i32, i32, i32, i32) {
    %c0_i32 = arith.constant 0 : i32
    %c0_i32_0 = arith.constant 0 : i32
    %c0_i32_1 = arith.constant 0 : i32
    %c0_i32_2 = arith.constant 0 : i32
    %c0_i32_3 = arith.constant 0 : i32
    return %c0_i32, %c0_i32_0, %c0_i32_1, %c0_i32_2 : i32, i32, i32, i32
  }
  func.func @transform_4(%arg0: i32) -> (i32, i32) {
    %c0_i32 = arith.constant 0 : i32
    %c0_i32_0 = arith.constant 0 : i32
    %c0_i32_1 = arith.constant 0 : i32
    return %c0_i32, %c0_i32_0 : i32, i32
  }
  func.func @transform_5(%arg0: i32) -> (i32, i32, i32, i32) {
    %c0_i32 = arith.constant 0 : i32
    %c0_i32_0 = arith.constant 0 : i32
    %c0_i32_1 = arith.constant 0 : i32
    %c0_i32_2 = arith.constant 0 : i32
    %c0_i32_3 = arith.constant 0 : i32
    return %c0_i32, %c0_i32_0, %c0_i32_1, %c0_i32_2 : i32, i32, i32, i32
  }
  func.func @transform_6(%arg0: i32) -> (i32, i32) {
    %c0_i32 = arith.constant 0 : i32
    %c0_i32_0 = arith.constant 0 : i32
    %c0_i32_1 = arith.constant 0 : i32
    return %c0_i32, %c0_i32_0 : i32, i32
  }
  func.func @transform_7(%arg0: i32) -> (i32, i32, i32, i32) {
    %c0_i32 = arith.constant 0 : i32
    %c0_i32_0 = arith.constant 0 : i32
    %c0_i32_1 = arith.constant 0 : i32
    %c0_i32_2 = arith.constant 0 : i32
    %c0_i32_3 = arith.constant 0 : i32
    return %c0_i32, %c0_i32_0, %c0_i32_1, %c0_i32_2 : i32, i32, i32, i32
  }
  func.func @transform_8(%arg0: i32) -> (i32, i32) {
    %c0_i32 = arith.constant 0 : i32
    %c0_i32_0 = arith.constant 0 : i32
    %c0_i32_1 = arith.constant 0 : i32
    return %c0_i32, %c0_i32_0 : i32, i32
  }
  func.func @transform_9(%arg0: i32) -> (i32, i32, i32, i32) {
    %c0_i32 = arith.constant 0 : i32
    %c0_i32_0 = arith.constant 0 : i32
    %c0_i32_1 = arith.constant 0 : i32
    %c0_i32_2 = arith.constant 0 : i32
    return %arg0, %c0_i32, %c0_i32_0, %c0_i32_1 : i32, i32, i32, i32
  }
}

</mosaic_0001>

<llo_original>
// kernel: scnn_forward.1
$region0: #{scnn_forward.1}
  #allocation0 [shape = 'u32[]', space=smem, size = 0x4, offset = 0x4, fixed_abs, tag = 'smem constant byte address 0x4 - core index']
  #allocation1 [shape = 'u32[144,128]{1,0:T(1,128)}', space=vmem, size = 0x12000, scoped, tag = 'internal scratch']
  #allocation2 [shape = 'f32[14,14,128]{2,1,0:T(8,128)}', space=vmem, size = 0x1c000, scoped, tag = 'scratch operand']
  #allocation3 [shape = 'f32[7,7,128]{2,1,0:T(8,128)}', space=vmem, size = 0x7000, scoped, tag = 'scratch operand']
  #allocation4 [shape = 'f32[5,5,128]{2,1,0:T(8,128)}', space=vmem, size = 0x5000, scoped, tag = 'scratch operand']
  #allocation5 [shape = 'f32[4,4,128]{2,1,0:T(4,128)}', space=vmem, size = 0x2000, scoped, tag = 'scratch operand']
  #allocation6 [shape = 'f32[4,4,128]{2,1,0:T(4,128)}', space=vmem, size = 0x2000, scoped, tag = 'scratch operand']
  %s0 = inlined_call_operand.vmem [shape: bf16[2,16,16,128], index: 0, kind: input, shape index: {}]
  %s1 = inlined_call_operand.vmem [shape: bf16[3,3,128,128], index: 1, kind: input, shape index: {}]
  %s2 = inlined_call_operand.vmem [shape: f32[1,128], index: 2, kind: input, shape index: {}]
  %s3 = inlined_call_operand.vmem [shape: bf16[3,3,128,128], index: 3, kind: input, shape index: {}]
  %s4 = inlined_call_operand.vmem [shape: f32[1,128], index: 4, kind: input, shape index: {}]
  %s5 = inlined_call_operand.vmem [shape: bf16[3,3,128,128], index: 5, kind: input, shape index: {}]
  %s6 = inlined_call_operand.vmem [shape: f32[1,128], index: 6, kind: input, shape index: {}]
  %s7 = inlined_call_operand.vmem [shape: bf16[3,3,128,128], index: 7, kind: input, shape index: {}]
  %s8 = inlined_call_operand.vmem [shape: f32[1,128], index: 8, kind: input, shape index: {}]
  %s9 = inlined_call_operand.vmem [shape: f32[2,2,2,128], index: 9, kind: output, shape index: {}]
  %s10 = sld [smem:[#allocation0]]
  $region97: #{scnn_forward.1} parent=0
    _
  %s12 = ssub.s32 1, %s10
  %s13 = scalar_select 0, %s12, %s10
  loop: start=0, step=1, limit=4
  $region2: #{scnn_forward.1} parent=0 // loop_pre_header
    _
  $region3: #{scnn_forward.1} parent=0 // loop_header
    %s15 = sphi 0, %s19
    %p16 = scmp.ge.s32.totalorder %s15, 4
    %s25 = sphi 0, %s27
    %s28 = sphi 0, %s25
    %s29 = sphi 0, %s28
    %s45 = sphi 0, %s29
    %s49 = sphi 0, %s49
    %s51 = sphi 0, %s49
    %s52 = sphi 0, %s51
    %s66 = sphi 0, %s52
    %s70 = sphi 0, %s70
    %s72 = sphi 0, %s70
    %s73 = sphi 0, %s72
    %s87 = sphi 0, %s73
    %s91 = sphi 0, %s91
    %s93 = sphi 0, %s91
    %s94 = sphi 0, %s93
    %s108 = sphi 0, %s94
    %s112 = sphi 0, %s112
    %s114 = sphi 0, %s112
    %s115 = sphi 0, %s114
    %s129 = sphi 0, %s115
    %s133 = sphi 0, %s133
    %s135 = sphi 0, %s133
    %s136 = sphi 0, %s135
    %s150 = sphi 0, %s136
    %s154 = sphi 0, %s154
    %s156 = sphi 0, %s154
    %s157 = sphi 0, %s156
    %s171 = sphi 0, %s157
    %s175 = sphi 0, %s175
    %s177 = sphi 0, %s175
    %s178 = sphi 0, %s177
    %s192 = sphi 0, %s178
    %s196 = sphi 0, %s196
    %s198 = sphi 0, %s196
    %s199 = sphi 0, %s198
    %s213 = sphi 0, %s199
    %s219 = sphi 0, %s221
    %s222 = sphi 0, %s219
    %s223 = sphi 0, %s222
    %s239 = sphi 0, %s223
  $region4: #{scnn_forward.1} parent=0 // loop_header_branch
    %18 = sbr.rel (%p16) target = $region8
  $region5: #{scnn_forward.1} parent=0 // loop_body
    %s20 = ssub.s32 %s15, 1
    %s21 = ssub.s32 %s15, 2
    %s22 = sadd.s32 %s15, 1
    %s23 = ssub.s32 %s15, %s22
    %p24 = scmp.eq.s32.totalorder %s23, 0
    %s26 = sadd.s32 %s25, 1
    %s27 = scalar_select %p24, %s25, %s26
    %p30 = pneg %p24
    %p31 = scmp.eq.s32.totalorder %s15, 1
    %p32 = por %p30, %p31
    %p33 = scmp.ne.s32.totalorder %s25, %s28
    %p34 = scmp.eq.s32.totalorder %s15, 0
    %p35 = por %p33, %p34
    %p36 = scmp.ne.s32.totalorder %s25, %s28
    %p37 = scmp.eq.s32.totalorder %s20, 1
    %p38 = por %p36, %p37
    %p39 = scmp.ne.s32.totalorder %s28, %s29
    %p40 = scmp.eq.s32.totalorder %s20, 0
    %p41 = por %p39, %p40
    %p42 = scmp.ne.s32.totalorder %s28, %s29
    %p43 = scmp.eq.s32.totalorder %s21, 1
    %p44 = por %p42, %p43
    %p46 = scmp.ne.s32.totalorder %s29, %s45
    %p47 = scmp.eq.s32.totalorder %s21, 0
    %p48 = por %p46, %p47
    %s50 = sadd.s32 %s49, 1
    %p53 = scmp.eq.s32.totalorder %s15, 1
    %p54 = scmp.ne.s32.totalorder %s49, %s51
    %p55 = scmp.eq.s32.totalorder %s15, 0
    %p56 = por %p54, %p55
    %p57 = scmp.ne.s32.totalorder %s49, %s51
    %p58 = scmp.eq.s32.totalorder %s20, 1
    %p59 = por %p57, %p58
    %p60 = scmp.ne.s32.totalorder %s51, %s52
    %p61 = scmp.eq.s32.totalorder %s20, 0
    %p62 = por %p60, %p61
    %p63 = scmp.ne.s32.totalorder %s51, %s52
    %p64 = scmp.eq.s32.totalorder %s21, 1
    %p65 = por %p63, %p64
    %p67 = scmp.ne.s32.totalorder %s52, %s66
    %p68 = scmp.eq.s32.totalorder %s21, 0
    %p69 = por %p67, %p68
    %s71 = sadd.s32 %s70, 1
    %p74 = scmp.eq.s32.totalorder %s15, 1
    %p75 = scmp.ne.s32.totalorder %s70, %s72
    %p76 = scmp.eq.s32.totalorder %s15, 0
    %p77 = por %p75, %p76
    %p78 = scmp.ne.s32.totalorder %s70, %s72
    %p79 = scmp.eq.s32.totalorder %s20, 1
    %p80 = por %p78, %p79
    %p81 = scmp.ne.s32.totalorder %s72, %s73
    %p82 = scmp.eq.s32.totalorder %s20, 0
    %p83 = por %p81, %p82
    %p84 = scmp.ne.s32.totalorder %s72, %s73
    %p85 = scmp.eq.s32.totalorder %s21, 1
    %p86 = por %p84, %p85
    %p88 = scmp.ne.s32.totalorder %s73, %s87
    %p89 = scmp.eq.s32.totalorder %s21, 0
    %p90 = por %p88, %p89
    %s92 = sadd.s32 %s91, 1
    %p95 = scmp.eq.s32.totalorder %s15, 1
    %p96 = scmp.ne.s32.totalorder %s91, %s93
    %p97 = scmp.eq.s32.totalorder %s15, 0
    %p98 = por %p96, %p97
    %p99 = scmp.ne.s32.totalorder %s91, %s93
    %p100 = scmp.eq.s32.totalorder %s20, 1
    %p101 = por %p99, %p100
    %p102 = scmp.ne.s32.totalorder %s93, %s94
    %p103 = scmp.eq.s32.totalorder %s20, 0
    %p104 = por %p102, %p103
    %p105 = scmp.ne.s32.totalorder %s93, %s94
    %p106 = scmp.eq.s32.totalorder %s21, 1
    %p107 = por %p105, %p106
    %p109 = scmp.ne.s32.totalorder %s94, %s108
    %p110 = scmp.eq.s32.totalorder %s21, 0
    %p111 = por %p109, %p110
    %s113 = sadd.s32 %s112, 1
    %p116 = scmp.eq.s32.totalorder %s15, 1
    %p117 = scmp.ne.s32.totalorder %s112, %s114
    %p118 = scmp.eq.s32.totalorder %s15, 0
    %p119 = por %p117, %p118
    %p120 = scmp.ne.s32.totalorder %s112, %s114
    %p121 = scmp.eq.s32.totalorder %s20, 1
    %p122 = por %p120, %p121
    %p123 = scmp.ne.s32.totalorder %s114, %s115
    %p124 = scmp.eq.s32.totalorder %s20, 0
    %p125 = por %p123, %p124
    %p126 = scmp.ne.s32.totalorder %s114, %s115
    %p127 = scmp.eq.s32.totalorder %s21, 1
    %p128 = por %p126, %p127
    %p130 = scmp.ne.s32.totalorder %s115, %s129
    %p131 = scmp.eq.s32.totalorder %s21, 0
    %p132 = por %p130, %p131
    %s134 = sadd.s32 %s133, 1
    %p137 = scmp.eq.s32.totalorder %s15, 1
    %p138 = scmp.ne.s32.totalorder %s133, %s135
    %p139 = scmp.eq.s32.totalorder %s15, 0
    %p140 = por %p138, %p139
    %p141 = scmp.ne.s32.totalorder %s133, %s135
    %p142 = scmp.eq.s32.totalorder %s20, 1
    %p143 = por %p141, %p142
    %p144 = scmp.ne.s32.totalorder %s135, %s136
    %p145 = scmp.eq.s32.totalorder %s20, 0
    %p146 = por %p144, %p145
    %p147 = scmp.ne.s32.totalorder %s135, %s136
    %p148 = scmp.eq.s32.totalorder %s21, 1
    %p149 = por %p147, %p148
    %p151 = scmp.ne.s32.totalorder %s136, %s150
    %p152 = scmp.eq.s32.totalorder %s21, 0
    %p153 = por %p151, %p152
    %s155 = sadd.s32 %s154, 1
    %p158 = scmp.eq.s32.totalorder %s15, 1
    %p159 = scmp.ne.s32.totalorder %s154, %s156
    %p160 = scmp.eq.s32.totalorder %s15, 0
    %p161 = por %p159, %p160
    %p162 = scmp.ne.s32.totalorder %s154, %s156
    %p163 = scmp.eq.s32.totalorder %s20, 1
    %p164 = por %p162, %p163
    %p165 = scmp.ne.s32.totalorder %s156, %s157
    %p166 = scmp.eq.s32.totalorder %s20, 0
    %p167 = por %p165, %p166
    %p168 = scmp.ne.s32.totalorder %s156, %s157
    %p169 = scmp.eq.s32.totalorder %s21, 1
    %p170 = por %p168, %p169
    %p172 = scmp.ne.s32.totalorder %s157, %s171
    %p173 = scmp.eq.s32.totalorder %s21, 0
    %p174 = por %p172, %p173
    %s176 = sadd.s32 %s175, 1
    %p179 = scmp.eq.s32.totalorder %s15, 1
    %p180 = scmp.ne.s32.totalorder %s175, %s177
    %p181 = scmp.eq.s32.totalorder %s15, 0
    %p182 = por %p180, %p181
    %p183 = scmp.ne.s32.totalorder %s175, %s177
    %p184 = scmp.eq.s32.totalorder %s20, 1
    %p185 = por %p183, %p184
    %p186 = scmp.ne.s32.totalorder %s177, %s178
    %p187 = scmp.eq.s32.totalorder %s20, 0
    %p188 = por %p186, %p187
    %p189 = scmp.ne.s32.totalorder %s177, %s178
    %p190 = scmp.eq.s32.totalorder %s21, 1
    %p191 = por %p189, %p190
    %p193 = scmp.ne.s32.totalorder %s178, %s192
    %p194 = scmp.eq.s32.totalorder %s21, 0
    %p195 = por %p193, %p194
    %s197 = sadd.s32 %s196, 1
    %p200 = scmp.eq.s32.totalorder %s15, 1
    %p201 = scmp.ne.s32.totalorder %s196, %s198
    %p202 = scmp.eq.s32.totalorder %s15, 0
    %p203 = por %p201, %p202
    %p204 = scmp.ne.s32.totalorder %s196, %s198
    %p205 = scmp.eq.s32.totalorder %s20, 1
    %p206 = por %p204, %p205
    %p207 = scmp.ne.s32.totalorder %s198, %s199
    %p208 = scmp.eq.s32.totalorder %s20, 0
    %p209 = por %p207, %p208
    %p210 = scmp.ne.s32.totalorder %s198, %s199
    %p211 = scmp.eq.s32.totalorder %s21, 1
    %p212 = por %p210, %p211
    %p214 = scmp.ne.s32.totalorder %s199, %s213
    %p215 = scmp.eq.s32.totalorder %s21, 0
    %p216 = por %p214, %p215
    %s217 = ssub.s32 %s15, %s22
    %p218 = scmp.eq.s32.totalorder %s217, 0
    %s220 = sadd.s32 %s219, 1
    %s221 = scalar_select %p218, %s219, %s220
    %p224 = pneg %p218
    %p225 = scmp.eq.s32.totalorder %s15, 1
    %p226 = por %p224, %p225
    %p227 = scmp.ne.s32.totalorder %s219, %s222
    %p228 = scmp.eq.s32.totalorder %s15, 0
    %p229 = por %p227, %p228
    %p230 = scmp.ne.s32.totalorder %s219, %s222
    %p231 = scmp.eq.s32.totalorder %s20, 1
    %p232 = por %p230, %p231
    %p233 = scmp.ne.s32.totalorder %s222, %s223
    %p234 = scmp.eq.s32.totalorder %s20, 0
    %p235 = por %p233, %p234
    %p236 = scmp.ne.s32.totalorder %s222, %s223
    %p237 = scmp.eq.s32.totalorder %s21, 1
    %p238 = por %p236, %p237
    %p240 = scmp.ne.s32.totalorder %s223, %s239
    %p241 = scmp.eq.s32.totalorder %s21, 0
    %p242 = por %p240, %p241
    %p243 = scmp.le.s32.totalorder 1, %s15
    %p244 = scmp.lt.s32.totalorder %s15, 3
    %p245 = pnand %p243, %p244
    %p246 = pneg %p245
    // Predicated region
    $region9: #{scnn_forward.1} parent=5 // pred_check
      _
    $region10: #{scnn_forward.1} parent=5 // pred_check_branch
      %248 = sbr.rel (%p245) target = $region12
    $region11: #{scnn_forward.1} parent=5 // pred_region
      %s249 = ssub.s32 %s15, 1
      // Predicated region
      $region13: #{scnn_forward.1} parent=11 // pred_check
        %p250 = pneg %p62
      $region14: #{scnn_forward.1} parent=11 // pred_check_branch
        %252 = sbr.rel (%p250) target = $region16
      $region15: #{scnn_forward.1} parent=11 // pred_region
        _
      $region16: #{scnn_forward.1} parent=11 // pred_fallthru
        _
      // Predicated region
      $region17: #{scnn_forward.1} parent=11 // pred_check
        %p253 = pneg %p83
      $region18: #{scnn_forward.1} parent=11 // pred_check_branch
        %255 = sbr.rel (%p253) target = $region20
      $region19: #{scnn_forward.1} parent=11 // pred_region
        _
      $region20: #{scnn_forward.1} parent=11 // pred_fallthru
        _
      // Predicated region
      $region21: #{scnn_forward.1} parent=11 // pred_check
        %p256 = pneg %p104
      $region22: #{scnn_forward.1} parent=11 // pred_check_branch
        %258 = sbr.rel (%p256) target = $region24
      $region23: #{scnn_forward.1} parent=11 // pred_region
        _
      $region24: #{scnn_forward.1} parent=11 // pred_fallthru
        _
      // Predicated region
      $region25: #{scnn_forward.1} parent=11 // pred_check
        %p259 = pneg %p125
      $region26: #{scnn_forward.1} parent=11 // pred_check_branch
        %261 = sbr.rel (%p259) target = $region28
      $region27: #{scnn_forward.1} parent=11 // pred_region
        _
      $region28: #{scnn_forward.1} parent=11 // pred_fallthru
        _
      // Predicated region
      $region29: #{scnn_forward.1} parent=11 // pred_check
        %p262 = pneg %p146
      $region30: #{scnn_forward.1} parent=11 // pred_check_branch
        %264 = sbr.rel (%p262) target = $region32
      $region31: #{scnn_forward.1} parent=11 // pred_region
        _
      $region32: #{scnn_forward.1} parent=11 // pred_fallthru
        _
      // Predicated region
      $region33: #{scnn_forward.1} parent=11 // pred_check
        %p265 = pneg %p167
      $region34: #{scnn_forward.1} parent=11 // pred_check_branch
        %267 = sbr.rel (%p265) target = $region36
      $region35: #{scnn_forward.1} parent=11 // pred_region
        _
      $region36: #{scnn_forward.1} parent=11 // pred_fallthru
        _
      // Predicated region
      $region37: #{scnn_forward.1} parent=11 // pred_check
        %p268 = pneg %p188
      $region38: #{scnn_forward.1} parent=11 // pred_check_branch
        %270 = sbr.rel (%p268) target = $region40
      $region39: #{scnn_forward.1} parent=11 // pred_region
        _
      $region40: #{scnn_forward.1} parent=11 // pred_fallthru
        _
      // Predicated region
      $region41: #{scnn_forward.1} parent=11 // pred_check
        %p271 = pneg %p209
      $region42: #{scnn_forward.1} parent=11 // pred_check_branch
        %273 = sbr.rel (%p271) target = $region44
      $region43: #{scnn_forward.1} parent=11 // pred_region
        _
      $region44: #{scnn_forward.1} parent=11 // pred_fallthru
        _
    $region12: #{scnn_forward.1} parent=5 // pred_fallthru
      _
    %p274 = scmp.lt.s32.totalorder %s15, 2
    // Predicated region
    $region45: #{scnn_forward.1} parent=5 // pred_check
      %p275 = pneg %p274
    $region46: #{scnn_forward.1} parent=5 // pred_check_branch
      %277 = sbr.rel (%p275) target = $region48
    $region47: #{scnn_forward.1} parent=5 // pred_region
      // Predicated region
      $region49: #{scnn_forward.1} parent=47 // pred_check
        %p278 = pneg %p35
      $region50: #{scnn_forward.1} parent=47 // pred_check_branch
        %280 = sbr.rel (%p278) target = $region52
      $region51: #{scnn_forward.1} parent=47 // pred_region
        %p281 = scmp.lt.s32.totalorder %s15, 1
        %s282 = scalar_select %p281, %s15, 1
        %s283 = smul.addr %s282, 32
        %s284 = smul.addr %s283, 4
        %s285 = scalar_lea.vmem %s0, %s284
      $region52: #{scnn_forward.1} parent=47 // pred_fallthru
        _
    $region48: #{scnn_forward.1} parent=5 // pred_fallthru
      _
    %p286 = scmp.le.s32.totalorder 1, %s15
    %p287 = scmp.lt.s32.totalorder %s15, 3
    %p288 = pnand %p286, %p287
    %p289 = pneg %p288
    // Predicated region
    $region53: #{scnn_forward.1} parent=5 // pred_check
      _
    $region54: #{scnn_forward.1} parent=5 // pred_check_branch
      %291 = sbr.rel (%p288) target = $region56
    $region55: #{scnn_forward.1} parent=5 // pred_region
      %s292 = ssub.s32 %s15, 1
      %p293 = scmp.lt.s32.totalorder %s20, 1
      %s294 = scalar_select %p293, %s20, 1
      %s295 = smul.addr %s294, 32
      %s296 = smul.addr %s295, 4
      %s297 = scalar_lea.vmem %s0, %s296
      %p298 = pneg %p41
      %p299 = pneg %p38
      %p300 = pneg %p62
      %p301 = pneg %p59
      %p302 = pneg %p83
      %p303 = pneg %p80
      %p304 = pneg %p104
      %p305 = pneg %p101
      %p306 = pneg %p125
      %p307 = pneg %p122
      %p308 = pneg %p146
      %p309 = pneg %p143
      %p310 = pneg %p167
      %p311 = pneg %p164
      %p312 = pneg %p188
      %p313 = pneg %p185
      %p314 = pneg %p209
      %p315 = pneg %p206
      %p316 = pneg %p235
      %p317 = pneg %p232
      %p318 = scmp.lt.s32.totalorder %s20, 1
      %s319 = scalar_select %p318, %s20, 1
      %s320 = smul.addr %s319, 2
      %s321 = smul.addr %s320, 2
      %s322 = scalar_lea.vmem %s9, %s321
      %p323 = scmp.lt.s32.totalorder %s20, 1
      %s324 = scalar_select %p323, %s20, 1
      %s325 = smul.addr %s324, 32
      %s326 = smul.addr %s325, 4
      %s327 = scalar_lea.vmem %s0, %s326
      %p328 = scmp.lt.s32.totalorder %s20, 1
      %s329 = scalar_select %p328, %s20, 1
      %s330 = smul.addr %s329, 2
      %s331 = smul.addr %s330, 2
      %s332 = scalar_lea.vmem %s9, %s331
      loop: start=0, step=1, limit=14
      $region57: #{scnn_forward.1} parent=55 // loop_pre_header
        _
      $region58: #{scnn_forward.1} parent=55 // loop_header
        %s335 = sphi 0, %s339
        %p336 = scmp.ge.s32.totalorder %s335, 14
      $region59: #{scnn_forward.1} parent=55 // loop_header_branch
        %338 = sbr.rel (%p336) target = $region63
      $region60: #{scnn_forward.1} parent=55 // loop_body
        %s340 = smul.u32 %s335, 2
        %s341 = smul.addr %s340, 4
        %s342 = scalar_lea.vmem %s327, %s341
        %v343 = vld [vmem:[%s342] sm:$0xf]
        %v344 = vld [vmem:[%s342 + $0x4] sm:$0x7]
        %v345 = vld [vmem:[%s1] sm:$0xf]
        %v346 = vld [vmem:[%s1 + $0x4] sm:$0xf]
        %v347 = vld [vmem:[%s1 + $0x8] sm:$0xf]
        %v348 = vld [vmem:[%s1 + $0xc] sm:$0xf]
        %v349 = vld [vmem:[%s1 + $0x10] sm:$0xf]
        %v350 = vld [vmem:[%s1 + $0x14] sm:$0xf]
        %v351 = vld [vmem:[%s1 + $0x18] sm:$0xf]
        %v352 = vld [vmem:[%s1 + $0x1c] sm:$0xf]
        %v353 = vld [vmem:[%s1 + $0x20] sm:$0xf]
        %v354 = vld [vmem:[%s1 + $0x24] sm:$0xf]
        %v355 = vld [vmem:[%s1 + $0x28] sm:$0xf]
        %v356 = vld [vmem:[%s1 + $0x2c] sm:$0xf]
        %v357 = vld [vmem:[%s1 + $0x30] sm:$0xf]
        %v358 = vld [vmem:[%s1 + $0x34] sm:$0xf]
        %v359 = vld [vmem:[%s1 + $0x38] sm:$0xf]
        %v360 = vld [vmem:[%s1 + $0x3c] sm:$0xf]
        %v361 = vld [vmem:[%s342 + $0x4] sm:$0xf]
        %s362 = scalar_lea.vmem %s1, 64
        %v363 = vld [vmem:[%s362] sm:$0xf]
        %v364 = vld [vmem:[%s362 + $0x4] sm:$0xf]
        %v365 = vld [vmem:[%s362 + $0x8] sm:$0xf]
        %v366 = vld [vmem:[%s362 + $0xc] sm:$0xf]
        %v367 = vld [vmem:[%s362 + $0x10] sm:$0xf]
        %v368 = vld [vmem:[%s362 + $0x14] sm:$0xf]
        %v369 = vld [vmem:[%s362 + $0x18] sm:$0xf]
        %v370 = vld [vmem:[%s362 + $0x1c] sm:$0xf]
        %v371 = vld [vmem:[%s362 + $0x20] sm:$0xf]
        %v372 = vld [vmem:[%s362 + $0x24] sm:$0xf]
        %v373 = vld [vmem:[%s362 + $0x28] sm:$0xf]
        %v374 = vld [vmem:[%s362 + $0x2c] sm:$0xf]
        %v375 = vld [vmem:[%s362 + $0x30] sm:$0xf]
        %v376 = vld [vmem:[%s362 + $0x34] sm:$0xf]
        %v377 = vld [vmem:[%s362 + $0x38] sm:$0xf]
        %v378 = vld [vmem:[%s362 + $0x3c] sm:$0xf]
        %v381 = vunpack.c.l.b16 %v343
        %v382 = vunpack.c.l.b16 %v361
        %v383 = vpack.c.b16 %v382, %v381
        %v385 = vshrl.u32 %v383, 16
        %v387 = vshll.u32 %v383, 16
        %v389 = vrot.slane %v387, 1
        %v390 = vor.u32 %v385, %v389
        %v408 = vunpack.c.l.b16 %v363
        %v409 = vunpack.c.l.b16 %v364
        %v410 = vunpack.c.l.b16 %v365
        %v411 = vunpack.c.l.b16 %v366
        %v412 = vunpack.c.l.b16 %v367
        %v413 = vunpack.c.l.b16 %v368
        %v414 = vunpack.c.l.b16 %v369
        %v415 = vunpack.c.l.b16 %v370
        %v416 = vunpack.c.l.b16 %v371
        %v417 = vunpack.c.l.b16 %v372
        %v418 = vunpack.c.l.b16 %v373
        %v419 = vunpack.c.l.b16 %v374
        %v420 = vunpack.c.l.b16 %v375
        %v421 = vunpack.c.l.b16 %v376
        %v422 = vunpack.c.l.b16 %v377
        %v423 = vunpack.c.l.b16 %v378
        %v424 = vpack.c.b16 %v409, %v408
        %v425 = vpack.c.b16 %v411, %v410
        %v426 = vpack.c.b16 %v413, %v412
        %v427 = vpack.c.b16 %v415, %v414
        %v428 = vpack.c.b16 %v417, %v416
        %v429 = vpack.c.b16 %v419, %v418
        %v430 = vpack.c.b16 %v421, %v420
        %v431 = vpack.c.b16 %v423, %v422
        %440 = vmatprep.subr.bf16.mxu0 0
        %441 = vmatpush1.bf16.msra.mxu0 %v424
        %442 = vmatprep.subr.bf16.mxu0 0
        %443 = vmatpush1.bf16.msra.mxu0 %v425
        %444 = vmatprep.subr.bf16.mxu0 0
        %445 = vmatpush1.bf16.msra.mxu0 %v426
        %446 = vmatprep.subr.bf16.mxu0 0
        %447 = vmatpush1.bf16.msra.mxu0 %v427
        %448 = vmatprep.subr.bf16.mxu0 0
        %449 = vmatpush1.bf16.msra.mxu0 %v428
        %450 = vmatprep.subr.bf16.mxu0 0
        %451 = vmatpush1.bf16.msra.mxu0 %v429
        %452 = vmatprep.subr.bf16.mxu0 0
        %453 = vmatpush1.bf16.msra.mxu0 %v430
        %454 = vmatprep.subr.bf16.mxu0 0
        %455 = vmatpush1.bf16.msra.mxu0 %v431
        %456 = vmatprep.subr.bf16.mxu0 0
        %457 = vmatpush1.bf16.msra.mxu0 0
        %458 = vmatprep.subr.bf16.mxu0 0
        %459 = vmatpush1.bf16.msra.mxu0 0
        %460 = vmatprep.subr.bf16.mxu0 0
        %461 = vmatpush1.bf16.msra.mxu0 0
        %462 = vmatprep.subr.bf16.mxu0 0
        %463 = vmatpush1.bf16.msra.mxu0 0
        %464 = vmatprep.subr.bf16.mxu0 0
        %465 = vmatpush1.bf16.msra.mxu0 0
        %466 = vmatprep.subr.bf16.mxu0 0
        %467 = vmatpush1.bf16.msra.mxu0 0
        %468 = vmatprep.subr.bf16.mxu0 0
        %469 = vmatpush1.bf16.msra.mxu0 0
        %470 = vmatprep.subr.bf16.mxu0 0
        %471 = vmatpush1.bf16.msra.mxu0 0
        %472 = vmatprep.mubr.bf16.mxu0 0
        %473 = vmatmul.mubr.bf16.gmra.mrb[0].mxu0 %v390
        %v474 = vpop.f32.mrb[0].mxu0
        %v475 = vadd.f32 0.0, %v474
        %v476 = vpop.f32.mrb[0].mxu0
        %v477 = vpop.f32.mrb[0].mxu0
        %v478 = vadd.f32 0.0, %v477
        %v479 = vpop.f32.mrb[0].mxu0
        %480 = vdwg.mxu0
        %v482 = vunpack.c.l.b16 %v344
        %v483 = vpack.c.b16 %v482, %v381
        %v501 = vunpack.c.l.b16 %v345
        %v502 = vunpack.c.l.b16 %v346
        %v503 = vunpack.c.l.b16 %v347
        %v504 = vunpack.c.l.b16 %v348
        %v505 = vunpack.c.l.b16 %v349
        %v506 = vunpack.c.l.b16 %v350
        %v507 = vunpack.c.l.b16 %v351
        %v508 = vunpack.c.l.b16 %v352
        %v509 = vunpack.c.l.b16 %v353
        %v510 = vunpack.c.l.b16 %v354
        %v511 = vunpack.c.l.b16 %v355
        %v512 = vunpack.c.l.b16 %v356
        %v513 = vunpack.c.l.b16 %v357
        %v514 = vunpack.c.l.b16 %v358
        %v515 = vunpack.c.l.b16 %v359
        %v516 = vunpack.c.l.b16 %v360
        %v517 = vpack.c.b16 %v502, %v501
        %v518 = vpack.c.b16 %v504, %v503
        %v519 = vpack.c.b16 %v506, %v505
        %v520 = vpack.c.b16 %v508, %v507
        %v521 = vpack.c.b16 %v510, %v509
        %v522 = vpack.c.b16 %v512, %v511
        %v523 = vpack.c.b16 %v514, %v513
        %v524 = vpack.c.b16 %v516, %v515
        %533 = vmatprep.subr.bf16.mxu0 0
        %534 = vmatpush1.bf16.msra.mxu0 %v517
        %535 = vmatprep.subr.bf16.mxu0 0
        %536 = vmatpush1.bf16.msra.mxu0 %v518
        %537 = vmatprep.subr.bf16.mxu0 0
        %538 = vmatpush1.bf16.msra.mxu0 %v519
        %539 = vmatprep.subr.bf16.mxu0 0
        %540 = vmatpush1.bf16.msra.mxu0 %v520
        %541 = vmatprep.subr.bf16.mxu0 0
        %542 = vmatpush1.bf16.msra.mxu0 %v521
        %543 = vmatprep.subr.bf16.mxu0 0
        %544 = vmatpush1.bf16.msra.mxu0 %v522
        %545 = vmatprep.subr.bf16.mxu0 0
        %546 = vmatpush1.bf16.msra.mxu0 %v523
        %547 = vmatprep.subr.bf16.mxu0 0
        %548 = vmatpush1.bf16.msra.mxu0 %v524
        %549 = vmatprep.subr.bf16.mxu0 0
        %550 = vmatpush1.bf16.msra.mxu0 0
        %551 = vmatprep.subr.bf16.mxu0 0
        %552 = vmatpush1.bf16.msra.mxu0 0
        %553 = vmatprep.subr.bf16.mxu0 0
        %554 = vmatpush1.bf16.msra.mxu0 0
        %555 = vmatprep.subr.bf16.mxu0 0
        %556 = vmatpush1.bf16.msra.mxu0 0
        %557 = vmatprep.subr.bf16.mxu0 0
        %558 = vmatpush1.bf16.msra.mxu0 0
        %559 = vmatprep.subr.bf16.mxu0 0
        %560 = vmatpush1.bf16.msra.mxu0 0
        %561 = vmatprep.subr.bf16.mxu0 0
        %562 = vmatpush1.bf16.msra.mxu0 0
        %563 = vmatprep.subr.bf16.mxu0 0
        %564 = vmatpush1.bf16.msra.mxu0 0
        %565 = vmatprep.mubr.bf16.mxu0 0
        %566 = vmatmul.mubr.bf16.gmra.mrb[0].mxu0 %v483
        %v567 = vpop.f32.mrb[0].mxu0
        %v568 = vadd.f32 %v475, %v567
        %v569 = vpop.f32.mrb[0].mxu0
        %v570 = vpop.f32.mrb[0].mxu0
        %v571 = vadd.f32 %v478, %v570
        %v572 = vpop.f32.mrb[0].mxu0
        %573 = vdwg.mxu0
        %v574 = vld [vmem:[%s342] sm:$0xe]
        %s575 = scalar_lea.vmem %s1, 128
        %v576 = vld [vmem:[%s575] sm:$0xf]
        %v577 = vld [vmem:[%s575 + $0x4] sm:$0xf]
        %v578 = vld [vmem:[%s575 + $0x8] sm:$0xf]
        %v579 = vld [vmem:[%s575 + $0xc] sm:$0xf]
        %v580 = vld [vmem:[%s575 + $0x10] sm:$0xf]
        %v581 = vld [vmem:[%s575 + $0x14] sm:$0xf]
        %v582 = vld [vmem:[%s575 + $0x18] sm:$0xf]
        %v583 = vld [vmem:[%s575 + $0x1c] sm:$0xf]
        %v584 = vld [vmem:[%s575 + $0x20] sm:$0xf]
        %v585 = vld [vmem:[%s575 + $0x24] sm:$0xf]
        %v586 = vld [vmem:[%s575 + $0x28] sm:$0xf]
        %v587 = vld [vmem:[%s575 + $0x2c] sm:$0xf]
        %v588 = vld [vmem:[%s575 + $0x30] sm:$0xf]
        %v589 = vld [vmem:[%s575 + $0x34] sm:$0xf]
        %v590 = vld [vmem:[%s575 + $0x38] sm:$0xf]
        %v591 = vld [vmem:[%s575 + $0x3c] sm:$0xf]
        %v593 = vunpack.c.l.b16 %v574
        %v594 = vpack.c.b16 %v382, %v593
        %v595 = vrot.slane %v594, 1
        %v613 = vunpack.c.l.b16 %v576
        %v614 = vunpack.c.l.b16 %v577
        %v615 = vunpack.c.l.b16 %v578
        %v616 = vunpack.c.l.b16 %v579
        %v617 = vunpack.c.l.b16 %v580
        %v618 = vunpack.c.l.b16 %v581
        %v619 = vunpack.c.l.b16 %v582
        %v620 = vunpack.c.l.b16 %v583
        %v621 = vunpack.c.l.b16 %v584
        %v622 = vunpack.c.l.b16 %v585
        %v623 = vunpack.c.l.b16 %v586
        %v624 = vunpack.c.l.b16 %v587
        %v625 = vunpack.c.l.b16 %v588
        %v626 = vunpack.c.l.b16 %v589
        %v627 = vunpack.c.l.b16 %v590
        %v628 = vunpack.c.l.b16 %v591
        %v629 = vpack.c.b16 %v614, %v613
        %v630 = vpack.c.b16 %v616, %v615
        %v631 = vpack.c.b16 %v618, %v617
        %v632 = vpack.c.b16 %v620, %v619
        %v633 = vpack.c.b16 %v622, %v621
        %v634 = vpack.c.b16 %v624, %v623
        %v635 = vpack.c.b16 %v626, %v625
        %v636 = vpack.c.b16 %v628, %v627
        %645 = vmatprep.subr.bf16.mxu0 0
        %646 = vmatpush1.bf16.msra.mxu0 %v629
        %647 = vmatprep.subr.bf16.mxu0 0
        %648 = vmatpush1.bf16.msra.mxu0 %v630
        %649 = vmatprep.subr.bf16.mxu0 0
        %650 = vmatpush1.bf16.msra.mxu0 %v631
        %651 = vmatprep.subr.bf16.mxu0 0
        %652 = vmatpush1.bf16.msra.mxu0 %v632
        %653 = vmatprep.subr.bf16.mxu0 0
        %654 = vmatpush1.bf16.msra.mxu0 %v633
        %655 = vmatprep.subr.bf16.mxu0 0
        %656 = vmatpush1.bf16.msra.mxu0 %v634
        %657 = vmatprep.subr.bf16.mxu0 0
        %658 = vmatpush1.bf16.msra.mxu0 %v635
        %659 = vmatprep.subr.bf16.mxu0 0
        %660 = vmatpush1.bf16.msra.mxu0 %v636
        %661 = vmatprep.subr.bf16.mxu0 0
        %662 = vmatpush1.bf16.msra.mxu0 0
        %663 = vmatprep.subr.bf16.mxu0 0
        %664 = vmatpush1.bf16.msra.mxu0 0
        %665 = vmatprep.subr.bf16.mxu0 0
        %666 = vmatpush1.bf16.msra.mxu0 0
        %667 = vmatprep.subr.bf16.mxu0 0
        %668 = vmatpush1.bf16.msra.mxu0 0
        %669 = vmatprep.subr.bf16.mxu0 0
        %670 = vmatpush1.bf16.msra.mxu0 0
        %671 = vmatprep.subr.bf16.mxu0 0
        %672 = vmatpush1.bf16.msra.mxu0 0
        %673 = vmatprep.subr.bf16.mxu0 0
        %674 = vmatpush1.bf16.msra.mxu0 0
        %675 = vmatprep.subr.bf16.mxu0 0
        %676 = vmatpush1.bf16.msra.mxu0 0
        %677 = vmatprep.mubr.bf16.mxu0 0
        %678 = vmatmul.mubr.bf16.gmra.mrb[0].mxu0 %v595
        %v679 = vpop.f32.mrb[0].mxu0
        %v680 = vadd.f32 0.0, %v679
        %v681 = vpop.f32.mrb[0].mxu0
        %v682 = vpop.f32.mrb[0].mxu0
        %v683 = vadd.f32 0.0, %v682
        %v684 = vpop.f32.mrb[0].mxu0
        %685 = vdwg.mxu0
        %v686 = vadd.f32 %v568, %v680
        %v687 = vadd.f32 %v571, %v683
        %s688 = sadd.s32 %s335, 1
        %s689 = smul.u32 %s688, 2
        %s690 = smul.addr %s689, 4
        %s691 = scalar_lea.vmem %s327, %s690
        %v692 = vld [vmem:[%s691] sm:$0xf]
        %v693 = vld [vmem:[%s691 + $0x4] sm:$0x7]
        %s694 = scalar_lea.vmem %s1, 192
        %v695 = vld [vmem:[%s694] sm:$0xf]
        %v696 = vld [vmem:[%s694 + $0x4] sm:$0xf]
        %v697 = vld [vmem:[%s694 + $0x8] sm:$0xf]
        %v698 = vld [vmem:[%s694 + $0xc] sm:$0xf]
        %v699 = vld [vmem:[%s694 + $0x10] sm:$0xf]
        %v700 = vld [vmem:[%s694 + $0x14] sm:$0xf]
        %v701 = vld [vmem:[%s694 + $0x18] sm:$0xf]
        %v702 = vld [vmem:[%s694 + $0x1c] sm:$0xf]
        %v703 = vld [vmem:[%s694 + $0x20] sm:$0xf]
        %v704 = vld [vmem:[%s694 + $0x24] sm:$0xf]
        %v705 = vld [vmem:[%s694 + $0x28] sm:$0xf]
        %v706 = vld [vmem:[%s694 + $0x2c] sm:$0xf]
        %v707 = vld [vmem:[%s694 + $0x30] sm:$0xf]
        %v708 = vld [vmem:[%s694 + $0x34] sm:$0xf]
        %v709 = vld [vmem:[%s694 + $0x38] sm:$0xf]
        %v710 = vld [vmem:[%s694 + $0x3c] sm:$0xf]
        %v713 = vunpack.c.l.b16 %v692
        %v714 = vunpack.c.l.b16 %v693
        %v715 = vpack.c.b16 %v714, %v713
        %v733 = vunpack.c.l.b16 %v695
        %v734 = vunpack.c.l.b16 %v696
        %v735 = vunpack.c.l.b16 %v697
        %v736 = vunpack.c.l.b16 %v698
        %v737 = vunpack.c.l.b16 %v699
        %v738 = vunpack.c.l.b16 %v700
        %v739 = vunpack.c.l.b16 %v701
        %v740 = vunpack.c.l.b16 %v702
        %v741 = vunpack.c.l.b16 %v703
        %v742 = vunpack.c.l.b16 %v704
        %v743 = vunpack.c.l.b16 %v705
        %v744 = vunpack.c.l.b16 %v706
        %v745 = vunpack.c.l.b16 %v707
        %v746 = vunpack.c.l.b16 %v708
        %v747 = vunpack.c.l.b16 %v709
        %v748 = vunpack.c.l.b16 %v710
        %v749 = vpack.c.b16 %v734, %v733
        %v750 = vpack.c.b16 %v736, %v735
        %v751 = vpack.c.b16 %v738, %v737
        %v752 = vpack.c.b16 %v740, %v739
        %v753 = vpack.c.b16 %v742, %v741
        %v754 = vpack.c.b16 %v744, %v743
        %v755 = vpack.c.b16 %v746, %v745
        %v756 = vpack.c.b16 %v748, %v747
        %765 = vmatprep.subr.bf16.mxu0 0
        %766 = vmatpush1.bf16.msra.mxu0 %v749
        %767 = vmatprep.subr.bf16.mxu0 0
        %768 = vmatpush1.bf16.msra.mxu0 %v750
        %769 = vmatprep.subr.bf16.mxu0 0
        %770 = vmatpush1.bf16.msra.mxu0 %v751
        %771 = vmatprep.subr.bf16.mxu0 0
        %772 = vmatpush1.bf16.msra.mxu0 %v752
        %773 = vmatprep.subr.bf16.mxu0 0
        %774 = vmatpush1.bf16.msra.mxu0 %v753
        %775 = vmatprep.subr.bf16.mxu0 0
        %776 = vmatpush1.bf16.msra.mxu0 %v754
        %777 = vmatprep.subr.bf16.mxu0 0
        %778 = vmatpush1.bf16.msra.mxu0 %v755
        %779 = vmatprep.subr.bf16.mxu0 0
        %780 = vmatpush1.bf16.msra.mxu0 %v756
        %781 = vmatprep.subr.bf16.mxu0 0
        %782 = vmatpush1.bf16.msra.mxu0 0
        %783 = vmatprep.subr.bf16.mxu0 0
        %784 = vmatpush1.bf16.msra.mxu0 0
        %785 = vmatprep.subr.bf16.mxu0 0
        %786 = vmatpush1.bf16.msra.mxu0 0
        %787 = vmatprep.subr.bf16.mxu0 0
        %788 = vmatpush1.bf16.msra.mxu0 0
        %789 = vmatprep.subr.bf16.mxu0 0
        %790 = vmatpush1.bf16.msra.mxu0 0
        %791 = vmatprep.subr.bf16.mxu0 0
        %792 = vmatpush1.bf16.msra.mxu0 0
        %793 = vmatprep.subr.bf16.mxu0 0
        %794 = vmatpush1.bf16.msra.mxu0 0
        %795 = vmatprep.subr.bf16.mxu0 0
        %796 = vmatpush1.bf16.msra.mxu0 0
        %797 = vmatprep.mubr.bf16.mxu0 0
        %798 = vmatmul.mubr.bf16.gmra.mrb[0].mxu0 %v715
        %v799 = vpop.f32.mrb[0].mxu0
        %v800 = vadd.f32 0.0, %v799
        %v801 = vpop.f32.mrb[0].mxu0
        %v802 = vpop.f32.mrb[0].mxu0
        %v803 = vadd.f32 0.0, %v802
        %v804 = vpop.f32.mrb[0].mxu0
        %805 = vdwg.mxu0
        %v806 = vadd.f32 %v686, %v800
        %v807 = vadd.f32 %v687, %v803
        %v808 = vld [vmem:[%s691 + $0x4] sm:$0xf]
        %s809 = scalar_lea.vmem %s1, 256
        %v810 = vld [vmem:[%s809] sm:$0xf]
        %v811 = vld [vmem:[%s809 + $0x4] sm:$0xf]
        %v812 = vld [vmem:[%s809 + $0x8] sm:$0xf]
        %v813 = vld [vmem:[%s809 + $0xc] sm:$0xf]
        %v814 = vld [vmem:[%s809 + $0x10] sm:$0xf]
        %v815 = vld [vmem:[%s809 + $0x14] sm:$0xf]
        %v816 = vld [vmem:[%s809 + $0x18] sm:$0xf]
        %v817 = vld [vmem:[%s809 + $0x1c] sm:$0xf]
        %v818 = vld [vmem:[%s809 + $0x20] sm:$0xf]
        %v819 = vld [vmem:[%s809 + $0x24] sm:$0xf]
        %v820 = vld [vmem:[%s809 + $0x28] sm:$0xf]
        %v821 = vld [vmem:[%s809 + $0x2c] sm:$0xf]
        %v822 = vld [vmem:[%s809 + $0x30] sm:$0xf]
        %v823 = vld [vmem:[%s809 + $0x34] sm:$0xf]
        %v824 = vld [vmem:[%s809 + $0x38] sm:$0xf]
        %v825 = vld [vmem:[%s809 + $0x3c] sm:$0xf]
        %v827 = vunpack.c.l.b16 %v808
        %v828 = vpack.c.b16 %v827, %v713
        %v830 = vshrl.u32 %v828, 16
        %v832 = vshll.u32 %v828, 16
        %v834 = vrot.slane %v832, 1
        %v835 = vor.u32 %v830, %v834
        %v853 = vunpack.c.l.b16 %v810
        %v854 = vunpack.c.l.b16 %v811
        %v855 = vunpack.c.l.b16 %v812
        %v856 = vunpack.c.l.b16 %v813
        %v857 = vunpack.c.l.b16 %v814
        %v858 = vunpack.c.l.b16 %v815
        %v859 = vunpack.c.l.b16 %v816
        %v860 = vunpack.c.l.b16 %v817
        %v861 = vunpack.c.l.b16 %v818
        %v862 = vunpack.c.l.b16 %v819
        %v863 = vunpack.c.l.b16 %v820
        %v864 = vunpack.c.l.b16 %v821
        %v865 = vunpack.c.l.b16 %v822
        %v866 = vunpack.c.l.b16 %v823
        %v867 = vunpack.c.l.b16 %v824
        %v868 = vunpack.c.l.b16 %v825
        %v869 = vpack.c.b16 %v854, %v853
        %v870 = vpack.c.b16 %v856, %v855
        %v871 = vpack.c.b16 %v858, %v857
        %v872 = vpack.c.b16 %v860, %v859
        %v873 = vpack.c.b16 %v862, %v861
        %v874 = vpack.c.b16 %v864, %v863
        %v875 = vpack.c.b16 %v866, %v865
        %v876 = vpack.c.b16 %v868, %v867
        %885 = vmatprep.subr.bf16.mxu0 0
        %886 = vmatpush1.bf16.msra.mxu0 %v869
        %887 = vmatprep.subr.bf16.mxu0 0
        %888 = vmatpush1.bf16.msra.mxu0 %v870
        %889 = vmatprep.subr.bf16.mxu0 0
        %890 = vmatpush1.bf16.msra.mxu0 %v871
        %891 = vmatprep.subr.bf16.mxu0 0
        %892 = vmatpush1.bf16.msra.mxu0 %v872
        %893 = vmatprep.subr.bf16.mxu0 0
        %894 = vmatpush1.bf16.msra.mxu0 %v873
        %895 = vmatprep.subr.bf16.mxu0 0
        %896 = vmatpush1.bf16.msra.mxu0 %v874
        %897 = vmatprep.subr.bf16.mxu0 0
        %898 = vmatpush1.bf16.msra.mxu0 %v875
        %899 = vmatprep.subr.bf16.mxu0 0
        %900 = vmatpush1.bf16.msra.mxu0 %v876
        %901 = vmatprep.subr.bf16.mxu0 0
        %902 = vmatpush1.bf16.msra.mxu0 0
        %903 = vmatprep.subr.bf16.mxu0 0
        %904 = vmatpush1.bf16.msra.mxu0 0
        %905 = vmatprep.subr.bf16.mxu0 0
        %906 = vmatpush1.bf16.msra.mxu0 0
        %907 = vmatprep.subr.bf16.mxu0 0
        %908 = vmatpush1.bf16.msra.mxu0 0
        %909 = vmatprep.subr.bf16.mxu0 0
        %910 = vmatpush1.bf16.msra.mxu0 0
        %911 = vmatprep.subr.bf16.mxu0 0
        %912 = vmatpush1.bf16.msra.mxu0 0
        %913 = vmatprep.subr.bf16.mxu0 0
        %914 = vmatpush1.bf16.msra.mxu0 0
        %915 = vmatprep.subr.bf16.mxu0 0
        %916 = vmatpush1.bf16.msra.mxu0 0
        %917 = vmatprep.mubr.bf16.mxu0 0
        %918 = vmatmul.mubr.bf16.gmra.mrb[0].mxu0 %v835
        %v919 = vpop.f32.mrb[0].mxu0
        %v920 = vadd.f32 0.0, %v919
        %v921 = vpop.f32.mrb[0].mxu0
        %v922 = vpop.f32.mrb[0].mxu0
        %v923 = vadd.f32 0.0, %v922
        %v924 = vpop.f32.mrb[0].mxu0
        %925 = vdwg.mxu0
        %v926 = vadd.f32 %v806, %v920
        %v927 = vadd.f32 %v807, %v923
        %v928 = vld [vmem:[%s691] sm:$0xe]
        %s929 = scalar_lea.vmem %s1, 320
        %v930 = vld [vmem:[%s929] sm:$0xf]
        %v931 = vld [vmem:[%s929 + $0x4] sm:$0xf]
        %v932 = vld [vmem:[%s929 + $0x8] sm:$0xf]
        %v933 = vld [vmem:[%s929 + $0xc] sm:$0xf]
        %v934 = vld [vmem:[%s929 + $0x10] sm:$0xf]
        %v935 = vld [vmem:[%s929 + $0x14] sm:$0xf]
        %v936 = vld [vmem:[%s929 + $0x18] sm:$0xf]
        %v937 = vld [vmem:[%s929 + $0x1c] sm:$0xf]
        %v938 = vld [vmem:[%s929 + $0x20] sm:$0xf]
        %v939 = vld [vmem:[%s929 + $0x24] sm:$0xf]
        %v940 = vld [vmem:[%s929 + $0x28] sm:$0xf]
        %v941 = vld [vmem:[%s929 + $0x2c] sm:$0xf]
        %v942 = vld [vmem:[%s929 + $0x30] sm:$0xf]
        %v943 = vld [vmem:[%s929 + $0x34] sm:$0xf]
        %v944 = vld [vmem:[%s929 + $0x38] sm:$0xf]
        %v945 = vld [vmem:[%s929 + $0x3c] sm:$0xf]
        %v947 = vunpack.c.l.b16 %v928
        %v948 = vpack.c.b16 %v827, %v947
        %v949 = vrot.slane %v948, 1
        %v967 = vunpack.c.l.b16 %v930
        %v968 = vunpack.c.l.b16 %v931
        %v969 = vunpack.c.l.b16 %v932
        %v970 = vunpack.c.l.b16 %v933
        %v971 = vunpack.c.l.b16 %v934
        %v972 = vunpack.c.l.b16 %v935
        %v973 = vunpack.c.l.b16 %v936
        %v974 = vunpack.c.l.b16 %v937
        %v975 = vunpack.c.l.b16 %v938
        %v976 = vunpack.c.l.b16 %v939
        %v977 = vunpack.c.l.b16 %v940
        %v978 = vunpack.c.l.b16 %v941
        %v979 = vunpack.c.l.b16 %v942
        %v980 = vunpack.c.l.b16 %v943
        %v981 = vunpack.c.l.b16 %v944
        %v982 = vunpack.c.l.b16 %v945
        %v983 = vpack.c.b16 %v968, %v967
        %v984 = vpack.c.b16 %v970, %v969
        %v985 = vpack.c.b16 %v972, %v971
        %v986 = vpack.c.b16 %v974, %v973
        %v987 = vpack.c.b16 %v976, %v975
        %v988 = vpack.c.b16 %v978, %v977
        %v989 = vpack.c.b16 %v980, %v979
        %v990 = vpack.c.b16 %v982, %v981
        %999 = vmatprep.subr.bf16.mxu0 0
        %1000 = vmatpush1.bf16.msra.mxu0 %v983
        %1001 = vmatprep.subr.bf16.mxu0 0
        %1002 = vmatpush1.bf16.msra.mxu0 %v984
        %1003 = vmatprep.subr.bf16.mxu0 0
        %1004 = vmatpush1.bf16.msra.mxu0 %v985
        %1005 = vmatprep.subr.bf16.mxu0 0
        %1006 = vmatpush1.bf16.msra.mxu0 %v986
        %1007 = vmatprep.subr.bf16.mxu0 0
        %1008 = vmatpush1.bf16.msra.mxu0 %v987
        %1009 = vmatprep.subr.bf16.mxu0 0
        %1010 = vmatpush1.bf16.msra.mxu0 %v988
        %1011 = vmatprep.subr.bf16.mxu0 0
        %1012 = vmatpush1.bf16.msra.mxu0 %v989
        %1013 = vmatprep.subr.bf16.mxu0 0
        %1014 = vmatpush1.bf16.msra.mxu0 %v990
        %1015 = vmatprep.subr.bf16.mxu0 0
        %1016 = vmatpush1.bf16.msra.mxu0 0
        %1017 = vmatprep.subr.bf16.mxu0 0
        %1018 = vmatpush1.bf16.msra.mxu0 0
        %1019 = vmatprep.subr.bf16.mxu0 0
        %1020 = vmatpush1.bf16.msra.mxu0 0
        %1021 = vmatprep.subr.bf16.mxu0 0
        %1022 = vmatpush1.bf16.msra.mxu0 0
        %1023 = vmatprep.subr.bf16.mxu0 0
        %1024 = vmatpush1.bf16.msra.mxu0 0
        %1025 = vmatprep.subr.bf16.mxu0 0
        %1026 = vmatpush1.bf16.msra.mxu0 0
        %1027 = vmatprep.subr.bf16.mxu0 0
        %1028 = vmatpush1.bf16.msra.mxu0 0
        %1029 = vmatprep.subr.bf16.mxu0 0
        %1030 = vmatpush1.bf16.msra.mxu0 0
        %1031 = vmatprep.mubr.bf16.mxu0 0
        %1032 = vmatmul.mubr.bf16.gmra.mrb[0].mxu0 %v949
        %v1033 = vpop.f32.mrb[0].mxu0
        %v1034 = vadd.f32 0.0, %v1033
        %v1035 = vpop.f32.mrb[0].mxu0
        %v1036 = vpop.f32.mrb[0].mxu0
        %v1037 = vadd.f32 0.0, %v1036
        %v1038 = vpop.f32.mrb[0].mxu0
        %1039 = vdwg.mxu0
        %v1040 = vadd.f32 %v926, %v1034
        %v1041 = vadd.f32 %v927, %v1037
        %s1042 = sadd.s32 %s335, 2
        %s1043 = smul.u32 %s1042, 2
        %s1044 = smul.addr %s1043, 4
        %s1045 = scalar_lea.vmem %s327, %s1044
        %v1046 = vld [vmem:[%s1045] sm:$0xf]
        %v1047 = vld [vmem:[%s1045 + $0x4] sm:$0x7]
        %s1048 = scalar_lea.vmem %s1, 384
        %v1049 = vld [vmem:[%s1048] sm:$0xf]
        %v1050 = vld [vmem:[%s1048 + $0x4] sm:$0xf]
        %v1051 = vld [vmem:[%s1048 + $0x8] sm:$0xf]
        %v1052 = vld [vmem:[%s1048 + $0xc] sm:$0xf]
        %v1053 = vld [vmem:[%s1048 + $0x10] sm:$0xf]
        %v1054 = vld [vmem:[%s1048 + $0x14] sm:$0xf]
        %v1055 = vld [vmem:[%s1048 + $0x18] sm:$0xf]
        %v1056 = vld [vmem:[%s1048 + $0x1c] sm:$0xf]
        %v1057 = vld [vmem:[%s1048 + $0x20] sm:$0xf]
        %v1058 = vld [vmem:[%s1048 + $0x24] sm:$0xf]
        %v1059 = vld [vmem:[%s1048 + $0x28] sm:$0xf]
        %v1060 = vld [vmem:[%s1048 + $0x2c] sm:$0xf]
        %v1061 = vld [vmem:[%s1048 + $0x30] sm:$0xf]
        %v1062 = vld [vmem:[%s1048 + $0x34] sm:$0xf]
        %v1063 = vld [vmem:[%s1048 + $0x38] sm:$0xf]
        %v1064 = vld [vmem:[%s1048 + $0x3c] sm:$0xf]
        %v1067 = vunpack.c.l.b16 %v1046
        %v1068 = vunpack.c.l.b16 %v1047
        %v1069 = vpack.c.b16 %v1068, %v1067
        %v1087 = vunpack.c.l.b16 %v1049
        %v1088 = vunpack.c.l.b16 %v1050
        %v1089 = vunpack.c.l.b16 %v1051
        %v1090 = vunpack.c.l.b16 %v1052
        %v1091 = vunpack.c.l.b16 %v1053
        %v1092 = vunpack.c.l.b16 %v1054
        %v1093 = vunpack.c.l.b16 %v1055
        %v1094 = vunpack.c.l.b16 %v1056
        %v1095 = vunpack.c.l.b16 %v1057
        %v1096 = vunpack.c.l.b16 %v1058
        %v1097 = vunpack.c.l.b16 %v1059
        %v1098 = vunpack.c.l.b16 %v1060
        %v1099 = vunpack.c.l.b16 %v1061
        %v1100 = vunpack.c.l.b16 %v1062
        %v1101 = vunpack.c.l.b16 %v1063
        %v1102 = vunpack.c.l.b16 %v1064
        %v1103 = vpack.c.b16 %v1088, %v1087
        %v1104 = vpack.c.b16 %v1090, %v1089
        %v1105 = vpack.c.b16 %v1092, %v1091
        %v1106 = vpack.c.b16 %v1094, %v1093
        %v1107 = vpack.c.b16 %v1096, %v1095
        %v1108 = vpack.c.b16 %v1098, %v1097
        %v1109 = vpack.c.b16 %v1100, %v1099
        %v1110 = vpack.c.b16 %v1102, %v1101
        %1119 = vmatprep.subr.bf16.mxu0 0
        %1120 = vmatpush1.bf16.msra.mxu0 %v1103
        %1121 = vmatprep.subr.bf16.mxu0 0
        %1122 = vmatpush1.bf16.msra.mxu0 %v1104
        %1123 = vmatprep.subr.bf16.mxu0 0
        %1124 = vmatpush1.bf16.msra.mxu0 %v1105
        %1125 = vmatprep.subr.bf16.mxu0 0
        %1126 = vmatpush1.bf16.msra.mxu0 %v1106
        %1127 = vmatprep.subr.bf16.mxu0 0
        %1128 = vmatpush1.bf16.msra.mxu0 %v1107
        %1129 = vmatprep.subr.bf16.mxu0 0
        %1130 = vmatpush1.bf16.msra.mxu0 %v1108
        %1131 = vmatprep.subr.bf16.mxu0 0
        %1132 = vmatpush1.bf16.msra.mxu0 %v1109
        %1133 = vmatprep.subr.bf16.mxu0 0
        %1134 = vmatpush1.bf16.msra.mxu0 %v1110
        %1135 = vmatprep.subr.bf16.mxu0 0
        %1136 = vmatpush1.bf16.msra.mxu0 0
        %1137 = vmatprep.subr.bf16.mxu0 0
        %1138 = vmatpush1.bf16.msra.mxu0 0
        %1139 = vmatprep.subr.bf16.mxu0 0
        %1140 = vmatpush1.bf16.msra.mxu0 0
        %1141 = vmatprep.subr.bf16.mxu0 0
        %1142 = vmatpush1.bf16.msra.mxu0 0
        %1143 = vmatprep.subr.bf16.mxu0 0
        %1144 = vmatpush1.bf16.msra.mxu0 0
        %1145 = vmatprep.subr.bf16.mxu0 0
        %1146 = vmatpush1.bf16.msra.mxu0 0
        %1147 = vmatprep.subr.bf16.mxu0 0
        %1148 = vmatpush1.bf16.msra.mxu0 0
        %1149 = vmatprep.subr.bf16.mxu0 0
        %1150 = vmatpush1.bf16.msra.mxu0 0
        %1151 = vmatprep.mubr.bf16.mxu0 0
        %1152 = vmatmul.mubr.bf16.gmra.mrb[0].mxu0 %v1069
        %v1153 = vpop.f32.mrb[0].mxu0
        %v1154 = vadd.f32 0.0, %v1153
        %v1155 = vpop.f32.mrb[0].mxu0
        %v1156 = vpop.f32.mrb[0].mxu0
        %v1157 = vadd.f32 0.0, %v1156
        %v1158 = vpop.f32.mrb[0].mxu0
        %1159 = vdwg.mxu0
        %v1160 = vadd.f32 %v1040, %v1154
        %v1161 = vadd.f32 %v1041, %v1157
        %v1162 = vld [vmem:[%s1045 + $0x4] sm:$0xf]
        %s1163 = scalar_lea.vmem %s1, 448
        %v1164 = vld [vmem:[%s1163] sm:$0xf]
        %v1165 = vld [vmem:[%s1163 + $0x4] sm:$0xf]
        %v1166 = vld [vmem:[%s1163 + $0x8] sm:$0xf]
        %v1167 = vld [vmem:[%s1163 + $0xc] sm:$0xf]
        %v1168 = vld [vmem:[%s1163 + $0x10] sm:$0xf]
        %v1169 = vld [vmem:[%s1163 + $0x14] sm:$0xf]
        %v1170 = vld [vmem:[%s1163 + $0x18] sm:$0xf]
        %v1171 = vld [vmem:[%s1163 + $0x1c] sm:$0xf]
        %v1172 = vld [vmem:[%s1163 + $0x20] sm:$0xf]
        %v1173 = vld [vmem:[%s1163 + $0x24] sm:$0xf]
        %v1174 = vld [vmem:[%s1163 + $0x28] sm:$0xf]
        %v1175 = vld [vmem:[%s1163 + $0x2c] sm:$0xf]
        %v1176 = vld [vmem:[%s1163 + $0x30] sm:$0xf]
        %v1177 = vld [vmem:[%s1163 + $0x34] sm:$0xf]
        %v1178 = vld [vmem:[%s1163 + $0x38] sm:$0xf]
        %v1179 = vld [vmem:[%s1163 + $0x3c] sm:$0xf]
        %v1181 = vunpack.c.l.b16 %v1162
        %v1182 = vpack.c.b16 %v1181, %v1067
        %v1184 = vshrl.u32 %v1182, 16
        %v1186 = vshll.u32 %v1182, 16
        %v1188 = vrot.slane %v1186, 1
        %v1189 = vor.u32 %v1184, %v1188
        %v1207 = vunpack.c.l.b16 %v1164
        %v1208 = vunpack.c.l.b16 %v1165
        %v1209 = vunpack.c.l.b16 %v1166
        %v1210 = vunpack.c.l.b16 %v1167
        %v1211 = vunpack.c.l.b16 %v1168
        %v1212 = vunpack.c.l.b16 %v1169
        %v1213 = vunpack.c.l.b16 %v1170
        %v1214 = vunpack.c.l.b16 %v1171
        %v1215 = vunpack.c.l.b16 %v1172
        %v1216 = vunpack.c.l.b16 %v1173
        %v1217 = vunpack.c.l.b16 %v1174
        %v1218 = vunpack.c.l.b16 %v1175
        %v1219 = vunpack.c.l.b16 %v1176
        %v1220 = vunpack.c.l.b16 %v1177
        %v1221 = vunpack.c.l.b16 %v1178
        %v1222 = vunpack.c.l.b16 %v1179
        %v1223 = vpack.c.b16 %v1208, %v1207
        %v1224 = vpack.c.b16 %v1210, %v1209
        %v1225 = vpack.c.b16 %v1212, %v1211
        %v1226 = vpack.c.b16 %v1214, %v1213
        %v1227 = vpack.c.b16 %v1216, %v1215
        %v1228 = vpack.c.b16 %v1218, %v1217
        %v1229 = vpack.c.b16 %v1220, %v1219
        %v1230 = vpack.c.b16 %v1222, %v1221
        %1239 = vmatprep.subr.bf16.mxu0 0
        %1240 = vmatpush1.bf16.msra.mxu0 %v1223
        %1241 = vmatprep.subr.bf16.mxu0 0
        %1242 = vmatpush1.bf16.msra.mxu0 %v1224
        %1243 = vmatprep.subr.bf16.mxu0 0
        %1244 = vmatpush1.bf16.msra.mxu0 %v1225
        %1245 = vmatprep.subr.bf16.mxu0 0
        %1246 = vmatpush1.bf16.msra.mxu0 %v1226
        %1247 = vmatprep.subr.bf16.mxu0 0
        %1248 = vmatpush1.bf16.msra.mxu0 %v1227
        %1249 = vmatprep.subr.bf16.mxu0 0
        %1250 = vmatpush1.bf16.msra.mxu0 %v1228
        %1251 = vmatprep.subr.bf16.mxu0 0
        %1252 = vmatpush1.bf16.msra.mxu0 %v1229
        %1253 = vmatprep.subr.bf16.mxu0 0
        %1254 = vmatpush1.bf16.msra.mxu0 %v1230
        %1255 = vmatprep.subr.bf16.mxu0 0
        %1256 = vmatpush1.bf16.msra.mxu0 0
        %1257 = vmatprep.subr.bf16.mxu0 0
        %1258 = vmatpush1.bf16.msra.mxu0 0
        %1259 = vmatprep.subr.bf16.mxu0 0
        %1260 = vmatpush1.bf16.msra.mxu0 0
        %1261 = vmatprep.subr.bf16.mxu0 0
        %1262 = vmatpush1.bf16.msra.mxu0 0
        %1263 = vmatprep.subr.bf16.mxu0 0
        %1264 = vmatpush1.bf16.msra.mxu0 0
        %1265 = vmatprep.subr.bf16.mxu0 0
        %1266 = vmatpush1.bf16.msra.mxu0 0
        %1267 = vmatprep.subr.bf16.mxu0 0
        %1268 = vmatpush1.bf16.msra.mxu0 0
        %1269 = vmatprep.subr.bf16.mxu0 0
        %1270 = vmatpush1.bf16.msra.mxu0 0
        %1271 = vmatprep.mubr.bf16.mxu0 0
        %1272 = vmatmul.mubr.bf16.gmra.mrb[0].mxu0 %v1189
        %v1273 = vpop.f32.mrb[0].mxu0
        %v1274 = vadd.f32 0.0, %v1273
        %v1275 = vpop.f32.mrb[0].mxu0
        %v1276 = vpop.f32.mrb[0].mxu0
        %v1277 = vadd.f32 0.0, %v1276
        %v1278 = vpop.f32.mrb[0].mxu0
        %1279 = vdwg.mxu0
        %v1280 = vadd.f32 %v1160, %v1274
        %v1281 = vadd.f32 %v1161, %v1277
        %v1282 = vld [vmem:[%s1045] sm:$0xe]
        %s1283 = scalar_lea.vmem %s1, 512
        %v1284 = vld [vmem:[%s1283] sm:$0xf]
        %v1285 = vld [vmem:[%s1283 + $0x4] sm:$0xf]
        %v1286 = vld [vmem:[%s1283 + $0x8] sm:$0xf]
        %v1287 = vld [vmem:[%s1283 + $0xc] sm:$0xf]
        %v1288 = vld [vmem:[%s1283 + $0x10] sm:$0xf]
        %v1289 = vld [vmem:[%s1283 + $0x14] sm:$0xf]
        %v1290 = vld [vmem:[%s1283 + $0x18] sm:$0xf]
        %v1291 = vld [vmem:[%s1283 + $0x1c] sm:$0xf]
        %v1292 = vld [vmem:[%s1283 + $0x20] sm:$0xf]
        %v1293 = vld [vmem:[%s1283 + $0x24] sm:$0xf]
        %v1294 = vld [vmem:[%s1283 + $0x28] sm:$0xf]
        %v1295 = vld [vmem:[%s1283 + $0x2c] sm:$0xf]
        %v1296 = vld [vmem:[%s1283 + $0x30] sm:$0xf]
        %v1297 = vld [vmem:[%s1283 + $0x34] sm:$0xf]
        %v1298 = vld [vmem:[%s1283 + $0x38] sm:$0xf]
        %v1299 = vld [vmem:[%s1283 + $0x3c] sm:$0xf]
        %v1301 = vunpack.c.l.b16 %v1282
        %v1302 = vpack.c.b16 %v1181, %v1301
        %v1303 = vrot.slane %v1302, 1
        %v1321 = vunpack.c.l.b16 %v1284
        %v1322 = vunpack.c.l.b16 %v1285
        %v1323 = vunpack.c.l.b16 %v1286
        %v1324 = vunpack.c.l.b16 %v1287
        %v1325 = vunpack.c.l.b16 %v1288
        %v1326 = vunpack.c.l.b16 %v1289
        %v1327 = vunpack.c.l.b16 %v1290
        %v1328 = vunpack.c.l.b16 %v1291
        %v1329 = vunpack.c.l.b16 %v1292
        %v1330 = vunpack.c.l.b16 %v1293
        %v1331 = vunpack.c.l.b16 %v1294
        %v1332 = vunpack.c.l.b16 %v1295
        %v1333 = vunpack.c.l.b16 %v1296
        %v1334 = vunpack.c.l.b16 %v1297
        %v1335 = vunpack.c.l.b16 %v1298
        %v1336 = vunpack.c.l.b16 %v1299
        %v1337 = vpack.c.b16 %v1322, %v1321
        %v1338 = vpack.c.b16 %v1324, %v1323
        %v1339 = vpack.c.b16 %v1326, %v1325
        %v1340 = vpack.c.b16 %v1328, %v1327
        %v1341 = vpack.c.b16 %v1330, %v1329
        %v1342 = vpack.c.b16 %v1332, %v1331
        %v1343 = vpack.c.b16 %v1334, %v1333
        %v1344 = vpack.c.b16 %v1336, %v1335
        %1353 = vmatprep.subr.bf16.mxu0 0
        %1354 = vmatpush1.bf16.msra.mxu0 %v1337
        %1355 = vmatprep.subr.bf16.mxu0 0
        %1356 = vmatpush1.bf16.msra.mxu0 %v1338
        %1357 = vmatprep.subr.bf16.mxu0 0
        %1358 = vmatpush1.bf16.msra.mxu0 %v1339
        %1359 = vmatprep.subr.bf16.mxu0 0
        %1360 = vmatpush1.bf16.msra.mxu0 %v1340
        %1361 = vmatprep.subr.bf16.mxu0 0
        %1362 = vmatpush1.bf16.msra.mxu0 %v1341
        %1363 = vmatprep.subr.bf16.mxu0 0
        %1364 = vmatpush1.bf16.msra.mxu0 %v1342
        %1365 = vmatprep.subr.bf16.mxu0 0
        %1366 = vmatpush1.bf16.msra.mxu0 %v1343
        %1367 = vmatprep.subr.bf16.mxu0 0
        %1368 = vmatpush1.bf16.msra.mxu0 %v1344
        %1369 = vmatprep.subr.bf16.mxu0 0
        %1370 = vmatpush1.bf16.msra.mxu0 0
        %1371 = vmatprep.subr.bf16.mxu0 0
        %1372 = vmatpush1.bf16.msra.mxu0 0
        %1373 = vmatprep.subr.bf16.mxu0 0
        %1374 = vmatpush1.bf16.msra.mxu0 0
        %1375 = vmatprep.subr.bf16.mxu0 0
        %1376 = vmatpush1.bf16.msra.mxu0 0
        %1377 = vmatprep.subr.bf16.mxu0 0
        %1378 = vmatpush1.bf16.msra.mxu0 0
        %1379 = vmatprep.subr.bf16.mxu0 0
        %1380 = vmatpush1.bf16.msra.mxu0 0
        %1381 = vmatprep.subr.bf16.mxu0 0
        %1382 = vmatpush1.bf16.msra.mxu0 0
        %1383 = vmatprep.subr.bf16.mxu0 0
        %1384 = vmatpush1.bf16.msra.mxu0 0
        %1385 = vmatprep.mubr.bf16.mxu0 0
        %1386 = vmatmul.mubr.bf16.gmra.mrb[0].mxu0 %v1303
        %v1387 = vpop.f32.mrb[0].mxu0
        %v1388 = vadd.f32 0.0, %v1387
        %v1389 = vpop.f32.mrb[0].mxu0
        %v1390 = vpop.f32.mrb[0].mxu0
        %v1391 = vadd.f32 0.0, %v1390
        %v1392 = vpop.f32.mrb[0].mxu0
        %1393 = vdwg.mxu0
        %v1394 = vadd.f32 %v1280, %v1388
        %v1395 = vadd.f32 %v1281, %v1391
        %v1396 = vld [vmem:[%s2] sm:$0x1]
        %v1398 = vlaneseq
        %v1399 = vshrl.u32 %v1398, 7
        %v1400 = vsub.s32 0, %v1399
        %v1401 = vrot.slane %v1396, %v1400
        %v1403 = vadd.f32 %v1394, %v1401
        %v1404 = vadd.f32 %v1395, %v1401
        %v1405 = vmax.f32 %v1403, 0.0
        %v1406 = vmax.f32 %v1404, 0.0
        %s1407 = smul.u32 %s335, 16
        %s1408 = scalar_lea.vmem [#allocation2], %s1407
        %1409 = vst [vmem:[%s1408] sm:$0xff] %v1405
        %1410 = vst [vmem:[%s1408 + $0x8] sm:$0x3f] %v1406
      $region61: #{scnn_forward.1} parent=55 // loop_footer
        %s339 = sadd.s32 1, %s335
      $region62: #{scnn_forward.1} parent=55 // loop_footer_branch
        %334 = sbr.rel target = $region58
      $region63: #{scnn_forward.1} parent=55 // loop_exit
        _
      %v1411 = vld [vmem:[#allocation2] sm:$0x1]
      %v1412 = vld [vmem:[#allocation2 + $0x1] sm:$0x1]
      %s1413 = scalar_lea.vmem [#allocation2], 16
      %v1414 = vld [vmem:[%s1413] sm:$0x1]
      %v1415 = vld [vmem:[%s1413 + $0x1] sm:$0x1]
      %v1416 = vmax.f32 %v1411, %v1412
      %v1417 = vmax.f32 %v1414, %v1415
      %v1418 = vmax.f32 %v1416, %v1417
      %1419 = vst [vmem:[#allocation3] sm:$0x1] %v1418
      %v1420 = vld [vmem:[#allocation2 + $0x2] sm:$0x1]
      %v1421 = vld [vmem:[#allocation2 + $0x3] sm:$0x1]
      %v1422 = vld [vmem:[%s1413 + $0x2] sm:$0x1]
      %v1423 = vld [vmem:[%s1413 + $0x3] sm:$0x1]
      %v1424 = vmax.f32 %v1420, %v1421
      %v1425 = vmax.f32 %v1422, %v1423
      %v1426 = vmax.f32 %v1424, %v1425
      %1427 = vst [vmem:[#allocation3 + $0x1] sm:$0x1] %v1426
      %v1428 = vld [vmem:[#allocation2 + $0x4] sm:$0x1]
      %v1429 = vld [vmem:[#allocation2 + $0x5] sm:$0x1]
      %v1430 = vld [vmem:[%s1413 + $0x4] sm:$0x1]
      %v1431 = vld [vmem:[%s1413 + $0x5] sm:$0x1]
      %v1432 = vmax.f32 %v1428, %v1429
      %v1433 = vmax.f32 %v1430, %v1431
      %v1434 = vmax.f32 %v1432, %v1433
      %1435 = vst [vmem:[#allocation3 + $0x2] sm:$0x1] %v1434
      %v1436 = vld [vmem:[#allocation2 + $0x6] sm:$0x1]
      %v1437 = vld [vmem:[#allocation2 + $0x7] sm:$0x1]
      %v1438 = vld [vmem:[%s1413 + $0x6] sm:$0x1]
      %v1439 = vld [vmem:[%s1413 + $0x7] sm:$0x1]
      %v1440 = vmax.f32 %v1436, %v1437
      %v1441 = vmax.f32 %v1438, %v1439
      %v1442 = vmax.f32 %v1440, %v1441
      %1443 = vst [vmem:[#allocation3 + $0x3] sm:$0x1] %v1442
      %v1444 = vld [vmem:[#allocation2 + $0x8] sm:$0x1]
      %v1445 = vld [vmem:[#allocation2 + $0x9] sm:$0x1]
      %v1446 = vld [vmem:[%s1413 + $0x8] sm:$0x1]
      %v1447 = vld [vmem:[%s1413 + $0x9] sm:$0x1]
      %v1448 = vmax.f32 %v1444, %v1445
      %v1449 = vmax.f32 %v1446, %v1447
      %v1450 = vmax.f32 %v1448, %v1449
      %1451 = vst [vmem:[#allocation3 + $0x4] sm:$0x1] %v1450
      %v1452 = vld [vmem:[#allocation2 + $0xa] sm:$0x1]
      %v1453 = vld [vmem:[#allocation2 + $0xb] sm:$0x1]
      %v1454 = vld [vmem:[%s1413 + $0xa] sm:$0x1]
      %v1455 = vld [vmem:[%s1413 + $0xb] sm:$0x1]
      %v1456 = vmax.f32 %v1452, %v1453
      %v1457 = vmax.f32 %v1454, %v1455
      %v1458 = vmax.f32 %v1456, %v1457
      %1459 = vst [vmem:[#allocation3 + $0x5] sm:$0x1] %v1458
      %v1460 = vld [vmem:[#allocation2 + $0xc] sm:$0x1]
      %v1461 = vld [vmem:[#allocation2 + $0xd] sm:$0x1]
      %v1462 = vld [vmem:[%s1413 + $0xc] sm:$0x1]
      %v1463 = vld [vmem:[%s1413 + $0xd] sm:$0x1]
      %v1464 = vmax.f32 %v1460, %v1461
      %v1465 = vmax.f32 %v1462, %v1463
      %v1466 = vmax.f32 %v1464, %v1465
      %1467 = vst [vmem:[#allocation3 + $0x6] sm:$0x1] %v1466
      %s1468 = scalar_lea.vmem [#allocation2], 32
      %v1469 = vld [vmem:[%s1468] sm:$0x1]
      %v1470 = vld [vmem:[%s1468 + $0x1] sm:$0x1]
      %s1471 = scalar_lea.vmem [#allocation2], 48
      %v1472 = vld [vmem:[%s1471] sm:$0x1]
      %v1473 = vld [vmem:[%s1471 + $0x1] sm:$0x1]
      %v1474 = vmax.f32 %v1469, %v1470
      %v1475 = vmax.f32 %v1472, %v1473
      %v1476 = vmax.f32 %v1474, %v1475
      %s1477 = scalar_lea.vmem [#allocation3], 8
      %1478 = vst [vmem:[%s1477] sm:$0x1] %v1476
      %v1479 = vld [vmem:[%s1468 + $0x2] sm:$0x1]
      %v1480 = vld [vmem:[%s1468 + $0x3] sm:$0x1]
      %v1481 = vld [vmem:[%s1471 + $0x2] sm:$0x1]
      %v1482 = vld [vmem:[%s1471 + $0x3] sm:$0x1]
      %v1483 = vmax.f32 %v1479, %v1480
      %v1484 = vmax.f32 %v1481, %v1482
      %v1485 = vmax.f32 %v1483, %v1484
      %1486 = vst [vmem:[%s1477 + $0x1] sm:$0x1] %v1485
      %v1487 = vld [vmem:[%s1468 + $0x4] sm:$0x1]
      %v1488 = vld [vmem:[%s1468 + $0x5] sm:$0x1]
      %v1489 = vld [vmem:[%s1471 + $0x4] sm:$0x1]
      %v1490 = vld [vmem:[%s1471 + $0x5] sm:$0x1]
      %v1491 = vmax.f32 %v1487, %v1488
      %v1492 = vmax.f32 %v1489, %v1490
      %v1493 = vmax.f32 %v1491, %v1492
      %1494 = vst [vmem:[%s1477 + $0x2] sm:$0x1] %v1493
      %v1495 = vld [vmem:[%s1468 + $0x6] sm:$0x1]
      %v1496 = vld [vmem:[%s1468 + $0x7] sm:$0x1]
      %v1497 = vld [vmem:[%s1471 + $0x6] sm:$0x1]
      %v1498 = vld [vmem:[%s1471 + $0x7] sm:$0x1]
      %v1499 = vmax.f32 %v1495, %v1496
      %v1500 = vmax.f32 %v1497, %v1498
      %v1501 = vmax.f32 %v1499, %v1500
      %1502 = vst [vmem:[%s1477 + $0x3] sm:$0x1] %v1501
      %v1503 = vld [vmem:[%s1468 + $0x8] sm:$0x1]
      %v1504 = vld [vmem:[%s1468 + $0x9] sm:$0x1]
      %v1505 = vld [vmem:[%s1471 + $0x8] sm:$0x1]
      %v1506 = vld [vmem:[%s1471 + $0x9] sm:$0x1]
      %v1507 = vmax.f32 %v1503, %v1504
      %v1508 = vmax.f32 %v1505, %v1506
      %v1509 = vmax.f32 %v1507, %v1508
      %1510 = vst [vmem:[%s1477 + $0x4] sm:$0x1] %v1509
      %v1511 = vld [vmem:[%s1468 + $0xa] sm:$0x1]
      %v1512 = vld [vmem:[%s1468 + $0xb] sm:$0x1]
      %v1513 = vld [vmem:[%s1471 + $0xa] sm:$0x1]
      %v1514 = vld [vmem:[%s1471 + $0xb] sm:$0x1]
      %v1515 = vmax.f32 %v1511, %v1512
      %v1516 = vmax.f32 %v1513, %v1514
      %v1517 = vmax.f32 %v1515, %v1516
      %1518 = vst [vmem:[%s1477 + $0x5] sm:$0x1] %v1517
      %v1519 = vld [vmem:[%s1468 + $0xc] sm:$0x1]
      %v1520 = vld [vmem:[%s1468 + $0xd] sm:$0x1]
      %v1521 = vld [vmem:[%s1471 + $0xc] sm:$0x1]
      %v1522 = vld [vmem:[%s1471 + $0xd] sm:$0x1]
      %v1523 = vmax.f32 %v1519, %v1520
      %v1524 = vmax.f32 %v1521, %v1522
      %v1525 = vmax.f32 %v1523, %v1524
      %1526 = vst [vmem:[%s1477 + $0x6] sm:$0x1] %v1525
      %s1527 = scalar_lea.vmem [#allocation2], 64
      %v1528 = vld [vmem:[%s1527] sm:$0x1]
      %v1529 = vld [vmem:[%s1527 + $0x1] sm:$0x1]
      %s1530 = scalar_lea.vmem [#allocation2], 80
      %v1531 = vld [vmem:[%s1530] sm:$0x1]
      %v1532 = vld [vmem:[%s1530 + $0x1] sm:$0x1]
      %v1533 = vmax.f32 %v1528, %v1529
      %v1534 = vmax.f32 %v1531, %v1532
      %v1535 = vmax.f32 %v1533, %v1534
      %s1536 = scalar_lea.vmem [#allocation3], 16
      %1537 = vst [vmem:[%s1536] sm:$0x1] %v1535
      %v1538 = vld [vmem:[%s1527 + $0x2] sm:$0x1]
      %v1539 = vld [vmem:[%s1527 + $0x3] sm:$0x1]
      %v1540 = vld [vmem:[%s1530 + $0x2] sm:$0x1]
      %v1541 = vld [vmem:[%s1530 + $0x3] sm:$0x1]
      %v1542 = vmax.f32 %v1538, %v1539
      %v1543 = vmax.f32 %v1540, %v1541
      %v1544 = vmax.f32 %v1542, %v1543
      %1545 = vst [vmem:[%s1536 + $0x1] sm:$0x1] %v1544
      %v1546 = vld [vmem:[%s1527 + $0x4] sm:$0x1]
      %v1547 = vld [vmem:[%s1527 + $0x5] sm:$0x1]
      %v1548 = vld [vmem:[%s1530 + $0x4] sm:$0x1]
      %v1549 = vld [vmem:[%s1530 + $0x5] sm:$0x1]
      %v1550 = vmax.f32 %v1546, %v1547
      %v1551 = vmax.f32 %v1548, %v1549
      %v1552 = vmax.f32 %v1550, %v1551
      %1553 = vst [vmem:[%s1536 + $0x2] sm:$0x1] %v1552
      %v1554 = vld [vmem:[%s1527 + $0x6] sm:$0x1]
      %v1555 = vld [vmem:[%s1527 + $0x7] sm:$0x1]
      %v1556 = vld [vmem:[%s1530 + $0x6] sm:$0x1]
      %v1557 = vld [vmem:[%s1530 + $0x7] sm:$0x1]
      %v1558 = vmax.f32 %v1554, %v1555
      %v1559 = vmax.f32 %v1556, %v1557
      %v1560 = vmax.f32 %v1558, %v1559
      %1561 = vst [vmem:[%s1536 + $0x3] sm:$0x1] %v1560
      %v1562 = vld [vmem:[%s1527 + $0x8] sm:$0x1]
      %v1563 = vld [vmem:[%s1527 + $0x9] sm:$0x1]
      %v1564 = vld [vmem:[%s1530 + $0x8] sm:$0x1]
      %v1565 = vld [vmem:[%s1530 + $0x9] sm:$0x1]
      %v1566 = vmax.f32 %v1562, %v1563
      %v1567 = vmax.f32 %v1564, %v1565
      %v1568 = vmax.f32 %v1566, %v1567
      %1569 = vst [vmem:[%s1536 + $0x4] sm:$0x1] %v1568
      %v1570 = vld [vmem:[%s1527 + $0xa] sm:$0x1]
      %v1571 = vld [vmem:[%s1527 + $0xb] sm:$0x1]
      %v1572 = vld [vmem:[%s1530 + $0xa] sm:$0x1]
      %v1573 = vld [vmem:[%s1530 + $0xb] sm:$0x1]
      %v1574 = vmax.f32 %v1570, %v1571
      %v1575 = vmax.f32 %v1572, %v1573
      %v1576 = vmax.f32 %v1574, %v1575
      %1577 = vst [vmem:[%s1536 + $0x5] sm:$0x1] %v1576
      %v1578 = vld [vmem:[%s1527 + $0xc] sm:$0x1]
      %v1579 = vld [vmem:[%s1527 + $0xd] sm:$0x1]
      %v1580 = vld [vmem:[%s1530 + $0xc] sm:$0x1]
      %v1581 = vld [vmem:[%s1530 + $0xd] sm:$0x1]
      %v1582 = vmax.f32 %v1578, %v1579
      %v1583 = vmax.f32 %v1580, %v1581
      %v1584 = vmax.f32 %v1582, %v1583
      %1585 = vst [vmem:[%s1536 + $0x6] sm:$0x1] %v1584
      %s1586 = scalar_lea.vmem [#allocation2], 96
      %v1587 = vld [vmem:[%s1586] sm:$0x1]
      %v1588 = vld [vmem:[%s1586 + $0x1] sm:$0x1]
      %s1589 = scalar_lea.vmem [#allocation2], 112
      %v1590 = vld [vmem:[%s1589] sm:$0x1]
      %v1591 = vld [vmem:[%s1589 + $0x1] sm:$0x1]
      %v1592 = vmax.f32 %v1587, %v1588
      %v1593 = vmax.f32 %v1590, %v1591
      %v1594 = vmax.f32 %v1592, %v1593
      %s1595 = scalar_lea.vmem [#allocation3], 24
      %1596 = vst [vmem:[%s1595] sm:$0x1] %v1594
      %v1597 = vld [vmem:[%s1586 + $0x2] sm:$0x1]
      %v1598 = vld [vmem:[%s1586 + $0x3] sm:$0x1]
      %v1599 = vld [vmem:[%s1589 + $0x2] sm:$0x1]
      %v1600 = vld [vmem:[%s1589 + $0x3] sm:$0x1]
      %v1601 = vmax.f32 %v1597, %v1598
      %v1602 = vmax.f32 %v1599, %v1600
      %v1603 = vmax.f32 %v1601, %v1602
      %1604 = vst [vmem:[%s1595 + $0x1] sm:$0x1] %v1603
      %v1605 = vld [vmem:[%s1586 + $0x4] sm:$0x1]
      %v1606 = vld [vmem:[%s1586 + $0x5] sm:$0x1]
      %v1607 = vld [vmem:[%s1589 + $0x4] sm:$0x1]
      %v1608 = vld [vmem:[%s1589 + $0x5] sm:$0x1]
      %v1609 = vmax.f32 %v1605, %v1606
      %v1610 = vmax.f32 %v1607, %v1608
      %v1611 = vmax.f32 %v1609, %v1610
      %1612 = vst [vmem:[%s1595 + $0x2] sm:$0x1] %v1611
      %v1613 = vld [vmem:[%s1586 + $0x6] sm:$0x1]
      %v1614 = vld [vmem:[%s1586 + $0x7] sm:$0x1]
      %v1615 = vld [vmem:[%s1589 + $0x6] sm:$0x1]
      %v1616 = vld [vmem:[%s1589 + $0x7] sm:$0x1]
      %v1617 = vmax.f32 %v1613, %v1614
      %v1618 = vmax.f32 %v1615, %v1616
      %v1619 = vmax.f32 %v1617, %v1618
      %1620 = vst [vmem:[%s1595 + $0x3] sm:$0x1] %v1619
      %v1621 = vld [vmem:[%s1586 + $0x8] sm:$0x1]
      %v1622 = vld [vmem:[%s1586 + $0x9] sm:$0x1]
      %v1623 = vld [vmem:[%s1589 + $0x8] sm:$0x1]
      %v1624 = vld [vmem:[%s1589 + $0x9] sm:$0x1]
      %v1625 = vmax.f32 %v1621, %v1622
      %v1626 = vmax.f32 %v1623, %v1624
      %v1627 = vmax.f32 %v1625, %v1626
      %1628 = vst [vmem:[%s1595 + $0x4] sm:$0x1] %v1627
      %v1629 = vld [vmem:[%s1586 + $0xa] sm:$0x1]
      %v1630 = vld [vmem:[%s1586 + $0xb] sm:$0x1]
      %v1631 = vld [vmem:[%s1589 + $0xa] sm:$0x1]
      %v1632 = vld [vmem:[%s1589 + $0xb] sm:$0x1]
      %v1633 = vmax.f32 %v1629, %v1630
      %v1634 = vmax.f32 %v1631, %v1632
      %v1635 = vmax.f32 %v1633, %v1634
      %1636 = vst [vmem:[%s1595 + $0x5] sm:$0x1] %v1635
      %v1637 = vld [vmem:[%s1586 + $0xc] sm:$0x1]
      %v1638 = vld [vmem:[%s1586 + $0xd] sm:$0x1]
      %v1639 = vld [vmem:[%s1589 + $0xc] sm:$0x1]
      %v1640 = vld [vmem:[%s1589 + $0xd] sm:$0x1]
      %v1641 = vmax.f32 %v1637, %v1638
      %v1642 = vmax.f32 %v1639, %v1640
      %v1643 = vmax.f32 %v1641, %v1642
      %1644 = vst [vmem:[%s1595 + $0x6] sm:$0x1] %v1643
      %s1645 = scalar_lea.vmem [#allocation2], 128
      %v1646 = vld [vmem:[%s1645] sm:$0x1]
      %v1647 = vld [vmem:[%s1645 + $0x1] sm:$0x1]
      %s1648 = scalar_lea.vmem [#allocation2], 144
      %v1649 = vld [vmem:[%s1648] sm:$0x1]
      %v1650 = vld [vmem:[%s1648 + $0x1] sm:$0x1]
      %v1651 = vmax.f32 %v1646, %v1647
      %v1652 = vmax.f32 %v1649, %v1650
      %v1653 = vmax.f32 %v1651, %v1652
      %s1654 = scalar_lea.vmem [#allocation3], 32
      %1655 = vst [vmem:[%s1654] sm:$0x1] %v1653
      %v1656 = vld [vmem:[%s1645 + $0x2] sm:$0x1]
      %v1657 = vld [vmem:[%s1645 + $0x3] sm:$0x1]
      %v1658 = vld [vmem:[%s1648 + $0x2] sm:$0x1]
      %v1659 = vld [vmem:[%s1648 + $0x3] sm:$0x1]
      %v1660 = vmax.f32 %v1656, %v1657
      %v1661 = vmax.f32 %v1658, %v1659
      %v1662 = vmax.f32 %v1660, %v1661
      %1663 = vst [vmem:[%s1654 + $0x1] sm:$0x1] %v1662
      %v1664 = vld [vmem:[%s1645 + $0x4] sm:$0x1]
      %v1665 = vld [vmem:[%s1645 + $0x5] sm:$0x1]
      %v1666 = vld [vmem:[%s1648 + $0x4] sm:$0x1]
      %v1667 = vld [vmem:[%s1648 + $0x5] sm:$0x1]
      %v1668 = vmax.f32 %v1664, %v1665
      %v1669 = vmax.f32 %v1666, %v1667
      %v1670 = vmax.f32 %v1668, %v1669
      %1671 = vst [vmem:[%s1654 + $0x2] sm:$0x1] %v1670
      %v1672 = vld [vmem:[%s1645 + $0x6] sm:$0x1]
      %v1673 = vld [vmem:[%s1645 + $0x7] sm:$0x1]
      %v1674 = vld [vmem:[%s1648 + $0x6] sm:$0x1]
      %v1675 = vld [vmem:[%s1648 + $0x7] sm:$0x1]
      %v1676 = vmax.f32 %v1672, %v1673
      %v1677 = vmax.f32 %v1674, %v1675
      %v1678 = vmax.f32 %v1676, %v1677
      %1679 = vst [vmem:[%s1654 + $0x3] sm:$0x1] %v1678
      %v1680 = vld [vmem:[%s1645 + $0x8] sm:$0x1]
      %v1681 = vld [vmem:[%s1645 + $0x9] sm:$0x1]
      %v1682 = vld [vmem:[%s1648 + $0x8] sm:$0x1]
      %v1683 = vld [vmem:[%s1648 + $0x9] sm:$0x1]
      %v1684 = vmax.f32 %v1680, %v1681
      %v1685 = vmax.f32 %v1682, %v1683
      %v1686 = vmax.f32 %v1684, %v1685
      %1687 = vst [vmem:[%s1654 + $0x4] sm:$0x1] %v1686
      %v1688 = vld [vmem:[%s1645 + $0xa] sm:$0x1]
      %v1689 = vld [vmem:[%s1645 + $0xb] sm:$0x1]
      %v1690 = vld [vmem:[%s1648 + $0xa] sm:$0x1]
      %v1691 = vld [vmem:[%s1648 + $0xb] sm:$0x1]
      %v1692 = vmax.f32 %v1688, %v1689
      %v1693 = vmax.f32 %v1690, %v1691
      %v1694 = vmax.f32 %v1692, %v1693
      %1695 = vst [vmem:[%s1654 + $0x5] sm:$0x1] %v1694
      %v1696 = vld [vmem:[%s1645 + $0xc] sm:$0x1]
      %v1697 = vld [vmem:[%s1645 + $0xd] sm:$0x1]
      %v1698 = vld [vmem:[%s1648 + $0xc] sm:$0x1]
      %v1699 = vld [vmem:[%s1648 + $0xd] sm:$0x1]
      %v1700 = vmax.f32 %v1696, %v1697
      %v1701 = vmax.f32 %v1698, %v1699
      %v1702 = vmax.f32 %v1700, %v1701
      %1703 = vst [vmem:[%s1654 + $0x6] sm:$0x1] %v1702
      %s1704 = scalar_lea.vmem [#allocation2], 160
      %v1705 = vld [vmem:[%s1704] sm:$0x1]
      %v1706 = vld [vmem:[%s1704 + $0x1] sm:$0x1]
      %s1707 = scalar_lea.vmem [#allocation2], 176
      %v1708 = vld [vmem:[%s1707] sm:$0x1]
      %v1709 = vld [vmem:[%s1707 + $0x1] sm:$0x1]
      %v1710 = vmax.f32 %v1705, %v1706
      %v1711 = vmax.f32 %v1708, %v1709
      %v1712 = vmax.f32 %v1710, %v1711
      %s1713 = scalar_lea.vmem [#allocation3], 40
      %1714 = vst [vmem:[%s1713] sm:$0x1] %v1712
      %v1715 = vld [vmem:[%s1704 + $0x2] sm:$0x1]
      %v1716 = vld [vmem:[%s1704 + $0x3] sm:$0x1]
      %v1717 = vld [vmem:[%s1707 + $0x2] sm:$0x1]
      %v1718 = vld [vmem:[%s1707 + $0x3] sm:$0x1]
      %v1719 = vmax.f32 %v1715, %v1716
      %v1720 = vmax.f32 %v1717, %v1718
      %v1721 = vmax.f32 %v1719, %v1720
      %1722 = vst [vmem:[%s1713 + $0x1] sm:$0x1] %v1721
      %v1723 = vld [vmem:[%s1704 + $0x4] sm:$0x1]
      %v1724 = vld [vmem:[%s1704 + $0x5] sm:$0x1]
      %v1725 = vld [vmem:[%s1707 + $0x4] sm:$0x1]
      %v1726 = vld [vmem:[%s1707 + $0x5] sm:$0x1]
      %v1727 = vmax.f32 %v1723, %v1724
      %v1728 = vmax.f32 %v1725, %v1726
      %v1729 = vmax.f32 %v1727, %v1728
      %1730 = vst [vmem:[%s1713 + $0x2] sm:$0x1] %v1729
      %v1731 = vld [vmem:[%s1704 + $0x6] sm:$0x1]
      %v1732 = vld [vmem:[%s1704 + $0x7] sm:$0x1]
      %v1733 = vld [vmem:[%s1707 + $0x6] sm:$0x1]
      %v1734 = vld [vmem:[%s1707 + $0x7] sm:$0x1]
      %v1735 = vmax.f32 %v1731, %v1732
      %v1736 = vmax.f32 %v1733, %v1734
      %v1737 = vmax.f32 %v1735, %v1736
      %1738 = vst [vmem:[%s1713 + $0x3] sm:$0x1] %v1737
      %v1739 = vld [vmem:[%s1704 + $0x8] sm:$0x1]
      %v1740 = vld [vmem:[%s1704 + $0x9] sm:$0x1]
      %v1741 = vld [vmem:[%s1707 + $0x8] sm:$0x1]
      %v1742 = vld [vmem:[%s1707 + $0x9] sm:$0x1]
      %v1743 = vmax.f32 %v1739, %v1740
      %v1744 = vmax.f32 %v1741, %v1742
      %v1745 = vmax.f32 %v1743, %v1744
      %1746 = vst [vmem:[%s1713 + $0x4] sm:$0x1] %v1745
      %v1747 = vld [vmem:[%s1704 + $0xa] sm:$0x1]
      %v1748 = vld [vmem:[%s1704 + $0xb] sm:$0x1]
      %v1749 = vld [vmem:[%s1707 + $0xa] sm:$0x1]
      %v1750 = vld [vmem:[%s1707 + $0xb] sm:$0x1]
      %v1751 = vmax.f32 %v1747, %v1748
      %v1752 = vmax.f32 %v1749, %v1750
      %v1753 = vmax.f32 %v1751, %v1752
      %1754 = vst [vmem:[%s1713 + $0x5] sm:$0x1] %v1753
      %v1755 = vld [vmem:[%s1704 + $0xc] sm:$0x1]
      %v1756 = vld [vmem:[%s1704 + $0xd] sm:$0x1]
      %v1757 = vld [vmem:[%s1707 + $0xc] sm:$0x1]
      %v1758 = vld [vmem:[%s1707 + $0xd] sm:$0x1]
      %v1759 = vmax.f32 %v1755, %v1756
      %v1760 = vmax.f32 %v1757, %v1758
      %v1761 = vmax.f32 %v1759, %v1760
      %1762 = vst [vmem:[%s1713 + $0x6] sm:$0x1] %v1761
      %s1763 = scalar_lea.vmem [#allocation2], 192
      %v1764 = vld [vmem:[%s1763] sm:$0x1]
      %v1765 = vld [vmem:[%s1763 + $0x1] sm:$0x1]
      %s1766 = scalar_lea.vmem [#allocation2], 208
      %v1767 = vld [vmem:[%s1766] sm:$0x1]
      %v1768 = vld [vmem:[%s1766 + $0x1] sm:$0x1]
      %v1769 = vmax.f32 %v1764, %v1765
      %v1770 = vmax.f32 %v1767, %v1768
      %v1771 = vmax.f32 %v1769, %v1770
      %s1772 = scalar_lea.vmem [#allocation3], 48
      %1773 = vst [vmem:[%s1772] sm:$0x1] %v1771
      %v1774 = vld [vmem:[%s1763 + $0x2] sm:$0x1]
      %v1775 = vld [vmem:[%s1763 + $0x3] sm:$0x1]
      %v1776 = vld [vmem:[%s1766 + $0x2] sm:$0x1]
      %v1777 = vld [vmem:[%s1766 + $0x3] sm:$0x1]
      %v1778 = vmax.f32 %v1774, %v1775
      %v1779 = vmax.f32 %v1776, %v1777
      %v1780 = vmax.f32 %v1778, %v1779
      %1781 = vst [vmem:[%s1772 + $0x1] sm:$0x1] %v1780
      %v1782 = vld [vmem:[%s1763 + $0x4] sm:$0x1]
      %v1783 = vld [vmem:[%s1763 + $0x5] sm:$0x1]
      %v1784 = vld [vmem:[%s1766 + $0x4] sm:$0x1]
      %v1785 = vld [vmem:[%s1766 + $0x5] sm:$0x1]
      %v1786 = vmax.f32 %v1782, %v1783
      %v1787 = vmax.f32 %v1784, %v1785
      %v1788 = vmax.f32 %v1786, %v1787
      %1789 = vst [vmem:[%s1772 + $0x2] sm:$0x1] %v1788
      %v1790 = vld [vmem:[%s1763 + $0x6] sm:$0x1]
      %v1791 = vld [vmem:[%s1763 + $0x7] sm:$0x1]
      %v1792 = vld [vmem:[%s1766 + $0x6] sm:$0x1]
      %v1793 = vld [vmem:[%s1766 + $0x7] sm:$0x1]
      %v1794 = vmax.f32 %v1790, %v1791
      %v1795 = vmax.f32 %v1792, %v1793
      %v1796 = vmax.f32 %v1794, %v1795
      %1797 = vst [vmem:[%s1772 + $0x3] sm:$0x1] %v1796
      %v1798 = vld [vmem:[%s1763 + $0x8] sm:$0x1]
      %v1799 = vld [vmem:[%s1763 + $0x9] sm:$0x1]
      %v1800 = vld [vmem:[%s1766 + $0x8] sm:$0x1]
      %v1801 = vld [vmem:[%s1766 + $0x9] sm:$0x1]
      %v1802 = vmax.f32 %v1798, %v1799
      %v1803 = vmax.f32 %v1800, %v1801
      %v1804 = vmax.f32 %v1802, %v1803
      %1805 = vst [vmem:[%s1772 + $0x4] sm:$0x1] %v1804
      %v1806 = vld [vmem:[%s1763 + $0xa] sm:$0x1]
      %v1807 = vld [vmem:[%s1763 + $0xb] sm:$0x1]
      %v1808 = vld [vmem:[%s1766 + $0xa] sm:$0x1]
      %v1809 = vld [vmem:[%s1766 + $0xb] sm:$0x1]
      %v1810 = vmax.f32 %v1806, %v1807
      %v1811 = vmax.f32 %v1808, %v1809
      %v1812 = vmax.f32 %v1810, %v1811
      %1813 = vst [vmem:[%s1772 + $0x5] sm:$0x1] %v1812
      %v1814 = vld [vmem:[%s1763 + $0xc] sm:$0x1]
      %v1815 = vld [vmem:[%s1763 + $0xd] sm:$0x1]
      %v1816 = vld [vmem:[%s1766 + $0xc] sm:$0x1]
      %v1817 = vld [vmem:[%s1766 + $0xd] sm:$0x1]
      %v1818 = vmax.f32 %v1814, %v1815
      %v1819 = vmax.f32 %v1816, %v1817
      %v1820 = vmax.f32 %v1818, %v1819
      %1821 = vst [vmem:[%s1772 + $0x6] sm:$0x1] %v1820
      loop: start=0, step=1, limit=5
      $region64: #{scnn_forward.1} parent=55 // loop_pre_header
        _
      $region65: #{scnn_forward.1} parent=55 // loop_header
        %s1823 = sphi 0, %s1827
        %p1824 = scmp.ge.s32.totalorder %s1823, 5
      $region66: #{scnn_forward.1} parent=55 // loop_header_branch
        %1826 = sbr.rel (%p1824) target = $region70
      $region67: #{scnn_forward.1} parent=55 // loop_body
        %s1828 = smul.u32 %s1823, 8
        %s1829 = scalar_lea.vmem [#allocation3], %s1828
        %v1830 = vld [vmem:[%s1829] sm:$0x1f]
        %v1831 = vpack.c.bf16 %v1830, %v1830
        %v1832 = vld [vmem:[%s3] sm:$0xf]
        %v1833 = vld [vmem:[%s3 + $0x4] sm:$0xf]
        %v1834 = vld [vmem:[%s3 + $0x8] sm:$0xf]
        %v1835 = vld [vmem:[%s3 + $0xc] sm:$0xf]
        %v1836 = vld [vmem:[%s3 + $0x10] sm:$0xf]
        %v1837 = vld [vmem:[%s3 + $0x14] sm:$0xf]
        %v1838 = vld [vmem:[%s3 + $0x18] sm:$0xf]
        %v1839 = vld [vmem:[%s3 + $0x1c] sm:$0xf]
        %v1840 = vld [vmem:[%s3 + $0x20] sm:$0xf]
        %v1841 = vld [vmem:[%s3 + $0x24] sm:$0xf]
        %v1842 = vld [vmem:[%s3 + $0x28] sm:$0xf]
        %v1843 = vld [vmem:[%s3 + $0x2c] sm:$0xf]
        %v1844 = vld [vmem:[%s3 + $0x30] sm:$0xf]
        %v1845 = vld [vmem:[%s3 + $0x34] sm:$0xf]
        %v1846 = vld [vmem:[%s3 + $0x38] sm:$0xf]
        %v1847 = vld [vmem:[%s3 + $0x3c] sm:$0xf]
        %v1848 = vld [vmem:[%s1829 + $0x1] sm:$0x1f]
        %v1849 = vpack.c.bf16 %v1848, %v1848
        %s1850 = scalar_lea.vmem %s3, 64
        %v1851 = vld [vmem:[%s1850] sm:$0xf]
        %v1852 = vld [vmem:[%s1850 + $0x4] sm:$0xf]
        %v1853 = vld [vmem:[%s1850 + $0x8] sm:$0xf]
        %v1854 = vld [vmem:[%s1850 + $0xc] sm:$0xf]
        %v1855 = vld [vmem:[%s1850 + $0x10] sm:$0xf]
        %v1856 = vld [vmem:[%s1850 + $0x14] sm:$0xf]
        %v1857 = vld [vmem:[%s1850 + $0x18] sm:$0xf]
        %v1858 = vld [vmem:[%s1850 + $0x1c] sm:$0xf]
        %v1859 = vld [vmem:[%s1850 + $0x20] sm:$0xf]
        %v1860 = vld [vmem:[%s1850 + $0x24] sm:$0xf]
        %v1861 = vld [vmem:[%s1850 + $0x28] sm:$0xf]
        %v1862 = vld [vmem:[%s1850 + $0x2c] sm:$0xf]
        %v1863 = vld [vmem:[%s1850 + $0x30] sm:$0xf]
        %v1864 = vld [vmem:[%s1850 + $0x34] sm:$0xf]
        %v1865 = vld [vmem:[%s1850 + $0x38] sm:$0xf]
        %v1866 = vld [vmem:[%s1850 + $0x3c] sm:$0xf]
        %v1883 = vunpack.c.l.b16 %v1851
        %v1884 = vunpack.c.l.b16 %v1852
        %v1885 = vunpack.c.l.b16 %v1853
        %v1886 = vunpack.c.l.b16 %v1854
        %v1887 = vunpack.c.l.b16 %v1855
        %v1888 = vunpack.c.l.b16 %v1856
        %v1889 = vunpack.c.l.b16 %v1857
        %v1890 = vunpack.c.l.b16 %v1858
        %v1891 = vunpack.c.l.b16 %v1859
        %v1892 = vunpack.c.l.b16 %v1860
        %v1893 = vunpack.c.l.b16 %v1861
        %v1894 = vunpack.c.l.b16 %v1862
        %v1895 = vunpack.c.l.b16 %v1863
        %v1896 = vunpack.c.l.b16 %v1864
        %v1897 = vunpack.c.l.b16 %v1865
        %v1898 = vunpack.c.l.b16 %v1866
        %v1899 = vpack.c.b16 %v1884, %v1883
        %v1900 = vpack.c.b16 %v1886, %v1885
        %v1901 = vpack.c.b16 %v1888, %v1887
        %v1902 = vpack.c.b16 %v1890, %v1889
        %v1903 = vpack.c.b16 %v1892, %v1891
        %v1904 = vpack.c.b16 %v1894, %v1893
        %v1905 = vpack.c.b16 %v1896, %v1895
        %v1906 = vpack.c.b16 %v1898, %v1897
        %1915 = vmatprep.subr.bf16.mxu0 0
        %1916 = vmatpush1.bf16.msra.mxu0 %v1899
        %1917 = vmatprep.subr.bf16.mxu0 0
        %1918 = vmatpush1.bf16.msra.mxu0 %v1900
        %1919 = vmatprep.subr.bf16.mxu0 0
        %1920 = vmatpush1.bf16.msra.mxu0 %v1901
        %1921 = vmatprep.subr.bf16.mxu0 0
        %1922 = vmatpush1.bf16.msra.mxu0 %v1902
        %1923 = vmatprep.subr.bf16.mxu0 0
        %1924 = vmatpush1.bf16.msra.mxu0 %v1903
        %1925 = vmatprep.subr.bf16.mxu0 0
        %1926 = vmatpush1.bf16.msra.mxu0 %v1904
        %1927 = vmatprep.subr.bf16.mxu0 0
        %1928 = vmatpush1.bf16.msra.mxu0 %v1905
        %1929 = vmatprep.subr.bf16.mxu0 0
        %1930 = vmatpush1.bf16.msra.mxu0 %v1906
        %1931 = vmatprep.subr.bf16.mxu0 0
        %1932 = vmatpush1.bf16.msra.mxu0 0
        %1933 = vmatprep.subr.bf16.mxu0 0
        %1934 = vmatpush1.bf16.msra.mxu0 0
        %1935 = vmatprep.subr.bf16.mxu0 0
        %1936 = vmatpush1.bf16.msra.mxu0 0
        %1937 = vmatprep.subr.bf16.mxu0 0
        %1938 = vmatpush1.bf16.msra.mxu0 0
        %1939 = vmatprep.subr.bf16.mxu0 0
        %1940 = vmatpush1.bf16.msra.mxu0 0
        %1941 = vmatprep.subr.bf16.mxu0 0
        %1942 = vmatpush1.bf16.msra.mxu0 0
        %1943 = vmatprep.subr.bf16.mxu0 0
        %1944 = vmatpush1.bf16.msra.mxu0 0
        %1945 = vmatprep.subr.bf16.mxu0 0
        %1946 = vmatpush1.bf16.msra.mxu0 0
        %1947 = vmatprep.mubr.bf16.mxu0 0
        %1948 = vmatmul.mubr.bf16.gmra.mrb[0].mxu0 %v1849
        %v1949 = vpop.f32.mrb[0].mxu0
        %v1950 = vadd.f32 0.0, %v1949
        %v1951 = vpop.f32.mrb[0].mxu0
        %v1952 = vpop.f32.mrb[0].mxu0
        %v1953 = vpop.f32.mrb[0].mxu0
        %1954 = vdwg.mxu0
        %v1971 = vunpack.c.l.b16 %v1832
        %v1972 = vunpack.c.l.b16 %v1833
        %v1973 = vunpack.c.l.b16 %v1834
        %v1974 = vunpack.c.l.b16 %v1835
        %v1975 = vunpack.c.l.b16 %v1836
        %v1976 = vunpack.c.l.b16 %v1837
        %v1977 = vunpack.c.l.b16 %v1838
        %v1978 = vunpack.c.l.b16 %v1839
        %v1979 = vunpack.c.l.b16 %v1840
        %v1980 = vunpack.c.l.b16 %v1841
        %v1981 = vunpack.c.l.b16 %v1842
        %v1982 = vunpack.c.l.b16 %v1843
        %v1983 = vunpack.c.l.b16 %v1844
        %v1984 = vunpack.c.l.b16 %v1845
        %v1985 = vunpack.c.l.b16 %v1846
        %v1986 = vunpack.c.l.b16 %v1847
        %v1987 = vpack.c.b16 %v1972, %v1971
        %v1988 = vpack.c.b16 %v1974, %v1973
        %v1989 = vpack.c.b16 %v1976, %v1975
        %v1990 = vpack.c.b16 %v1978, %v1977
        %v1991 = vpack.c.b16 %v1980, %v1979
        %v1992 = vpack.c.b16 %v1982, %v1981
        %v1993 = vpack.c.b16 %v1984, %v1983
        %v1994 = vpack.c.b16 %v1986, %v1985
        %2003 = vmatprep.subr.bf16.mxu0 0
        %2004 = vmatpush1.bf16.msra.mxu0 %v1987
        %2005 = vmatprep.subr.bf16.mxu0 0
        %2006 = vmatpush1.bf16.msra.mxu0 %v1988
        %2007 = vmatprep.subr.bf16.mxu0 0
        %2008 = vmatpush1.bf16.msra.mxu0 %v1989
        %2009 = vmatprep.subr.bf16.mxu0 0
        %2010 = vmatpush1.bf16.msra.mxu0 %v1990
        %2011 = vmatprep.subr.bf16.mxu0 0
        %2012 = vmatpush1.bf16.msra.mxu0 %v1991
        %2013 = vmatprep.subr.bf16.mxu0 0
        %2014 = vmatpush1.bf16.msra.mxu0 %v1992
        %2015 = vmatprep.subr.bf16.mxu0 0
        %2016 = vmatpush1.bf16.msra.mxu0 %v1993
        %2017 = vmatprep.subr.bf16.mxu0 0
        %2018 = vmatpush1.bf16.msra.mxu0 %v1994
        %2019 = vmatprep.subr.bf16.mxu0 0
        %2020 = vmatpush1.bf16.msra.mxu0 0
        %2021 = vmatprep.subr.bf16.mxu0 0
        %2022 = vmatpush1.bf16.msra.mxu0 0
        %2023 = vmatprep.subr.bf16.mxu0 0
        %2024 = vmatpush1.bf16.msra.mxu0 0
        %2025 = vmatprep.subr.bf16.mxu0 0
        %2026 = vmatpush1.bf16.msra.mxu0 0
        %2027 = vmatprep.subr.bf16.mxu0 0
        %2028 = vmatpush1.bf16.msra.mxu0 0
        %2029 = vmatprep.subr.bf16.mxu0 0
        %2030 = vmatpush1.bf16.msra.mxu0 0
        %2031 = vmatprep.subr.bf16.mxu0 0
        %2032 = vmatpush1.bf16.msra.mxu0 0
        %2033 = vmatprep.subr.bf16.mxu0 0
        %2034 = vmatpush1.bf16.msra.mxu0 0
        %2035 = vmatprep.mubr.bf16.mxu0 0
        %2036 = vmatmul.mubr.bf16.gmra.mrb[0].mxu0 %v1831
        %v2037 = vpop.f32.mrb[0].mxu0
        %v2038 = vadd.f32 %v1950, %v2037
        %v2039 = vpop.f32.mrb[0].mxu0
        %v2040 = vpop.f32.mrb[0].mxu0
        %v2041 = vpop.f32.mrb[0].mxu0
        %2042 = vdwg.mxu0
        %v2043 = vld [vmem:[%s1829 + $0x2] sm:$0x1f]
        %v2044 = vpack.c.bf16 %v2043, %v2043
        %s2045 = scalar_lea.vmem %s3, 128
        %v2046 = vld [vmem:[%s2045] sm:$0xf]
        %v2047 = vld [vmem:[%s2045 + $0x4] sm:$0xf]
        %v2048 = vld [vmem:[%s2045 + $0x8] sm:$0xf]
        %v2049 = vld [vmem:[%s2045 + $0xc] sm:$0xf]
        %v2050 = vld [vmem:[%s2045 + $0x10] sm:$0xf]
        %v2051 = vld [vmem:[%s2045 + $0x14] sm:$0xf]
        %v2052 = vld [vmem:[%s2045 + $0x18] sm:$0xf]
        %v2053 = vld [vmem:[%s2045 + $0x1c] sm:$0xf]
        %v2054 = vld [vmem:[%s2045 + $0x20] sm:$0xf]
        %v2055 = vld [vmem:[%s2045 + $0x24] sm:$0xf]
        %v2056 = vld [vmem:[%s2045 + $0x28] sm:$0xf]
        %v2057 = vld [vmem:[%s2045 + $0x2c] sm:$0xf]
        %v2058 = vld [vmem:[%s2045 + $0x30] sm:$0xf]
        %v2059 = vld [vmem:[%s2045 + $0x34] sm:$0xf]
        %v2060 = vld [vmem:[%s2045 + $0x38] sm:$0xf]
        %v2061 = vld [vmem:[%s2045 + $0x3c] sm:$0xf]
        %v2078 = vunpack.c.l.b16 %v2046
        %v2079 = vunpack.c.l.b16 %v2047
        %v2080 = vunpack.c.l.b16 %v2048
        %v2081 = vunpack.c.l.b16 %v2049
        %v2082 = vunpack.c.l.b16 %v2050
        %v2083 = vunpack.c.l.b16 %v2051
        %v2084 = vunpack.c.l.b16 %v2052
        %v2085 = vunpack.c.l.b16 %v2053
        %v2086 = vunpack.c.l.b16 %v2054
        %v2087 = vunpack.c.l.b16 %v2055
        %v2088 = vunpack.c.l.b16 %v2056
        %v2089 = vunpack.c.l.b16 %v2057
        %v2090 = vunpack.c.l.b16 %v2058
        %v2091 = vunpack.c.l.b16 %v2059
        %v2092 = vunpack.c.l.b16 %v2060
        %v2093 = vunpack.c.l.b16 %v2061
        %v2094 = vpack.c.b16 %v2079, %v2078
        %v2095 = vpack.c.b16 %v2081, %v2080
        %v2096 = vpack.c.b16 %v2083, %v2082
        %v2097 = vpack.c.b16 %v2085, %v2084
        %v2098 = vpack.c.b16 %v2087, %v2086
        %v2099 = vpack.c.b16 %v2089, %v2088
        %v2100 = vpack.c.b16 %v2091, %v2090
        %v2101 = vpack.c.b16 %v2093, %v2092
        %2110 = vmatprep.subr.bf16.mxu0 0
        %2111 = vmatpush1.bf16.msra.mxu0 %v2094
        %2112 = vmatprep.subr.bf16.mxu0 0
        %2113 = vmatpush1.bf16.msra.mxu0 %v2095
        %2114 = vmatprep.subr.bf16.mxu0 0
        %2115 = vmatpush1.bf16.msra.mxu0 %v2096
        %2116 = vmatprep.subr.bf16.mxu0 0
        %2117 = vmatpush1.bf16.msra.mxu0 %v2097
        %2118 = vmatprep.subr.bf16.mxu0 0
        %2119 = vmatpush1.bf16.msra.mxu0 %v2098
        %2120 = vmatprep.subr.bf16.mxu0 0
        %2121 = vmatpush1.bf16.msra.mxu0 %v2099
        %2122 = vmatprep.subr.bf16.mxu0 0
        %2123 = vmatpush1.bf16.msra.mxu0 %v2100
        %2124 = vmatprep.subr.bf16.mxu0 0
        %2125 = vmatpush1.bf16.msra.mxu0 %v2101
        %2126 = vmatprep.subr.bf16.mxu0 0
        %2127 = vmatpush1.bf16.msra.mxu0 0
        %2128 = vmatprep.subr.bf16.mxu0 0
        %2129 = vmatpush1.bf16.msra.mxu0 0
        %2130 = vmatprep.subr.bf16.mxu0 0
        %2131 = vmatpush1.bf16.msra.mxu0 0
        %2132 = vmatprep.subr.bf16.mxu0 0
        %2133 = vmatpush1.bf16.msra.mxu0 0
        %2134 = vmatprep.subr.bf16.mxu0 0
        %2135 = vmatpush1.bf16.msra.mxu0 0
        %2136 = vmatprep.subr.bf16.mxu0 0
        %2137 = vmatpush1.bf16.msra.mxu0 0
        %2138 = vmatprep.subr.bf16.mxu0 0
        %2139 = vmatpush1.bf16.msra.mxu0 0
        %2140 = vmatprep.subr.bf16.mxu0 0
        %2141 = vmatpush1.bf16.msra.mxu0 0
        %2142 = vmatprep.mubr.bf16.mxu0 0
        %2143 = vmatmul.mubr.bf16.gmra.mrb[0].mxu0 %v2044
        %v2144 = vpop.f32.mrb[0].mxu0
        %v2145 = vadd.f32 0.0, %v2144
        %v2146 = vpop.f32.mrb[0].mxu0
        %v2147 = vpop.f32.mrb[0].mxu0
        %v2148 = vpop.f32.mrb[0].mxu0
        %2149 = vdwg.mxu0
        %v2150 = vadd.f32 %v2038, %v2145
        %s2151 = sadd.s32 %s1823, 1
        %s2152 = smul.u32 %s2151, 8
        %s2153 = scalar_lea.vmem [#allocation3], %s2152
        %v2154 = vld [vmem:[%s2153] sm:$0x1f]
        %v2155 = vpack.c.bf16 %v2154, %v2154
        %s2156 = scalar_lea.vmem %s3, 192
        %v2157 = vld [vmem:[%s2156] sm:$0xf]
        %v2158 = vld [vmem:[%s2156 + $0x4] sm:$0xf]
        %v2159 = vld [vmem:[%s2156 + $0x8] sm:$0xf]
        %v2160 = vld [vmem:[%s2156 + $0xc] sm:$0xf]
        %v2161 = vld [vmem:[%s2156 + $0x10] sm:$0xf]
        %v2162 = vld [vmem:[%s2156 + $0x14] sm:$0xf]
        %v2163 = vld [vmem:[%s2156 + $0x18] sm:$0xf]
        %v2164 = vld [vmem:[%s2156 + $0x1c] sm:$0xf]
        %v2165 = vld [vmem:[%s2156 + $0x20] sm:$0xf]
        %v2166 = vld [vmem:[%s2156 + $0x24] sm:$0xf]
        %v2167 = vld [vmem:[%s2156 + $0x28] sm:$0xf]
        %v2168 = vld [vmem:[%s2156 + $0x2c] sm:$0xf]
        %v2169 = vld [vmem:[%s2156 + $0x30] sm:$0xf]
        %v2170 = vld [vmem:[%s2156 + $0x34] sm:$0xf]
        %v2171 = vld [vmem:[%s2156 + $0x38] sm:$0xf]
        %v2172 = vld [vmem:[%s2156 + $0x3c] sm:$0xf]
        %v2189 = vunpack.c.l.b16 %v2157
        %v2190 = vunpack.c.l.b16 %v2158
        %v2191 = vunpack.c.l.b16 %v2159
        %v2192 = vunpack.c.l.b16 %v2160
        %v2193 = vunpack.c.l.b16 %v2161
        %v2194 = vunpack.c.l.b16 %v2162
        %v2195 = vunpack.c.l.b16 %v2163
        %v2196 = vunpack.c.l.b16 %v2164
        %v2197 = vunpack.c.l.b16 %v2165
        %v2198 = vunpack.c.l.b16 %v2166
        %v2199 = vunpack.c.l.b16 %v2167
        %v2200 = vunpack.c.l.b16 %v2168
        %v2201 = vunpack.c.l.b16 %v2169
        %v2202 = vunpack.c.l.b16 %v2170
        %v2203 = vunpack.c.l.b16 %v2171
        %v2204 = vunpack.c.l.b16 %v2172
        %v2205 = vpack.c.b16 %v2190, %v2189
        %v2206 = vpack.c.b16 %v2192, %v2191
        %v2207 = vpack.c.b16 %v2194, %v2193
        %v2208 = vpack.c.b16 %v2196, %v2195
        %v2209 = vpack.c.b16 %v2198, %v2197
        %v2210 = vpack.c.b16 %v2200, %v2199
        %v2211 = vpack.c.b16 %v2202, %v2201
        %v2212 = vpack.c.b16 %v2204, %v2203
        %2221 = vmatprep.subr.bf16.mxu0 0
        %2222 = vmatpush1.bf16.msra.mxu0 %v2205
        %2223 = vmatprep.subr.bf16.mxu0 0
        %2224 = vmatpush1.bf16.msra.mxu0 %v2206
        %2225 = vmatprep.subr.bf16.mxu0 0
        %2226 = vmatpush1.bf16.msra.mxu0 %v2207
        %2227 = vmatprep.subr.bf16.mxu0 0
        %2228 = vmatpush1.bf16.msra.mxu0 %v2208
        %2229 = vmatprep.subr.bf16.mxu0 0
        %2230 = vmatpush1.bf16.msra.mxu0 %v2209
        %2231 = vmatprep.subr.bf16.mxu0 0
        %2232 = vmatpush1.bf16.msra.mxu0 %v2210
        %2233 = vmatprep.subr.bf16.mxu0 0
        %2234 = vmatpush1.bf16.msra.mxu0 %v2211
        %2235 = vmatprep.subr.bf16.mxu0 0
        %2236 = vmatpush1.bf16.msra.mxu0 %v2212
        %2237 = vmatprep.subr.bf16.mxu0 0
        %2238 = vmatpush1.bf16.msra.mxu0 0
        %2239 = vmatprep.subr.bf16.mxu0 0
        %2240 = vmatpush1.bf16.msra.mxu0 0
        %2241 = vmatprep.subr.bf16.mxu0 0
        %2242 = vmatpush1.bf16.msra.mxu0 0
        %2243 = vmatprep.subr.bf16.mxu0 0
        %2244 = vmatpush1.bf16.msra.mxu0 0
        %2245 = vmatprep.subr.bf16.mxu0 0
        %2246 = vmatpush1.bf16.msra.mxu0 0
        %2247 = vmatprep.subr.bf16.mxu0 0
        %2248 = vmatpush1.bf16.msra.mxu0 0
        %2249 = vmatprep.subr.bf16.mxu0 0
        %2250 = vmatpush1.bf16.msra.mxu0 0
        %2251 = vmatprep.subr.bf16.mxu0 0
        %2252 = vmatpush1.bf16.msra.mxu0 0
        %2253 = vmatprep.mubr.bf16.mxu0 0
        %2254 = vmatmul.mubr.bf16.gmra.mrb[0].mxu0 %v2155
        %v2255 = vpop.f32.mrb[0].mxu0
        %v2256 = vadd.f32 0.0, %v2255
        %v2257 = vpop.f32.mrb[0].mxu0
        %v2258 = vpop.f32.mrb[0].mxu0
        %v2259 = vpop.f32.mrb[0].mxu0
        %2260 = vdwg.mxu0
        %v2261 = vadd.f32 %v2150, %v2256
        %v2262 = vld [vmem:[%s2153 + $0x1] sm:$0x1f]
        %v2263 = vpack.c.bf16 %v2262, %v2262
        %s2264 = scalar_lea.vmem %s3, 256
        %v2265 = vld [vmem:[%s2264] sm:$0xf]
        %v2266 = vld [vmem:[%s2264 + $0x4] sm:$0xf]
        %v2267 = vld [vmem:[%s2264 + $0x8] sm:$0xf]
        %v2268 = vld [vmem:[%s2264 + $0xc] sm:$0xf]
        %v2269 = vld [vmem:[%s2264 + $0x10] sm:$0xf]
        %v2270 = vld [vmem:[%s2264 + $0x14] sm:$0xf]
        %v2271 = vld [vmem:[%s2264 + $0x18] sm:$0xf]
        %v2272 = vld [vmem:[%s2264 + $0x1c] sm:$0xf]
        %v2273 = vld [vmem:[%s2264 + $0x20] sm:$0xf]
        %v2274 = vld [vmem:[%s2264 + $0x24] sm:$0xf]
        %v2275 = vld [vmem:[%s2264 + $0x28] sm:$0xf]
        %v2276 = vld [vmem:[%s2264 + $0x2c] sm:$0xf]
        %v2277 = vld [vmem:[%s2264 + $0x30] sm:$0xf]
        %v2278 = vld [vmem:[%s2264 + $0x34] sm:$0xf]
        %v2279 = vld [vmem:[%s2264 + $0x38] sm:$0xf]
        %v2280 = vld [vmem:[%s2264 + $0x3c] sm:$0xf]
        %v2297 = vunpack.c.l.b16 %v2265
        %v2298 = vunpack.c.l.b16 %v2266
        %v2299 = vunpack.c.l.b16 %v2267
        %v2300 = vunpack.c.l.b16 %v2268
        %v2301 = vunpack.c.l.b16 %v2269
        %v2302 = vunpack.c.l.b16 %v2270
        %v2303 = vunpack.c.l.b16 %v2271
        %v2304 = vunpack.c.l.b16 %v2272
        %v2305 = vunpack.c.l.b16 %v2273
        %v2306 = vunpack.c.l.b16 %v2274
        %v2307 = vunpack.c.l.b16 %v2275
        %v2308 = vunpack.c.l.b16 %v2276
        %v2309 = vunpack.c.l.b16 %v2277
        %v2310 = vunpack.c.l.b16 %v2278
        %v2311 = vunpack.c.l.b16 %v2279
        %v2312 = vunpack.c.l.b16 %v2280
        %v2313 = vpack.c.b16 %v2298, %v2297
        %v2314 = vpack.c.b16 %v2300, %v2299
        %v2315 = vpack.c.b16 %v2302, %v2301
        %v2316 = vpack.c.b16 %v2304, %v2303
        %v2317 = vpack.c.b16 %v2306, %v2305
        %v2318 = vpack.c.b16 %v2308, %v2307
        %v2319 = vpack.c.b16 %v2310, %v2309
        %v2320 = vpack.c.b16 %v2312, %v2311
        %2329 = vmatprep.subr.bf16.mxu0 0
        %2330 = vmatpush1.bf16.msra.mxu0 %v2313
        %2331 = vmatprep.subr.bf16.mxu0 0
        %2332 = vmatpush1.bf16.msra.mxu0 %v2314
        %2333 = vmatprep.subr.bf16.mxu0 0
        %2334 = vmatpush1.bf16.msra.mxu0 %v2315
        %2335 = vmatprep.subr.bf16.mxu0 0
        %2336 = vmatpush1.bf16.msra.mxu0 %v2316
        %2337 = vmatprep.subr.bf16.mxu0 0
        %2338 = vmatpush1.bf16.msra.mxu0 %v2317
        %2339 = vmatprep.subr.bf16.mxu0 0
        %2340 = vmatpush1.bf16.msra.mxu0 %v2318
        %2341 = vmatprep.subr.bf16.mxu0 0
        %2342 = vmatpush1.bf16.msra.mxu0 %v2319
        %2343 = vmatprep.subr.bf16.mxu0 0
        %2344 = vmatpush1.bf16.msra.mxu0 %v2320
        %2345 = vmatprep.subr.bf16.mxu0 0
        %2346 = vmatpush1.bf16.msra.mxu0 0
        %2347 = vmatprep.subr.bf16.mxu0 0
        %2348 = vmatpush1.bf16.msra.mxu0 0
        %2349 = vmatprep.subr.bf16.mxu0 0
        %2350 = vmatpush1.bf16.msra.mxu0 0
        %2351 = vmatprep.subr.bf16.mxu0 0
        %2352 = vmatpush1.bf16.msra.mxu0 0
        %2353 = vmatprep.subr.bf16.mxu0 0
        %2354 = vmatpush1.bf16.msra.mxu0 0
        %2355 = vmatprep.subr.bf16.mxu0 0
        %2356 = vmatpush1.bf16.msra.mxu0 0
        %2357 = vmatprep.subr.bf16.mxu0 0
        %2358 = vmatpush1.bf16.msra.mxu0 0
        %2359 = vmatprep.subr.bf16.mxu0 0
        %2360 = vmatpush1.bf16.msra.mxu0 0
        %2361 = vmatprep.mubr.bf16.mxu0 0
        %2362 = vmatmul.mubr.bf16.gmra.mrb[0].mxu0 %v2263
        %v2363 = vpop.f32.mrb[0].mxu0
        %v2364 = vadd.f32 0.0, %v2363
        %v2365 = vpop.f32.mrb[0].mxu0
        %v2366 = vpop.f32.mrb[0].mxu0
        %v2367 = vpop.f32.mrb[0].mxu0
        %2368 = vdwg.mxu0
        %v2369 = vadd.f32 %v2261, %v2364
        %v2370 = vld [vmem:[%s2153 + $0x2] sm:$0x1f]
        %v2371 = vpack.c.bf16 %v2370, %v2370
        %s2372 = scalar_lea.vmem %s3, 320
        %v2373 = vld [vmem:[%s2372] sm:$0xf]
        %v2374 = vld [vmem:[%s2372 + $0x4] sm:$0xf]
        %v2375 = vld [vmem:[%s2372 + $0x8] sm:$0xf]
        %v2376 = vld [vmem:[%s2372 + $0xc] sm:$0xf]
        %v2377 = vld [vmem:[%s2372 + $0x10] sm:$0xf]
        %v2378 = vld [vmem:[%s2372 + $0x14] sm:$0xf]
        %v2379 = vld [vmem:[%s2372 + $0x18] sm:$0xf]
        %v2380 = vld [vmem:[%s2372 + $0x1c] sm:$0xf]
        %v2381 = vld [vmem:[%s2372 + $0x20] sm:$0xf]
        %v2382 = vld [vmem:[%s2372 + $0x24] sm:$0xf]
        %v2383 = vld [vmem:[%s2372 + $0x28] sm:$0xf]
        %v2384 = vld [vmem:[%s2372 + $0x2c] sm:$0xf]
        %v2385 = vld [vmem:[%s2372 + $0x30] sm:$0xf]
        %v2386 = vld [vmem:[%s2372 + $0x34] sm:$0xf]
        %v2387 = vld [vmem:[%s2372 + $0x38] sm:$0xf]
        %v2388 = vld [vmem:[%s2372 + $0x3c] sm:$0xf]
        %v2405 = vunpack.c.l.b16 %v2373
        %v2406 = vunpack.c.l.b16 %v2374
        %v2407 = vunpack.c.l.b16 %v2375
        %v2408 = vunpack.c.l.b16 %v2376
        %v2409 = vunpack.c.l.b16 %v2377
        %v2410 = vunpack.c.l.b16 %v2378
        %v2411 = vunpack.c.l.b16 %v2379
        %v2412 = vunpack.c.l.b16 %v2380
        %v2413 = vunpack.c.l.b16 %v2381
        %v2414 = vunpack.c.l.b16 %v2382
        %v2415 = vunpack.c.l.b16 %v2383
        %v2416 = vunpack.c.l.b16 %v2384
        %v2417 = vunpack.c.l.b16 %v2385
        %v2418 = vunpack.c.l.b16 %v2386
        %v2419 = vunpack.c.l.b16 %v2387
        %v2420 = vunpack.c.l.b16 %v2388
        %v2421 = vpack.c.b16 %v2406, %v2405
        %v2422 = vpack.c.b16 %v2408, %v2407
        %v2423 = vpack.c.b16 %v2410, %v2409
        %v2424 = vpack.c.b16 %v2412, %v2411
        %v2425 = vpack.c.b16 %v2414, %v2413
        %v2426 = vpack.c.b16 %v2416, %v2415
        %v2427 = vpack.c.b16 %v2418, %v2417
        %v2428 = vpack.c.b16 %v2420, %v2419
        %2437 = vmatprep.subr.bf16.mxu0 0
        %2438 = vmatpush1.bf16.msra.mxu0 %v2421
        %2439 = vmatprep.subr.bf16.mxu0 0
        %2440 = vmatpush1.bf16.msra.mxu0 %v2422
        %2441 = vmatprep.subr.bf16.mxu0 0
        %2442 = vmatpush1.bf16.msra.mxu0 %v2423
        %2443 = vmatprep.subr.bf16.mxu0 0
        %2444 = vmatpush1.bf16.msra.mxu0 %v2424
        %2445 = vmatprep.subr.bf16.mxu0 0
        %2446 = vmatpush1.bf16.msra.mxu0 %v2425
        %2447 = vmatprep.subr.bf16.mxu0 0
        %2448 = vmatpush1.bf16.msra.mxu0 %v2426
        %2449 = vmatprep.subr.bf16.mxu0 0
        %2450 = vmatpush1.bf16.msra.mxu0 %v2427
        %2451 = vmatprep.subr.bf16.mxu0 0
        %2452 = vmatpush1.bf16.msra.mxu0 %v2428
        %2453 = vmatprep.subr.bf16.mxu0 0
        %2454 = vmatpush1.bf16.msra.mxu0 0
        %2455 = vmatprep.subr.bf16.mxu0 0
        %2456 = vmatpush1.bf16.msra.mxu0 0
        %2457 = vmatprep.subr.bf16.mxu0 0
        %2458 = vmatpush1.bf16.msra.mxu0 0
        %2459 = vmatprep.subr.bf16.mxu0 0
        %2460 = vmatpush1.bf16.msra.mxu0 0
        %2461 = vmatprep.subr.bf16.mxu0 0
        %2462 = vmatpush1.bf16.msra.mxu0 0
        %2463 = vmatprep.subr.bf16.mxu0 0
        %2464 = vmatpush1.bf16.msra.mxu0 0
        %2465 = vmatprep.subr.bf16.mxu0 0
        %2466 = vmatpush1.bf16.msra.mxu0 0
        %2467 = vmatprep.subr.bf16.mxu0 0
        %2468 = vmatpush1.bf16.msra.mxu0 0
        %2469 = vmatprep.mubr.bf16.mxu0 0
        %2470 = vmatmul.mubr.bf16.gmra.mrb[0].mxu0 %v2371
        %v2471 = vpop.f32.mrb[0].mxu0
        %v2472 = vadd.f32 0.0, %v2471
        %v2473 = vpop.f32.mrb[0].mxu0
        %v2474 = vpop.f32.mrb[0].mxu0
        %v2475 = vpop.f32.mrb[0].mxu0
        %2476 = vdwg.mxu0
        %v2477 = vadd.f32 %v2369, %v2472
        %s2478 = sadd.s32 %s1823, 2
        %s2479 = smul.u32 %s2478, 8
        %s2480 = scalar_lea.vmem [#allocation3], %s2479
        %v2481 = vld [vmem:[%s2480] sm:$0x1f]
        %v2482 = vpack.c.bf16 %v2481, %v2481
        %s2483 = scalar_lea.vmem %s3, 384
        %v2484 = vld [vmem:[%s2483] sm:$0xf]
        %v2485 = vld [vmem:[%s2483 + $0x4] sm:$0xf]
        %v2486 = vld [vmem:[%s2483 + $0x8] sm:$0xf]
        %v2487 = vld [vmem:[%s2483 + $0xc] sm:$0xf]
        %v2488 = vld [vmem:[%s2483 + $0x10] sm:$0xf]
        %v2489 = vld [vmem:[%s2483 + $0x14] sm:$0xf]
        %v2490 = vld [vmem:[%s2483 + $0x18] sm:$0xf]
        %v2491 = vld [vmem:[%s2483 + $0x1c] sm:$0xf]
        %v2492 = vld [vmem:[%s2483 + $0x20] sm:$0xf]
        %v2493 = vld [vmem:[%s2483 + $0x24] sm:$0xf]
        %v2494 = vld [vmem:[%s2483 + $0x28] sm:$0xf]
        %v2495 = vld [vmem:[%s2483 + $0x2c] sm:$0xf]
        %v2496 = vld [vmem:[%s2483 + $0x30] sm:$0xf]
        %v2497 = vld [vmem:[%s2483 + $0x34] sm:$0xf]
        %v2498 = vld [vmem:[%s2483 + $0x38] sm:$0xf]
        %v2499 = vld [vmem:[%s2483 + $0x3c] sm:$0xf]
        %v2516 = vunpack.c.l.b16 %v2484
        %v2517 = vunpack.c.l.b16 %v2485
        %v2518 = vunpack.c.l.b16 %v2486
        %v2519 = vunpack.c.l.b16 %v2487
        %v2520 = vunpack.c.l.b16 %v2488
        %v2521 = vunpack.c.l.b16 %v2489
        %v2522 = vunpack.c.l.b16 %v2490
        %v2523 = vunpack.c.l.b16 %v2491
        %v2524 = vunpack.c.l.b16 %v2492
        %v2525 = vunpack.c.l.b16 %v2493
        %v2526 = vunpack.c.l.b16 %v2494
        %v2527 = vunpack.c.l.b16 %v2495
        %v2528 = vunpack.c.l.b16 %v2496
        %v2529 = vunpack.c.l.b16 %v2497
        %v2530 = vunpack.c.l.b16 %v2498
        %v2531 = vunpack.c.l.b16 %v2499
        %v2532 = vpack.c.b16 %v2517, %v2516
        %v2533 = vpack.c.b16 %v2519, %v2518
        %v2534 = vpack.c.b16 %v2521, %v2520
        %v2535 = vpack.c.b16 %v2523, %v2522
        %v2536 = vpack.c.b16 %v2525, %v2524
        %v2537 = vpack.c.b16 %v2527, %v2526
        %v2538 = vpack.c.b16 %v2529, %v2528
        %v2539 = vpack.c.b16 %v2531, %v2530
        %2548 = vmatprep.subr.bf16.mxu0 0
        %2549 = vmatpush1.bf16.msra.mxu0 %v2532
        %2550 = vmatprep.subr.bf16.mxu0 0
        %2551 = vmatpush1.bf16.msra.mxu0 %v2533
        %2552 = vmatprep.subr.bf16.mxu0 0
        %2553 = vmatpush1.bf16.msra.mxu0 %v2534
        %2554 = vmatprep.subr.bf16.mxu0 0
        %2555 = vmatpush1.bf16.msra.mxu0 %v2535
        %2556 = vmatprep.subr.bf16.mxu0 0
        %2557 = vmatpush1.bf16.msra.mxu0 %v2536
        %2558 = vmatprep.subr.bf16.mxu0 0
        %2559 = vmatpush1.bf16.msra.mxu0 %v2537
        %2560 = vmatprep.subr.bf16.mxu0 0
        %2561 = vmatpush1.bf16.msra.mxu0 %v2538
        %2562 = vmatprep.subr.bf16.mxu0 0
        %2563 = vmatpush1.bf16.msra.mxu0 %v2539
        %2564 = vmatprep.subr.bf16.mxu0 0
        %2565 = vmatpush1.bf16.msra.mxu0 0
        %2566 = vmatprep.subr.bf16.mxu0 0
        %2567 = vmatpush1.bf16.msra.mxu0 0
        %2568 = vmatprep.subr.bf16.mxu0 0
        %2569 = vmatpush1.bf16.msra.mxu0 0
        %2570 = vmatprep.subr.bf16.mxu0 0
        %2571 = vmatpush1.bf16.msra.mxu0 0
        %2572 = vmatprep.subr.bf16.mxu0 0
        %2573 = vmatpush1.bf16.msra.mxu0 0
        %2574 = vmatprep.subr.bf16.mxu0 0
        %2575 = vmatpush1.bf16.msra.mxu0 0
        %2576 = vmatprep.subr.bf16.mxu0 0
        %2577 = vmatpush1.bf16.msra.mxu0 0
        %2578 = vmatprep.subr.bf16.mxu0 0
        %2579 = vmatpush1.bf16.msra.mxu0 0
        %2580 = vmatprep.mubr.bf16.mxu0 0
        %2581 = vmatmul.mubr.bf16.gmra.mrb[0].mxu0 %v2482
        %v2582 = vpop.f32.mrb[0].mxu0
        %v2583 = vadd.f32 0.0, %v2582
        %v2584 = vpop.f32.mrb[0].mxu0
        %v2585 = vpop.f32.mrb[0].mxu0
        %v2586 = vpop.f32.mrb[0].mxu0
        %2587 = vdwg.mxu0
        %v2588 = vadd.f32 %v2477, %v2583
        %v2589 = vld [vmem:[%s2480 + $0x1] sm:$0x1f]
        %v2590 = vpack.c.bf16 %v2589, %v2589
        %s2591 = scalar_lea.vmem %s3, 448
        %v2592 = vld [vmem:[%s2591] sm:$0xf]
        %v2593 = vld [vmem:[%s2591 + $0x4] sm:$0xf]
        %v2594 = vld [vmem:[%s2591 + $0x8] sm:$0xf]
        %v2595 = vld [vmem:[%s2591 + $0xc] sm:$0xf]
        %v2596 = vld [vmem:[%s2591 + $0x10] sm:$0xf]
        %v2597 = vld [vmem:[%s2591 + $0x14] sm:$0xf]
        %v2598 = vld [vmem:[%s2591 + $0x18] sm:$0xf]
        %v2599 = vld [vmem:[%s2591 + $0x1c] sm:$0xf]
        %v2600 = vld [vmem:[%s2591 + $0x20] sm:$0xf]
        %v2601 = vld [vmem:[%s2591 + $0x24] sm:$0xf]
        %v2602 = vld [vmem:[%s2591 + $0x28] sm:$0xf]
        %v2603 = vld [vmem:[%s2591 + $0x2c] sm:$0xf]
        %v2604 = vld [vmem:[%s2591 + $0x30] sm:$0xf]
        %v2605 = vld [vmem:[%s2591 + $0x34] sm:$0xf]
        %v2606 = vld [vmem:[%s2591 + $0x38] sm:$0xf]
        %v2607 = vld [vmem:[%s2591 + $0x3c] sm:$0xf]
        %v2624 = vunpack.c.l.b16 %v2592
        %v2625 = vunpack.c.l.b16 %v2593
        %v2626 = vunpack.c.l.b16 %v2594
        %v2627 = vunpack.c.l.b16 %v2595
        %v2628 = vunpack.c.l.b16 %v2596
        %v2629 = vunpack.c.l.b16 %v2597
        %v2630 = vunpack.c.l.b16 %v2598
        %v2631 = vunpack.c.l.b16 %v2599
        %v2632 = vunpack.c.l.b16 %v2600
        %v2633 = vunpack.c.l.b16 %v2601
        %v2634 = vunpack.c.l.b16 %v2602
        %v2635 = vunpack.c.l.b16 %v2603
        %v2636 = vunpack.c.l.b16 %v2604
        %v2637 = vunpack.c.l.b16 %v2605
        %v2638 = vunpack.c.l.b16 %v2606
        %v2639 = vunpack.c.l.b16 %v2607
        %v2640 = vpack.c.b16 %v2625, %v2624
        %v2641 = vpack.c.b16 %v2627, %v2626
        %v2642 = vpack.c.b16 %v2629, %v2628
        %v2643 = vpack.c.b16 %v2631, %v2630
        %v2644 = vpack.c.b16 %v2633, %v2632
        %v2645 = vpack.c.b16 %v2635, %v2634
        %v2646 = vpack.c.b16 %v2637, %v2636
        %v2647 = vpack.c.b16 %v2639, %v2638
        %2656 = vmatprep.subr.bf16.mxu0 0
        %2657 = vmatpush1.bf16.msra.mxu0 %v2640
        %2658 = vmatprep.subr.bf16.mxu0 0
        %2659 = vmatpush1.bf16.msra.mxu0 %v2641
        %2660 = vmatprep.subr.bf16.mxu0 0
        %2661 = vmatpush1.bf16.msra.mxu0 %v2642
        %2662 = vmatprep.subr.bf16.mxu0 0
        %2663 = vmatpush1.bf16.msra.mxu0 %v2643
        %2664 = vmatprep.subr.bf16.mxu0 0
        %2665 = vmatpush1.bf16.msra.mxu0 %v2644
        %2666 = vmatprep.subr.bf16.mxu0 0
        %2667 = vmatpush1.bf16.msra.mxu0 %v2645
        %2668 = vmatprep.subr.bf16.mxu0 0
        %2669 = vmatpush1.bf16.msra.mxu0 %v2646
        %2670 = vmatprep.subr.bf16.mxu0 0
        %2671 = vmatpush1.bf16.msra.mxu0 %v2647
        %2672 = vmatprep.subr.bf16.mxu0 0
        %2673 = vmatpush1.bf16.msra.mxu0 0
        %2674 = vmatprep.subr.bf16.mxu0 0
        %2675 = vmatpush1.bf16.msra.mxu0 0
        %2676 = vmatprep.subr.bf16.mxu0 0
        %2677 = vmatpush1.bf16.msra.mxu0 0
        %2678 = vmatprep.subr.bf16.mxu0 0
        %2679 = vmatpush1.bf16.msra.mxu0 0
        %2680 = vmatprep.subr.bf16.mxu0 0
        %2681 = vmatpush1.bf16.msra.mxu0 0
        %2682 = vmatprep.subr.bf16.mxu0 0
        %2683 = vmatpush1.bf16.msra.mxu0 0
        %2684 = vmatprep.subr.bf16.mxu0 0
        %2685 = vmatpush1.bf16.msra.mxu0 0
        %2686 = vmatprep.subr.bf16.mxu0 0
        %2687 = vmatpush1.bf16.msra.mxu0 0
        %2688 = vmatprep.mubr.bf16.mxu0 0
        %2689 = vmatmul.mubr.bf16.gmra.mrb[0].mxu0 %v2590
        %v2690 = vpop.f32.mrb[0].mxu0
        %v2691 = vadd.f32 0.0, %v2690
        %v2692 = vpop.f32.mrb[0].mxu0
        %v2693 = vpop.f32.mrb[0].mxu0
        %v2694 = vpop.f32.mrb[0].mxu0
        %2695 = vdwg.mxu0
        %v2696 = vadd.f32 %v2588, %v2691
        %v2697 = vld [vmem:[%s2480 + $0x2] sm:$0x1f]
        %v2698 = vpack.c.bf16 %v2697, %v2697
        %s2699 = scalar_lea.vmem %s3, 512
        %v2700 = vld [vmem:[%s2699] sm:$0xf]
        %v2701 = vld [vmem:[%s2699 + $0x4] sm:$0xf]
        %v2702 = vld [vmem:[%s2699 + $0x8] sm:$0xf]
        %v2703 = vld [vmem:[%s2699 + $0xc] sm:$0xf]
        %v2704 = vld [vmem:[%s2699 + $0x10] sm:$0xf]
        %v2705 = vld [vmem:[%s2699 + $0x14] sm:$0xf]
        %v2706 = vld [vmem:[%s2699 + $0x18] sm:$0xf]
        %v2707 = vld [vmem:[%s2699 + $0x1c] sm:$0xf]
        %v2708 = vld [vmem:[%s2699 + $0x20] sm:$0xf]
        %v2709 = vld [vmem:[%s2699 + $0x24] sm:$0xf]
        %v2710 = vld [vmem:[%s2699 + $0x28] sm:$0xf]
        %v2711 = vld [vmem:[%s2699 + $0x2c] sm:$0xf]
        %v2712 = vld [vmem:[%s2699 + $0x30] sm:$0xf]
        %v2713 = vld [vmem:[%s2699 + $0x34] sm:$0xf]
        %v2714 = vld [vmem:[%s2699 + $0x38] sm:$0xf]
        %v2715 = vld [vmem:[%s2699 + $0x3c] sm:$0xf]
        %v2732 = vunpack.c.l.b16 %v2700
        %v2733 = vunpack.c.l.b16 %v2701
        %v2734 = vunpack.c.l.b16 %v2702
        %v2735 = vunpack.c.l.b16 %v2703
        %v2736 = vunpack.c.l.b16 %v2704
        %v2737 = vunpack.c.l.b16 %v2705
        %v2738 = vunpack.c.l.b16 %v2706
        %v2739 = vunpack.c.l.b16 %v2707
        %v2740 = vunpack.c.l.b16 %v2708
        %v2741 = vunpack.c.l.b16 %v2709
        %v2742 = vunpack.c.l.b16 %v2710
        %v2743 = vunpack.c.l.b16 %v2711
        %v2744 = vunpack.c.l.b16 %v2712
        %v2745 = vunpack.c.l.b16 %v2713
        %v2746 = vunpack.c.l.b16 %v2714
        %v2747 = vunpack.c.l.b16 %v2715
        %v2748 = vpack.c.b16 %v2733, %v2732
        %v2749 = vpack.c.b16 %v2735, %v2734
        %v2750 = vpack.c.b16 %v2737, %v2736
        %v2751 = vpack.c.b16 %v2739, %v2738
        %v2752 = vpack.c.b16 %v2741, %v2740
        %v2753 = vpack.c.b16 %v2743, %v2742
        %v2754 = vpack.c.b16 %v2745, %v2744
        %v2755 = vpack.c.b16 %v2747, %v2746
        %2764 = vmatprep.subr.bf16.mxu0 0
        %2765 = vmatpush1.bf16.msra.mxu0 %v2748
        %2766 = vmatprep.subr.bf16.mxu0 0
        %2767 = vmatpush1.bf16.msra.mxu0 %v2749
        %2768 = vmatprep.subr.bf16.mxu0 0
        %2769 = vmatpush1.bf16.msra.mxu0 %v2750
        %2770 = vmatprep.subr.bf16.mxu0 0
        %2771 = vmatpush1.bf16.msra.mxu0 %v2751
        %2772 = vmatprep.subr.bf16.mxu0 0
        %2773 = vmatpush1.bf16.msra.mxu0 %v2752
        %2774 = vmatprep.subr.bf16.mxu0 0
        %2775 = vmatpush1.bf16.msra.mxu0 %v2753
        %2776 = vmatprep.subr.bf16.mxu0 0
        %2777 = vmatpush1.bf16.msra.mxu0 %v2754
        %2778 = vmatprep.subr.bf16.mxu0 0
        %2779 = vmatpush1.bf16.msra.mxu0 %v2755
        %2780 = vmatprep.subr.bf16.mxu0 0
        %2781 = vmatpush1.bf16.msra.mxu0 0
        %2782 = vmatprep.subr.bf16.mxu0 0
        %2783 = vmatpush1.bf16.msra.mxu0 0
        %2784 = vmatprep.subr.bf16.mxu0 0
        %2785 = vmatpush1.bf16.msra.mxu0 0
        %2786 = vmatprep.subr.bf16.mxu0 0
        %2787 = vmatpush1.bf16.msra.mxu0 0
        %2788 = vmatprep.subr.bf16.mxu0 0
        %2789 = vmatpush1.bf16.msra.mxu0 0
        %2790 = vmatprep.subr.bf16.mxu0 0
        %2791 = vmatpush1.bf16.msra.mxu0 0
        %2792 = vmatprep.subr.bf16.mxu0 0
        %2793 = vmatpush1.bf16.msra.mxu0 0
        %2794 = vmatprep.subr.bf16.mxu0 0
        %2795 = vmatpush1.bf16.msra.mxu0 0
        %2796 = vmatprep.mubr.bf16.mxu0 0
        %2797 = vmatmul.mubr.bf16.gmra.mrb[0].mxu0 %v2698
        %v2798 = vpop.f32.mrb[0].mxu0
        %v2799 = vadd.f32 0.0, %v2798
        %v2800 = vpop.f32.mrb[0].mxu0
        %v2801 = vpop.f32.mrb[0].mxu0
        %v2802 = vpop.f32.mrb[0].mxu0
        %2803 = vdwg.mxu0
        %v2804 = vadd.f32 %v2696, %v2799
        %v2805 = vld [vmem:[%s4] sm:$0x1]
        %v2807 = vlaneseq
        %v2808 = vshrl.u32 %v2807, 7
        %v2809 = vsub.s32 0, %v2808
        %v2810 = vrot.slane %v2805, %v2809
        %v2812 = vadd.f32 %v2804, %v2810
        %v2813 = vmax.f32 %v2812, 0.0
        %s2814 = scalar_lea.vmem [#allocation4], %s1828
        %2815 = vst [vmem:[%s2814] sm:$0x1f] %v2813
      $region68: #{scnn_forward.1} parent=55 // loop_footer
        %s1827 = sadd.s32 1, %s1823
      $region69: #{scnn_forward.1} parent=55 // loop_footer_branch
        %1822 = sbr.rel target = $region65
      $region70: #{scnn_forward.1} parent=55 // loop_exit
        _
      %2816 = vst [vmem:[#allocation5] sm:$0xf] 0.0
      %2817 = vst [vmem:[#allocation5 + $0x4] sm:$0xf] 0.0
      %2818 = vst [vmem:[#allocation5 + $0x8] sm:$0xf] 0.0
      %2819 = vst [vmem:[#allocation5 + $0xc] sm:$0xf] 0.0
      %v2820 = vld [vmem:[#allocation4] sm:$0x1]
      %v2821 = vld [vmem:[#allocation4 + $0x1] sm:$0x1]
      %s2822 = scalar_lea.vmem [#allocation4], 8
      %v2823 = vld [vmem:[%s2822] sm:$0x1]
      %v2824 = vld [vmem:[%s2822 + $0x1] sm:$0x1]
      %v2825 = vmax.f32 %v2820, %v2821
      %v2826 = vmax.f32 %v2823, %v2824
      %v2827 = vmax.f32 %v2825, %v2826
      %s2828 = scalar_lea.vmem [#allocation5], 4
      %2829 = vst [vmem:[%s2828 + $0x1] sm:$0x1] %v2827
      %v2830 = vld [vmem:[#allocation4 + $0x2] sm:$0x1]
      %v2831 = vld [vmem:[#allocation4 + $0x3] sm:$0x1]
      %v2832 = vld [vmem:[%s2822 + $0x2] sm:$0x1]
      %v2833 = vld [vmem:[%s2822 + $0x3] sm:$0x1]
      %v2834 = vmax.f32 %v2830, %v2831
      %v2835 = vmax.f32 %v2832, %v2833
      %v2836 = vmax.f32 %v2834, %v2835
      %2837 = vst [vmem:[%s2828 + $0x2] sm:$0x1] %v2836
      %s2838 = scalar_lea.vmem [#allocation4], 16
      %v2839 = vld [vmem:[%s2838] sm:$0x1]
      %v2840 = vld [vmem:[%s2838 + $0x1] sm:$0x1]
      %s2841 = scalar_lea.vmem [#allocation4], 24
      %v2842 = vld [vmem:[%s2841] sm:$0x1]
      %v2843 = vld [vmem:[%s2841 + $0x1] sm:$0x1]
      %v2844 = vmax.f32 %v2839, %v2840
      %v2845 = vmax.f32 %v2842, %v2843
      %v2846 = vmax.f32 %v2844, %v2845
      %s2847 = scalar_lea.vmem [#allocation5], 8
      %2848 = vst [vmem:[%s2847 + $0x1] sm:$0x1] %v2846
      %v2849 = vld [vmem:[%s2838 + $0x2] sm:$0x1]
      %v2850 = vld [vmem:[%s2838 + $0x3] sm:$0x1]
      %v2851 = vld [vmem:[%s2841 + $0x2] sm:$0x1]
      %v2852 = vld [vmem:[%s2841 + $0x3] sm:$0x1]
      %v2853 = vmax.f32 %v2849, %v2850
      %v2854 = vmax.f32 %v2851, %v2852
      %v2855 = vmax.f32 %v2853, %v2854
      %2856 = vst [vmem:[%s2847 + $0x2] sm:$0x1] %v2855
      %2857 = vst [vmem:[#allocation6] sm:$0xf] 0.0
      %2858 = vst [vmem:[#allocation6 + $0x4] sm:$0xf] 0.0
      %2859 = vst [vmem:[#allocation6 + $0x8] sm:$0xf] 0.0
      %2860 = vst [vmem:[#allocation6 + $0xc] sm:$0xf] 0.0
      loop: start=0, step=1, limit=2
      $region71: #{scnn_forward.1} parent=55 // loop_pre_header
        _
      $region72: #{scnn_forward.1} parent=55 // loop_header
        %s2862 = sphi 0, %s2866
        %p2863 = scmp.ge.s32.totalorder %s2862, 2
      $region73: #{scnn_forward.1} parent=55 // loop_header_branch
        %2865 = sbr.rel (%p2863) target = $region77
      $region74: #{scnn_forward.1} parent=55 // loop_body
        %s2867 = smul.u32 %s2862, 4
        %s2868 = scalar_lea.vmem [#allocation5], %s2867
        %v2869 = vld [vmem:[%s2868] sm:$0x3]
        %v2870 = vpack.c.bf16 %v2869, %v2869
        %v2871 = vld [vmem:[%s5] sm:$0xf]
        %v2872 = vld [vmem:[%s5 + $0x4] sm:$0xf]
        %v2873 = vld [vmem:[%s5 + $0x8] sm:$0xf]
        %v2874 = vld [vmem:[%s5 + $0xc] sm:$0xf]
        %v2875 = vld [vmem:[%s5 + $0x10] sm:$0xf]
        %v2876 = vld [vmem:[%s5 + $0x14] sm:$0xf]
        %v2877 = vld [vmem:[%s5 + $0x18] sm:$0xf]
        %v2878 = vld [vmem:[%s5 + $0x1c] sm:$0xf]
        %v2879 = vld [vmem:[%s5 + $0x20] sm:$0xf]
        %v2880 = vld [vmem:[%s5 + $0x24] sm:$0xf]
        %v2881 = vld [vmem:[%s5 + $0x28] sm:$0xf]
        %v2882 = vld [vmem:[%s5 + $0x2c] sm:$0xf]
        %v2883 = vld [vmem:[%s5 + $0x30] sm:$0xf]
        %v2884 = vld [vmem:[%s5 + $0x34] sm:$0xf]
        %v2885 = vld [vmem:[%s5 + $0x38] sm:$0xf]
        %v2886 = vld [vmem:[%s5 + $0x3c] sm:$0xf]
        %v2887 = vld [vmem:[%s2868 + $0x1] sm:$0x3]
        %v2888 = vpack.c.bf16 %v2887, %v2887
        %s2889 = scalar_lea.vmem %s5, 64
        %v2890 = vld [vmem:[%s2889] sm:$0xf]
        %v2891 = vld [vmem:[%s2889 + $0x4] sm:$0xf]
        %v2892 = vld [vmem:[%s2889 + $0x8] sm:$0xf]
        %v2893 = vld [vmem:[%s2889 + $0xc] sm:$0xf]
        %v2894 = vld [vmem:[%s2889 + $0x10] sm:$0xf]
        %v2895 = vld [vmem:[%s2889 + $0x14] sm:$0xf]
        %v2896 = vld [vmem:[%s2889 + $0x18] sm:$0xf]
        %v2897 = vld [vmem:[%s2889 + $0x1c] sm:$0xf]
        %v2898 = vld [vmem:[%s2889 + $0x20] sm:$0xf]
        %v2899 = vld [vmem:[%s2889 + $0x24] sm:$0xf]
        %v2900 = vld [vmem:[%s2889 + $0x28] sm:$0xf]
        %v2901 = vld [vmem:[%s2889 + $0x2c] sm:$0xf]
        %v2902 = vld [vmem:[%s2889 + $0x30] sm:$0xf]
        %v2903 = vld [vmem:[%s2889 + $0x34] sm:$0xf]
        %v2904 = vld [vmem:[%s2889 + $0x38] sm:$0xf]
        %v2905 = vld [vmem:[%s2889 + $0x3c] sm:$0xf]
        %v2922 = vunpack.c.l.b16 %v2890
        %v2923 = vunpack.c.l.b16 %v2891
        %v2924 = vunpack.c.l.b16 %v2892
        %v2925 = vunpack.c.l.b16 %v2893
        %v2926 = vunpack.c.l.b16 %v2894
        %v2927 = vunpack.c.l.b16 %v2895
        %v2928 = vunpack.c.l.b16 %v2896
        %v2929 = vunpack.c.l.b16 %v2897
        %v2930 = vunpack.c.l.b16 %v2898
        %v2931 = vunpack.c.l.b16 %v2899
        %v2932 = vunpack.c.l.b16 %v2900
        %v2933 = vunpack.c.l.b16 %v2901
        %v2934 = vunpack.c.l.b16 %v2902
        %v2935 = vunpack.c.l.b16 %v2903
        %v2936 = vunpack.c.l.b16 %v2904
        %v2937 = vunpack.c.l.b16 %v2905
        %v2938 = vpack.c.b16 %v2923, %v2922
        %v2939 = vpack.c.b16 %v2925, %v2924
        %v2940 = vpack.c.b16 %v2927, %v2926
        %v2941 = vpack.c.b16 %v2929, %v2928
        %v2942 = vpack.c.b16 %v2931, %v2930
        %v2943 = vpack.c.b16 %v2933, %v2932
        %v2944 = vpack.c.b16 %v2935, %v2934
        %v2945 = vpack.c.b16 %v2937, %v2936
        %2954 = vmatprep.subr.bf16.mxu0 0
        %2955 = vmatpush1.bf16.msra.mxu0 %v2938
        %2956 = vmatprep.subr.bf16.mxu0 0
        %2957 = vmatpush1.bf16.msra.mxu0 %v2939
        %2958 = vmatprep.subr.bf16.mxu0 0
        %2959 = vmatpush1.bf16.msra.mxu0 %v2940
        %2960 = vmatprep.subr.bf16.mxu0 0
        %2961 = vmatpush1.bf16.msra.mxu0 %v2941
        %2962 = vmatprep.subr.bf16.mxu0 0
        %2963 = vmatpush1.bf16.msra.mxu0 %v2942
        %2964 = vmatprep.subr.bf16.mxu0 0
        %2965 = vmatpush1.bf16.msra.mxu0 %v2943
        %2966 = vmatprep.subr.bf16.mxu0 0
        %2967 = vmatpush1.bf16.msra.mxu0 %v2944
        %2968 = vmatprep.subr.bf16.mxu0 0
        %2969 = vmatpush1.bf16.msra.mxu0 %v2945
        %2970 = vmatprep.subr.bf16.mxu0 0
        %2971 = vmatpush1.bf16.msra.mxu0 0
        %2972 = vmatprep.subr.bf16.mxu0 0
        %2973 = vmatpush1.bf16.msra.mxu0 0
        %2974 = vmatprep.subr.bf16.mxu0 0
        %2975 = vmatpush1.bf16.msra.mxu0 0
        %2976 = vmatprep.subr.bf16.mxu0 0
        %2977 = vmatpush1.bf16.msra.mxu0 0
        %2978 = vmatprep.subr.bf16.mxu0 0
        %2979 = vmatpush1.bf16.msra.mxu0 0
        %2980 = vmatprep.subr.bf16.mxu0 0
        %2981 = vmatpush1.bf16.msra.mxu0 0
        %2982 = vmatprep.subr.bf16.mxu0 0
        %2983 = vmatpush1.bf16.msra.mxu0 0
        %2984 = vmatprep.subr.bf16.mxu0 0
        %2985 = vmatpush1.bf16.msra.mxu0 0
        %2986 = vmatprep.mubr.bf16.mxu0 0
        %2987 = vmatmul.mubr.bf16.gmra.mrb[0].mxu0 %v2888
        %v2988 = vpop.f32.mrb[0].mxu0
        %v2989 = vadd.f32 0.0, %v2988
        %v2990 = vpop.f32.mrb[0].mxu0
        %v2991 = vpop.f32.mrb[0].mxu0
        %v2992 = vpop.f32.mrb[0].mxu0
        %2993 = vdwg.mxu0
        %v3010 = vunpack.c.l.b16 %v2871
        %v3011 = vunpack.c.l.b16 %v2872
        %v3012 = vunpack.c.l.b16 %v2873
        %v3013 = vunpack.c.l.b16 %v2874
        %v3014 = vunpack.c.l.b16 %v2875
        %v3015 = vunpack.c.l.b16 %v2876
        %v3016 = vunpack.c.l.b16 %v2877
        %v3017 = vunpack.c.l.b16 %v2878
        %v3018 = vunpack.c.l.b16 %v2879
        %v3019 = vunpack.c.l.b16 %v2880
        %v3020 = vunpack.c.l.b16 %v2881
        %v3021 = vunpack.c.l.b16 %v2882
        %v3022 = vunpack.c.l.b16 %v2883
        %v3023 = vunpack.c.l.b16 %v2884
        %v3024 = vunpack.c.l.b16 %v2885
        %v3025 = vunpack.c.l.b16 %v2886
        %v3026 = vpack.c.b16 %v3011, %v3010
        %v3027 = vpack.c.b16 %v3013, %v3012
        %v3028 = vpack.c.b16 %v3015, %v3014
        %v3029 = vpack.c.b16 %v3017, %v3016
        %v3030 = vpack.c.b16 %v3019, %v3018
        %v3031 = vpack.c.b16 %v3021, %v3020
        %v3032 = vpack.c.b16 %v3023, %v3022
        %v3033 = vpack.c.b16 %v3025, %v3024
        %3042 = vmatprep.subr.bf16.mxu0 0
        %3043 = vmatpush1.bf16.msra.mxu0 %v3026
        %3044 = vmatprep.subr.bf16.mxu0 0
        %3045 = vmatpush1.bf16.msra.mxu0 %v3027
        %3046 = vmatprep.subr.bf16.mxu0 0
        %3047 = vmatpush1.bf16.msra.mxu0 %v3028
        %3048 = vmatprep.subr.bf16.mxu0 0
        %3049 = vmatpush1.bf16.msra.mxu0 %v3029
        %3050 = vmatprep.subr.bf16.mxu0 0
        %3051 = vmatpush1.bf16.msra.mxu0 %v3030
        %3052 = vmatprep.subr.bf16.mxu0 0
        %3053 = vmatpush1.bf16.msra.mxu0 %v3031
        %3054 = vmatprep.subr.bf16.mxu0 0
        %3055 = vmatpush1.bf16.msra.mxu0 %v3032
        %3056 = vmatprep.subr.bf16.mxu0 0
        %3057 = vmatpush1.bf16.msra.mxu0 %v3033
        %3058 = vmatprep.subr.bf16.mxu0 0
        %3059 = vmatpush1.bf16.msra.mxu0 0
        %3060 = vmatprep.subr.bf16.mxu0 0
        %3061 = vmatpush1.bf16.msra.mxu0 0
        %3062 = vmatprep.subr.bf16.mxu0 0
        %3063 = vmatpush1.bf16.msra.mxu0 0
        %3064 = vmatprep.subr.bf16.mxu0 0
        %3065 = vmatpush1.bf16.msra.mxu0 0
        %3066 = vmatprep.subr.bf16.mxu0 0
        %3067 = vmatpush1.bf16.msra.mxu0 0
        %3068 = vmatprep.subr.bf16.mxu0 0
        %3069 = vmatpush1.bf16.msra.mxu0 0
        %3070 = vmatprep.subr.bf16.mxu0 0
        %3071 = vmatpush1.bf16.msra.mxu0 0
        %3072 = vmatprep.subr.bf16.mxu0 0
        %3073 = vmatpush1.bf16.msra.mxu0 0
        %3074 = vmatprep.mubr.bf16.mxu0 0
        %3075 = vmatmul.mubr.bf16.gmra.mrb[0].mxu0 %v2870
        %v3076 = vpop.f32.mrb[0].mxu0
        %v3077 = vadd.f32 %v2989, %v3076
        %v3078 = vpop.f32.mrb[0].mxu0
        %v3079 = vpop.f32.mrb[0].mxu0
        %v3080 = vpop.f32.mrb[0].mxu0
        %3081 = vdwg.mxu0
        %v3082 = vld [vmem:[%s2868 + $0x2] sm:$0x3]
        %v3083 = vpack.c.bf16 %v3082, %v3082
        %s3084 = scalar_lea.vmem %s5, 128
        %v3085 = vld [vmem:[%s3084] sm:$0xf]
        %v3086 = vld [vmem:[%s3084 + $0x4] sm:$0xf]
        %v3087 = vld [vmem:[%s3084 + $0x8] sm:$0xf]
        %v3088 = vld [vmem:[%s3084 + $0xc] sm:$0xf]
        %v3089 = vld [vmem:[%s3084 + $0x10] sm:$0xf]
        %v3090 = vld [vmem:[%s3084 + $0x14] sm:$0xf]
        %v3091 = vld [vmem:[%s3084 + $0x18] sm:$0xf]
        %v3092 = vld [vmem:[%s3084 + $0x1c] sm:$0xf]
        %v3093 = vld [vmem:[%s3084 + $0x20] sm:$0xf]
        %v3094 = vld [vmem:[%s3084 + $0x24] sm:$0xf]
        %v3095 = vld [vmem:[%s3084 + $0x28] sm:$0xf]
        %v3096 = vld [vmem:[%s3084 + $0x2c] sm:$0xf]
        %v3097 = vld [vmem:[%s3084 + $0x30] sm:$0xf]
        %v3098 = vld [vmem:[%s3084 + $0x34] sm:$0xf]
        %v3099 = vld [vmem:[%s3084 + $0x38] sm:$0xf]
        %v3100 = vld [vmem:[%s3084 + $0x3c] sm:$0xf]
        %v3117 = vunpack.c.l.b16 %v3085
        %v3118 = vunpack.c.l.b16 %v3086
        %v3119 = vunpack.c.l.b16 %v3087
        %v3120 = vunpack.c.l.b16 %v3088
        %v3121 = vunpack.c.l.b16 %v3089
        %v3122 = vunpack.c.l.b16 %v3090
        %v3123 = vunpack.c.l.b16 %v3091
        %v3124 = vunpack.c.l.b16 %v3092
        %v3125 = vunpack.c.l.b16 %v3093
        %v3126 = vunpack.c.l.b16 %v3094
        %v3127 = vunpack.c.l.b16 %v3095
        %v3128 = vunpack.c.l.b16 %v3096
        %v3129 = vunpack.c.l.b16 %v3097
        %v3130 = vunpack.c.l.b16 %v3098
        %v3131 = vunpack.c.l.b16 %v3099
        %v3132 = vunpack.c.l.b16 %v3100
        %v3133 = vpack.c.b16 %v3118, %v3117
        %v3134 = vpack.c.b16 %v3120, %v3119
        %v3135 = vpack.c.b16 %v3122, %v3121
        %v3136 = vpack.c.b16 %v3124, %v3123
        %v3137 = vpack.c.b16 %v3126, %v3125
        %v3138 = vpack.c.b16 %v3128, %v3127
        %v3139 = vpack.c.b16 %v3130, %v3129
        %v3140 = vpack.c.b16 %v3132, %v3131
        %3149 = vmatprep.subr.bf16.mxu0 0
        %3150 = vmatpush1.bf16.msra.mxu0 %v3133
        %3151 = vmatprep.subr.bf16.mxu0 0
        %3152 = vmatpush1.bf16.msra.mxu0 %v3134
        %3153 = vmatprep.subr.bf16.mxu0 0
        %3154 = vmatpush1.bf16.msra.mxu0 %v3135
        %3155 = vmatprep.subr.bf16.mxu0 0
        %3156 = vmatpush1.bf16.msra.mxu0 %v3136
        %3157 = vmatprep.subr.bf16.mxu0 0
        %3158 = vmatpush1.bf16.msra.mxu0 %v3137
        %3159 = vmatprep.subr.bf16.mxu0 0
        %3160 = vmatpush1.bf16.msra.mxu0 %v3138
        %3161 = vmatprep.subr.bf16.mxu0 0
        %3162 = vmatpush1.bf16.msra.mxu0 %v3139
        %3163 = vmatprep.subr.bf16.mxu0 0
        %3164 = vmatpush1.bf16.msra.mxu0 %v3140
        %3165 = vmatprep.subr.bf16.mxu0 0
        %3166 = vmatpush1.bf16.msra.mxu0 0
        %3167 = vmatprep.subr.bf16.mxu0 0
        %3168 = vmatpush1.bf16.msra.mxu0 0
        %3169 = vmatprep.subr.bf16.mxu0 0
        %3170 = vmatpush1.bf16.msra.mxu0 0
        %3171 = vmatprep.subr.bf16.mxu0 0
        %3172 = vmatpush1.bf16.msra.mxu0 0
        %3173 = vmatprep.subr.bf16.mxu0 0
        %3174 = vmatpush1.bf16.msra.mxu0 0
        %3175 = vmatprep.subr.bf16.mxu0 0
        %3176 = vmatpush1.bf16.msra.mxu0 0
        %3177 = vmatprep.subr.bf16.mxu0 0
        %3178 = vmatpush1.bf16.msra.mxu0 0
        %3179 = vmatprep.subr.bf16.mxu0 0
        %3180 = vmatpush1.bf16.msra.mxu0 0
        %3181 = vmatprep.mubr.bf16.mxu0 0
        %3182 = vmatmul.mubr.bf16.gmra.mrb[0].mxu0 %v3083
        %v3183 = vpop.f32.mrb[0].mxu0
        %v3184 = vadd.f32 0.0, %v3183
        %v3185 = vpop.f32.mrb[0].mxu0
        %v3186 = vpop.f32.mrb[0].mxu0
        %v3187 = vpop.f32.mrb[0].mxu0
        %3188 = vdwg.mxu0
        %v3189 = vadd.f32 %v3077, %v3184
        %s3190 = sadd.s32 %s2862, 1
        %s3191 = smul.u32 %s3190, 4
        %s3192 = scalar_lea.vmem [#allocation5], %s3191
        %v3193 = vld [vmem:[%s3192] sm:$0x3]
        %v3194 = vpack.c.bf16 %v3193, %v3193
        %s3195 = scalar_lea.vmem %s5, 192
        %v3196 = vld [vmem:[%s3195] sm:$0xf]
        %v3197 = vld [vmem:[%s3195 + $0x4] sm:$0xf]
        %v3198 = vld [vmem:[%s3195 + $0x8] sm:$0xf]
        %v3199 = vld [vmem:[%s3195 + $0xc] sm:$0xf]
        %v3200 = vld [vmem:[%s3195 + $0x10] sm:$0xf]
        %v3201 = vld [vmem:[%s3195 + $0x14] sm:$0xf]
        %v3202 = vld [vmem:[%s3195 + $0x18] sm:$0xf]
        %v3203 = vld [vmem:[%s3195 + $0x1c] sm:$0xf]
        %v3204 = vld [vmem:[%s3195 + $0x20] sm:$0xf]
        %v3205 = vld [vmem:[%s3195 + $0x24] sm:$0xf]
        %v3206 = vld [vmem:[%s3195 + $0x28] sm:$0xf]
        %v3207 = vld [vmem:[%s3195 + $0x2c] sm:$0xf]
        %v3208 = vld [vmem:[%s3195 + $0x30] sm:$0xf]
        %v3209 = vld [vmem:[%s3195 + $0x34] sm:$0xf]
        %v3210 = vld [vmem:[%s3195 + $0x38] sm:$0xf]
        %v3211 = vld [vmem:[%s3195 + $0x3c] sm:$0xf]
        %v3228 = vunpack.c.l.b16 %v3196
        %v3229 = vunpack.c.l.b16 %v3197
        %v3230 = vunpack.c.l.b16 %v3198
        %v3231 = vunpack.c.l.b16 %v3199
        %v3232 = vunpack.c.l.b16 %v3200
        %v3233 = vunpack.c.l.b16 %v3201
        %v3234 = vunpack.c.l.b16 %v3202
        %v3235 = vunpack.c.l.b16 %v3203
        %v3236 = vunpack.c.l.b16 %v3204
        %v3237 = vunpack.c.l.b16 %v3205
        %v3238 = vunpack.c.l.b16 %v3206
        %v3239 = vunpack.c.l.b16 %v3207
        %v3240 = vunpack.c.l.b16 %v3208
        %v3241 = vunpack.c.l.b16 %v3209
        %v3242 = vunpack.c.l.b16 %v3210
        %v3243 = vunpack.c.l.b16 %v3211
        %v3244 = vpack.c.b16 %v3229, %v3228
        %v3245 = vpack.c.b16 %v3231, %v3230
        %v3246 = vpack.c.b16 %v3233, %v3232
        %v3247 = vpack.c.b16 %v3235, %v3234
        %v3248 = vpack.c.b16 %v3237, %v3236
        %v3249 = vpack.c.b16 %v3239, %v3238
        %v3250 = vpack.c.b16 %v3241, %v3240
        %v3251 = vpack.c.b16 %v3243, %v3242
        %3260 = vmatprep.subr.bf16.mxu0 0
        %3261 = vmatpush1.bf16.msra.mxu0 %v3244
        %3262 = vmatprep.subr.bf16.mxu0 0
        %3263 = vmatpush1.bf16.msra.mxu0 %v3245
        %3264 = vmatprep.subr.bf16.mxu0 0
        %3265 = vmatpush1.bf16.msra.mxu0 %v3246
        %3266 = vmatprep.subr.bf16.mxu0 0
        %3267 = vmatpush1.bf16.msra.mxu0 %v3247
        %3268 = vmatprep.subr.bf16.mxu0 0
        %3269 = vmatpush1.bf16.msra.mxu0 %v3248
        %3270 = vmatprep.subr.bf16.mxu0 0
        %3271 = vmatpush1.bf16.msra.mxu0 %v3249
        %3272 = vmatprep.subr.bf16.mxu0 0
        %3273 = vmatpush1.bf16.msra.mxu0 %v3250
        %3274 = vmatprep.subr.bf16.mxu0 0
        %3275 = vmatpush1.bf16.msra.mxu0 %v3251
        %3276 = vmatprep.subr.bf16.mxu0 0
        %3277 = vmatpush1.bf16.msra.mxu0 0
        %3278 = vmatprep.subr.bf16.mxu0 0
        %3279 = vmatpush1.bf16.msra.mxu0 0
        %3280 = vmatprep.subr.bf16.mxu0 0
        %3281 = vmatpush1.bf16.msra.mxu0 0
        %3282 = vmatprep.subr.bf16.mxu0 0
        %3283 = vmatpush1.bf16.msra.mxu0 0
        %3284 = vmatprep.subr.bf16.mxu0 0
        %3285 = vmatpush1.bf16.msra.mxu0 0
        %3286 = vmatprep.subr.bf16.mxu0 0
        %3287 = vmatpush1.bf16.msra.mxu0 0
        %3288 = vmatprep.subr.bf16.mxu0 0
        %3289 = vmatpush1.bf16.msra.mxu0 0
        %3290 = vmatprep.subr.bf16.mxu0 0
        %3291 = vmatpush1.bf16.msra.mxu0 0
        %3292 = vmatprep.mubr.bf16.mxu0 0
        %3293 = vmatmul.mubr.bf16.gmra.mrb[0].mxu0 %v3194
        %v3294 = vpop.f32.mrb[0].mxu0
        %v3295 = vadd.f32 0.0, %v3294
        %v3296 = vpop.f32.mrb[0].mxu0
        %v3297 = vpop.f32.mrb[0].mxu0
        %v3298 = vpop.f32.mrb[0].mxu0
        %3299 = vdwg.mxu0
        %v3300 = vadd.f32 %v3189, %v3295
        %v3301 = vld [vmem:[%s3192 + $0x1] sm:$0x3]
        %v3302 = vpack.c.bf16 %v3301, %v3301
        %s3303 = scalar_lea.vmem %s5, 256
        %v3304 = vld [vmem:[%s3303] sm:$0xf]
        %v3305 = vld [vmem:[%s3303 + $0x4] sm:$0xf]
        %v3306 = vld [vmem:[%s3303 + $0x8] sm:$0xf]
        %v3307 = vld [vmem:[%s3303 + $0xc] sm:$0xf]
        %v3308 = vld [vmem:[%s3303 + $0x10] sm:$0xf]
        %v3309 = vld [vmem:[%s3303 + $0x14] sm:$0xf]
        %v3310 = vld [vmem:[%s3303 + $0x18] sm:$0xf]
        %v3311 = vld [vmem:[%s3303 + $0x1c] sm:$0xf]
        %v3312 = vld [vmem:[%s3303 + $0x20] sm:$0xf]
        %v3313 = vld [vmem:[%s3303 + $0x24] sm:$0xf]
        %v3314 = vld [vmem:[%s3303 + $0x28] sm:$0xf]
        %v3315 = vld [vmem:[%s3303 + $0x2c] sm:$0xf]
        %v3316 = vld [vmem:[%s3303 + $0x30] sm:$0xf]
        %v3317 = vld [vmem:[%s3303 + $0x34] sm:$0xf]
        %v3318 = vld [vmem:[%s3303 + $0x38] sm:$0xf]
        %v3319 = vld [vmem:[%s3303 + $0x3c] sm:$0xf]
        %v3336 = vunpack.c.l.b16 %v3304
        %v3337 = vunpack.c.l.b16 %v3305
        %v3338 = vunpack.c.l.b16 %v3306
        %v3339 = vunpack.c.l.b16 %v3307
        %v3340 = vunpack.c.l.b16 %v3308
        %v3341 = vunpack.c.l.b16 %v3309
        %v3342 = vunpack.c.l.b16 %v3310
        %v3343 = vunpack.c.l.b16 %v3311
        %v3344 = vunpack.c.l.b16 %v3312
        %v3345 = vunpack.c.l.b16 %v3313
        %v3346 = vunpack.c.l.b16 %v3314
        %v3347 = vunpack.c.l.b16 %v3315
        %v3348 = vunpack.c.l.b16 %v3316
        %v3349 = vunpack.c.l.b16 %v3317
        %v3350 = vunpack.c.l.b16 %v3318
        %v3351 = vunpack.c.l.b16 %v3319
        %v3352 = vpack.c.b16 %v3337, %v3336
        %v3353 = vpack.c.b16 %v3339, %v3338
        %v3354 = vpack.c.b16 %v3341, %v3340
        %v3355 = vpack.c.b16 %v3343, %v3342
        %v3356 = vpack.c.b16 %v3345, %v3344
        %v3357 = vpack.c.b16 %v3347, %v3346
        %v3358 = vpack.c.b16 %v3349, %v3348
        %v3359 = vpack.c.b16 %v3351, %v3350
        %3368 = vmatprep.subr.bf16.mxu0 0
        %3369 = vmatpush1.bf16.msra.mxu0 %v3352
        %3370 = vmatprep.subr.bf16.mxu0 0
        %3371 = vmatpush1.bf16.msra.mxu0 %v3353
        %3372 = vmatprep.subr.bf16.mxu0 0
        %3373 = vmatpush1.bf16.msra.mxu0 %v3354
        %3374 = vmatprep.subr.bf16.mxu0 0
        %3375 = vmatpush1.bf16.msra.mxu0 %v3355
        %3376 = vmatprep.subr.bf16.mxu0 0
        %3377 = vmatpush1.bf16.msra.mxu0 %v3356
        %3378 = vmatprep.subr.bf16.mxu0 0
        %3379 = vmatpush1.bf16.msra.mxu0 %v3357
        %3380 = vmatprep.subr.bf16.mxu0 0
        %3381 = vmatpush1.bf16.msra.mxu0 %v3358
        %3382 = vmatprep.subr.bf16.mxu0 0
        %3383 = vmatpush1.bf16.msra.mxu0 %v3359
        %3384 = vmatprep.subr.bf16.mxu0 0
        %3385 = vmatpush1.bf16.msra.mxu0 0
        %3386 = vmatprep.subr.bf16.mxu0 0
        %3387 = vmatpush1.bf16.msra.mxu0 0
        %3388 = vmatprep.subr.bf16.mxu0 0
        %3389 = vmatpush1.bf16.msra.mxu0 0
        %3390 = vmatprep.subr.bf16.mxu0 0
        %3391 = vmatpush1.bf16.msra.mxu0 0
        %3392 = vmatprep.subr.bf16.mxu0 0
        %3393 = vmatpush1.bf16.msra.mxu0 0
        %3394 = vmatprep.subr.bf16.mxu0 0
        %3395 = vmatpush1.bf16.msra.mxu0 0
        %3396 = vmatprep.subr.bf16.mxu0 0
        %3397 = vmatpush1.bf16.msra.mxu0 0
        %3398 = vmatprep.subr.bf16.mxu0 0
        %3399 = vmatpush1.bf16.msra.mxu0 0
        %3400 = vmatprep.mubr.bf16.mxu0 0
        %3401 = vmatmul.mubr.bf16.gmra.mrb[0].mxu0 %v3302
        %v3402 = vpop.f32.mrb[0].mxu0
        %v3403 = vadd.f32 0.0, %v3402
        %v3404 = vpop.f32.mrb[0].mxu0
        %v3405 = vpop.f32.mrb[0].mxu0
        %v3406 = vpop.f32.mrb[0].mxu0
        %3407 = vdwg.mxu0
        %v3408 = vadd.f32 %v3300, %v3403
        %v3409 = vld [vmem:[%s3192 + $0x2] sm:$0x3]
        %v3410 = vpack.c.bf16 %v3409, %v3409
        %s3411 = scalar_lea.vmem %s5, 320
        %v3412 = vld [vmem:[%s3411] sm:$0xf]
        %v3413 = vld [vmem:[%s3411 + $0x4] sm:$0xf]
        %v3414 = vld [vmem:[%s3411 + $0x8] sm:$0xf]
        %v3415 = vld [vmem:[%s3411 + $0xc] sm:$0xf]
        %v3416 = vld [vmem:[%s3411 + $0x10] sm:$0xf]
        %v3417 = vld [vmem:[%s3411 + $0x14] sm:$0xf]
        %v3418 = vld [vmem:[%s3411 + $0x18] sm:$0xf]
        %v3419 = vld [vmem:[%s3411 + $0x1c] sm:$0xf]
        %v3420 = vld [vmem:[%s3411 + $0x20] sm:$0xf]
        %v3421 = vld [vmem:[%s3411 + $0x24] sm:$0xf]
        %v3422 = vld [vmem:[%s3411 + $0x28] sm:$0xf]
        %v3423 = vld [vmem:[%s3411 + $0x2c] sm:$0xf]
        %v3424 = vld [vmem:[%s3411 + $0x30] sm:$0xf]
        %v3425 = vld [vmem:[%s3411 + $0x34] sm:$0xf]
        %v3426 = vld [vmem:[%s3411 + $0x38] sm:$0xf]
        %v3427 = vld [vmem:[%s3411 + $0x3c] sm:$0xf]
        %v3444 = vunpack.c.l.b16 %v3412
        %v3445 = vunpack.c.l.b16 %v3413
        %v3446 = vunpack.c.l.b16 %v3414
        %v3447 = vunpack.c.l.b16 %v3415
        %v3448 = vunpack.c.l.b16 %v3416
        %v3449 = vunpack.c.l.b16 %v3417
        %v3450 = vunpack.c.l.b16 %v3418
        %v3451 = vunpack.c.l.b16 %v3419
        %v3452 = vunpack.c.l.b16 %v3420
        %v3453 = vunpack.c.l.b16 %v3421
        %v3454 = vunpack.c.l.b16 %v3422
        %v3455 = vunpack.c.l.b16 %v3423
        %v3456 = vunpack.c.l.b16 %v3424
        %v3457 = vunpack.c.l.b16 %v3425
        %v3458 = vunpack.c.l.b16 %v3426
        %v3459 = vunpack.c.l.b16 %v3427
        %v3460 = vpack.c.b16 %v3445, %v3444
        %v3461 = vpack.c.b16 %v3447, %v3446
        %v3462 = vpack.c.b16 %v3449, %v3448
        %v3463 = vpack.c.b16 %v3451, %v3450
        %v3464 = vpack.c.b16 %v3453, %v3452
        %v3465 = vpack.c.b16 %v3455, %v3454
        %v3466 = vpack.c.b16 %v3457, %v3456
        %v3467 = vpack.c.b16 %v3459, %v3458
        %3476 = vmatprep.subr.bf16.mxu0 0
        %3477 = vmatpush1.bf16.msra.mxu0 %v3460
        %3478 = vmatprep.subr.bf16.mxu0 0
        %3479 = vmatpush1.bf16.msra.mxu0 %v3461
        %3480 = vmatprep.subr.bf16.mxu0 0
        %3481 = vmatpush1.bf16.msra.mxu0 %v3462
        %3482 = vmatprep.subr.bf16.mxu0 0
        %3483 = vmatpush1.bf16.msra.mxu0 %v3463
        %3484 = vmatprep.subr.bf16.mxu0 0
        %3485 = vmatpush1.bf16.msra.mxu0 %v3464
        %3486 = vmatprep.subr.bf16.mxu0 0
        %3487 = vmatpush1.bf16.msra.mxu0 %v3465
        %3488 = vmatprep.subr.bf16.mxu0 0
        %3489 = vmatpush1.bf16.msra.mxu0 %v3466
        %3490 = vmatprep.subr.bf16.mxu0 0
        %3491 = vmatpush1.bf16.msra.mxu0 %v3467
        %3492 = vmatprep.subr.bf16.mxu0 0
        %3493 = vmatpush1.bf16.msra.mxu0 0
        %3494 = vmatprep.subr.bf16.mxu0 0
        %3495 = vmatpush1.bf16.msra.mxu0 0
        %3496 = vmatprep.subr.bf16.mxu0 0
        %3497 = vmatpush1.bf16.msra.mxu0 0
        %3498 = vmatprep.subr.bf16.mxu0 0
        %3499 = vmatpush1.bf16.msra.mxu0 0
        %3500 = vmatprep.subr.bf16.mxu0 0
        %3501 = vmatpush1.bf16.msra.mxu0 0
        %3502 = vmatprep.subr.bf16.mxu0 0
        %3503 = vmatpush1.bf16.msra.mxu0 0
        %3504 = vmatprep.subr.bf16.mxu0 0
        %3505 = vmatpush1.bf16.msra.mxu0 0
        %3506 = vmatprep.subr.bf16.mxu0 0
        %3507 = vmatpush1.bf16.msra.mxu0 0
        %3508 = vmatprep.mubr.bf16.mxu0 0
        %3509 = vmatmul.mubr.bf16.gmra.mrb[0].mxu0 %v3410
        %v3510 = vpop.f32.mrb[0].mxu0
        %v3511 = vadd.f32 0.0, %v3510
        %v3512 = vpop.f32.mrb[0].mxu0
        %v3513 = vpop.f32.mrb[0].mxu0
        %v3514 = vpop.f32.mrb[0].mxu0
        %3515 = vdwg.mxu0
        %v3516 = vadd.f32 %v3408, %v3511
        %s3517 = sadd.s32 %s2862, 2
        %s3518 = smul.u32 %s3517, 4
        %s3519 = scalar_lea.vmem [#allocation5], %s3518
        %v3520 = vld [vmem:[%s3519] sm:$0x3]
        %v3521 = vpack.c.bf16 %v3520, %v3520
        %s3522 = scalar_lea.vmem %s5, 384
        %v3523 = vld [vmem:[%s3522] sm:$0xf]
        %v3524 = vld [vmem:[%s3522 + $0x4] sm:$0xf]
        %v3525 = vld [vmem:[%s3522 + $0x8] sm:$0xf]
        %v3526 = vld [vmem:[%s3522 + $0xc] sm:$0xf]
        %v3527 = vld [vmem:[%s3522 + $0x10] sm:$0xf]
        %v3528 = vld [vmem:[%s3522 + $0x14] sm:$0xf]
        %v3529 = vld [vmem:[%s3522 + $0x18] sm:$0xf]
        %v3530 = vld [vmem:[%s3522 + $0x1c] sm:$0xf]
        %v3531 = vld [vmem:[%s3522 + $0x20] sm:$0xf]
        %v3532 = vld [vmem:[%s3522 + $0x24] sm:$0xf]
        %v3533 = vld [vmem:[%s3522 + $0x28] sm:$0xf]
        %v3534 = vld [vmem:[%s3522 + $0x2c] sm:$0xf]
        %v3535 = vld [vmem:[%s3522 + $0x30] sm:$0xf]
        %v3536 = vld [vmem:[%s3522 + $0x34] sm:$0xf]
        %v3537 = vld [vmem:[%s3522 + $0x38] sm:$0xf]
        %v3538 = vld [vmem:[%s3522 + $0x3c] sm:$0xf]
        %v3555 = vunpack.c.l.b16 %v3523
        %v3556 = vunpack.c.l.b16 %v3524
        %v3557 = vunpack.c.l.b16 %v3525
        %v3558 = vunpack.c.l.b16 %v3526
        %v3559 = vunpack.c.l.b16 %v3527
        %v3560 = vunpack.c.l.b16 %v3528
        %v3561 = vunpack.c.l.b16 %v3529
        %v3562 = vunpack.c.l.b16 %v3530
        %v3563 = vunpack.c.l.b16 %v3531
        %v3564 = vunpack.c.l.b16 %v3532
        %v3565 = vunpack.c.l.b16 %v3533
        %v3566 = vunpack.c.l.b16 %v3534
        %v3567 = vunpack.c.l.b16 %v3535
        %v3568 = vunpack.c.l.b16 %v3536
        %v3569 = vunpack.c.l.b16 %v3537
        %v3570 = vunpack.c.l.b16 %v3538
        %v3571 = vpack.c.b16 %v3556, %v3555
        %v3572 = vpack.c.b16 %v3558, %v3557
        %v3573 = vpack.c.b16 %v3560, %v3559
        %v3574 = vpack.c.b16 %v3562, %v3561
        %v3575 = vpack.c.b16 %v3564, %v3563
        %v3576 = vpack.c.b16 %v3566, %v3565
        %v3577 = vpack.c.b16 %v3568, %v3567
        %v3578 = vpack.c.b16 %v3570, %v3569
        %3587 = vmatprep.subr.bf16.mxu0 0
        %3588 = vmatpush1.bf16.msra.mxu0 %v3571
        %3589 = vmatprep.subr.bf16.mxu0 0
        %3590 = vmatpush1.bf16.msra.mxu0 %v3572
        %3591 = vmatprep.subr.bf16.mxu0 0
        %3592 = vmatpush1.bf16.msra.mxu0 %v3573
        %3593 = vmatprep.subr.bf16.mxu0 0
        %3594 = vmatpush1.bf16.msra.mxu0 %v3574
        %3595 = vmatprep.subr.bf16.mxu0 0
        %3596 = vmatpush1.bf16.msra.mxu0 %v3575
        %3597 = vmatprep.subr.bf16.mxu0 0
        %3598 = vmatpush1.bf16.msra.mxu0 %v3576
        %3599 = vmatprep.subr.bf16.mxu0 0
        %3600 = vmatpush1.bf16.msra.mxu0 %v3577
        %3601 = vmatprep.subr.bf16.mxu0 0
        %3602 = vmatpush1.bf16.msra.mxu0 %v3578
        %3603 = vmatprep.subr.bf16.mxu0 0
        %3604 = vmatpush1.bf16.msra.mxu0 0
        %3605 = vmatprep.subr.bf16.mxu0 0
        %3606 = vmatpush1.bf16.msra.mxu0 0
        %3607 = vmatprep.subr.bf16.mxu0 0
        %3608 = vmatpush1.bf16.msra.mxu0 0
        %3609 = vmatprep.subr.bf16.mxu0 0
        %3610 = vmatpush1.bf16.msra.mxu0 0
        %3611 = vmatprep.subr.bf16.mxu0 0
        %3612 = vmatpush1.bf16.msra.mxu0 0
        %3613 = vmatprep.subr.bf16.mxu0 0
        %3614 = vmatpush1.bf16.msra.mxu0 0
        %3615 = vmatprep.subr.bf16.mxu0 0
        %3616 = vmatpush1.bf16.msra.mxu0 0
        %3617 = vmatprep.subr.bf16.mxu0 0
        %3618 = vmatpush1.bf16.msra.mxu0 0
        %3619 = vmatprep.mubr.bf16.mxu0 0
        %3620 = vmatmul.mubr.bf16.gmra.mrb[0].mxu0 %v3521
        %v3621 = vpop.f32.mrb[0].mxu0
        %v3622 = vadd.f32 0.0, %v3621
        %v3623 = vpop.f32.mrb[0].mxu0
        %v3624 = vpop.f32.mrb[0].mxu0
        %v3625 = vpop.f32.mrb[0].mxu0
        %3626 = vdwg.mxu0
        %v3627 = vadd.f32 %v3516, %v3622
        %v3628 = vld [vmem:[%s3519 + $0x1] sm:$0x3]
        %v3629 = vpack.c.bf16 %v3628, %v3628
        %s3630 = scalar_lea.vmem %s5, 448
        %v3631 = vld [vmem:[%s3630] sm:$0xf]
        %v3632 = vld [vmem:[%s3630 + $0x4] sm:$0xf]
        %v3633 = vld [vmem:[%s3630 + $0x8] sm:$0xf]
        %v3634 = vld [vmem:[%s3630 + $0xc] sm:$0xf]
        %v3635 = vld [vmem:[%s3630 + $0x10] sm:$0xf]
        %v3636 = vld [vmem:[%s3630 + $0x14] sm:$0xf]
        %v3637 = vld [vmem:[%s3630 + $0x18] sm:$0xf]
        %v3638 = vld [vmem:[%s3630 + $0x1c] sm:$0xf]
        %v3639 = vld [vmem:[%s3630 + $0x20] sm:$0xf]
        %v3640 = vld [vmem:[%s3630 + $0x24] sm:$0xf]
        %v3641 = vld [vmem:[%s3630 + $0x28] sm:$0xf]
        %v3642 = vld [vmem:[%s3630 + $0x2c] sm:$0xf]
        %v3643 = vld [vmem:[%s3630 + $0x30] sm:$0xf]
        %v3644 = vld [vmem:[%s3630 + $0x34] sm:$0xf]
        %v3645 = vld [vmem:[%s3630 + $0x38] sm:$0xf]
        %v3646 = vld [vmem:[%s3630 + $0x3c] sm:$0xf]
        %v3663 = vunpack.c.l.b16 %v3631
        %v3664 = vunpack.c.l.b16 %v3632
        %v3665 = vunpack.c.l.b16 %v3633
        %v3666 = vunpack.c.l.b16 %v3634
        %v3667 = vunpack.c.l.b16 %v3635
        %v3668 = vunpack.c.l.b16 %v3636
        %v3669 = vunpack.c.l.b16 %v3637
        %v3670 = vunpack.c.l.b16 %v3638
        %v3671 = vunpack.c.l.b16 %v3639
        %v3672 = vunpack.c.l.b16 %v3640
        %v3673 = vunpack.c.l.b16 %v3641
        %v3674 = vunpack.c.l.b16 %v3642
        %v3675 = vunpack.c.l.b16 %v3643
        %v3676 = vunpack.c.l.b16 %v3644
        %v3677 = vunpack.c.l.b16 %v3645
        %v3678 = vunpack.c.l.b16 %v3646
        %v3679 = vpack.c.b16 %v3664, %v3663
        %v3680 = vpack.c.b16 %v3666, %v3665
        %v3681 = vpack.c.b16 %v3668, %v3667
        %v3682 = vpack.c.b16 %v3670, %v3669
        %v3683 = vpack.c.b16 %v3672, %v3671
        %v3684 = vpack.c.b16 %v3674, %v3673
        %v3685 = vpack.c.b16 %v3676, %v3675
        %v3686 = vpack.c.b16 %v3678, %v3677
        %3695 = vmatprep.subr.bf16.mxu0 0
        %3696 = vmatpush1.bf16.msra.mxu0 %v3679
        %3697 = vmatprep.subr.bf16.mxu0 0
        %3698 = vmatpush1.bf16.msra.mxu0 %v3680
        %3699 = vmatprep.subr.bf16.mxu0 0
        %3700 = vmatpush1.bf16.msra.mxu0 %v3681
        %3701 = vmatprep.subr.bf16.mxu0 0
        %3702 = vmatpush1.bf16.msra.mxu0 %v3682
        %3703 = vmatprep.subr.bf16.mxu0 0
        %3704 = vmatpush1.bf16.msra.mxu0 %v3683
        %3705 = vmatprep.subr.bf16.mxu0 0
        %3706 = vmatpush1.bf16.msra.mxu0 %v3684
        %3707 = vmatprep.subr.bf16.mxu0 0
        %3708 = vmatpush1.bf16.msra.mxu0 %v3685
        %3709 = vmatprep.subr.bf16.mxu0 0
        %3710 = vmatpush1.bf16.msra.mxu0 %v3686
        %3711 = vmatprep.subr.bf16.mxu0 0
        %3712 = vmatpush1.bf16.msra.mxu0 0
        %3713 = vmatprep.subr.bf16.mxu0 0
        %3714 = vmatpush1.bf16.msra.mxu0 0
        %3715 = vmatprep.subr.bf16.mxu0 0
        %3716 = vmatpush1.bf16.msra.mxu0 0
        %3717 = vmatprep.subr.bf16.mxu0 0
        %3718 = vmatpush1.bf16.msra.mxu0 0
        %3719 = vmatprep.subr.bf16.mxu0 0
        %3720 = vmatpush1.bf16.msra.mxu0 0
        %3721 = vmatprep.subr.bf16.mxu0 0
        %3722 = vmatpush1.bf16.msra.mxu0 0
        %3723 = vmatprep.subr.bf16.mxu0 0
        %3724 = vmatpush1.bf16.msra.mxu0 0
        %3725 = vmatprep.subr.bf16.mxu0 0
        %3726 = vmatpush1.bf16.msra.mxu0 0
        %3727 = vmatprep.mubr.bf16.mxu0 0
        %3728 = vmatmul.mubr.bf16.gmra.mrb[0].mxu0 %v3629
        %v3729 = vpop.f32.mrb[0].mxu0
        %v3730 = vadd.f32 0.0, %v3729
        %v3731 = vpop.f32.mrb[0].mxu0
        %v3732 = vpop.f32.mrb[0].mxu0
        %v3733 = vpop.f32.mrb[0].mxu0
        %3734 = vdwg.mxu0
        %v3735 = vadd.f32 %v3627, %v3730
        %v3736 = vld [vmem:[%s3519 + $0x2] sm:$0x3]
        %v3737 = vpack.c.bf16 %v3736, %v3736
        %s3738 = scalar_lea.vmem %s5, 512
        %v3739 = vld [vmem:[%s3738] sm:$0xf]
        %v3740 = vld [vmem:[%s3738 + $0x4] sm:$0xf]
        %v3741 = vld [vmem:[%s3738 + $0x8] sm:$0xf]
        %v3742 = vld [vmem:[%s3738 + $0xc] sm:$0xf]
        %v3743 = vld [vmem:[%s3738 + $0x10] sm:$0xf]
        %v3744 = vld [vmem:[%s3738 + $0x14] sm:$0xf]
        %v3745 = vld [vmem:[%s3738 + $0x18] sm:$0xf]
        %v3746 = vld [vmem:[%s3738 + $0x1c] sm:$0xf]
        %v3747 = vld [vmem:[%s3738 + $0x20] sm:$0xf]
        %v3748 = vld [vmem:[%s3738 + $0x24] sm:$0xf]
        %v3749 = vld [vmem:[%s3738 + $0x28] sm:$0xf]
        %v3750 = vld [vmem:[%s3738 + $0x2c] sm:$0xf]
        %v3751 = vld [vmem:[%s3738 + $0x30] sm:$0xf]
        %v3752 = vld [vmem:[%s3738 + $0x34] sm:$0xf]
        %v3753 = vld [vmem:[%s3738 + $0x38] sm:$0xf]
        %v3754 = vld [vmem:[%s3738 + $0x3c] sm:$0xf]
        %v3771 = vunpack.c.l.b16 %v3739
        %v3772 = vunpack.c.l.b16 %v3740
        %v3773 = vunpack.c.l.b16 %v3741
        %v3774 = vunpack.c.l.b16 %v3742
        %v3775 = vunpack.c.l.b16 %v3743
        %v3776 = vunpack.c.l.b16 %v3744
        %v3777 = vunpack.c.l.b16 %v3745
        %v3778 = vunpack.c.l.b16 %v3746
        %v3779 = vunpack.c.l.b16 %v3747
        %v3780 = vunpack.c.l.b16 %v3748
        %v3781 = vunpack.c.l.b16 %v3749
        %v3782 = vunpack.c.l.b16 %v3750
        %v3783 = vunpack.c.l.b16 %v3751
        %v3784 = vunpack.c.l.b16 %v3752
        %v3785 = vunpack.c.l.b16 %v3753
        %v3786 = vunpack.c.l.b16 %v3754
        %v3787 = vpack.c.b16 %v3772, %v3771
        %v3788 = vpack.c.b16 %v3774, %v3773
        %v3789 = vpack.c.b16 %v3776, %v3775
        %v3790 = vpack.c.b16 %v3778, %v3777
        %v3791 = vpack.c.b16 %v3780, %v3779
        %v3792 = vpack.c.b16 %v3782, %v3781
        %v3793 = vpack.c.b16 %v3784, %v3783
        %v3794 = vpack.c.b16 %v3786, %v3785
        %3803 = vmatprep.subr.bf16.mxu0 0
        %3804 = vmatpush1.bf16.msra.mxu0 %v3787
        %3805 = vmatprep.subr.bf16.mxu0 0
        %3806 = vmatpush1.bf16.msra.mxu0 %v3788
        %3807 = vmatprep.subr.bf16.mxu0 0
        %3808 = vmatpush1.bf16.msra.mxu0 %v3789
        %3809 = vmatprep.subr.bf16.mxu0 0
        %3810 = vmatpush1.bf16.msra.mxu0 %v3790
        %3811 = vmatprep.subr.bf16.mxu0 0
        %3812 = vmatpush1.bf16.msra.mxu0 %v3791
        %3813 = vmatprep.subr.bf16.mxu0 0
        %3814 = vmatpush1.bf16.msra.mxu0 %v3792
        %3815 = vmatprep.subr.bf16.mxu0 0
        %3816 = vmatpush1.bf16.msra.mxu0 %v3793
        %3817 = vmatprep.subr.bf16.mxu0 0
        %3818 = vmatpush1.bf16.msra.mxu0 %v3794
        %3819 = vmatprep.subr.bf16.mxu0 0
        %3820 = vmatpush1.bf16.msra.mxu0 0
        %3821 = vmatprep.subr.bf16.mxu0 0
        %3822 = vmatpush1.bf16.msra.mxu0 0
        %3823 = vmatprep.subr.bf16.mxu0 0
        %3824 = vmatpush1.bf16.msra.mxu0 0
        %3825 = vmatprep.subr.bf16.mxu0 0
        %3826 = vmatpush1.bf16.msra.mxu0 0
        %3827 = vmatprep.subr.bf16.mxu0 0
        %3828 = vmatpush1.bf16.msra.mxu0 0
        %3829 = vmatprep.subr.bf16.mxu0 0
        %3830 = vmatpush1.bf16.msra.mxu0 0
        %3831 = vmatprep.subr.bf16.mxu0 0
        %3832 = vmatpush1.bf16.msra.mxu0 0
        %3833 = vmatprep.subr.bf16.mxu0 0
        %3834 = vmatpush1.bf16.msra.mxu0 0
        %3835 = vmatprep.mubr.bf16.mxu0 0
        %3836 = vmatmul.mubr.bf16.gmra.mrb[0].mxu0 %v3737
        %v3837 = vpop.f32.mrb[0].mxu0
        %v3838 = vadd.f32 0.0, %v3837
        %v3839 = vpop.f32.mrb[0].mxu0
        %v3840 = vpop.f32.mrb[0].mxu0
        %v3841 = vpop.f32.mrb[0].mxu0
        %3842 = vdwg.mxu0
        %v3843 = vadd.f32 %v3735, %v3838
        %v3844 = vld [vmem:[%s6] sm:$0x1]
        %v3846 = vlaneseq
        %v3847 = vshrl.u32 %v3846, 7
        %v3848 = vsub.s32 0, %v3847
        %v3849 = vrot.slane %v3844, %v3848
        %v3851 = vadd.f32 %v3843, %v3849
        %v3852 = vmax.f32 %v3851, 0.0
        %s3853 = scalar_lea.vmem [#allocation6], %s3191
        %3854 = vst [vmem:[%s3853 + $0x1] sm:$0x3] %v3852
      $region75: #{scnn_forward.1} parent=55 // loop_footer
        %s2866 = sadd.s32 1, %s2862
      $region76: #{scnn_forward.1} parent=55 // loop_footer_branch
        %2861 = sbr.rel target = $region72
      $region77: #{scnn_forward.1} parent=55 // loop_exit
        _
      loop: start=0, step=1, limit=2
      $region78: #{scnn_forward.1} parent=55 // loop_pre_header
        _
      $region79: #{scnn_forward.1} parent=55 // loop_header
        %s3856 = sphi 0, %s3860
        %p3857 = scmp.ge.s32.totalorder %s3856, 2
      $region80: #{scnn_forward.1} parent=55 // loop_header_branch
        %3859 = sbr.rel (%p3857) target = $region84
      $region81: #{scnn_forward.1} parent=55 // loop_body
        %s3861 = smul.u32 %s3856, 4
        %s3862 = scalar_lea.vmem [#allocation6], %s3861
        %v3863 = vld [vmem:[%s3862] sm:$0x3]
        %v3864 = vpack.c.bf16 %v3863, %v3863
        %v3865 = vld [vmem:[%s7] sm:$0xf]
        %v3866 = vld [vmem:[%s7 + $0x4] sm:$0xf]
        %v3867 = vld [vmem:[%s7 + $0x8] sm:$0xf]
        %v3868 = vld [vmem:[%s7 + $0xc] sm:$0xf]
        %v3869 = vld [vmem:[%s7 + $0x10] sm:$0xf]
        %v3870 = vld [vmem:[%s7 + $0x14] sm:$0xf]
        %v3871 = vld [vmem:[%s7 + $0x18] sm:$0xf]
        %v3872 = vld [vmem:[%s7 + $0x1c] sm:$0xf]
        %v3873 = vld [vmem:[%s7 + $0x20] sm:$0xf]
        %v3874 = vld [vmem:[%s7 + $0x24] sm:$0xf]
        %v3875 = vld [vmem:[%s7 + $0x28] sm:$0xf]
        %v3876 = vld [vmem:[%s7 + $0x2c] sm:$0xf]
        %v3877 = vld [vmem:[%s7 + $0x30] sm:$0xf]
        %v3878 = vld [vmem:[%s7 + $0x34] sm:$0xf]
        %v3879 = vld [vmem:[%s7 + $0x38] sm:$0xf]
        %v3880 = vld [vmem:[%s7 + $0x3c] sm:$0xf]
        %v3881 = vld [vmem:[%s3862 + $0x1] sm:$0x3]
        %v3882 = vpack.c.bf16 %v3881, %v3881
        %s3883 = scalar_lea.vmem %s7, 64
        %v3884 = vld [vmem:[%s3883] sm:$0xf]
        %v3885 = vld [vmem:[%s3883 + $0x4] sm:$0xf]
        %v3886 = vld [vmem:[%s3883 + $0x8] sm:$0xf]
        %v3887 = vld [vmem:[%s3883 + $0xc] sm:$0xf]
        %v3888 = vld [vmem:[%s3883 + $0x10] sm:$0xf]
        %v3889 = vld [vmem:[%s3883 + $0x14] sm:$0xf]
        %v3890 = vld [vmem:[%s3883 + $0x18] sm:$0xf]
        %v3891 = vld [vmem:[%s3883 + $0x1c] sm:$0xf]
        %v3892 = vld [vmem:[%s3883 + $0x20] sm:$0xf]
        %v3893 = vld [vmem:[%s3883 + $0x24] sm:$0xf]
        %v3894 = vld [vmem:[%s3883 + $0x28] sm:$0xf]
        %v3895 = vld [vmem:[%s3883 + $0x2c] sm:$0xf]
        %v3896 = vld [vmem:[%s3883 + $0x30] sm:$0xf]
        %v3897 = vld [vmem:[%s3883 + $0x34] sm:$0xf]
        %v3898 = vld [vmem:[%s3883 + $0x38] sm:$0xf]
        %v3899 = vld [vmem:[%s3883 + $0x3c] sm:$0xf]
        %v3916 = vunpack.c.l.b16 %v3884
        %v3917 = vunpack.c.l.b16 %v3885
        %v3918 = vunpack.c.l.b16 %v3886
        %v3919 = vunpack.c.l.b16 %v3887
        %v3920 = vunpack.c.l.b16 %v3888
        %v3921 = vunpack.c.l.b16 %v3889
        %v3922 = vunpack.c.l.b16 %v3890
        %v3923 = vunpack.c.l.b16 %v3891
        %v3924 = vunpack.c.l.b16 %v3892
        %v3925 = vunpack.c.l.b16 %v3893
        %v3926 = vunpack.c.l.b16 %v3894
        %v3927 = vunpack.c.l.b16 %v3895
        %v3928 = vunpack.c.l.b16 %v3896
        %v3929 = vunpack.c.l.b16 %v3897
        %v3930 = vunpack.c.l.b16 %v3898
        %v3931 = vunpack.c.l.b16 %v3899
        %v3932 = vpack.c.b16 %v3917, %v3916
        %v3933 = vpack.c.b16 %v3919, %v3918
        %v3934 = vpack.c.b16 %v3921, %v3920
        %v3935 = vpack.c.b16 %v3923, %v3922
        %v3936 = vpack.c.b16 %v3925, %v3924
        %v3937 = vpack.c.b16 %v3927, %v3926
        %v3938 = vpack.c.b16 %v3929, %v3928
        %v3939 = vpack.c.b16 %v3931, %v3930
        %3948 = vmatprep.subr.bf16.mxu0 0
        %3949 = vmatpush1.bf16.msra.mxu0 %v3932
        %3950 = vmatprep.subr.bf16.mxu0 0
        %3951 = vmatpush1.bf16.msra.mxu0 %v3933
        %3952 = vmatprep.subr.bf16.mxu0 0
        %3953 = vmatpush1.bf16.msra.mxu0 %v3934
        %3954 = vmatprep.subr.bf16.mxu0 0
        %3955 = vmatpush1.bf16.msra.mxu0 %v3935
        %3956 = vmatprep.subr.bf16.mxu0 0
        %3957 = vmatpush1.bf16.msra.mxu0 %v3936
        %3958 = vmatprep.subr.bf16.mxu0 0
        %3959 = vmatpush1.bf16.msra.mxu0 %v3937
        %3960 = vmatprep.subr.bf16.mxu0 0
        %3961 = vmatpush1.bf16.msra.mxu0 %v3938
        %3962 = vmatprep.subr.bf16.mxu0 0
        %3963 = vmatpush1.bf16.msra.mxu0 %v3939
        %3964 = vmatprep.subr.bf16.mxu0 0
        %3965 = vmatpush1.bf16.msra.mxu0 0
        %3966 = vmatprep.subr.bf16.mxu0 0
        %3967 = vmatpush1.bf16.msra.mxu0 0
        %3968 = vmatprep.subr.bf16.mxu0 0
        %3969 = vmatpush1.bf16.msra.mxu0 0
        %3970 = vmatprep.subr.bf16.mxu0 0
        %3971 = vmatpush1.bf16.msra.mxu0 0
        %3972 = vmatprep.subr.bf16.mxu0 0
        %3973 = vmatpush1.bf16.msra.mxu0 0
        %3974 = vmatprep.subr.bf16.mxu0 0
        %3975 = vmatpush1.bf16.msra.mxu0 0
        %3976 = vmatprep.subr.bf16.mxu0 0
        %3977 = vmatpush1.bf16.msra.mxu0 0
        %3978 = vmatprep.subr.bf16.mxu0 0
        %3979 = vmatpush1.bf16.msra.mxu0 0
        %3980 = vmatprep.mubr.bf16.mxu0 0
        %3981 = vmatmul.mubr.bf16.gmra.mrb[0].mxu0 %v3882
        %v3982 = vpop.f32.mrb[0].mxu0
        %v3983 = vadd.f32 0.0, %v3982
        %v3984 = vpop.f32.mrb[0].mxu0
        %v3985 = vpop.f32.mrb[0].mxu0
        %v3986 = vpop.f32.mrb[0].mxu0
        %3987 = vdwg.mxu0
        %v4004 = vunpack.c.l.b16 %v3865
        %v4005 = vunpack.c.l.b16 %v3866
        %v4006 = vunpack.c.l.b16 %v3867
        %v4007 = vunpack.c.l.b16 %v3868
        %v4008 = vunpack.c.l.b16 %v3869
        %v4009 = vunpack.c.l.b16 %v3870
        %v4010 = vunpack.c.l.b16 %v3871
        %v4011 = vunpack.c.l.b16 %v3872
        %v4012 = vunpack.c.l.b16 %v3873
        %v4013 = vunpack.c.l.b16 %v3874
        %v4014 = vunpack.c.l.b16 %v3875
        %v4015 = vunpack.c.l.b16 %v3876
        %v4016 = vunpack.c.l.b16 %v3877
        %v4017 = vunpack.c.l.b16 %v3878
        %v4018 = vunpack.c.l.b16 %v3879
        %v4019 = vunpack.c.l.b16 %v3880
        %v4020 = vpack.c.b16 %v4005, %v4004
        %v4021 = vpack.c.b16 %v4007, %v4006
        %v4022 = vpack.c.b16 %v4009, %v4008
        %v4023 = vpack.c.b16 %v4011, %v4010
        %v4024 = vpack.c.b16 %v4013, %v4012
        %v4025 = vpack.c.b16 %v4015, %v4014
        %v4026 = vpack.c.b16 %v4017, %v4016
        %v4027 = vpack.c.b16 %v4019, %v4018
        %4036 = vmatprep.subr.bf16.mxu0 0
        %4037 = vmatpush1.bf16.msra.mxu0 %v4020
        %4038 = vmatprep.subr.bf16.mxu0 0
        %4039 = vmatpush1.bf16.msra.mxu0 %v4021
        %4040 = vmatprep.subr.bf16.mxu0 0
        %4041 = vmatpush1.bf16.msra.mxu0 %v4022
        %4042 = vmatprep.subr.bf16.mxu0 0
        %4043 = vmatpush1.bf16.msra.mxu0 %v4023
        %4044 = vmatprep.subr.bf16.mxu0 0
        %4045 = vmatpush1.bf16.msra.mxu0 %v4024
        %4046 = vmatprep.subr.bf16.mxu0 0
        %4047 = vmatpush1.bf16.msra.mxu0 %v4025
        %4048 = vmatprep.subr.bf16.mxu0 0
        %4049 = vmatpush1.bf16.msra.mxu0 %v4026
        %4050 = vmatprep.subr.bf16.mxu0 0
        %4051 = vmatpush1.bf16.msra.mxu0 %v4027
        %4052 = vmatprep.subr.bf16.mxu0 0
        %4053 = vmatpush1.bf16.msra.mxu0 0
        %4054 = vmatprep.subr.bf16.mxu0 0
        %4055 = vmatpush1.bf16.msra.mxu0 0
        %4056 = vmatprep.subr.bf16.mxu0 0
        %4057 = vmatpush1.bf16.msra.mxu0 0
        %4058 = vmatprep.subr.bf16.mxu0 0
        %4059 = vmatpush1.bf16.msra.mxu0 0
        %4060 = vmatprep.subr.bf16.mxu0 0
        %4061 = vmatpush1.bf16.msra.mxu0 0
        %4062 = vmatprep.subr.bf16.mxu0 0
        %4063 = vmatpush1.bf16.msra.mxu0 0
        %4064 = vmatprep.subr.bf16.mxu0 0
        %4065 = vmatpush1.bf16.msra.mxu0 0
        %4066 = vmatprep.subr.bf16.mxu0 0
        %4067 = vmatpush1.bf16.msra.mxu0 0
        %4068 = vmatprep.mubr.bf16.mxu0 0
        %4069 = vmatmul.mubr.bf16.gmra.mrb[0].mxu0 %v3864
        %v4070 = vpop.f32.mrb[0].mxu0
        %v4071 = vadd.f32 %v3983, %v4070
        %v4072 = vpop.f32.mrb[0].mxu0
        %v4073 = vpop.f32.mrb[0].mxu0
        %v4074 = vpop.f32.mrb[0].mxu0
        %4075 = vdwg.mxu0
        %v4076 = vld [vmem:[%s3862 + $0x2] sm:$0x3]
        %v4077 = vpack.c.bf16 %v4076, %v4076
        %s4078 = scalar_lea.vmem %s7, 128
        %v4079 = vld [vmem:[%s4078] sm:$0xf]
        %v4080 = vld [vmem:[%s4078 + $0x4] sm:$0xf]
        %v4081 = vld [vmem:[%s4078 + $0x8] sm:$0xf]
        %v4082 = vld [vmem:[%s4078 + $0xc] sm:$0xf]
        %v4083 = vld [vmem:[%s4078 + $0x10] sm:$0xf]
        %v4084 = vld [vmem:[%s4078 + $0x14] sm:$0xf]
        %v4085 = vld [vmem:[%s4078 + $0x18] sm:$0xf]
        %v4086 = vld [vmem:[%s4078 + $0x1c] sm:$0xf]
        %v4087 = vld [vmem:[%s4078 + $0x20] sm:$0xf]
        %v4088 = vld [vmem:[%s4078 + $0x24] sm:$0xf]
        %v4089 = vld [vmem:[%s4078 + $0x28] sm:$0xf]
        %v4090 = vld [vmem:[%s4078 + $0x2c] sm:$0xf]
        %v4091 = vld [vmem:[%s4078 + $0x30] sm:$0xf]
        %v4092 = vld [vmem:[%s4078 + $0x34] sm:$0xf]
        %v4093 = vld [vmem:[%s4078 + $0x38] sm:$0xf]
        %v4094 = vld [vmem:[%s4078 + $0x3c] sm:$0xf]
        %v4111 = vunpack.c.l.b16 %v4079
        %v4112 = vunpack.c.l.b16 %v4080
        %v4113 = vunpack.c.l.b16 %v4081
        %v4114 = vunpack.c.l.b16 %v4082
        %v4115 = vunpack.c.l.b16 %v4083
        %v4116 = vunpack.c.l.b16 %v4084
        %v4117 = vunpack.c.l.b16 %v4085
        %v4118 = vunpack.c.l.b16 %v4086
        %v4119 = vunpack.c.l.b16 %v4087
        %v4120 = vunpack.c.l.b16 %v4088
        %v4121 = vunpack.c.l.b16 %v4089
        %v4122 = vunpack.c.l.b16 %v4090
        %v4123 = vunpack.c.l.b16 %v4091
        %v4124 = vunpack.c.l.b16 %v4092
        %v4125 = vunpack.c.l.b16 %v4093
        %v4126 = vunpack.c.l.b16 %v4094
        %v4127 = vpack.c.b16 %v4112, %v4111
        %v4128 = vpack.c.b16 %v4114, %v4113
        %v4129 = vpack.c.b16 %v4116, %v4115
        %v4130 = vpack.c.b16 %v4118, %v4117
        %v4131 = vpack.c.b16 %v4120, %v4119
        %v4132 = vpack.c.b16 %v4122, %v4121
        %v4133 = vpack.c.b16 %v4124, %v4123
        %v4134 = vpack.c.b16 %v4126, %v4125
        %4143 = vmatprep.subr.bf16.mxu0 0
        %4144 = vmatpush1.bf16.msra.mxu0 %v4127
        %4145 = vmatprep.subr.bf16.mxu0 0
        %4146 = vmatpush1.bf16.msra.mxu0 %v4128
        %4147 = vmatprep.subr.bf16.mxu0 0
        %4148 = vmatpush1.bf16.msra.mxu0 %v4129
        %4149 = vmatprep.subr.bf16.mxu0 0
        %4150 = vmatpush1.bf16.msra.mxu0 %v4130
        %4151 = vmatprep.subr.bf16.mxu0 0
        %4152 = vmatpush1.bf16.msra.mxu0 %v4131
        %4153 = vmatprep.subr.bf16.mxu0 0
        %4154 = vmatpush1.bf16.msra.mxu0 %v4132
        %4155 = vmatprep.subr.bf16.mxu0 0
        %4156 = vmatpush1.bf16.msra.mxu0 %v4133
        %4157 = vmatprep.subr.bf16.mxu0 0
        %4158 = vmatpush1.bf16.msra.mxu0 %v4134
        %4159 = vmatprep.subr.bf16.mxu0 0
        %4160 = vmatpush1.bf16.msra.mxu0 0
        %4161 = vmatprep.subr.bf16.mxu0 0
        %4162 = vmatpush1.bf16.msra.mxu0 0
        %4163 = vmatprep.subr.bf16.mxu0 0
        %4164 = vmatpush1.bf16.msra.mxu0 0
        %4165 = vmatprep.subr.bf16.mxu0 0
        %4166 = vmatpush1.bf16.msra.mxu0 0
        %4167 = vmatprep.subr.bf16.mxu0 0
        %4168 = vmatpush1.bf16.msra.mxu0 0
        %4169 = vmatprep.subr.bf16.mxu0 0
        %4170 = vmatpush1.bf16.msra.mxu0 0
        %4171 = vmatprep.subr.bf16.mxu0 0
        %4172 = vmatpush1.bf16.msra.mxu0 0
        %4173 = vmatprep.subr.bf16.mxu0 0
        %4174 = vmatpush1.bf16.msra.mxu0 0
        %4175 = vmatprep.mubr.bf16.mxu0 0
        %4176 = vmatmul.mubr.bf16.gmra.mrb[0].mxu0 %v4077
        %v4177 = vpop.f32.mrb[0].mxu0
        %v4178 = vadd.f32 0.0, %v4177
        %v4179 = vpop.f32.mrb[0].mxu0
        %v4180 = vpop.f32.mrb[0].mxu0
        %v4181 = vpop.f32.mrb[0].mxu0
        %4182 = vdwg.mxu0
        %v4183 = vadd.f32 %v4071, %v4178
        %s4184 = sadd.s32 %s3856, 1
        %s4185 = smul.u32 %s4184, 4
        %s4186 = scalar_lea.vmem [#allocation6], %s4185
        %v4187 = vld [vmem:[%s4186] sm:$0x3]
        %v4188 = vpack.c.bf16 %v4187, %v4187
        %s4189 = scalar_lea.vmem %s7, 192
        %v4190 = vld [vmem:[%s4189] sm:$0xf]
        %v4191 = vld [vmem:[%s4189 + $0x4] sm:$0xf]
        %v4192 = vld [vmem:[%s4189 + $0x8] sm:$0xf]
        %v4193 = vld [vmem:[%s4189 + $0xc] sm:$0xf]
        %v4194 = vld [vmem:[%s4189 + $0x10] sm:$0xf]
        %v4195 = vld [vmem:[%s4189 + $0x14] sm:$0xf]
        %v4196 = vld [vmem:[%s4189 + $0x18] sm:$0xf]
        %v4197 = vld [vmem:[%s4189 + $0x1c] sm:$0xf]
        %v4198 = vld [vmem:[%s4189 + $0x20] sm:$0xf]
        %v4199 = vld [vmem:[%s4189 + $0x24] sm:$0xf]
        %v4200 = vld [vmem:[%s4189 + $0x28] sm:$0xf]
        %v4201 = vld [vmem:[%s4189 + $0x2c] sm:$0xf]
        %v4202 = vld [vmem:[%s4189 + $0x30] sm:$0xf]
        %v4203 = vld [vmem:[%s4189 + $0x34] sm:$0xf]
        %v4204 = vld [vmem:[%s4189 + $0x38] sm:$0xf]
        %v4205 = vld [vmem:[%s4189 + $0x3c] sm:$0xf]
        %v4222 = vunpack.c.l.b16 %v4190
        %v4223 = vunpack.c.l.b16 %v4191
        %v4224 = vunpack.c.l.b16 %v4192
        %v4225 = vunpack.c.l.b16 %v4193
        %v4226 = vunpack.c.l.b16 %v4194
        %v4227 = vunpack.c.l.b16 %v4195
        %v4228 = vunpack.c.l.b16 %v4196
        %v4229 = vunpack.c.l.b16 %v4197
        %v4230 = vunpack.c.l.b16 %v4198
        %v4231 = vunpack.c.l.b16 %v4199
        %v4232 = vunpack.c.l.b16 %v4200
        %v4233 = vunpack.c.l.b16 %v4201
        %v4234 = vunpack.c.l.b16 %v4202
        %v4235 = vunpack.c.l.b16 %v4203
        %v4236 = vunpack.c.l.b16 %v4204
        %v4237 = vunpack.c.l.b16 %v4205
        %v4238 = vpack.c.b16 %v4223, %v4222
        %v4239 = vpack.c.b16 %v4225, %v4224
        %v4240 = vpack.c.b16 %v4227, %v4226
        %v4241 = vpack.c.b16 %v4229, %v4228
        %v4242 = vpack.c.b16 %v4231, %v4230
        %v4243 = vpack.c.b16 %v4233, %v4232
        %v4244 = vpack.c.b16 %v4235, %v4234
        %v4245 = vpack.c.b16 %v4237, %v4236
        %4254 = vmatprep.subr.bf16.mxu0 0
        %4255 = vmatpush1.bf16.msra.mxu0 %v4238
        %4256 = vmatprep.subr.bf16.mxu0 0
        %4257 = vmatpush1.bf16.msra.mxu0 %v4239
        %4258 = vmatprep.subr.bf16.mxu0 0
        %4259 = vmatpush1.bf16.msra.mxu0 %v4240
        %4260 = vmatprep.subr.bf16.mxu0 0
        %4261 = vmatpush1.bf16.msra.mxu0 %v4241
        %4262 = vmatprep.subr.bf16.mxu0 0
        %4263 = vmatpush1.bf16.msra.mxu0 %v4242
        %4264 = vmatprep.subr.bf16.mxu0 0
        %4265 = vmatpush1.bf16.msra.mxu0 %v4243
        %4266 = vmatprep.subr.bf16.mxu0 0
        %4267 = vmatpush1.bf16.msra.mxu0 %v4244
        %4268 = vmatprep.subr.bf16.mxu0 0
        %4269 = vmatpush1.bf16.msra.mxu0 %v4245
        %4270 = vmatprep.subr.bf16.mxu0 0
        %4271 = vmatpush1.bf16.msra.mxu0 0
        %4272 = vmatprep.subr.bf16.mxu0 0
        %4273 = vmatpush1.bf16.msra.mxu0 0
        %4274 = vmatprep.subr.bf16.mxu0 0
        %4275 = vmatpush1.bf16.msra.mxu0 0
        %4276 = vmatprep.subr.bf16.mxu0 0
        %4277 = vmatpush1.bf16.msra.mxu0 0
        %4278 = vmatprep.subr.bf16.mxu0 0
        %4279 = vmatpush1.bf16.msra.mxu0 0
        %4280 = vmatprep.subr.bf16.mxu0 0
        %4281 = vmatpush1.bf16.msra.mxu0 0
        %4282 = vmatprep.subr.bf16.mxu0 0
        %4283 = vmatpush1.bf16.msra.mxu0 0
        %4284 = vmatprep.subr.bf16.mxu0 0
        %4285 = vmatpush1.bf16.msra.mxu0 0
        %4286 = vmatprep.mubr.bf16.mxu0 0
        %4287 = vmatmul.mubr.bf16.gmra.mrb[0].mxu0 %v4188
        %v4288 = vpop.f32.mrb[0].mxu0
        %v4289 = vadd.f32 0.0, %v4288
        %v4290 = vpop.f32.mrb[0].mxu0
        %v4291 = vpop.f32.mrb[0].mxu0
        %v4292 = vpop.f32.mrb[0].mxu0
        %4293 = vdwg.mxu0
        %v4294 = vadd.f32 %v4183, %v4289
        %v4295 = vld [vmem:[%s4186 + $0x1] sm:$0x3]
        %v4296 = vpack.c.bf16 %v4295, %v4295
        %s4297 = scalar_lea.vmem %s7, 256
        %v4298 = vld [vmem:[%s4297] sm:$0xf]
        %v4299 = vld [vmem:[%s4297 + $0x4] sm:$0xf]
        %v4300 = vld [vmem:[%s4297 + $0x8] sm:$0xf]
        %v4301 = vld [vmem:[%s4297 + $0xc] sm:$0xf]
        %v4302 = vld [vmem:[%s4297 + $0x10] sm:$0xf]
        %v4303 = vld [vmem:[%s4297 + $0x14] sm:$0xf]
        %v4304 = vld [vmem:[%s4297 + $0x18] sm:$0xf]
        %v4305 = vld [vmem:[%s4297 + $0x1c] sm:$0xf]
        %v4306 = vld [vmem:[%s4297 + $0x20] sm:$0xf]
        %v4307 = vld [vmem:[%s4297 + $0x24] sm:$0xf]
        %v4308 = vld [vmem:[%s4297 + $0x28] sm:$0xf]
        %v4309 = vld [vmem:[%s4297 + $0x2c] sm:$0xf]
        %v4310 = vld [vmem:[%s4297 + $0x30] sm:$0xf]
        %v4311 = vld [vmem:[%s4297 + $0x34] sm:$0xf]
        %v4312 = vld [vmem:[%s4297 + $0x38] sm:$0xf]
        %v4313 = vld [vmem:[%s4297 + $0x3c] sm:$0xf]
        %v4330 = vunpack.c.l.b16 %v4298
        %v4331 = vunpack.c.l.b16 %v4299
        %v4332 = vunpack.c.l.b16 %v4300
        %v4333 = vunpack.c.l.b16 %v4301
        %v4334 = vunpack.c.l.b16 %v4302
        %v4335 = vunpack.c.l.b16 %v4303
        %v4336 = vunpack.c.l.b16 %v4304
        %v4337 = vunpack.c.l.b16 %v4305
        %v4338 = vunpack.c.l.b16 %v4306
        %v4339 = vunpack.c.l.b16 %v4307
        %v4340 = vunpack.c.l.b16 %v4308
        %v4341 = vunpack.c.l.b16 %v4309
        %v4342 = vunpack.c.l.b16 %v4310
        %v4343 = vunpack.c.l.b16 %v4311
        %v4344 = vunpack.c.l.b16 %v4312
        %v4345 = vunpack.c.l.b16 %v4313
        %v4346 = vpack.c.b16 %v4331, %v4330
        %v4347 = vpack.c.b16 %v4333, %v4332
        %v4348 = vpack.c.b16 %v4335, %v4334
        %v4349 = vpack.c.b16 %v4337, %v4336
        %v4350 = vpack.c.b16 %v4339, %v4338
        %v4351 = vpack.c.b16 %v4341, %v4340
        %v4352 = vpack.c.b16 %v4343, %v4342
        %v4353 = vpack.c.b16 %v4345, %v4344
        %4362 = vmatprep.subr.bf16.mxu0 0
        %4363 = vmatpush1.bf16.msra.mxu0 %v4346
        %4364 = vmatprep.subr.bf16.mxu0 0
        %4365 = vmatpush1.bf16.msra.mxu0 %v4347
        %4366 = vmatprep.subr.bf16.mxu0 0
        %4367 = vmatpush1.bf16.msra.mxu0 %v4348
        %4368 = vmatprep.subr.bf16.mxu0 0
        %4369 = vmatpush1.bf16.msra.mxu0 %v4349
        %4370 = vmatprep.subr.bf16.mxu0 0
        %4371 = vmatpush1.bf16.msra.mxu0 %v4350
        %4372 = vmatprep.subr.bf16.mxu0 0
        %4373 = vmatpush1.bf16.msra.mxu0 %v4351
        %4374 = vmatprep.subr.bf16.mxu0 0
        %4375 = vmatpush1.bf16.msra.mxu0 %v4352
        %4376 = vmatprep.subr.bf16.mxu0 0
        %4377 = vmatpush1.bf16.msra.mxu0 %v4353
        %4378 = vmatprep.subr.bf16.mxu0 0
        %4379 = vmatpush1.bf16.msra.mxu0 0
        %4380 = vmatprep.subr.bf16.mxu0 0
        %4381 = vmatpush1.bf16.msra.mxu0 0
        %4382 = vmatprep.subr.bf16.mxu0 0
        %4383 = vmatpush1.bf16.msra.mxu0 0
        %4384 = vmatprep.subr.bf16.mxu0 0
        %4385 = vmatpush1.bf16.msra.mxu0 0
        %4386 = vmatprep.subr.bf16.mxu0 0
        %4387 = vmatpush1.bf16.msra.mxu0 0
        %4388 = vmatprep.subr.bf16.mxu0 0
        %4389 = vmatpush1.bf16.msra.mxu0 0
        %4390 = vmatprep.subr.bf16.mxu0 0
        %4391 = vmatpush1.bf16.msra.mxu0 0
        %4392 = vmatprep.subr.bf16.mxu0 0
        %4393 = vmatpush1.bf16.msra.mxu0 0
        %4394 = vmatprep.mubr.bf16.mxu0 0
        %4395 = vmatmul.mubr.bf16.gmra.mrb[0].mxu0 %v4296
        %v4396 = vpop.f32.mrb[0].mxu0
        %v4397 = vadd.f32 0.0, %v4396
        %v4398 = vpop.f32.mrb[0].mxu0
        %v4399 = vpop.f32.mrb[0].mxu0
        %v4400 = vpop.f32.mrb[0].mxu0
        %4401 = vdwg.mxu0
        %v4402 = vadd.f32 %v4294, %v4397
        %v4403 = vld [vmem:[%s4186 + $0x2] sm:$0x3]
        %v4404 = vpack.c.bf16 %v4403, %v4403
        %s4405 = scalar_lea.vmem %s7, 320
        %v4406 = vld [vmem:[%s4405] sm:$0xf]
        %v4407 = vld [vmem:[%s4405 + $0x4] sm:$0xf]
        %v4408 = vld [vmem:[%s4405 + $0x8] sm:$0xf]
        %v4409 = vld [vmem:[%s4405 + $0xc] sm:$0xf]
        %v4410 = vld [vmem:[%s4405 + $0x10] sm:$0xf]
        %v4411 = vld [vmem:[%s4405 + $0x14] sm:$0xf]
        %v4412 = vld [vmem:[%s4405 + $0x18] sm:$0xf]
        %v4413 = vld [vmem:[%s4405 + $0x1c] sm:$0xf]
        %v4414 = vld [vmem:[%s4405 + $0x20] sm:$0xf]
        %v4415 = vld [vmem:[%s4405 + $0x24] sm:$0xf]
        %v4416 = vld [vmem:[%s4405 + $0x28] sm:$0xf]
        %v4417 = vld [vmem:[%s4405 + $0x2c] sm:$0xf]
        %v4418 = vld [vmem:[%s4405 + $0x30] sm:$0xf]
        %v4419 = vld [vmem:[%s4405 + $0x34] sm:$0xf]
        %v4420 = vld [vmem:[%s4405 + $0x38] sm:$0xf]
        %v4421 = vld [vmem:[%s4405 + $0x3c] sm:$0xf]
        %v4438 = vunpack.c.l.b16 %v4406
        %v4439 = vunpack.c.l.b16 %v4407
        %v4440 = vunpack.c.l.b16 %v4408
        %v4441 = vunpack.c.l.b16 %v4409
        %v4442 = vunpack.c.l.b16 %v4410
        %v4443 = vunpack.c.l.b16 %v4411
        %v4444 = vunpack.c.l.b16 %v4412
        %v4445 = vunpack.c.l.b16 %v4413
        %v4446 = vunpack.c.l.b16 %v4414
        %v4447 = vunpack.c.l.b16 %v4415
        %v4448 = vunpack.c.l.b16 %v4416
        %v4449 = vunpack.c.l.b16 %v4417
        %v4450 = vunpack.c.l.b16 %v4418
        %v4451 = vunpack.c.l.b16 %v4419
        %v4452 = vunpack.c.l.b16 %v4420
        %v4453 = vunpack.c.l.b16 %v4421
        %v4454 = vpack.c.b16 %v4439, %v4438
        %v4455 = vpack.c.b16 %v4441, %v4440
        %v4456 = vpack.c.b16 %v4443, %v4442
        %v4457 = vpack.c.b16 %v4445, %v4444
        %v4458 = vpack.c.b16 %v4447, %v4446
        %v4459 = vpack.c.b16 %v4449, %v4448
        %v4460 = vpack.c.b16 %v4451, %v4450
        %v4461 = vpack.c.b16 %v4453, %v4452
        %4470 = vmatprep.subr.bf16.mxu0 0
        %4471 = vmatpush1.bf16.msra.mxu0 %v4454
        %4472 = vmatprep.subr.bf16.mxu0 0
        %4473 = vmatpush1.bf16.msra.mxu0 %v4455
        %4474 = vmatprep.subr.bf16.mxu0 0
        %4475 = vmatpush1.bf16.msra.mxu0 %v4456
        %4476 = vmatprep.subr.bf16.mxu0 0
        %4477 = vmatpush1.bf16.msra.mxu0 %v4457
        %4478 = vmatprep.subr.bf16.mxu0 0
        %4479 = vmatpush1.bf16.msra.mxu0 %v4458
        %4480 = vmatprep.subr.bf16.mxu0 0
        %4481 = vmatpush1.bf16.msra.mxu0 %v4459
        %4482 = vmatprep.subr.bf16.mxu0 0
        %4483 = vmatpush1.bf16.msra.mxu0 %v4460
        %4484 = vmatprep.subr.bf16.mxu0 0
        %4485 = vmatpush1.bf16.msra.mxu0 %v4461
        %4486 = vmatprep.subr.bf16.mxu0 0
        %4487 = vmatpush1.bf16.msra.mxu0 0
        %4488 = vmatprep.subr.bf16.mxu0 0
        %4489 = vmatpush1.bf16.msra.mxu0 0
        %4490 = vmatprep.subr.bf16.mxu0 0
        %4491 = vmatpush1.bf16.msra.mxu0 0
        %4492 = vmatprep.subr.bf16.mxu0 0
        %4493 = vmatpush1.bf16.msra.mxu0 0
        %4494 = vmatprep.subr.bf16.mxu0 0
        %4495 = vmatpush1.bf16.msra.mxu0 0
        %4496 = vmatprep.subr.bf16.mxu0 0
        %4497 = vmatpush1.bf16.msra.mxu0 0
        %4498 = vmatprep.subr.bf16.mxu0 0
        %4499 = vmatpush1.bf16.msra.mxu0 0
        %4500 = vmatprep.subr.bf16.mxu0 0
        %4501 = vmatpush1.bf16.msra.mxu0 0
        %4502 = vmatprep.mubr.bf16.mxu0 0
        %4503 = vmatmul.mubr.bf16.gmra.mrb[0].mxu0 %v4404
        %v4504 = vpop.f32.mrb[0].mxu0
        %v4505 = vadd.f32 0.0, %v4504
        %v4506 = vpop.f32.mrb[0].mxu0
        %v4507 = vpop.f32.mrb[0].mxu0
        %v4508 = vpop.f32.mrb[0].mxu0
        %4509 = vdwg.mxu0
        %v4510 = vadd.f32 %v4402, %v4505
        %s4511 = sadd.s32 %s3856, 2
        %s4512 = smul.u32 %s4511, 4
        %s4513 = scalar_lea.vmem [#allocation6], %s4512
        %v4514 = vld [vmem:[%s4513] sm:$0x3]
        %v4515 = vpack.c.bf16 %v4514, %v4514
        %s4516 = scalar_lea.vmem %s7, 384
        %v4517 = vld [vmem:[%s4516] sm:$0xf]
        %v4518 = vld [vmem:[%s4516 + $0x4] sm:$0xf]
        %v4519 = vld [vmem:[%s4516 + $0x8] sm:$0xf]
        %v4520 = vld [vmem:[%s4516 + $0xc] sm:$0xf]
        %v4521 = vld [vmem:[%s4516 + $0x10] sm:$0xf]
        %v4522 = vld [vmem:[%s4516 + $0x14] sm:$0xf]
        %v4523 = vld [vmem:[%s4516 + $0x18] sm:$0xf]
        %v4524 = vld [vmem:[%s4516 + $0x1c] sm:$0xf]
        %v4525 = vld [vmem:[%s4516 + $0x20] sm:$0xf]
        %v4526 = vld [vmem:[%s4516 + $0x24] sm:$0xf]
        %v4527 = vld [vmem:[%s4516 + $0x28] sm:$0xf]
        %v4528 = vld [vmem:[%s4516 + $0x2c] sm:$0xf]
        %v4529 = vld [vmem:[%s4516 + $0x30] sm:$0xf]
        %v4530 = vld [vmem:[%s4516 + $0x34] sm:$0xf]
        %v4531 = vld [vmem:[%s4516 + $0x38] sm:$0xf]
        %v4532 = vld [vmem:[%s4516 + $0x3c] sm:$0xf]
        %v4549 = vunpack.c.l.b16 %v4517
        %v4550 = vunpack.c.l.b16 %v4518
        %v4551 = vunpack.c.l.b16 %v4519
        %v4552 = vunpack.c.l.b16 %v4520
        %v4553 = vunpack.c.l.b16 %v4521
        %v4554 = vunpack.c.l.b16 %v4522
        %v4555 = vunpack.c.l.b16 %v4523
        %v4556 = vunpack.c.l.b16 %v4524
        %v4557 = vunpack.c.l.b16 %v4525
        %v4558 = vunpack.c.l.b16 %v4526
        %v4559 = vunpack.c.l.b16 %v4527
        %v4560 = vunpack.c.l.b16 %v4528
        %v4561 = vunpack.c.l.b16 %v4529
        %v4562 = vunpack.c.l.b16 %v4530
        %v4563 = vunpack.c.l.b16 %v4531
        %v4564 = vunpack.c.l.b16 %v4532
        %v4565 = vpack.c.b16 %v4550, %v4549
        %v4566 = vpack.c.b16 %v4552, %v4551
        %v4567 = vpack.c.b16 %v4554, %v4553
        %v4568 = vpack.c.b16 %v4556, %v4555
        %v4569 = vpack.c.b16 %v4558, %v4557
        %v4570 = vpack.c.b16 %v4560, %v4559
        %v4571 = vpack.c.b16 %v4562, %v4561
        %v4572 = vpack.c.b16 %v4564, %v4563
        %4581 = vmatprep.subr.bf16.mxu0 0
        %4582 = vmatpush1.bf16.msra.mxu0 %v4565
        %4583 = vmatprep.subr.bf16.mxu0 0
        %4584 = vmatpush1.bf16.msra.mxu0 %v4566
        %4585 = vmatprep.subr.bf16.mxu0 0
        %4586 = vmatpush1.bf16.msra.mxu0 %v4567
        %4587 = vmatprep.subr.bf16.mxu0 0
        %4588 = vmatpush1.bf16.msra.mxu0 %v4568
        %4589 = vmatprep.subr.bf16.mxu0 0
        %4590 = vmatpush1.bf16.msra.mxu0 %v4569
        %4591 = vmatprep.subr.bf16.mxu0 0
        %4592 = vmatpush1.bf16.msra.mxu0 %v4570
        %4593 = vmatprep.subr.bf16.mxu0 0
        %4594 = vmatpush1.bf16.msra.mxu0 %v4571
        %4595 = vmatprep.subr.bf16.mxu0 0
        %4596 = vmatpush1.bf16.msra.mxu0 %v4572
        %4597 = vmatprep.subr.bf16.mxu0 0
        %4598 = vmatpush1.bf16.msra.mxu0 0
        %4599 = vmatprep.subr.bf16.mxu0 0
        %4600 = vmatpush1.bf16.msra.mxu0 0
        %4601 = vmatprep.subr.bf16.mxu0 0
        %4602 = vmatpush1.bf16.msra.mxu0 0
        %4603 = vmatprep.subr.bf16.mxu0 0
        %4604 = vmatpush1.bf16.msra.mxu0 0
        %4605 = vmatprep.subr.bf16.mxu0 0
        %4606 = vmatpush1.bf16.msra.mxu0 0
        %4607 = vmatprep.subr.bf16.mxu0 0
        %4608 = vmatpush1.bf16.msra.mxu0 0
        %4609 = vmatprep.subr.bf16.mxu0 0
        %4610 = vmatpush1.bf16.msra.mxu0 0
        %4611 = vmatprep.subr.bf16.mxu0 0
        %4612 = vmatpush1.bf16.msra.mxu0 0
        %4613 = vmatprep.mubr.bf16.mxu0 0
        %4614 = vmatmul.mubr.bf16.gmra.mrb[0].mxu0 %v4515
        %v4615 = vpop.f32.mrb[0].mxu0
        %v4616 = vadd.f32 0.0, %v4615
        %v4617 = vpop.f32.mrb[0].mxu0
        %v4618 = vpop.f32.mrb[0].mxu0
        %v4619 = vpop.f32.mrb[0].mxu0
        %4620 = vdwg.mxu0
        %v4621 = vadd.f32 %v4510, %v4616
        %v4622 = vld [vmem:[%s4513 + $0x1] sm:$0x3]
        %v4623 = vpack.c.bf16 %v4622, %v4622
        %s4624 = scalar_lea.vmem %s7, 448
        %v4625 = vld [vmem:[%s4624] sm:$0xf]
        %v4626 = vld [vmem:[%s4624 + $0x4] sm:$0xf]
        %v4627 = vld [vmem:[%s4624 + $0x8] sm:$0xf]
        %v4628 = vld [vmem:[%s4624 + $0xc] sm:$0xf]
        %v4629 = vld [vmem:[%s4624 + $0x10] sm:$0xf]
        %v4630 = vld [vmem:[%s4624 + $0x14] sm:$0xf]
        %v4631 = vld [vmem:[%s4624 + $0x18] sm:$0xf]
        %v4632 = vld [vmem:[%s4624 + $0x1c] sm:$0xf]
        %v4633 = vld [vmem:[%s4624 + $0x20] sm:$0xf]
        %v4634 = vld [vmem:[%s4624 + $0x24] sm:$0xf]
        %v4635 = vld [vmem:[%s4624 + $0x28] sm:$0xf]
        %v4636 = vld [vmem:[%s4624 + $0x2c] sm:$0xf]
        %v4637 = vld [vmem:[%s4624 + $0x30] sm:$0xf]
        %v4638 = vld [vmem:[%s4624 + $0x34] sm:$0xf]
        %v4639 = vld [vmem:[%s4624 + $0x38] sm:$0xf]
        %v4640 = vld [vmem:[%s4624 + $0x3c] sm:$0xf]
        %v4657 = vunpack.c.l.b16 %v4625
        %v4658 = vunpack.c.l.b16 %v4626
        %v4659 = vunpack.c.l.b16 %v4627
        %v4660 = vunpack.c.l.b16 %v4628
        %v4661 = vunpack.c.l.b16 %v4629
        %v4662 = vunpack.c.l.b16 %v4630
        %v4663 = vunpack.c.l.b16 %v4631
        %v4664 = vunpack.c.l.b16 %v4632
        %v4665 = vunpack.c.l.b16 %v4633
        %v4666 = vunpack.c.l.b16 %v4634
        %v4667 = vunpack.c.l.b16 %v4635
        %v4668 = vunpack.c.l.b16 %v4636
        %v4669 = vunpack.c.l.b16 %v4637
        %v4670 = vunpack.c.l.b16 %v4638
        %v4671 = vunpack.c.l.b16 %v4639
        %v4672 = vunpack.c.l.b16 %v4640
        %v4673 = vpack.c.b16 %v4658, %v4657
        %v4674 = vpack.c.b16 %v4660, %v4659
        %v4675 = vpack.c.b16 %v4662, %v4661
        %v4676 = vpack.c.b16 %v4664, %v4663
        %v4677 = vpack.c.b16 %v4666, %v4665
        %v4678 = vpack.c.b16 %v4668, %v4667
        %v4679 = vpack.c.b16 %v4670, %v4669
        %v4680 = vpack.c.b16 %v4672, %v4671
        %4689 = vmatprep.subr.bf16.mxu0 0
        %4690 = vmatpush1.bf16.msra.mxu0 %v4673
        %4691 = vmatprep.subr.bf16.mxu0 0
        %4692 = vmatpush1.bf16.msra.mxu0 %v4674
        %4693 = vmatprep.subr.bf16.mxu0 0
        %4694 = vmatpush1.bf16.msra.mxu0 %v4675
        %4695 = vmatprep.subr.bf16.mxu0 0
        %4696 = vmatpush1.bf16.msra.mxu0 %v4676
        %4697 = vmatprep.subr.bf16.mxu0 0
        %4698 = vmatpush1.bf16.msra.mxu0 %v4677
        %4699 = vmatprep.subr.bf16.mxu0 0
        %4700 = vmatpush1.bf16.msra.mxu0 %v4678
        %4701 = vmatprep.subr.bf16.mxu0 0
        %4702 = vmatpush1.bf16.msra.mxu0 %v4679
        %4703 = vmatprep.subr.bf16.mxu0 0
        %4704 = vmatpush1.bf16.msra.mxu0 %v4680
        %4705 = vmatprep.subr.bf16.mxu0 0
        %4706 = vmatpush1.bf16.msra.mxu0 0
        %4707 = vmatprep.subr.bf16.mxu0 0
        %4708 = vmatpush1.bf16.msra.mxu0 0
        %4709 = vmatprep.subr.bf16.mxu0 0
        %4710 = vmatpush1.bf16.msra.mxu0 0
        %4711 = vmatprep.subr.bf16.mxu0 0
        %4712 = vmatpush1.bf16.msra.mxu0 0
        %4713 = vmatprep.subr.bf16.mxu0 0
        %4714 = vmatpush1.bf16.msra.mxu0 0
        %4715 = vmatprep.subr.bf16.mxu0 0
        %4716 = vmatpush1.bf16.msra.mxu0 0
        %4717 = vmatprep.subr.bf16.mxu0 0
        %4718 = vmatpush1.bf16.msra.mxu0 0
        %4719 = vmatprep.subr.bf16.mxu0 0
        %4720 = vmatpush1.bf16.msra.mxu0 0
        %4721 = vmatprep.mubr.bf16.mxu0 0
        %4722 = vmatmul.mubr.bf16.gmra.mrb[0].mxu0 %v4623
        %v4723 = vpop.f32.mrb[0].mxu0
        %v4724 = vadd.f32 0.0, %v4723
        %v4725 = vpop.f32.mrb[0].mxu0
        %v4726 = vpop.f32.mrb[0].mxu0
        %v4727 = vpop.f32.mrb[0].mxu0
        %4728 = vdwg.mxu0
        %v4729 = vadd.f32 %v4621, %v4724
        %v4730 = vld [vmem:[%s4513 + $0x2] sm:$0x3]
        %v4731 = vpack.c.bf16 %v4730, %v4730
        %s4732 = scalar_lea.vmem %s7, 512
        %v4733 = vld [vmem:[%s4732] sm:$0xf]
        %v4734 = vld [vmem:[%s4732 + $0x4] sm:$0xf]
        %v4735 = vld [vmem:[%s4732 + $0x8] sm:$0xf]
        %v4736 = vld [vmem:[%s4732 + $0xc] sm:$0xf]
        %v4737 = vld [vmem:[%s4732 + $0x10] sm:$0xf]
        %v4738 = vld [vmem:[%s4732 + $0x14] sm:$0xf]
        %v4739 = vld [vmem:[%s4732 + $0x18] sm:$0xf]
        %v4740 = vld [vmem:[%s4732 + $0x1c] sm:$0xf]
        %v4741 = vld [vmem:[%s4732 + $0x20] sm:$0xf]
        %v4742 = vld [vmem:[%s4732 + $0x24] sm:$0xf]
        %v4743 = vld [vmem:[%s4732 + $0x28] sm:$0xf]
        %v4744 = vld [vmem:[%s4732 + $0x2c] sm:$0xf]
        %v4745 = vld [vmem:[%s4732 + $0x30] sm:$0xf]
        %v4746 = vld [vmem:[%s4732 + $0x34] sm:$0xf]
        %v4747 = vld [vmem:[%s4732 + $0x38] sm:$0xf]
        %v4748 = vld [vmem:[%s4732 + $0x3c] sm:$0xf]
        %v4765 = vunpack.c.l.b16 %v4733
        %v4766 = vunpack.c.l.b16 %v4734
        %v4767 = vunpack.c.l.b16 %v4735
        %v4768 = vunpack.c.l.b16 %v4736
        %v4769 = vunpack.c.l.b16 %v4737
        %v4770 = vunpack.c.l.b16 %v4738
        %v4771 = vunpack.c.l.b16 %v4739
        %v4772 = vunpack.c.l.b16 %v4740
        %v4773 = vunpack.c.l.b16 %v4741
        %v4774 = vunpack.c.l.b16 %v4742
        %v4775 = vunpack.c.l.b16 %v4743
        %v4776 = vunpack.c.l.b16 %v4744
        %v4777 = vunpack.c.l.b16 %v4745
        %v4778 = vunpack.c.l.b16 %v4746
        %v4779 = vunpack.c.l.b16 %v4747
        %v4780 = vunpack.c.l.b16 %v4748
        %v4781 = vpack.c.b16 %v4766, %v4765
        %v4782 = vpack.c.b16 %v4768, %v4767
        %v4783 = vpack.c.b16 %v4770, %v4769
        %v4784 = vpack.c.b16 %v4772, %v4771
        %v4785 = vpack.c.b16 %v4774, %v4773
        %v4786 = vpack.c.b16 %v4776, %v4775
        %v4787 = vpack.c.b16 %v4778, %v4777
        %v4788 = vpack.c.b16 %v4780, %v4779
        %4797 = vmatprep.subr.bf16.mxu0 0
        %4798 = vmatpush1.bf16.msra.mxu0 %v4781
        %4799 = vmatprep.subr.bf16.mxu0 0
        %4800 = vmatpush1.bf16.msra.mxu0 %v4782
        %4801 = vmatprep.subr.bf16.mxu0 0
        %4802 = vmatpush1.bf16.msra.mxu0 %v4783
        %4803 = vmatprep.subr.bf16.mxu0 0
        %4804 = vmatpush1.bf16.msra.mxu0 %v4784
        %4805 = vmatprep.subr.bf16.mxu0 0
        %4806 = vmatpush1.bf16.msra.mxu0 %v4785
        %4807 = vmatprep.subr.bf16.mxu0 0
        %4808 = vmatpush1.bf16.msra.mxu0 %v4786
        %4809 = vmatprep.subr.bf16.mxu0 0
        %4810 = vmatpush1.bf16.msra.mxu0 %v4787
        %4811 = vmatprep.subr.bf16.mxu0 0
        %4812 = vmatpush1.bf16.msra.mxu0 %v4788
        %4813 = vmatprep.subr.bf16.mxu0 0
        %4814 = vmatpush1.bf16.msra.mxu0 0
        %4815 = vmatprep.subr.bf16.mxu0 0
        %4816 = vmatpush1.bf16.msra.mxu0 0
        %4817 = vmatprep.subr.bf16.mxu0 0
        %4818 = vmatpush1.bf16.msra.mxu0 0
        %4819 = vmatprep.subr.bf16.mxu0 0
        %4820 = vmatpush1.bf16.msra.mxu0 0
        %4821 = vmatprep.subr.bf16.mxu0 0
        %4822 = vmatpush1.bf16.msra.mxu0 0
        %4823 = vmatprep.subr.bf16.mxu0 0
        %4824 = vmatpush1.bf16.msra.mxu0 0
        %4825 = vmatprep.subr.bf16.mxu0 0
        %4826 = vmatpush1.bf16.msra.mxu0 0
        %4827 = vmatprep.subr.bf16.mxu0 0
        %4828 = vmatpush1.bf16.msra.mxu0 0
        %4829 = vmatprep.mubr.bf16.mxu0 0
        %4830 = vmatmul.mubr.bf16.gmra.mrb[0].mxu0 %v4731
        %v4831 = vpop.f32.mrb[0].mxu0
        %v4832 = vadd.f32 0.0, %v4831
        %v4833 = vpop.f32.mrb[0].mxu0
        %v4834 = vpop.f32.mrb[0].mxu0
        %v4835 = vpop.f32.mrb[0].mxu0
        %4836 = vdwg.mxu0
        %v4837 = vadd.f32 %v4729, %v4832
        %v4838 = vld [vmem:[%s8] sm:$0x1]
        %v4840 = vlaneseq
        %v4841 = vshrl.u32 %v4840, 7
        %v4842 = vsub.s32 0, %v4841
        %v4843 = vrot.slane %v4838, %v4842
        %v4845 = vadd.f32 %v4837, %v4843
        %v4846 = vmax.f32 %v4845, 0.0
        %s4847 = smul.u32 %s3856, 2
        %s4848 = scalar_lea.vmem %s332, %s4847
        %4849 = vst [vmem:[%s4848] sm:$0x3] %v4846
      $region82: #{scnn_forward.1} parent=55 // loop_footer
        %s3860 = sadd.s32 1, %s3856
      $region83: #{scnn_forward.1} parent=55 // loop_footer_branch
        %3855 = sbr.rel target = $region79
      $region84: #{scnn_forward.1} parent=55 // loop_exit
        _
      %p4850 = scmp.lt.s32.totalorder %s20, 1
      %s4851 = scalar_select %p4850, %s20, 1
      %s4852 = smul.addr %s4851, 2
      %s4853 = smul.addr %s4852, 2
      %s4854 = scalar_lea.vmem %s9, %s4853
      // Predicated region
      $region85: #{scnn_forward.1} parent=55 // pred_check
        %p4855 = pneg %p232
      $region86: #{scnn_forward.1} parent=55 // pred_check_branch
        %4857 = sbr.rel (%p4855) target = $region88
      $region87: #{scnn_forward.1} parent=55 // pred_region
        _
      $region88: #{scnn_forward.1} parent=55 // pred_fallthru
        _
    $region56: #{scnn_forward.1} parent=5 // pred_fallthru
      _
    %p4858 = scmp.le.s32.totalorder 2, %s15
    // Predicated region
    $region89: #{scnn_forward.1} parent=5 // pred_check
      %p4859 = pneg %p4858
    $region90: #{scnn_forward.1} parent=5 // pred_check_branch
      %4861 = sbr.rel (%p4859) target = $region92
    $region91: #{scnn_forward.1} parent=5 // pred_region
      %s4862 = ssub.s32 %s15, 2
      // Predicated region
      $region93: #{scnn_forward.1} parent=91 // pred_check
        %p4863 = pneg %p238
      $region94: #{scnn_forward.1} parent=91 // pred_check_branch
        %4865 = sbr.rel (%p4863) target = $region96
      $region95: #{scnn_forward.1} parent=91 // pred_region
        %p4866 = scmp.lt.s32.totalorder %s21, 1
        %s4867 = scalar_select %p4866, %s21, 1
        %s4868 = smul.addr %s4867, 2
        %s4869 = smul.addr %s4868, 2
        %s4870 = scalar_lea.vmem %s9, %s4869
      $region96: #{scnn_forward.1} parent=91 // pred_fallthru
        _
    $region92: #{scnn_forward.1} parent=5 // pred_fallthru
      _
  $region6: #{scnn_forward.1} parent=0 // loop_footer
    %s19 = sadd.s32 1, %s15
  $region7: #{scnn_forward.1} parent=0 // loop_footer_branch
    %14 = sbr.rel target = $region3
  $region8: #{scnn_forward.1} parent=0 // loop_exit
    _

</llo_original>
